<compile_context>
chip_gen: v7x
topology: tpu7x:2x2x1
jax: 0.10.0
libtpu: 0.0.40
codegen_flags: <defaults>
</compile_context>

<pallas_src>
import functools
import math

import jax
import jax.numpy as jnp
from jax.experimental import pallas as pl
from jax.experimental.pallas import tpu as pltpu


# ----------------------------------------------------------------------------
# VMEM budget helper
# ----------------------------------------------------------------------------

def _nbytes(*arrays):
    return sum(int(a.size) * a.dtype.itemsize for a in arrays)


def _vmem_limit(nbytes, floor=32 << 20, cap=64 << 20):
    # Explicit scoped-VMEM budget: generous multiple of the block footprint,
    # floored at the v6e default (32 MiB) and capped at v7x physical (64 MiB).
    return int(max(min(3 * nbytes + (4 << 20), cap), floor))


# ----------------------------------------------------------------------------
# Small helper kernels (row-tiled, lane-dense last dim)
# ----------------------------------------------------------------------------

def _linear_kernel(x_ref, w_ref, b_ref, o_ref):
    x = x_ref[...]
    w = w_ref[...]
    if x.dtype != w.dtype:
        x = x.astype(w.dtype)                       # bf16 MXU operands
    y = jnp.dot(x, w, preferred_element_type=jnp.float32)
    o_ref[...] = (y + b_ref[...].astype(jnp.float32)).astype(o_ref.dtype)


def linear(x, w, b, out_dtype=None, block_rows=512):
    """x: [M, K], w: [K, N] (bf16), b: [1, N] (f32) -> [M, N]."""
    M, K = x.shape
    N = w.shape[1]
    out_dtype = out_dtype or x.dtype
    if M % block_rows:
        block_rows = M
    return pl.pallas_call(
        _linear_kernel,
        out_shape=jax.ShapeDtypeStruct((M, N), out_dtype),
        grid=(M // block_rows,),
        in_specs=[pl.BlockSpec((block_rows, K), lambda i: (i, 0)),
                  pl.BlockSpec((K, N), lambda i: (0, 0)),
                  pl.BlockSpec((1, N), lambda i: (0, 0))],
        out_specs=pl.BlockSpec((block_rows, N), lambda i: (i, 0)),
        compiler_params=pltpu.CompilerParams(
            dimension_semantics=("parallel",),
            vmem_limit_bytes=_vmem_limit(_nbytes(x, w, b) + M * N * 4)),
    )(x, w, b)


def _layernorm(x, g, b, eps=1e-12):
    mu = jnp.mean(x, axis=-1, keepdims=True)
    var = jnp.mean((x - mu) ** 2, axis=-1, keepdims=True)
    return (x - mu) * jax.lax.rsqrt(var + eps) * g + b


def _layernorm_kernel(x_ref, g_ref, b_ref, o_ref):
    x = x_ref[...].astype(jnp.float32)              # f32 element math (v5e-safe)
    o_ref[...] = _layernorm(x, g_ref[...], b_ref[...]).astype(o_ref.dtype)


def layernorm(x, g, b, block_rows=512):
    """x: [M, H], g/b: [1, H] (f32)."""
    M, H = x.shape
    if M % block_rows:
        block_rows = M
    return pl.pallas_call(
        _layernorm_kernel,
        out_shape=jax.ShapeDtypeStruct((M, H), x.dtype),
        grid=(M // block_rows,),
        in_specs=[pl.BlockSpec((block_rows, H), lambda i: (i, 0)),
                  pl.BlockSpec((1, H), lambda i: (0, 0)),
                  pl.BlockSpec((1, H), lambda i: (0, 0))],
        out_specs=pl.BlockSpec((block_rows, H), lambda i: (i, 0)),
        compiler_params=pltpu.CompilerParams(
            dimension_semantics=("parallel",),
            vmem_limit_bytes=_vmem_limit(2 * _nbytes(x, g, b))),
    )(x, g, b)


# ----------------------------------------------------------------------------
# Fused BERT encoder layer kernel (one pallas_call per layer, grid over batch)
# ----------------------------------------------------------------------------

def _encoder_layer_kernel(x_ref, m_ref,
                          wqkv_ref, bqkv_ref, wo_ref, bo_ref, ln1g_ref, ln1b_ref,
                          w1_ref, b1_ref, w2_ref, b2_ref, ln2g_ref, ln2b_ref,
                          o_ref, *, num_heads):
    T, H = x_ref.shape
    d = H // num_heads
    scale = 1.0 / math.sqrt(d)
    cdtype = wqkv_ref.dtype                          # bf16 MXU operand dtype

    x = x_ref[...].astype(jnp.float32)               # [T, H] (residual / LN math)

    # Fused QKV projection: [T, H] @ [H, 3H] -> [T, 3H] (bf16 in, f32 accum).
    qkv = (jnp.dot(x_ref[...].astype(cdtype), wqkv_ref[...],
                   preferred_element_type=jnp.float32)
           + bqkv_ref[...].astype(jnp.float32))

    # Additive key mask broadcast hoisted out of the head loop (no CSE in JAX).
    mask = jnp.broadcast_to(m_ref[...].astype(jnp.float32), (T, T))

    head_outs = []
    for h in range(num_heads):
        q = qkv[:, h * d:(h + 1) * d].astype(cdtype)
        k = qkv[:, H + h * d:H + (h + 1) * d].astype(cdtype)
        v = qkv[:, 2 * H + h * d:2 * H + (h + 1) * d].astype(cdtype)
        # q @ k^T without an explicit transpose (contract the d dims directly).
        s = jax.lax.dot_general(q, k, (((1,), (1,)), ((), ())),
                                preferred_element_type=jnp.float32) * scale
        p = jax.nn.softmax(s + mask, axis=-1)                    # f32 [T, T]
        head_outs.append(jnp.dot(p.astype(cdtype), v,
                                 preferred_element_type=jnp.float32))
    # Heads merged, then ONE full-K output projection (K=H instead of K=d x heads).
    attn = jnp.dot(jnp.concatenate(head_outs, axis=-1).astype(cdtype), wo_ref[...],
                   preferred_element_type=jnp.float32)

    y = _layernorm(x + attn + bo_ref[...].astype(jnp.float32),
                   ln1g_ref[...], ln1b_ref[...])

    # Feed-forward block fused in the same kernel.
    hmid = (jnp.dot(y.astype(cdtype), w1_ref[...],
                    preferred_element_type=jnp.float32)
            + b1_ref[...].astype(jnp.float32))
    hmid = jax.nn.gelu(hmid)
    ff = (jnp.dot(hmid.astype(cdtype), w2_ref[...],
                  preferred_element_type=jnp.float32)
          + b2_ref[...].astype(jnp.float32))
    y2 = _layernorm(y + ff, ln2g_ref[...], ln2b_ref[...])

    o_ref[...] = y2.astype(o_ref.dtype)


def encoder_layer(p, x, add_mask, num_heads):
    """x: [B, T, H] bf16; add_mask: [B, 1, T] f32 additive (-1e9 on padded keys)."""
    B, T, H = x.shape

    def wspec(arr):
        n = arr.ndim
        return pl.BlockSpec(arr.shape, lambda b, n=n: (0,) * n)

    weights = (p["wqkv"], p["bqkv"], p["wo"], p["bo"], p["ln1_g"], p["ln1_b"],
               p["w1"], p["b1"], p["w2"], p["b2"], p["ln2_g"], p["ln2_b"])

    block_bytes = (_nbytes(*weights) + 2 * T * H * x.dtype.itemsize
                   + T * add_mask.dtype.itemsize)
    return pl.pallas_call(
        functools.partial(_encoder_layer_kernel, num_heads=num_heads),
        out_shape=jax.ShapeDtypeStruct((B, T, H), x.dtype),
        grid=(B,),
        in_specs=[pl.BlockSpec((None, T, H), lambda b: (b, 0, 0)),
                  pl.BlockSpec((None, 1, T), lambda b: (b, 0, 0))]
                 + [wspec(a) for a in weights],
        out_specs=pl.BlockSpec((None, T, H), lambda b: (b, 0, 0)),
        compiler_params=pltpu.CompilerParams(
            dimension_semantics=("parallel",),
            vmem_limit_bytes=_vmem_limit(2 * block_bytes)),
    )(x, add_mask, *weights)


# ----------------------------------------------------------------------------
# Fused bidirectional LSTM layer kernel (whole recurrence, both directions,
# time-major, single [T, B, 2H] output)
# ----------------------------------------------------------------------------

def _bilstm_kernel(xg_ref, whh_f_ref, whh_b_ref, o_ref,
                   hf, cf, hb, cb, *, hidden, emit_all):
    # xg_ref: [T, B, 8H] time-major precomputed x @ W_ih^T + b for both directions
    #         (fwd gates in [..., :4H], bwd gates in [..., 4H:]).
    # whh_*_ref: [H, 4H] bf16 (transposed hidden-to-hidden weights).
    # o_ref: [T, B, 2H] (emit_all) or [1, B, 2H] (last layer: only the time step
    #        the classifier reads is stored; fwd half [..., :H], bwd half [..., H:]).
    T = xg_ref.shape[0]
    H = hidden

    for r in (hf, cf, hb, cb):
        r[...] = jnp.zeros_like(r)

    whh_f = whh_f_ref[...]
    whh_b = whh_b_ref[...]

    def cell(gates, c):
        i = jax.nn.sigmoid(gates[:, 0 * H:1 * H])
        f = jax.nn.sigmoid(gates[:, 1 * H:2 * H])
        g = jnp.tanh(gates[:, 2 * H:3 * H])
        o = jax.nn.sigmoid(gates[:, 3 * H:4 * H])
        c_new = f * c + i * g
        return o * jnp.tanh(c_new), c_new

    def step(t, carry):
        # Forward direction consumes time step t.
        xg_t = xg_ref[t].astype(jnp.float32)                     # [B, 8H]
        gf = xg_t[:, :4 * H] + jnp.dot(hf[...].astype(whh_f.dtype), whh_f,
                                       preferred_element_type=jnp.float32)
        hfn, cfn = cell(gf, cf[...])
        hf[...] = hfn
        cf[...] = cfn
        if emit_all:
            o_ref[t, :, :H] = hfn.astype(o_ref.dtype)
        else:
            @pl.when(t == T - 1)
            def _():
                o_ref[0, :, :H] = hfn.astype(o_ref.dtype)

        # Backward direction consumes time step T-1-t (reversal via indexing).
        tb = T - 1 - t
        xg_tb = xg_ref[tb].astype(jnp.float32)                   # [B, 8H]
        gb = xg_tb[:, 4 * H:] + jnp.dot(hb[...].astype(whh_b.dtype), whh_b,
                                        preferred_element_type=jnp.float32)
        hbn, cbn = cell(gb, cb[...])
        hb[...] = hbn
        cb[...] = cbn
        if emit_all:
            o_ref[tb, :, H:] = hbn.astype(o_ref.dtype)
        else:
            @pl.when(t == 0)                                     # tb == T - 1
            def _():
                o_ref[0, :, H:] = hbn.astype(o_ref.dtype)
        return carry

    # Bounded unroll: keeps LLO scheduling visibility without blowing up
    # instruction memory / vreg live ranges at large T.
    jax.lax.fori_loop(0, T, step, 0, unroll=min(T, 8))


def bilstm_layer(lp, x_tm, last_layer=False):
    """One bidirectional LSTM layer, time-major.

    x_tm: [T, B, D] -> [T, B, 2H]  (or [1, B, 2H] for the last layer).
    """
    T, B, D = x_tm.shape
    H = lp["w_hh_f"].shape[0]

    # Fused input-to-hidden projection for BOTH directions in one gridded matmul
    # kernel; already time-major, so no transpose is needed afterwards.
    xg = linear(x_tm.reshape(T * B, D), lp["w_ih"], lp["b"])      # [T*B, 8H] bf16
    xg = xg.reshape(T, B, 8 * H)

    out_T = 1 if last_layer else T
    out = pl.pallas_call(
        functools.partial(_bilstm_kernel, hidden=H, emit_all=not last_layer),
        out_shape=jax.ShapeDtypeStruct((out_T, B, 2 * H), x_tm.dtype),
        scratch_shapes=[pltpu.VMEM((B, H), jnp.float32) for _ in range(4)],
        compiler_params=pltpu.CompilerParams(
            vmem_limit_bytes=_vmem_limit(
                2 * (_nbytes(xg, lp["w_hh_f"], lp["w_hh_b"])
                     + out_T * B * 2 * H * x_tm.dtype.itemsize))),
    )(xg, lp["w_hh_f"], lp["w_hh_b"])
    return out


# ----------------------------------------------------------------------------
# Model glue (plain JAX around the Pallas kernels)
# ----------------------------------------------------------------------------

def bert_forward(p, input_ids, attention_mask, num_heads):
    B, T = input_ids.shape
    H = p["word_emb"].shape[1]
    x = p["word_emb"][input_ids] + p["pos_emb"][:T][None, :, :]   # bf16 [B, T, H]
    x = layernorm(x.reshape(B * T, H), p["ln_emb_g"], p["ln_emb_b"]).reshape(B, T, H)
    add_mask = ((1.0 - attention_mask.astype(jnp.float32)) * -1e9)[:, None, :]
    for layer in p["layers"]:
        x = encoder_layer(layer, x, add_mask, num_heads)
    return x                                                      # [B, T, H]


def robert_lstm_forward(params, input_ids, attention_mask, *, num_heads):
    last_hidden_state = bert_forward(params["bert"], input_ids, attention_mask,
                                     num_heads)
    # Go time-major ONCE at hidden width; the whole LSTM stack stays time-major.
    x_tm = jnp.transpose(last_hidden_state, (1, 0, 2))            # [T, B, H]
    n_layers = len(params["lstm"])
    for i, lp in enumerate(params["lstm"]):
        x_tm = bilstm_layer(lp, x_tm, last_layer=(i == n_layers - 1))
    # Last layer emits only the time step the classifier reads.
    # TODO(synk): matches the PyTorch reference (last time step regardless of
    # attention_mask padding), not pack_padded_sequence semantics.
    last = x_tm[0]                                                # [B, 2H]
    return linear(last, params["out_w"], params["out_b"], out_dtype=jnp.float32)


# ----------------------------------------------------------------------------
# Deterministic parameter init (synthetic weights; num_heads is STATIC config).
# Matmul weights stored in bf16; biases / layernorm params in f32.
# ----------------------------------------------------------------------------

def init_params(key, *, vocab=100, max_pos=16, hidden=32,
                intermediate=128, bert_layers=1, num_classes=4):
    keys = iter(jax.random.split(key, 64))

    def w(shape, scale=0.02):
        return (scale * jax.random.normal(next(keys), shape)).astype(jnp.bfloat16)

    def zeros(shape):
        return jnp.zeros(shape, jnp.float32)

    def ones(shape):
        return jnp.ones(shape, jnp.float32)

    H = hidden
    layers = []
    for _ in range(bert_layers):
        layers.append(dict(
            wqkv=w((H, 3 * H)), bqkv=zeros((1, 3 * H)),
            wo=w((H, H)), bo=zeros((1, H)),
            ln1_g=ones((1, H)), ln1_b=zeros((1, H)),
            w1=w((H, intermediate)), b1=zeros((1, intermediate)),
            w2=w((intermediate, H)), b2=zeros((1, H)),
            ln2_g=ones((1, H)), ln2_b=zeros((1, H)),
        ))
    bert = dict(
        word_emb=w((vocab, H)), pos_emb=w((max_pos, H)),
        ln_emb_g=ones((1, H)), ln_emb_b=zeros((1, H)),
        layers=layers,
    )

    def lstm_layer(d_in):
        # PyTorch stores W_ih: (4H, d_in), W_hh: (4H, H); kept transposed for
        # x @ W^T.  Both directions' input weights are concatenated along the
        # output dim ([:, :4H] fwd, [:, 4H:] bwd); b = b_ih + b_hh folded.
        return dict(
            w_ih=w((d_in, 8 * H), 0.1),
            b=(0.1 * jax.random.normal(next(keys), (1, 8 * H))).astype(jnp.float32),
            w_hh_f=w((H, 4 * H), 0.1),
            w_hh_b=w((H, 4 * H), 0.1),
        )

    lstm = [lstm_layer(H), lstm_layer(2 * H)]

    return dict(bert=bert, lstm=lstm,
                out_w=w((2 * H, num_classes)), out_b=zeros((1, num_classes)))


# ----------------------------------------------------------------------------
# Main
# ----------------------------------------------------------------------------

if __name__ == "__main__":
    B, T, H, NUM_CLASSES, VOCAB, NUM_HEADS = 2, 8, 32, 4, 100, 2

    key = jax.random.PRNGKey(0)
    pkey, ikey = jax.random.split(key)
    params = init_params(pkey, vocab=VOCAB, max_pos=16, hidden=H,
                         intermediate=128, bert_layers=1,
                         num_classes=NUM_CLASSES)

    input_ids = jax.random.randint(ikey, (B, T), 0, VOCAB, dtype=jnp.int32)
    attention_mask = jnp.ones((B, T), jnp.int32).at[1, T - 2:].set(0)  # some padding

    fwd = jax.jit(functools.partial(robert_lstm_forward, num_heads=NUM_HEADS))
    logits = fwd(params, input_ids, attention_mask)
    jax.block_until_ready(logits)

    assert logits.shape == (B, NUM_CLASSES), logits.shape
    assert bool(jnp.all(jnp.isfinite(logits)))
    print("KERNEL_OK")
</pallas_src>

<mosaic_0001>
module attributes {stable_mosaic.version = 11 : i64} {
  func.func @_layernorm_kernel(%arg0: i32, %arg1: memref<16x32xbf16, #tpu.memory_space<vmem>>, %arg2: memref<1x32xf32, #tpu.memory_space<vmem>>, %arg3: memref<1x32xf32, #tpu.memory_space<vmem>>, %arg4: memref<16x32xbf16, #tpu.memory_space<vmem>>) attributes {dimension_semantics = [#tpu.dimension_semantics<parallel>], iteration_bounds = array<i64: 1>, scalar_prefetch = 0 : i64, scratch_operands = 0 : i64, tpu.core_type = #tpu.core_type<tc>, window_params = [{transform_indices = @transform_0, window_bounds = array<i64: 16, 32>}, {pipeline_mode = #tpu.pipeline_mode<synchronous>, transform_indices = @transform_1, window_bounds = array<i64: 1, 32>}, {pipeline_mode = #tpu.pipeline_mode<synchronous>, transform_indices = @transform_2, window_bounds = array<i64: 1, 32>}, {transform_indices = @transform_3, window_bounds = array<i64: 16, 32>}]} {
    %c0 = arith.constant 0 : index
    %c0_0 = arith.constant 0 : index
    %0 = vector.load %arg1[%c0, %c0_0] : memref<16x32xbf16, #tpu.memory_space<vmem>>, vector<16x32xbf16>
    %1 = arith.extf %0 : vector<16x32xbf16> to vector<16x32xf32>
    %c0_1 = arith.constant 0 : index
    %c0_2 = arith.constant 0 : index
    %2 = vector.load %arg2[%c0_1, %c0_2] : memref<1x32xf32, #tpu.memory_space<vmem>>, vector<1x32xf32>
    %c0_3 = arith.constant 0 : index
    %c0_4 = arith.constant 0 : index
    %3 = vector.load %arg3[%c0_3, %c0_4] : memref<1x32xf32, #tpu.memory_space<vmem>>, vector<1x32xf32>
    %cst = arith.constant dense<0.000000e+00> : vector<16xf32>
    %4 = vector.multi_reduction <add>, %1, %cst [1] : vector<16x32xf32> to vector<16xf32>
    %5 = vector.shape_cast %4 : vector<16xf32> to vector<16x1xf32>
    %cst_5 = arith.constant 3.200000e+01 : f32
    %6 = vector.broadcast %cst_5 : f32 to vector<16x1xf32>
    %7 = arith.divf %5, %6 : vector<16x1xf32>
    %8 = vector.broadcast %7 : vector<16x1xf32> to vector<16x32xf32>
    %9 = arith.subf %1, %8 : vector<16x32xf32>
    %10 = arith.mulf %9, %9 : vector<16x32xf32>
    %cst_6 = arith.constant dense<0.000000e+00> : vector<16xf32>
    %11 = vector.multi_reduction <add>, %10, %cst_6 [1] : vector<16x32xf32> to vector<16xf32>
    %12 = vector.shape_cast %11 : vector<16xf32> to vector<16x1xf32>
    %cst_7 = arith.constant 3.200000e+01 : f32
    %13 = vector.broadcast %cst_7 : f32 to vector<16x1xf32>
    %14 = arith.divf %12, %13 : vector<16x1xf32>
    %15 = vector.broadcast %7 : vector<16x1xf32> to vector<16x32xf32>
    %16 = arith.subf %1, %15 : vector<16x32xf32>
    %cst_8 = arith.constant 9.99999996E-13 : f32
    %17 = vector.broadcast %cst_8 : f32 to vector<16x1xf32>
    %18 = arith.addf %14, %17 : vector<16x1xf32>
    %19 = math.rsqrt %18 : vector<16x1xf32>
    %20 = vector.broadcast %19 : vector<16x1xf32> to vector<16x32xf32>
    %21 = arith.mulf %16, %20 : vector<16x32xf32>
    %22 = vector.broadcast %2 : vector<1x32xf32> to vector<16x32xf32>
    %23 = arith.mulf %21, %22 : vector<16x32xf32>
    %24 = vector.broadcast %3 : vector<1x32xf32> to vector<16x32xf32>
    %25 = arith.addf %23, %24 : vector<16x32xf32>
    %26 = arith.truncf %25 : vector<16x32xf32> to vector<16x32xbf16>
    %c0_9 = arith.constant 0 : index
    %c0_10 = arith.constant 0 : index
    %27 = vector.load %arg4[%c0_9, %c0_10] : memref<16x32xbf16, #tpu.memory_space<vmem>>, vector<16x32xbf16>
    tpu.vector_store %arg4[%c0_9, %c0_10], %26 {strides = array<i32>} : memref<16x32xbf16, #tpu.memory_space<vmem>>, vector<16x32xbf16>,
    return
  }
  func.func @transform_0(%arg0: i32) -> (i32, i32) {
    %c0_i32 = arith.constant 0 : i32
    %c0_i32_0 = arith.constant 0 : i32
    return %arg0, %c0_i32 : i32, i32
  }
  func.func @transform_1(%arg0: i32) -> (i32, i32) {
    %c0_i32 = arith.constant 0 : i32
    %c0_i32_0 = arith.constant 0 : i32
    %c0_i32_1 = arith.constant 0 : i32
    return %c0_i32, %c0_i32_0 : i32, i32
  }
  func.func @transform_2(%arg0: i32) -> (i32, i32) {
    %c0_i32 = arith.constant 0 : i32
    %c0_i32_0 = arith.constant 0 : i32
    %c0_i32_1 = arith.constant 0 : i32
    return %c0_i32, %c0_i32_0 : i32, i32
  }
  func.func @transform_3(%arg0: i32) -> (i32, i32) {
    %c0_i32 = arith.constant 0 : i32
    %c0_i32_0 = arith.constant 0 : i32
    return %arg0, %c0_i32 : i32, i32
  }
}

module attributes {stable_mosaic.version = 11 : i64} {
  func.func @_encoder_layer_kernel(%arg0: i32, %arg1: memref<1x8x32xbf16, #tpu.memory_space<vmem>>, %arg2: memref<1x1x8xf32, #tpu.memory_space<vmem>>, %arg3: memref<32x96xbf16, #tpu.memory_space<vmem>>, %arg4: memref<1x96xf32, #tpu.memory_space<vmem>>, %arg5: memref<32x32xbf16, #tpu.memory_space<vmem>>, %arg6: memref<1x32xf32, #tpu.memory_space<vmem>>, %arg7: memref<1x32xf32, #tpu.memory_space<vmem>>, %arg8: memref<1x32xf32, #tpu.memory_space<vmem>>, %arg9: memref<32x128xbf16, #tpu.memory_space<vmem>>, %arg10: memref<1x128xf32, #tpu.memory_space<vmem>>, %arg11: memref<128x32xbf16, #tpu.memory_space<vmem>>, %arg12: memref<1x32xf32, #tpu.memory_space<vmem>>, %arg13: memref<1x32xf32, #tpu.memory_space<vmem>>, %arg14: memref<1x32xf32, #tpu.memory_space<vmem>>, %arg15: memref<1x8x32xbf16, #tpu.memory_space<vmem>>) attributes {dimension_semantics = [#tpu.dimension_semantics<parallel>], iteration_bounds = array<i64: 2>, scalar_prefetch = 0 : i64, scratch_operands = 0 : i64, tpu.core_type = #tpu.core_type<tc>, window_params = [{transform_indices = @transform_0, window_bounds = array<i64: 1, 8, 32>}, {transform_indices = @transform_1, window_bounds = array<i64: 1, 1, 8>}, {pipeline_mode = #tpu.pipeline_mode<synchronous>, transform_indices = @transform_2, window_bounds = array<i64: 32, 96>}, {pipeline_mode = #tpu.pipeline_mode<synchronous>, transform_indices = @transform_3, window_bounds = array<i64: 1, 96>}, {pipeline_mode = #tpu.pipeline_mode<synchronous>, transform_indices = @transform_4, window_bounds = array<i64: 32, 32>}, {pipeline_mode = #tpu.pipeline_mode<synchronous>, transform_indices = @transform_5, window_bounds = array<i64: 1, 32>}, {pipeline_mode = #tpu.pipeline_mode<synchronous>, transform_indices = @transform_6, window_bounds = array<i64: 1, 32>}, {pipeline_mode = #tpu.pipeline_mode<synchronous>, transform_indices = @transform_7, window_bounds = array<i64: 1, 32>}, {pipeline_mode = #tpu.pipeline_mode<synchronous>, transform_indices = @transform_8, window_bounds = array<i64: 32, 128>}, {pipeline_mode = #tpu.pipeline_mode<synchronous>, transform_indices = @transform_9, window_bounds = array<i64: 1, 128>}, {pipeline_mode = #tpu.pipeline_mode<synchronous>, transform_indices = @transform_10, window_bounds = array<i64: 128, 32>}, {pipeline_mode = #tpu.pipeline_mode<synchronous>, transform_indices = @transform_11, window_bounds = array<i64: 1, 32>}, {pipeline_mode = #tpu.pipeline_mode<synchronous>, transform_indices = @transform_12, window_bounds = array<i64: 1, 32>}, {pipeline_mode = #tpu.pipeline_mode<synchronous>, transform_indices = @transform_13, window_bounds = array<i64: 1, 32>}, {transform_indices = @transform_14, window_bounds = array<i64: 1, 8, 32>}]} {
    %c0 = arith.constant 0 : index
    %c0_0 = arith.constant 0 : index
    %c0_1 = arith.constant 0 : index
    %0 = vector.load %arg1[%c0, %c0_0, %c0_1] : memref<1x8x32xbf16, #tpu.memory_space<vmem>>, vector<1x8x32xbf16>
    %1 = vector.shape_cast %0 : vector<1x8x32xbf16> to vector<8x32xbf16>
    %2 = arith.extf %1 : vector<8x32xbf16> to vector<8x32xf32>
    %c0_2 = arith.constant 0 : index
    %c0_3 = arith.constant 0 : index
    %c0_4 = arith.constant 0 : index
    %3 = vector.load %arg1[%c0_2, %c0_3, %c0_4] : memref<1x8x32xbf16, #tpu.memory_space<vmem>>, vector<1x8x32xbf16>
    %4 = vector.shape_cast %3 : vector<1x8x32xbf16> to vector<8x32xbf16>
    %c0_5 = arith.constant 0 : index
    %c0_6 = arith.constant 0 : index
    %5 = vector.load %arg3[%c0_5, %c0_6] : memref<32x96xbf16, #tpu.memory_space<vmem>>, vector<32x96xbf16>
    %cst = arith.constant dense<0.000000e+00> : vector<8x96xf32>
    %6 = tpu.matmul %4, %5, %cst {dimension_numbers = #tpu.dot_dimension_numbers<[1], [0], [0], [1], [0, 0, 1, 1], [], []>} : vector<8x32xbf16>, vector<32x96xbf16>, vector<8x96xf32> -> vector<8x96xf32>
    %c0_7 = arith.constant 0 : index
    %c0_8 = arith.constant 0 : index
    %7 = vector.load %arg4[%c0_7, %c0_8] : memref<1x96xf32, #tpu.memory_space<vmem>>, vector<1x96xf32>
    %8 = vector.broadcast %7 : vector<1x96xf32> to vector<8x96xf32>
    %9 = arith.addf %6, %8 : vector<8x96xf32>
    %c0_9 = arith.constant 0 : index
    %c0_10 = arith.constant 0 : index
    %c0_11 = arith.constant 0 : index
    %10 = vector.load %arg2[%c0_9, %c0_10, %c0_11] : memref<1x1x8xf32, #tpu.memory_space<vmem>>, vector<1x1x8xf32>
    %11 = vector.shape_cast %10 : vector<1x1x8xf32> to vector<1x8xf32>
    %12 = vector.shape_cast %11 : vector<1x8xf32> to vector<1x8xf32>
    %13 = vector.broadcast %12 : vector<1x8xf32> to vector<8x8xf32>
    %14 = vector.extract_strided_slice %9 {offsets = [0, 0], sizes = [8, 16], strides = [1, 1]} : vector<8x96xf32> to vector<8x16xf32>
    %15 = arith.truncf %14 : vector<8x16xf32> to vector<8x16xbf16>
    %16 = vector.extract_strided_slice %9 {offsets = [0, 32], sizes = [8, 16], strides = [1, 1]} : vector<8x96xf32> to vector<8x16xf32>
    %17 = arith.truncf %16 : vector<8x16xf32> to vector<8x16xbf16>
    %18 = vector.extract_strided_slice %9 {offsets = [0, 64], sizes = [8, 16], strides = [1, 1]} : vector<8x96xf32> to vector<8x16xf32>
    %19 = arith.truncf %18 : vector<8x16xf32> to vector<8x16xbf16>
    %cst_12 = arith.constant dense<0.000000e+00> : vector<8x8xf32>
    %20 = tpu.matmul %15, %17, %cst_12 {dimension_numbers = #tpu.dot_dimension_numbers<[1], [1], [0], [0], [0, 0, 1, 0], [], []>} : vector<8x16xbf16>, vector<8x16xbf16>, vector<8x8xf32> -> vector<8x8xf32>
    %cst_13 = arith.constant 2.500000e-01 : f32
    %21 = vector.broadcast %cst_13 : f32 to vector<8x8xf32>
    %22 = arith.mulf %20, %21 : vector<8x8xf32>
    %23 = arith.addf %22, %13 : vector<8x8xf32>
    %cst_14 = arith.constant dense<0xFF800000> : vector<8xf32>
    %24 = vector.multi_reduction <maximumf>, %23, %cst_14 [1] : vector<8x8xf32> to vector<8xf32>
    %cst_15 = arith.constant 0xFF800000 : f32
    %25 = vector.broadcast %cst_15 : f32 to vector<8xf32>
    %26 = arith.maximumf %25, %24 : vector<8xf32>
    %27 = vector.shape_cast %26 : vector<8xf32> to vector<8x1xf32>
    %28 = vector.broadcast %27 : vector<8x1xf32> to vector<8x8xf32>
    %29 = arith.subf %23, %28 : vector<8x8xf32>
    %30 = math.exp %29 : vector<8x8xf32>
    %cst_16 = arith.constant dense<0.000000e+00> : vector<8xf32>
    %31 = vector.multi_reduction <add>, %30, %cst_16 [1] : vector<8x8xf32> to vector<8xf32>
    %32 = vector.shape_cast %31 : vector<8xf32> to vector<8x1xf32>
    %33 = vector.broadcast %32 : vector<8x1xf32> to vector<8x8xf32>
    %34 = arith.divf %30, %33 : vector<8x8xf32>
    %35 = arith.truncf %34 : vector<8x8xf32> to vector<8x8xbf16>
    %cst_17 = arith.constant dense<0.000000e+00> : vector<8x16xf32>
    %36 = tpu.matmul %35, %19, %cst_17 {dimension_numbers = #tpu.dot_dimension_numbers<[1], [0], [0], [1], [0, 0, 1, 1], [], []>} : vector<8x8xbf16>, vector<8x16xbf16>, vector<8x16xf32> -> vector<8x16xf32>
    %37 = vector.extract_strided_slice %9 {offsets = [0, 16], sizes = [8, 16], strides = [1, 1]} : vector<8x96xf32> to vector<8x16xf32>
    %38 = arith.truncf %37 : vector<8x16xf32> to vector<8x16xbf16>
    %39 = vector.extract_strided_slice %9 {offsets = [0, 48], sizes = [8, 16], strides = [1, 1]} : vector<8x96xf32> to vector<8x16xf32>
    %40 = arith.truncf %39 : vector<8x16xf32> to vector<8x16xbf16>
    %41 = vector.extract_strided_slice %9 {offsets = [0, 80], sizes = [8, 16], strides = [1, 1]} : vector<8x96xf32> to vector<8x16xf32>
    %42 = arith.truncf %41 : vector<8x16xf32> to vector<8x16xbf16>
    %cst_18 = arith.constant dense<0.000000e+00> : vector<8x8xf32>
    %43 = tpu.matmul %38, %40, %cst_18 {dimension_numbers = #tpu.dot_dimension_numbers<[1], [1], [0], [0], [0, 0, 1, 0], [], []>} : vector<8x16xbf16>, vector<8x16xbf16>, vector<8x8xf32> -> vector<8x8xf32>
    %cst_19 = arith.constant 2.500000e-01 : f32
    %44 = vector.broadcast %cst_19 : f32 to vector<8x8xf32>
    %45 = arith.mulf %43, %44 : vector<8x8xf32>
    %46 = arith.addf %45, %13 : vector<8x8xf32>
    %cst_20 = arith.constant dense<0xFF800000> : vector<8xf32>
    %47 = vector.multi_reduction <maximumf>, %46, %cst_20 [1] : vector<8x8xf32> to vector<8xf32>
    %cst_21 = arith.constant 0xFF800000 : f32
    %48 = vector.broadcast %cst_21 : f32 to vector<8xf32>
    %49 = arith.maximumf %48, %47 : vector<8xf32>
    %50 = vector.shape_cast %49 : vector<8xf32> to vector<8x1xf32>
    %51 = vector.broadcast %50 : vector<8x1xf32> to vector<8x8xf32>
    %52 = arith.subf %46, %51 : vector<8x8xf32>
    %53 = math.exp %52 : vector<8x8xf32>
    %cst_22 = arith.constant dense<0.000000e+00> : vector<8xf32>
    %54 = vector.multi_reduction <add>, %53, %cst_22 [1] : vector<8x8xf32> to vector<8xf32>
    %55 = vector.shape_cast %54 : vector<8xf32> to vector<8x1xf32>
    %56 = vector.broadcast %55 : vector<8x1xf32> to vector<8x8xf32>
    %57 = arith.divf %53, %56 : vector<8x8xf32>
    %58 = arith.truncf %57 : vector<8x8xf32> to vector<8x8xbf16>
    %cst_23 = arith.constant dense<0.000000e+00> : vector<8x16xf32>
    %59 = tpu.matmul %58, %42, %cst_23 {dimension_numbers = #tpu.dot_dimension_numbers<[1], [0], [0], [1], [0, 0, 1, 1], [], []>} : vector<8x8xbf16>, vector<8x16xbf16>, vector<8x16xf32> -> vector<8x16xf32>
    %60 = tpu.concatenate %36, %59 in 1 : vector<8x16xf32>, vector<8x16xf32> -> vector<8x32xf32>
    %61 = arith.truncf %60 : vector<8x32xf32> to vector<8x32xbf16>
    %c0_24 = arith.constant 0 : index
    %c0_25 = arith.constant 0 : index
    %62 = vector.load %arg5[%c0_24, %c0_25] : memref<32x32xbf16, #tpu.memory_space<vmem>>, vector<32x32xbf16>
    %cst_26 = arith.constant dense<0.000000e+00> : vector<8x32xf32>
    %63 = tpu.matmul %61, %62, %cst_26 {dimension_numbers = #tpu.dot_dimension_numbers<[1], [0], [0], [1], [0, 0, 1, 1], [], []>} : vector<8x32xbf16>, vector<32x32xbf16>, vector<8x32xf32> -> vector<8x32xf32>
    %64 = arith.addf %2, %63 : vector<8x32xf32>
    %c0_27 = arith.constant 0 : index
    %c0_28 = arith.constant 0 : index
    %65 = vector.load %arg6[%c0_27, %c0_28] : memref<1x32xf32, #tpu.memory_space<vmem>>, vector<1x32xf32>
    %66 = vector.broadcast %65 : vector<1x32xf32> to vector<8x32xf32>
    %67 = arith.addf %64, %66 : vector<8x32xf32>
    %c0_29 = arith.constant 0 : index
    %c0_30 = arith.constant 0 : index
    %68 = vector.load %arg7[%c0_29, %c0_30] : memref<1x32xf32, #tpu.memory_space<vmem>>, vector<1x32xf32>
    %c0_31 = arith.constant 0 : index
    %c0_32 = arith.constant 0 : index
    %69 = vector.load %arg8[%c0_31, %c0_32] : memref<1x32xf32, #tpu.memory_space<vmem>>, vector<1x32xf32>
    %cst_33 = arith.constant dense<0.000000e+00> : vector<8xf32>
    %70 = vector.multi_reduction <add>, %67, %cst_33 [1] : vector<8x32xf32> to vector<8xf32>
    %71 = vector.shape_cast %70 : vector<8xf32> to vector<8x1xf32>
    %cst_34 = arith.constant 3.200000e+01 : f32
    %72 = vector.broadcast %cst_34 : f32 to vector<8x1xf32>
    %73 = arith.divf %71, %72 : vector<8x1xf32>
    %74 = vector.broadcast %73 : vector<8x1xf32> to vector<8x32xf32>
    %75 = arith.subf %67, %74 : vector<8x32xf32>
    %76 = arith.mulf %75, %75 : vector<8x32xf32>
    %cst_35 = arith.constant dense<0.000000e+00> : vector<8xf32>
    %77 = vector.multi_reduction <add>, %76, %cst_35 [1] : vector<8x32xf32> to vector<8xf32>
    %78 = vector.shape_cast %77 : vector<8xf32> to vector<8x1xf32>
    %cst_36 = arith.constant 3.200000e+01 : f32
    %79 = vector.broadcast %cst_36 : f32 to vector<8x1xf32>
    %80 = arith.divf %78, %79 : vector<8x1xf32>
    %81 = vector.broadcast %73 : vector<8x1xf32> to vector<8x32xf32>
    %82 = arith.subf %67, %81 : vector<8x32xf32>
    %cst_37 = arith.constant 9.99999996E-13 : f32
    %83 = vector.broadcast %cst_37 : f32 to vector<8x1xf32>
    %84 = arith.addf %80, %83 : vector<8x1xf32>
    %85 = math.rsqrt %84 : vector<8x1xf32>
    %86 = vector.broadcast %85 : vector<8x1xf32> to vector<8x32xf32>
    %87 = arith.mulf %82, %86 : vector<8x32xf32>
    %88 = vector.broadcast %68 : vector<1x32xf32> to vector<8x32xf32>
    %89 = arith.mulf %87, %88 : vector<8x32xf32>
    %90 = vector.broadcast %69 : vector<1x32xf32> to vector<8x32xf32>
    %91 = arith.addf %89, %90 : vector<8x32xf32>
    %92 = arith.truncf %91 : vector<8x32xf32> to vector<8x32xbf16>
    %c0_38 = arith.constant 0 : index
    %c0_39 = arith.constant 0 : index
    %93 = vector.load %arg9[%c0_38, %c0_39] : memref<32x128xbf16, #tpu.memory_space<vmem>>, vector<32x128xbf16>
    %cst_40 = arith.constant dense<0.000000e+00> : vector<8x128xf32>
    %94 = tpu.matmul %92, %93, %cst_40 {dimension_numbers = #tpu.dot_dimension_numbers<[1], [0], [0], [1], [0, 0, 1, 1], [], []>} : vector<8x32xbf16>, vector<32x128xbf16>, vector<8x128xf32> -> vector<8x128xf32>
    %c0_41 = arith.constant 0 : index
    %c0_42 = arith.constant 0 : index
    %95 = vector.load %arg10[%c0_41, %c0_42] : memref<1x128xf32, #tpu.memory_space<vmem>>, vector<1x128xf32>
    %96 = vector.broadcast %95 : vector<1x128xf32> to vector<8x128xf32>
    %97 = arith.addf %94, %96 : vector<8x128xf32>
    %98 = arith.mulf %97, %97 : vector<8x128xf32>
    %99 = arith.mulf %97, %98 : vector<8x128xf32>
    %cst_43 = arith.constant 4.471500e-02 : f32
    %100 = vector.broadcast %cst_43 : f32 to vector<8x128xf32>
    %101 = arith.mulf %100, %99 : vector<8x128xf32>
    %102 = arith.addf %97, %101 : vector<8x128xf32>
    %cst_44 = arith.constant 0.797884583 : f32
    %103 = vector.broadcast %cst_44 : f32 to vector<8x128xf32>
    %104 = arith.mulf %103, %102 : vector<8x128xf32>
    %105 = math.tanh %104 : vector<8x128xf32>
    %cst_45 = arith.constant 1.000000e+00 : f32
    %106 = vector.broadcast %cst_45 : f32 to vector<8x128xf32>
    %107 = arith.addf %106, %105 : vector<8x128xf32>
    %cst_46 = arith.constant 5.000000e-01 : f32
    %108 = vector.broadcast %cst_46 : f32 to vector<8x128xf32>
    %109 = arith.mulf %108, %107 : vector<8x128xf32>
    %110 = arith.mulf %97, %109 : vector<8x128xf32>
    %111 = arith.truncf %110 : vector<8x128xf32> to vector<8x128xbf16>
    %c0_47 = arith.constant 0 : index
    %c0_48 = arith.constant 0 : index
    %112 = vector.load %arg11[%c0_47, %c0_48] : memref<128x32xbf16, #tpu.memory_space<vmem>>, vector<128x32xbf16>
    %cst_49 = arith.constant dense<0.000000e+00> : vector<8x32xf32>
    %113 = tpu.matmul %111, %112, %cst_49 {dimension_numbers = #tpu.dot_dimension_numbers<[1], [0], [0], [1], [0, 0, 1, 1], [], []>} : vector<8x128xbf16>, vector<128x32xbf16>, vector<8x32xf32> -> vector<8x32xf32>
    %c0_50 = arith.constant 0 : index
    %c0_51 = arith.constant 0 : index
    %114 = vector.load %arg12[%c0_50, %c0_51] : memref<1x32xf32, #tpu.memory_space<vmem>>, vector<1x32xf32>
    %115 = vector.broadcast %114 : vector<1x32xf32> to vector<8x32xf32>
    %116 = arith.addf %113, %115 : vector<8x32xf32>
    %117 = arith.addf %91, %116 : vector<8x32xf32>
    %c0_52 = arith.constant 0 : index
    %c0_53 = arith.constant 0 : index
    %118 = vector.load %arg13[%c0_52, %c0_53] : memref<1x32xf32, #tpu.memory_space<vmem>>, vector<1x32xf32>
    %c0_54 = arith.constant 0 : index
    %c0_55 = arith.constant 0 : index
    %119 = vector.load %arg14[%c0_54, %c0_55] : memref<1x32xf32, #tpu.memory_space<vmem>>, vector<1x32xf32>
    %cst_56 = arith.constant dense<0.000000e+00> : vector<8xf32>
    %120 = vector.multi_reduction <add>, %117, %cst_56 [1] : vector<8x32xf32> to vector<8xf32>
    %121 = vector.shape_cast %120 : vector<8xf32> to vector<8x1xf32>
    %cst_57 = arith.constant 3.200000e+01 : f32
    %122 = vector.broadcast %cst_57 : f32 to vector<8x1xf32>
    %123 = arith.divf %121, %122 : vector<8x1xf32>
    %124 = vector.broadcast %123 : vector<8x1xf32> to vector<8x32xf32>
    %125 = arith.subf %117, %124 : vector<8x32xf32>
    %126 = arith.mulf %125, %125 : vector<8x32xf32>
    %cst_58 = arith.constant dense<0.000000e+00> : vector<8xf32>
    %127 = vector.multi_reduction <add>, %126, %cst_58 [1] : vector<8x32xf32> to vector<8xf32>
    %128 = vector.shape_cast %127 : vector<8xf32> to vector<8x1xf32>
    %cst_59 = arith.constant 3.200000e+01 : f32
    %129 = vector.broadcast %cst_59 : f32 to vector<8x1xf32>
    %130 = arith.divf %128, %129 : vector<8x1xf32>
    %131 = vector.broadcast %123 : vector<8x1xf32> to vector<8x32xf32>
    %132 = arith.subf %117, %131 : vector<8x32xf32>
    %cst_60 = arith.constant 9.99999996E-13 : f32
    %133 = vector.broadcast %cst_60 : f32 to vector<8x1xf32>
    %134 = arith.addf %130, %133 : vector<8x1xf32>
    %135 = math.rsqrt %134 : vector<8x1xf32>
    %136 = vector.broadcast %135 : vector<8x1xf32> to vector<8x32xf32>
    %137 = arith.mulf %132, %136 : vector<8x32xf32>
    %138 = vector.broadcast %118 : vector<1x32xf32> to vector<8x32xf32>
    %139 = arith.mulf %137, %138 : vector<8x32xf32>
    %140 = vector.broadcast %119 : vector<1x32xf32> to vector<8x32xf32>
    %141 = arith.addf %139, %140 : vector<8x32xf32>
    %142 = arith.truncf %141 : vector<8x32xf32> to vector<8x32xbf16>
    %c0_61 = arith.constant 0 : index
    %c0_62 = arith.constant 0 : index
    %c0_63 = arith.constant 0 : index
    %143 = vector.load %arg15[%c0_61, %c0_62, %c0_63] : memref<1x8x32xbf16, #tpu.memory_space<vmem>>, vector<1x8x32xbf16>
    %144 = vector.shape_cast %143 : vector<1x8x32xbf16> to vector<8x32xbf16>
    %145 = vector.shape_cast %142 : vector<8x32xbf16> to vector<1x8x32xbf16>
    tpu.vector_store %arg15[%c0_61, %c0_62, %c0_63], %145 {strides = array<i32>} : memref<1x8x32xbf16, #tpu.memory_space<vmem>>, vector<1x8x32xbf16>,
    return
  }
  func.func @transform_0(%arg0: i32) -> (i32, i32, i32) {
    %c0_i32 = arith.constant 0 : i32
    %c0_i32_0 = arith.constant 0 : i32
    %c0_i32_1 = arith.constant 0 : i32
    return %arg0, %c0_i32, %c0_i32_0 : i32, i32, i32
  }
  func.func @transform_1(%arg0: i32) -> (i32, i32, i32) {
    %c0_i32 = arith.constant 0 : i32
    %c0_i32_0 = arith.constant 0 : i32
    %c0_i32_1 = arith.constant 0 : i32
    return %arg0, %c0_i32, %c0_i32_0 : i32, i32, i32
  }
  func.func @transform_2(%arg0: i32) -> (i32, i32) {
    %c0_i32 = arith.constant 0 : i32
    %c0_i32_0 = arith.constant 0 : i32
    %c0_i32_1 = arith.constant 0 : i32
    return %c0_i32, %c0_i32_0 : i32, i32
  }
  func.func @transform_3(%arg0: i32) -> (i32, i32) {
    %c0_i32 = arith.constant 0 : i32
    %c0_i32_0 = arith.constant 0 : i32
    %c0_i32_1 = arith.constant 0 : i32
    return %c0_i32, %c0_i32_0 : i32, i32
  }
  func.func @transform_4(%arg0: i32) -> (i32, i32) {
    %c0_i32 = arith.constant 0 : i32
    %c0_i32_0 = arith.constant 0 : i32
    %c0_i32_1 = arith.constant 0 : i32
    return %c0_i32, %c0_i32_0 : i32, i32
  }
  func.func @transform_5(%arg0: i32) -> (i32, i32) {
    %c0_i32 = arith.constant 0 : i32
    %c0_i32_0 = arith.constant 0 : i32
    %c0_i32_1 = arith.constant 0 : i32
    return %c0_i32, %c0_i32_0 : i32, i32
  }
  func.func @transform_6(%arg0: i32) -> (i32, i32) {
    %c0_i32 = arith.constant 0 : i32
    %c0_i32_0 = arith.constant 0 : i32
    %c0_i32_1 = arith.constant 0 : i32
    return %c0_i32, %c0_i32_0 : i32, i32
  }
  func.func @transform_7(%arg0: i32) -> (i32, i32) {
    %c0_i32 = arith.constant 0 : i32
    %c0_i32_0 = arith.constant 0 : i32
    %c0_i32_1 = arith.constant 0 : i32
    return %c0_i32, %c0_i32_0 : i32, i32
  }
  func.func @transform_8(%arg0: i32) -> (i32, i32) {
    %c0_i32 = arith.constant 0 : i32
    %c0_i32_0 = arith.constant 0 : i32
    %c0_i32_1 = arith.constant 0 : i32
    return %c0_i32, %c0_i32_0 : i32, i32
  }
  func.func @transform_9(%arg0: i32) -> (i32, i32) {
    %c0_i32 = arith.constant 0 : i32
    %c0_i32_0 = arith.constant 0 : i32
    %c0_i32_1 = arith.constant 0 : i32
    return %c0_i32, %c0_i32_0 : i32, i32
  }
  func.func @transform_10(%arg0: i32) -> (i32, i32) {
    %c0_i32 = arith.constant 0 : i32
    %c0_i32_0 = arith.constant 0 : i32
    %c0_i32_1 = arith.constant 0 : i32
    return %c0_i32, %c0_i32_0 : i32, i32
  }
  func.func @transform_11(%arg0: i32) -> (i32, i32) {
    %c0_i32 = arith.constant 0 : i32
    %c0_i32_0 = arith.constant 0 : i32
    %c0_i32_1 = arith.constant 0 : i32
    return %c0_i32, %c0_i32_0 : i32, i32
  }
  func.func @transform_12(%arg0: i32) -> (i32, i32) {
    %c0_i32 = arith.constant 0 : i32
    %c0_i32_0 = arith.constant 0 : i32
    %c0_i32_1 = arith.constant 0 : i32
    return %c0_i32, %c0_i32_0 : i32, i32
  }
  func.func @transform_13(%arg0: i32) -> (i32, i32) {
    %c0_i32 = arith.constant 0 : i32
    %c0_i32_0 = arith.constant 0 : i32
    %c0_i32_1 = arith.constant 0 : i32
    return %c0_i32, %c0_i32_0 : i32, i32
  }
  func.func @transform_14(%arg0: i32) -> (i32, i32, i32) {
    %c0_i32 = arith.constant 0 : i32
    %c0_i32_0 = arith.constant 0 : i32
    %c0_i32_1 = arith.constant 0 : i32
    return %arg0, %c0_i32, %c0_i32_0 : i32, i32, i32
  }
}

module attributes {stable_mosaic.version = 11 : i64} {
  func.func @_linear_kernel(%arg0: i32, %arg1: memref<16x32xbf16, #tpu.memory_space<vmem>>, %arg2: memref<32x256xbf16, #tpu.memory_space<vmem>>, %arg3: memref<1x256xf32, #tpu.memory_space<vmem>>, %arg4: memref<16x256xbf16, #tpu.memory_space<vmem>>) attributes {dimension_semantics = [#tpu.dimension_semantics<parallel>], iteration_bounds = array<i64: 1>, scalar_prefetch = 0 : i64, scratch_operands = 0 : i64, tpu.core_type = #tpu.core_type<tc>, window_params = [{transform_indices = @transform_0, window_bounds = array<i64: 16, 32>}, {pipeline_mode = #tpu.pipeline_mode<synchronous>, transform_indices = @transform_1, window_bounds = array<i64: 32, 256>}, {pipeline_mode = #tpu.pipeline_mode<synchronous>, transform_indices = @transform_2, window_bounds = array<i64: 1, 256>}, {transform_indices = @transform_3, window_bounds = array<i64: 16, 256>}]} {
    %c0 = arith.constant 0 : index
    %c0_0 = arith.constant 0 : index
    %0 = vector.load %arg1[%c0, %c0_0] : memref<16x32xbf16, #tpu.memory_space<vmem>>, vector<16x32xbf16>
    %c0_1 = arith.constant 0 : index
    %c0_2 = arith.constant 0 : index
    %1 = vector.load %arg2[%c0_1, %c0_2] : memref<32x256xbf16, #tpu.memory_space<vmem>>, vector<32x256xbf16>
    %cst = arith.constant dense<0.000000e+00> : vector<16x256xf32>
    %2 = tpu.matmul %0, %1, %cst {dimension_numbers = #tpu.dot_dimension_numbers<[1], [0], [0], [1], [0, 0, 1, 1], [], []>} : vector<16x32xbf16>, vector<32x256xbf16>, vector<16x256xf32> -> vector<16x256xf32>
    %c0_3 = arith.constant 0 : index
    %c0_4 = arith.constant 0 : index
    %3 = vector.load %arg3[%c0_3, %c0_4] : memref<1x256xf32, #tpu.memory_space<vmem>>, vector<1x256xf32>
    %4 = vector.broadcast %3 : vector<1x256xf32> to vector<16x256xf32>
    %5 = arith.addf %2, %4 : vector<16x256xf32>
    %6 = arith.truncf %5 : vector<16x256xf32> to vector<16x256xbf16>
    %c0_5 = arith.constant 0 : index
    %c0_6 = arith.constant 0 : index
    %7 = vector.load %arg4[%c0_5, %c0_6] : memref<16x256xbf16, #tpu.memory_space<vmem>>, vector<16x256xbf16>
    tpu.vector_store %arg4[%c0_5, %c0_6], %6 {strides = array<i32>} : memref<16x256xbf16, #tpu.memory_space<vmem>>, vector<16x256xbf16>,
    return
  }
  func.func @transform_0(%arg0: i32) -> (i32, i32) {
    %c0_i32 = arith.constant 0 : i32
    %c0_i32_0 = arith.constant 0 : i32
    return %arg0, %c0_i32 : i32, i32
  }
  func.func @transform_1(%arg0: i32) -> (i32, i32) {
    %c0_i32 = arith.constant 0 : i32
    %c0_i32_0 = arith.constant 0 : i32
    %c0_i32_1 = arith.constant 0 : i32
    return %c0_i32, %c0_i32_0 : i32, i32
  }
  func.func @transform_2(%arg0: i32) -> (i32, i32) {
    %c0_i32 = arith.constant 0 : i32
    %c0_i32_0 = arith.constant 0 : i32
    %c0_i32_1 = arith.constant 0 : i32
    return %c0_i32, %c0_i32_0 : i32, i32
  }
  func.func @transform_3(%arg0: i32) -> (i32, i32) {
    %c0_i32 = arith.constant 0 : i32
    %c0_i32_0 = arith.constant 0 : i32
    return %arg0, %c0_i32 : i32, i32
  }
}

module attributes {stable_mosaic.version = 11 : i64} {
  func.func @_bilstm_kernel(%arg0: memref<8x2x256xbf16, #tpu.memory_space<vmem>>, %arg1: memref<32x128xbf16, #tpu.memory_space<vmem>>, %arg2: memref<32x128xbf16, #tpu.memory_space<vmem>>, %arg3: memref<8x2x64xbf16, #tpu.memory_space<vmem>>, %arg4: memref<2x32xf32, #tpu.memory_space<vmem>>, %arg5: memref<2x32xf32, #tpu.memory_space<vmem>>, %arg6: memref<2x32xf32, #tpu.memory_space<vmem>>, %arg7: memref<2x32xf32, #tpu.memory_space<vmem>>) attributes {dimension_semantics = [], scalar_prefetch = 0 : i64, scratch_operands = 4 : i64, tpu.core_type = #tpu.core_type<tc>} {
    %cst = arith.constant 0.000000e+00 : f32
    %0 = vector.broadcast %cst : f32 to vector<2x32xf32>
    %c0 = arith.constant 0 : index
    %c0_0 = arith.constant 0 : index
    %1 = vector.load %arg4[%c0, %c0_0] : memref<2x32xf32, #tpu.memory_space<vmem>>, vector<2x32xf32>
    tpu.vector_store %arg4[%c0, %c0_0], %0 {strides = array<i32>} : memref<2x32xf32, #tpu.memory_space<vmem>>, vector<2x32xf32>,
    %cst_1 = arith.constant 0.000000e+00 : f32
    %2 = vector.broadcast %cst_1 : f32 to vector<2x32xf32>
    %c0_2 = arith.constant 0 : index
    %c0_3 = arith.constant 0 : index
    %3 = vector.load %arg5[%c0_2, %c0_3] : memref<2x32xf32, #tpu.memory_space<vmem>>, vector<2x32xf32>
    tpu.vector_store %arg5[%c0_2, %c0_3], %2 {strides = array<i32>} : memref<2x32xf32, #tpu.memory_space<vmem>>, vector<2x32xf32>,
    %cst_4 = arith.constant 0.000000e+00 : f32
    %4 = vector.broadcast %cst_4 : f32 to vector<2x32xf32>
    %c0_5 = arith.constant 0 : index
    %c0_6 = arith.constant 0 : index
    %5 = vector.load %arg6[%c0_5, %c0_6] : memref<2x32xf32, #tpu.memory_space<vmem>>, vector<2x32xf32>
    tpu.vector_store %arg6[%c0_5, %c0_6], %4 {strides = array<i32>} : memref<2x32xf32, #tpu.memory_space<vmem>>, vector<2x32xf32>,
    %cst_7 = arith.constant 0.000000e+00 : f32
    %6 = vector.broadcast %cst_7 : f32 to vector<2x32xf32>
    %c0_8 = arith.constant 0 : index
    %c0_9 = arith.constant 0 : index
    %7 = vector.load %arg7[%c0_8, %c0_9] : memref<2x32xf32, #tpu.memory_space<vmem>>, vector<2x32xf32>
    tpu.vector_store %arg7[%c0_8, %c0_9], %6 {strides = array<i32>} : memref<2x32xf32, #tpu.memory_space<vmem>>, vector<2x32xf32>,
    %c0_10 = arith.constant 0 : index
    %c0_11 = arith.constant 0 : index
    %8 = vector.load %arg1[%c0_10, %c0_11] : memref<32x128xbf16, #tpu.memory_space<vmem>>, vector<32x128xbf16>
    %c0_12 = arith.constant 0 : index
    %c0_13 = arith.constant 0 : index
    %9 = vector.load %arg2[%c0_12, %c0_13] : memref<32x128xbf16, #tpu.memory_space<vmem>>, vector<32x128xbf16>
    %c0_i32 = arith.constant 0 : i32
    %10 = arith.index_cast %c0_i32 : i32 to index
    %c0_14 = arith.constant 0 : index
    %c0_15 = arith.constant 0 : index
    %11 = vector.load %arg0[%10, %c0_14, %c0_15] : memref<8x2x256xbf16, #tpu.memory_space<vmem>>, vector<1x2x256xbf16>
    %12 = vector.shape_cast %11 : vector<1x2x256xbf16> to vector<2x256xbf16>
    %13 = arith.extf %12 : vector<2x256xbf16> to vector<2x256xf32>
    %14 = vector.extract_strided_slice %13 {offsets = [0, 0], sizes = [2, 128], strides = [1, 1]} : vector<2x256xf32> to vector<2x128xf32>
    %c0_16 = arith.constant 0 : index
    %c0_17 = arith.constant 0 : index
    %15 = vector.load %arg4[%c0_16, %c0_17] : memref<2x32xf32, #tpu.memory_space<vmem>>, vector<2x32xf32>
    %16 = arith.truncf %15 : vector<2x32xf32> to vector<2x32xbf16>
    %cst_18 = arith.constant dense<0.000000e+00> : vector<2x128xf32>
    %17 = tpu.matmul %16, %8, %cst_18 {dimension_numbers = #tpu.dot_dimension_numbers<[1], [0], [0], [1], [0, 0, 1, 1], [], []>} : vector<2x32xbf16>, vector<32x128xbf16>, vector<2x128xf32> -> vector<2x128xf32>
    %18 = arith.addf %14, %17 : vector<2x128xf32>
    %c0_19 = arith.constant 0 : index
    %c0_20 = arith.constant 0 : index
    %19 = vector.load %arg5[%c0_19, %c0_20] : memref<2x32xf32, #tpu.memory_space<vmem>>, vector<2x32xf32>
    %20 = vector.extract_strided_slice %18 {offsets = [0, 0], sizes = [2, 32], strides = [1, 1]} : vector<2x128xf32> to vector<2x32xf32>
    %21 = arith.negf %20 : vector<2x32xf32>
    %22 = math.exp %21 : vector<2x32xf32>
    %cst_21 = arith.constant 1.000000e+00 : f32
    %23 = vector.broadcast %cst_21 : f32 to vector<2x32xf32>
    %24 = arith.addf %23, %22 : vector<2x32xf32>
    %25 = arith.divf %23, %24 : vector<2x32xf32>
    %26 = vector.extract_strided_slice %18 {offsets = [0, 32], sizes = [2, 32], strides = [1, 1]} : vector<2x128xf32> to vector<2x32xf32>
    %27 = arith.negf %26 : vector<2x32xf32>
    %28 = math.exp %27 : vector<2x32xf32>
    %cst_22 = arith.constant 1.000000e+00 : f32
    %29 = vector.broadcast %cst_22 : f32 to vector<2x32xf32>
    %30 = arith.addf %29, %28 : vector<2x32xf32>
    %31 = arith.divf %29, %30 : vector<2x32xf32>
    %32 = vector.extract_strided_slice %18 {offsets = [0, 64], sizes = [2, 32], strides = [1, 1]} : vector<2x128xf32> to vector<2x32xf32>
    %33 = math.tanh %32 : vector<2x32xf32>
    %34 = vector.extract_strided_slice %18 {offsets = [0, 96], sizes = [2, 32], strides = [1, 1]} : vector<2x128xf32> to vector<2x32xf32>
    %35 = arith.negf %34 : vector<2x32xf32>
    %36 = math.exp %35 : vector<2x32xf32>
    %cst_23 = arith.constant 1.000000e+00 : f32
    %37 = vector.broadcast %cst_23 : f32 to vector<2x32xf32>
    %38 = arith.addf %37, %36 : vector<2x32xf32>
    %39 = arith.divf %37, %38 : vector<2x32xf32>
    %40 = arith.mulf %31, %19 : vector<2x32xf32>
    %41 = arith.mulf %25, %33 : vector<2x32xf32>
    %42 = arith.addf %40, %41 : vector<2x32xf32>
    %43 = math.tanh %42 : vector<2x32xf32>
    %44 = arith.mulf %39, %43 : vector<2x32xf32>
    %c0_24 = arith.constant 0 : index
    %c0_25 = arith.constant 0 : index
    %45 = vector.load %arg4[%c0_24, %c0_25] : memref<2x32xf32, #tpu.memory_space<vmem>>, vector<2x32xf32>
    tpu.vector_store %arg4[%c0_24, %c0_25], %44 {strides = array<i32>} : memref<2x32xf32, #tpu.memory_space<vmem>>, vector<2x32xf32>,
    %c0_26 = arith.constant 0 : index
    %c0_27 = arith.constant 0 : index
    %46 = vector.load %arg5[%c0_26, %c0_27] : memref<2x32xf32, #tpu.memory_space<vmem>>, vector<2x32xf32>
    tpu.vector_store %arg5[%c0_26, %c0_27], %42 {strides = array<i32>} : memref<2x32xf32, #tpu.memory_space<vmem>>, vector<2x32xf32>,
    %47 = arith.truncf %44 : vector<2x32xf32> to vector<2x32xbf16>
    %48 = arith.index_cast %c0_i32 : i32 to index
    %c0_28 = arith.constant 0 : index
    %c0_29 = arith.constant 0 : index
    %49 = vector.load %arg3[%48, %c0_28, %c0_29] : memref<8x2x64xbf16, #tpu.memory_space<vmem>>, vector<1x2x32xbf16>
    %50 = vector.shape_cast %49 : vector<1x2x32xbf16> to vector<2x32xbf16>
    %51 = vector.shape_cast %47 : vector<2x32xbf16> to vector<1x2x32xbf16>
    tpu.vector_store %arg3[%48, %c0_28, %c0_29], %51 {strides = array<i32>} : memref<8x2x64xbf16, #tpu.memory_space<vmem>>, vector<1x2x32xbf16>,
    %c7_i32 = arith.constant 7 : i32
    %52 = arith.subi %c7_i32, %c0_i32 : i32
    %53 = arith.index_cast %52 : i32 to index
    %c0_30 = arith.constant 0 : index
    %c0_31 = arith.constant 0 : index
    %54 = vector.load %arg0[%53, %c0_30, %c0_31] : memref<8x2x256xbf16, #tpu.memory_space<vmem>>, vector<1x2x256xbf16>
    %55 = vector.shape_cast %54 : vector<1x2x256xbf16> to vector<2x256xbf16>
    %56 = arith.extf %55 : vector<2x256xbf16> to vector<2x256xf32>
    %57 = vector.extract_strided_slice %56 {offsets = [0, 128], sizes = [2, 128], strides = [1, 1]} : vector<2x256xf32> to vector<2x128xf32>
    %c0_32 = arith.constant 0 : index
    %c0_33 = arith.constant 0 : index
    %58 = vector.load %arg6[%c0_32, %c0_33] : memref<2x32xf32, #tpu.memory_space<vmem>>, vector<2x32xf32>
    %59 = arith.truncf %58 : vector<2x32xf32> to vector<2x32xbf16>
    %cst_34 = arith.constant dense<0.000000e+00> : vector<2x128xf32>
    %60 = tpu.matmul %59, %9, %cst_34 {dimension_numbers = #tpu.dot_dimension_numbers<[1], [0], [0], [1], [0, 0, 1, 1], [], []>} : vector<2x32xbf16>, vector<32x128xbf16>, vector<2x128xf32> -> vector<2x128xf32>
    %61 = arith.addf %57, %60 : vector<2x128xf32>
    %c0_35 = arith.constant 0 : index
    %c0_36 = arith.constant 0 : index
    %62 = vector.load %arg7[%c0_35, %c0_36] : memref<2x32xf32, #tpu.memory_space<vmem>>, vector<2x32xf32>
    %63 = vector.extract_strided_slice %61 {offsets = [0, 0], sizes = [2, 32], strides = [1, 1]} : vector<2x128xf32> to vector<2x32xf32>
    %64 = arith.negf %63 : vector<2x32xf32>
    %65 = math.exp %64 : vector<2x32xf32>
    %cst_37 = arith.constant 1.000000e+00 : f32
    %66 = vector.broadcast %cst_37 : f32 to vector<2x32xf32>
    %67 = arith.addf %66, %65 : vector<2x32xf32>
    %68 = arith.divf %66, %67 : vector<2x32xf32>
    %69 = vector.extract_strided_slice %61 {offsets = [0, 32], sizes = [2, 32], strides = [1, 1]} : vector<2x128xf32> to vector<2x32xf32>
    %70 = arith.negf %69 : vector<2x32xf32>
    %71 = math.exp %70 : vector<2x32xf32>
    %cst_38 = arith.constant 1.000000e+00 : f32
    %72 = vector.broadcast %cst_38 : f32 to vector<2x32xf32>
    %73 = arith.addf %72, %71 : vector<2x32xf32>
    %74 = arith.divf %72, %73 : vector<2x32xf32>
    %75 = vector.extract_strided_slice %61 {offsets = [0, 64], sizes = [2, 32], strides = [1, 1]} : vector<2x128xf32> to vector<2x32xf32>
    %76 = math.tanh %75 : vector<2x32xf32>
    %77 = vector.extract_strided_slice %61 {offsets = [0, 96], sizes = [2, 32], strides = [1, 1]} : vector<2x128xf32> to vector<2x32xf32>
    %78 = arith.negf %77 : vector<2x32xf32>
    %79 = math.exp %78 : vector<2x32xf32>
    %cst_39 = arith.constant 1.000000e+00 : f32
    %80 = vector.broadcast %cst_39 : f32 to vector<2x32xf32>
    %81 = arith.addf %80, %79 : vector<2x32xf32>
    %82 = arith.divf %80, %81 : vector<2x32xf32>
    %83 = arith.mulf %74, %62 : vector<2x32xf32>
    %84 = arith.mulf %68, %76 : vector<2x32xf32>
    %85 = arith.addf %83, %84 : vector<2x32xf32>
    %86 = math.tanh %85 : vector<2x32xf32>
    %87 = arith.mulf %82, %86 : vector<2x32xf32>
    %c0_40 = arith.constant 0 : index
    %c0_41 = arith.constant 0 : index
    %88 = vector.load %arg6[%c0_40, %c0_41] : memref<2x32xf32, #tpu.memory_space<vmem>>, vector<2x32xf32>
    tpu.vector_store %arg6[%c0_40, %c0_41], %87 {strides = array<i32>} : memref<2x32xf32, #tpu.memory_space<vmem>>, vector<2x32xf32>,
    %c0_42 = arith.constant 0 : index
    %c0_43 = arith.constant 0 : index
    %89 = vector.load %arg7[%c0_42, %c0_43] : memref<2x32xf32, #tpu.memory_space<vmem>>, vector<2x32xf32>
    tpu.vector_store %arg7[%c0_42, %c0_43], %85 {strides = array<i32>} : memref<2x32xf32, #tpu.memory_space<vmem>>, vector<2x32xf32>,
    %90 = arith.truncf %87 : vector<2x32xf32> to vector<2x32xbf16>
    %91 = arith.index_cast %52 : i32 to index
    %c0_44 = arith.constant 0 : index
    %c32 = arith.constant 32 : index
    %92 = vector.load %arg3[%91, %c0_44, %c32] : memref<8x2x64xbf16, #tpu.memory_space<vmem>>, vector<1x2x32xbf16>
    %93 = vector.shape_cast %92 : vector<1x2x32xbf16> to vector<2x32xbf16>
    %94 = vector.shape_cast %90 : vector<2x32xbf16> to vector<1x2x32xbf16>
    tpu.vector_store %arg3[%91, %c0_44, %c32], %94 {strides = array<i32>} : memref<8x2x64xbf16, #tpu.memory_space<vmem>>, vector<1x2x32xbf16>,
    %c1_i32 = arith.constant 1 : i32
    %95 = arith.index_cast %c1_i32 : i32 to index
    %c0_45 = arith.constant 0 : index
    %c0_46 = arith.constant 0 : index
    %96 = vector.load %arg0[%95, %c0_45, %c0_46] : memref<8x2x256xbf16, #tpu.memory_space<vmem>>, vector<1x2x256xbf16>
    %97 = vector.shape_cast %96 : vector<1x2x256xbf16> to vector<2x256xbf16>
    %98 = arith.extf %97 : vector<2x256xbf16> to vector<2x256xf32>
    %99 = vector.extract_strided_slice %98 {offsets = [0, 0], sizes = [2, 128], strides = [1, 1]} : vector<2x256xf32> to vector<2x128xf32>
    %c0_47 = arith.constant 0 : index
    %c0_48 = arith.constant 0 : index
    %100 = vector.load %arg4[%c0_47, %c0_48] : memref<2x32xf32, #tpu.memory_space<vmem>>, vector<2x32xf32>
    %101 = arith.truncf %100 : vector<2x32xf32> to vector<2x32xbf16>
    %cst_49 = arith.constant dense<0.000000e+00> : vector<2x128xf32>
    %102 = tpu.matmul %101, %8, %cst_49 {dimension_numbers = #tpu.dot_dimension_numbers<[1], [0], [0], [1], [0, 0, 1, 1], [], []>} : vector<2x32xbf16>, vector<32x128xbf16>, vector<2x128xf32> -> vector<2x128xf32>
    %103 = arith.addf %99, %102 : vector<2x128xf32>
    %c0_50 = arith.constant 0 : index
    %c0_51 = arith.constant 0 : index
    %104 = vector.load %arg5[%c0_50, %c0_51] : memref<2x32xf32, #tpu.memory_space<vmem>>, vector<2x32xf32>
    %105 = vector.extract_strided_slice %103 {offsets = [0, 0], sizes = [2, 32], strides = [1, 1]} : vector<2x128xf32> to vector<2x32xf32>
    %106 = arith.negf %105 : vector<2x32xf32>
    %107 = math.exp %106 : vector<2x32xf32>
    %cst_52 = arith.constant 1.000000e+00 : f32
    %108 = vector.broadcast %cst_52 : f32 to vector<2x32xf32>
    %109 = arith.addf %108, %107 : vector<2x32xf32>
    %110 = arith.divf %108, %109 : vector<2x32xf32>
    %111 = vector.extract_strided_slice %103 {offsets = [0, 32], sizes = [2, 32], strides = [1, 1]} : vector<2x128xf32> to vector<2x32xf32>
    %112 = arith.negf %111 : vector<2x32xf32>
    %113 = math.exp %112 : vector<2x32xf32>
    %cst_53 = arith.constant 1.000000e+00 : f32
    %114 = vector.broadcast %cst_53 : f32 to vector<2x32xf32>
    %115 = arith.addf %114, %113 : vector<2x32xf32>
    %116 = arith.divf %114, %115 : vector<2x32xf32>
    %117 = vector.extract_strided_slice %103 {offsets = [0, 64], sizes = [2, 32], strides = [1, 1]} : vector<2x128xf32> to vector<2x32xf32>
    %118 = math.tanh %117 : vector<2x32xf32>
    %119 = vector.extract_strided_slice %103 {offsets = [0, 96], sizes = [2, 32], strides = [1, 1]} : vector<2x128xf32> to vector<2x32xf32>
    %120 = arith.negf %119 : vector<2x32xf32>
    %121 = math.exp %120 : vector<2x32xf32>
    %cst_54 = arith.constant 1.000000e+00 : f32
    %122 = vector.broadcast %cst_54 : f32 to vector<2x32xf32>
    %123 = arith.addf %122, %121 : vector<2x32xf32>
    %124 = arith.divf %122, %123 : vector<2x32xf32>
    %125 = arith.mulf %116, %104 : vector<2x32xf32>
    %126 = arith.mulf %110, %118 : vector<2x32xf32>
    %127 = arith.addf %125, %126 : vector<2x32xf32>
    %128 = math.tanh %127 : vector<2x32xf32>
    %129 = arith.mulf %124, %128 : vector<2x32xf32>
    %c0_55 = arith.constant 0 : index
    %c0_56 = arith.constant 0 : index
    %130 = vector.load %arg4[%c0_55, %c0_56] : memref<2x32xf32, #tpu.memory_space<vmem>>, vector<2x32xf32>
    tpu.vector_store %arg4[%c0_55, %c0_56], %129 {strides = array<i32>} : memref<2x32xf32, #tpu.memory_space<vmem>>, vector<2x32xf32>,
    %c0_57 = arith.constant 0 : index
    %c0_58 = arith.constant 0 : index
    %131 = vector.load %arg5[%c0_57, %c0_58] : memref<2x32xf32, #tpu.memory_space<vmem>>, vector<2x32xf32>
    tpu.vector_store %arg5[%c0_57, %c0_58], %127 {strides = array<i32>} : memref<2x32xf32, #tpu.memory_space<vmem>>, vector<2x32xf32>,
    %132 = arith.truncf %129 : vector<2x32xf32> to vector<2x32xbf16>
    %133 = arith.index_cast %c1_i32 : i32 to index
    %c0_59 = arith.constant 0 : index
    %c0_60 = arith.constant 0 : index
    %134 = vector.load %arg3[%133, %c0_59, %c0_60] : memref<8x2x64xbf16, #tpu.memory_space<vmem>>, vector<1x2x32xbf16>
    %135 = vector.shape_cast %134 : vector<1x2x32xbf16> to vector<2x32xbf16>
    %136 = vector.shape_cast %132 : vector<2x32xbf16> to vector<1x2x32xbf16>
    tpu.vector_store %arg3[%133, %c0_59, %c0_60], %136 {strides = array<i32>} : memref<8x2x64xbf16, #tpu.memory_space<vmem>>, vector<1x2x32xbf16>,
    %c7_i32_61 = arith.constant 7 : i32
    %137 = arith.subi %c7_i32_61, %c1_i32 : i32
    %138 = arith.index_cast %137 : i32 to index
    %c0_62 = arith.constant 0 : index
    %c0_63 = arith.constant 0 : index
    %139 = vector.load %arg0[%138, %c0_62, %c0_63] : memref<8x2x256xbf16, #tpu.memory_space<vmem>>, vector<1x2x256xbf16>
    %140 = vector.shape_cast %139 : vector<1x2x256xbf16> to vector<2x256xbf16>
    %141 = arith.extf %140 : vector<2x256xbf16> to vector<2x256xf32>
    %142 = vector.extract_strided_slice %141 {offsets = [0, 128], sizes = [2, 128], strides = [1, 1]} : vector<2x256xf32> to vector<2x128xf32>
    %c0_64 = arith.constant 0 : index
    %c0_65 = arith.constant 0 : index
    %143 = vector.load %arg6[%c0_64, %c0_65] : memref<2x32xf32, #tpu.memory_space<vmem>>, vector<2x32xf32>
    %144 = arith.truncf %143 : vector<2x32xf32> to vector<2x32xbf16>
    %cst_66 = arith.constant dense<0.000000e+00> : vector<2x128xf32>
    %145 = tpu.matmul %144, %9, %cst_66 {dimension_numbers = #tpu.dot_dimension_numbers<[1], [0], [0], [1], [0, 0, 1, 1], [], []>} : vector<2x32xbf16>, vector<32x128xbf16>, vector<2x128xf32> -> vector<2x128xf32>
    %146 = arith.addf %142, %145 : vector<2x128xf32>
    %c0_67 = arith.constant 0 : index
    %c0_68 = arith.constant 0 : index
    %147 = vector.load %arg7[%c0_67, %c0_68] : memref<2x32xf32, #tpu.memory_space<vmem>>, vector<2x32xf32>
    %148 = vector.extract_strided_slice %146 {offsets = [0, 0], sizes = [2, 32], strides = [1, 1]} : vector<2x128xf32> to vector<2x32xf32>
    %149 = arith.negf %148 : vector<2x32xf32>
    %150 = math.exp %149 : vector<2x32xf32>
    %cst_69 = arith.constant 1.000000e+00 : f32
    %151 = vector.broadcast %cst_69 : f32 to vector<2x32xf32>
    %152 = arith.addf %151, %150 : vector<2x32xf32>
    %153 = arith.divf %151, %152 : vector<2x32xf32>
    %154 = vector.extract_strided_slice %146 {offsets = [0, 32], sizes = [2, 32], strides = [1, 1]} : vector<2x128xf32> to vector<2x32xf32>
    %155 = arith.negf %154 : vector<2x32xf32>
    %156 = math.exp %155 : vector<2x32xf32>
    %cst_70 = arith.constant 1.000000e+00 : f32
    %157 = vector.broadcast %cst_70 : f32 to vector<2x32xf32>
    %158 = arith.addf %157, %156 : vector<2x32xf32>
    %159 = arith.divf %157, %158 : vector<2x32xf32>
    %160 = vector.extract_strided_slice %146 {offsets = [0, 64], sizes = [2, 32], strides = [1, 1]} : vector<2x128xf32> to vector<2x32xf32>
    %161 = math.tanh %160 : vector<2x32xf32>
    %162 = vector.extract_strided_slice %146 {offsets = [0, 96], sizes = [2, 32], strides = [1, 1]} : vector<2x128xf32> to vector<2x32xf32>
    %163 = arith.negf %162 : vector<2x32xf32>
    %164 = math.exp %163 : vector<2x32xf32>
    %cst_71 = arith.constant 1.000000e+00 : f32
    %165 = vector.broadcast %cst_71 : f32 to vector<2x32xf32>
    %166 = arith.addf %165, %164 : vector<2x32xf32>
    %167 = arith.divf %165, %166 : vector<2x32xf32>
    %168 = arith.mulf %159, %147 : vector<2x32xf32>
    %169 = arith.mulf %153, %161 : vector<2x32xf32>
    %170 = arith.addf %168, %169 : vector<2x32xf32>
    %171 = math.tanh %170 : vector<2x32xf32>
    %172 = arith.mulf %167, %171 : vector<2x32xf32>
    %c0_72 = arith.constant 0 : index
    %c0_73 = arith.constant 0 : index
    %173 = vector.load %arg6[%c0_72, %c0_73] : memref<2x32xf32, #tpu.memory_space<vmem>>, vector<2x32xf32>
    tpu.vector_store %arg6[%c0_72, %c0_73], %172 {strides = array<i32>} : memref<2x32xf32, #tpu.memory_space<vmem>>, vector<2x32xf32>,
    %c0_74 = arith.constant 0 : index
    %c0_75 = arith.constant 0 : index
    %174 = vector.load %arg7[%c0_74, %c0_75] : memref<2x32xf32, #tpu.memory_space<vmem>>, vector<2x32xf32>
    tpu.vector_store %arg7[%c0_74, %c0_75], %170 {strides = array<i32>} : memref<2x32xf32, #tpu.memory_space<vmem>>, vector<2x32xf32>,
    %175 = arith.truncf %172 : vector<2x32xf32> to vector<2x32xbf16>
    %176 = arith.index_cast %137 : i32 to index
    %c0_76 = arith.constant 0 : index
    %c32_77 = arith.constant 32 : index
    %177 = vector.load %arg3[%176, %c0_76, %c32_77] : memref<8x2x64xbf16, #tpu.memory_space<vmem>>, vector<1x2x32xbf16>
    %178 = vector.shape_cast %177 : vector<1x2x32xbf16> to vector<2x32xbf16>
    %179 = vector.shape_cast %175 : vector<2x32xbf16> to vector<1x2x32xbf16>
    tpu.vector_store %arg3[%176, %c0_76, %c32_77], %179 {strides = array<i32>} : memref<8x2x64xbf16, #tpu.memory_space<vmem>>, vector<1x2x32xbf16>,
    %c2_i32 = arith.constant 2 : i32
    %180 = arith.index_cast %c2_i32 : i32 to index
    %c0_78 = arith.constant 0 : index
    %c0_79 = arith.constant 0 : index
    %181 = vector.load %arg0[%180, %c0_78, %c0_79] : memref<8x2x256xbf16, #tpu.memory_space<vmem>>, vector<1x2x256xbf16>
    %182 = vector.shape_cast %181 : vector<1x2x256xbf16> to vector<2x256xbf16>
    %183 = arith.extf %182 : vector<2x256xbf16> to vector<2x256xf32>
    %184 = vector.extract_strided_slice %183 {offsets = [0, 0], sizes = [2, 128], strides = [1, 1]} : vector<2x256xf32> to vector<2x128xf32>
    %c0_80 = arith.constant 0 : index
    %c0_81 = arith.constant 0 : index
    %185 = vector.load %arg4[%c0_80, %c0_81] : memref<2x32xf32, #tpu.memory_space<vmem>>, vector<2x32xf32>
    %186 = arith.truncf %185 : vector<2x32xf32> to vector<2x32xbf16>
    %cst_82 = arith.constant dense<0.000000e+00> : vector<2x128xf32>
    %187 = tpu.matmul %186, %8, %cst_82 {dimension_numbers = #tpu.dot_dimension_numbers<[1], [0], [0], [1], [0, 0, 1, 1], [], []>} : vector<2x32xbf16>, vector<32x128xbf16>, vector<2x128xf32> -> vector<2x128xf32>
    %188 = arith.addf %184, %187 : vector<2x128xf32>
    %c0_83 = arith.constant 0 : index
    %c0_84 = arith.constant 0 : index
    %189 = vector.load %arg5[%c0_83, %c0_84] : memref<2x32xf32, #tpu.memory_space<vmem>>, vector<2x32xf32>
    %190 = vector.extract_strided_slice %188 {offsets = [0, 0], sizes = [2, 32], strides = [1, 1]} : vector<2x128xf32> to vector<2x32xf32>
    %191 = arith.negf %190 : vector<2x32xf32>
    %192 = math.exp %191 : vector<2x32xf32>
    %cst_85 = arith.constant 1.000000e+00 : f32
    %193 = vector.broadcast %cst_85 : f32 to vector<2x32xf32>
    %194 = arith.addf %193, %192 : vector<2x32xf32>
    %195 = arith.divf %193, %194 : vector<2x32xf32>
    %196 = vector.extract_strided_slice %188 {offsets = [0, 32], sizes = [2, 32], strides = [1, 1]} : vector<2x128xf32> to vector<2x32xf32>
    %197 = arith.negf %196 : vector<2x32xf32>
    %198 = math.exp %197 : vector<2x32xf32>
    %cst_86 = arith.constant 1.000000e+00 : f32
    %199 = vector.broadcast %cst_86 : f32 to vector<2x32xf32>
    %200 = arith.addf %199, %198 : vector<2x32xf32>
    %201 = arith.divf %199, %200 : vector<2x32xf32>
    %202 = vector.extract_strided_slice %188 {offsets = [0, 64], sizes = [2, 32], strides = [1, 1]} : vector<2x128xf32> to vector<2x32xf32>
    %203 = math.tanh %202 : vector<2x32xf32>
    %204 = vector.extract_strided_slice %188 {offsets = [0, 96], sizes = [2, 32], strides = [1, 1]} : vector<2x128xf32> to vector<2x32xf32>
    %205 = arith.negf %204 : vector<2x32xf32>
    %206 = math.exp %205 : vector<2x32xf32>
    %cst_87 = arith.constant 1.000000e+00 : f32
    %207 = vector.broadcast %cst_87 : f32 to vector<2x32xf32>
    %208 = arith.addf %207, %206 : vector<2x32xf32>
    %209 = arith.divf %207, %208 : vector<2x32xf32>
    %210 = arith.mulf %201, %189 : vector<2x32xf32>
    %211 = arith.mulf %195, %203 : vector<2x32xf32>
    %212 = arith.addf %210, %211 : vector<2x32xf32>
    %213 = math.tanh %212 : vector<2x32xf32>
    %214 = arith.mulf %209, %213 : vector<2x32xf32>
    %c0_88 = arith.constant 0 : index
    %c0_89 = arith.constant 0 : index
    %215 = vector.load %arg4[%c0_88, %c0_89] : memref<2x32xf32, #tpu.memory_space<vmem>>, vector<2x32xf32>
    tpu.vector_store %arg4[%c0_88, %c0_89], %214 {strides = array<i32>} : memref<2x32xf32, #tpu.memory_space<vmem>>, vector<2x32xf32>,
    %c0_90 = arith.constant 0 : index
    %c0_91 = arith.constant 0 : index
    %216 = vector.load %arg5[%c0_90, %c0_91] : memref<2x32xf32, #tpu.memory_space<vmem>>, vector<2x32xf32>
    tpu.vector_store %arg5[%c0_90, %c0_91], %212 {strides = array<i32>} : memref<2x32xf32, #tpu.memory_space<vmem>>, vector<2x32xf32>,
    %217 = arith.truncf %214 : vector<2x32xf32> to vector<2x32xbf16>
    %218 = arith.index_cast %c2_i32 : i32 to index
    %c0_92 = arith.constant 0 : index
    %c0_93 = arith.constant 0 : index
    %219 = vector.load %arg3[%218, %c0_92, %c0_93] : memref<8x2x64xbf16, #tpu.memory_space<vmem>>, vector<1x2x32xbf16>
    %220 = vector.shape_cast %219 : vector<1x2x32xbf16> to vector<2x32xbf16>
    %221 = vector.shape_cast %217 : vector<2x32xbf16> to vector<1x2x32xbf16>
    tpu.vector_store %arg3[%218, %c0_92, %c0_93], %221 {strides = array<i32>} : memref<8x2x64xbf16, #tpu.memory_space<vmem>>, vector<1x2x32xbf16>,
    %c7_i32_94 = arith.constant 7 : i32
    %222 = arith.subi %c7_i32_94, %c2_i32 : i32
    %223 = arith.index_cast %222 : i32 to index
    %c0_95 = arith.constant 0 : index
    %c0_96 = arith.constant 0 : index
    %224 = vector.load %arg0[%223, %c0_95, %c0_96] : memref<8x2x256xbf16, #tpu.memory_space<vmem>>, vector<1x2x256xbf16>
    %225 = vector.shape_cast %224 : vector<1x2x256xbf16> to vector<2x256xbf16>
    %226 = arith.extf %225 : vector<2x256xbf16> to vector<2x256xf32>
    %227 = vector.extract_strided_slice %226 {offsets = [0, 128], sizes = [2, 128], strides = [1, 1]} : vector<2x256xf32> to vector<2x128xf32>
    %c0_97 = arith.constant 0 : index
    %c0_98 = arith.constant 0 : index
    %228 = vector.load %arg6[%c0_97, %c0_98] : memref<2x32xf32, #tpu.memory_space<vmem>>, vector<2x32xf32>
    %229 = arith.truncf %228 : vector<2x32xf32> to vector<2x32xbf16>
    %cst_99 = arith.constant dense<0.000000e+00> : vector<2x128xf32>
    %230 = tpu.matmul %229, %9, %cst_99 {dimension_numbers = #tpu.dot_dimension_numbers<[1], [0], [0], [1], [0, 0, 1, 1], [], []>} : vector<2x32xbf16>, vector<32x128xbf16>, vector<2x128xf32> -> vector<2x128xf32>
    %231 = arith.addf %227, %230 : vector<2x128xf32>
    %c0_100 = arith.constant 0 : index
    %c0_101 = arith.constant 0 : index
    %232 = vector.load %arg7[%c0_100, %c0_101] : memref<2x32xf32, #tpu.memory_space<vmem>>, vector<2x32xf32>
    %233 = vector.extract_strided_slice %231 {offsets = [0, 0], sizes = [2, 32], strides = [1, 1]} : vector<2x128xf32> to vector<2x32xf32>
    %234 = arith.negf %233 : vector<2x32xf32>
    %235 = math.exp %234 : vector<2x32xf32>
    %cst_102 = arith.constant 1.000000e+00 : f32
    %236 = vector.broadcast %cst_102 : f32 to vector<2x32xf32>
    %237 = arith.addf %236, %235 : vector<2x32xf32>
    %238 = arith.divf %236, %237 : vector<2x32xf32>
    %239 = vector.extract_strided_slice %231 {offsets = [0, 32], sizes = [2, 32], strides = [1, 1]} : vector<2x128xf32> to vector<2x32xf32>
    %240 = arith.negf %239 : vector<2x32xf32>
    %241 = math.exp %240 : vector<2x32xf32>
    %cst_103 = arith.constant 1.000000e+00 : f32
    %242 = vector.broadcast %cst_103 : f32 to vector<2x32xf32>
    %243 = arith.addf %242, %241 : vector<2x32xf32>
    %244 = arith.divf %242, %243 : vector<2x32xf32>
    %245 = vector.extract_strided_slice %231 {offsets = [0, 64], sizes = [2, 32], strides = [1, 1]} : vector<2x128xf32> to vector<2x32xf32>
    %246 = math.tanh %245 : vector<2x32xf32>
    %247 = vector.extract_strided_slice %231 {offsets = [0, 96], sizes = [2, 32], strides = [1, 1]} : vector<2x128xf32> to vector<2x32xf32>
    %248 = arith.negf %247 : vector<2x32xf32>
    %249 = math.exp %248 : vector<2x32xf32>
    %cst_104 = arith.constant 1.000000e+00 : f32
    %250 = vector.broadcast %cst_104 : f32 to vector<2x32xf32>
    %251 = arith.addf %250, %249 : vector<2x32xf32>
    %252 = arith.divf %250, %251 : vector<2x32xf32>
    %253 = arith.mulf %244, %232 : vector<2x32xf32>
    %254 = arith.mulf %238, %246 : vector<2x32xf32>
    %255 = arith.addf %253, %254 : vector<2x32xf32>
    %256 = math.tanh %255 : vector<2x32xf32>
    %257 = arith.mulf %252, %256 : vector<2x32xf32>
    %c0_105 = arith.constant 0 : index
    %c0_106 = arith.constant 0 : index
    %258 = vector.load %arg6[%c0_105, %c0_106] : memref<2x32xf32, #tpu.memory_space<vmem>>, vector<2x32xf32>
    tpu.vector_store %arg6[%c0_105, %c0_106], %257 {strides = array<i32>} : memref<2x32xf32, #tpu.memory_space<vmem>>, vector<2x32xf32>,
    %c0_107 = arith.constant 0 : index
    %c0_108 = arith.constant 0 : index
    %259 = vector.load %arg7[%c0_107, %c0_108] : memref<2x32xf32, #tpu.memory_space<vmem>>, vector<2x32xf32>
    tpu.vector_store %arg7[%c0_107, %c0_108], %255 {strides = array<i32>} : memref<2x32xf32, #tpu.memory_space<vmem>>, vector<2x32xf32>,
    %260 = arith.truncf %257 : vector<2x32xf32> to vector<2x32xbf16>
    %261 = arith.index_cast %222 : i32 to index
    %c0_109 = arith.constant 0 : index
    %c32_110 = arith.constant 32 : index
    %262 = vector.load %arg3[%261, %c0_109, %c32_110] : memref<8x2x64xbf16, #tpu.memory_space<vmem>>, vector<1x2x32xbf16>
    %263 = vector.shape_cast %262 : vector<1x2x32xbf16> to vector<2x32xbf16>
    %264 = vector.shape_cast %260 : vector<2x32xbf16> to vector<1x2x32xbf16>
    tpu.vector_store %arg3[%261, %c0_109, %c32_110], %264 {strides = array<i32>} : memref<8x2x64xbf16, #tpu.memory_space<vmem>>, vector<1x2x32xbf16>,
    %c3_i32 = arith.constant 3 : i32
    %265 = arith.index_cast %c3_i32 : i32 to index
    %c0_111 = arith.constant 0 : index
    %c0_112 = arith.constant 0 : index
    %266 = vector.load %arg0[%265, %c0_111, %c0_112] : memref<8x2x256xbf16, #tpu.memory_space<vmem>>, vector<1x2x256xbf16>
    %267 = vector.shape_cast %266 : vector<1x2x256xbf16> to vector<2x256xbf16>
    %268 = arith.extf %267 : vector<2x256xbf16> to vector<2x256xf32>
    %269 = vector.extract_strided_slice %268 {offsets = [0, 0], sizes = [2, 128], strides = [1, 1]} : vector<2x256xf32> to vector<2x128xf32>
    %c0_113 = arith.constant 0 : index
    %c0_114 = arith.constant 0 : index
    %270 = vector.load %arg4[%c0_113, %c0_114] : memref<2x32xf32, #tpu.memory_space<vmem>>, vector<2x32xf32>
    %271 = arith.truncf %270 : vector<2x32xf32> to vector<2x32xbf16>
    %cst_115 = arith.constant dense<0.000000e+00> : vector<2x128xf32>
    %272 = tpu.matmul %271, %8, %cst_115 {dimension_numbers = #tpu.dot_dimension_numbers<[1], [0], [0], [1], [0, 0, 1, 1], [], []>} : vector<2x32xbf16>, vector<32x128xbf16>, vector<2x128xf32> -> vector<2x128xf32>
    %273 = arith.addf %269, %272 : vector<2x128xf32>
    %c0_116 = arith.constant 0 : index
    %c0_117 = arith.constant 0 : index
    %274 = vector.load %arg5[%c0_116, %c0_117] : memref<2x32xf32, #tpu.memory_space<vmem>>, vector<2x32xf32>
    %275 = vector.extract_strided_slice %273 {offsets = [0, 0], sizes = [2, 32], strides = [1, 1]} : vector<2x128xf32> to vector<2x32xf32>
    %276 = arith.negf %275 : vector<2x32xf32>
    %277 = math.exp %276 : vector<2x32xf32>
    %cst_118 = arith.constant 1.000000e+00 : f32
    %278 = vector.broadcast %cst_118 : f32 to vector<2x32xf32>
    %279 = arith.addf %278, %277 : vector<2x32xf32>
    %280 = arith.divf %278, %279 : vector<2x32xf32>
    %281 = vector.extract_strided_slice %273 {offsets = [0, 32], sizes = [2, 32], strides = [1, 1]} : vector<2x128xf32> to vector<2x32xf32>
    %282 = arith.negf %281 : vector<2x32xf32>
    %283 = math.exp %282 : vector<2x32xf32>
    %cst_119 = arith.constant 1.000000e+00 : f32
    %284 = vector.broadcast %cst_119 : f32 to vector<2x32xf32>
    %285 = arith.addf %284, %283 : vector<2x32xf32>
    %286 = arith.divf %284, %285 : vector<2x32xf32>
    %287 = vector.extract_strided_slice %273 {offsets = [0, 64], sizes = [2, 32], strides = [1, 1]} : vector<2x128xf32> to vector<2x32xf32>
    %288 = math.tanh %287 : vector<2x32xf32>
    %289 = vector.extract_strided_slice %273 {offsets = [0, 96], sizes = [2, 32], strides = [1, 1]} : vector<2x128xf32> to vector<2x32xf32>
    %290 = arith.negf %289 : vector<2x32xf32>
    %291 = math.exp %290 : vector<2x32xf32>
    %cst_120 = arith.constant 1.000000e+00 : f32
    %292 = vector.broadcast %cst_120 : f32 to vector<2x32xf32>
    %293 = arith.addf %292, %291 : vector<2x32xf32>
    %294 = arith.divf %292, %293 : vector<2x32xf32>
    %295 = arith.mulf %286, %274 : vector<2x32xf32>
    %296 = arith.mulf %280, %288 : vector<2x32xf32>
    %297 = arith.addf %295, %296 : vector<2x32xf32>
    %298 = math.tanh %297 : vector<2x32xf32>
    %299 = arith.mulf %294, %298 : vector<2x32xf32>
    %c0_121 = arith.constant 0 : index
    %c0_122 = arith.constant 0 : index
    %300 = vector.load %arg4[%c0_121, %c0_122] : memref<2x32xf32, #tpu.memory_space<vmem>>, vector<2x32xf32>
    tpu.vector_store %arg4[%c0_121, %c0_122], %299 {strides = array<i32>} : memref<2x32xf32, #tpu.memory_space<vmem>>, vector<2x32xf32>,
    %c0_123 = arith.constant 0 : index
    %c0_124 = arith.constant 0 : index
    %301 = vector.load %arg5[%c0_123, %c0_124] : memref<2x32xf32, #tpu.memory_space<vmem>>, vector<2x32xf32>
    tpu.vector_store %arg5[%c0_123, %c0_124], %297 {strides = array<i32>} : memref<2x32xf32, #tpu.memory_space<vmem>>, vector<2x32xf32>,
    %302 = arith.truncf %299 : vector<2x32xf32> to vector<2x32xbf16>
    %303 = arith.index_cast %c3_i32 : i32 to index
    %c0_125 = arith.constant 0 : index
    %c0_126 = arith.constant 0 : index
    %304 = vector.load %arg3[%303, %c0_125, %c0_126] : memref<8x2x64xbf16, #tpu.memory_space<vmem>>, vector<1x2x32xbf16>
    %305 = vector.shape_cast %304 : vector<1x2x32xbf16> to vector<2x32xbf16>
    %306 = vector.shape_cast %302 : vector<2x32xbf16> to vector<1x2x32xbf16>
    tpu.vector_store %arg3[%303, %c0_125, %c0_126], %306 {strides = array<i32>} : memref<8x2x64xbf16, #tpu.memory_space<vmem>>, vector<1x2x32xbf16>,
    %c7_i32_127 = arith.constant 7 : i32
    %307 = arith.subi %c7_i32_127, %c3_i32 : i32
    %308 = arith.index_cast %307 : i32 to index
    %c0_128 = arith.constant 0 : index
    %c0_129 = arith.constant 0 : index
    %309 = vector.load %arg0[%308, %c0_128, %c0_129] : memref<8x2x256xbf16, #tpu.memory_space<vmem>>, vector<1x2x256xbf16>
    %310 = vector.shape_cast %309 : vector<1x2x256xbf16> to vector<2x256xbf16>
    %311 = arith.extf %310 : vector<2x256xbf16> to vector<2x256xf32>
    %312 = vector.extract_strided_slice %311 {offsets = [0, 128], sizes = [2, 128], strides = [1, 1]} : vector<2x256xf32> to vector<2x128xf32>
    %c0_130 = arith.constant 0 : index
    %c0_131 = arith.constant 0 : index
    %313 = vector.load %arg6[%c0_130, %c0_131] : memref<2x32xf32, #tpu.memory_space<vmem>>, vector<2x32xf32>
    %314 = arith.truncf %313 : vector<2x32xf32> to vector<2x32xbf16>
    %cst_132 = arith.constant dense<0.000000e+00> : vector<2x128xf32>
    %315 = tpu.matmul %314, %9, %cst_132 {dimension_numbers = #tpu.dot_dimension_numbers<[1], [0], [0], [1], [0, 0, 1, 1], [], []>} : vector<2x32xbf16>, vector<32x128xbf16>, vector<2x128xf32> -> vector<2x128xf32>
    %316 = arith.addf %312, %315 : vector<2x128xf32>
    %c0_133 = arith.constant 0 : index
    %c0_134 = arith.constant 0 : index
    %317 = vector.load %arg7[%c0_133, %c0_134] : memref<2x32xf32, #tpu.memory_space<vmem>>, vector<2x32xf32>
    %318 = vector.extract_strided_slice %316 {offsets = [0, 0], sizes = [2, 32], strides = [1, 1]} : vector<2x128xf32> to vector<2x32xf32>
    %319 = arith.negf %318 : vector<2x32xf32>
    %320 = math.exp %319 : vector<2x32xf32>
    %cst_135 = arith.constant 1.000000e+00 : f32
    %321 = vector.broadcast %cst_135 : f32 to vector<2x32xf32>
    %322 = arith.addf %321, %320 : vector<2x32xf32>
    %323 = arith.divf %321, %322 : vector<2x32xf32>
    %324 = vector.extract_strided_slice %316 {offsets = [0, 32], sizes = [2, 32], strides = [1, 1]} : vector<2x128xf32> to vector<2x32xf32>
    %325 = arith.negf %324 : vector<2x32xf32>
    %326 = math.exp %325 : vector<2x32xf32>
    %cst_136 = arith.constant 1.000000e+00 : f32
    %327 = vector.broadcast %cst_136 : f32 to vector<2x32xf32>
    %328 = arith.addf %327, %326 : vector<2x32xf32>
    %329 = arith.divf %327, %328 : vector<2x32xf32>
    %330 = vector.extract_strided_slice %316 {offsets = [0, 64], sizes = [2, 32], strides = [1, 1]} : vector<2x128xf32> to vector<2x32xf32>
    %331 = math.tanh %330 : vector<2x32xf32>
    %332 = vector.extract_strided_slice %316 {offsets = [0, 96], sizes = [2, 32], strides = [1, 1]} : vector<2x128xf32> to vector<2x32xf32>
    %333 = arith.negf %332 : vector<2x32xf32>
    %334 = math.exp %333 : vector<2x32xf32>
    %cst_137 = arith.constant 1.000000e+00 : f32
    %335 = vector.broadcast %cst_137 : f32 to vector<2x32xf32>
    %336 = arith.addf %335, %334 : vector<2x32xf32>
    %337 = arith.divf %335, %336 : vector<2x32xf32>
    %338 = arith.mulf %329, %317 : vector<2x32xf32>
    %339 = arith.mulf %323, %331 : vector<2x32xf32>
    %340 = arith.addf %338, %339 : vector<2x32xf32>
    %341 = math.tanh %340 : vector<2x32xf32>
    %342 = arith.mulf %337, %341 : vector<2x32xf32>
    %c0_138 = arith.constant 0 : index
    %c0_139 = arith.constant 0 : index
    %343 = vector.load %arg6[%c0_138, %c0_139] : memref<2x32xf32, #tpu.memory_space<vmem>>, vector<2x32xf32>
    tpu.vector_store %arg6[%c0_138, %c0_139], %342 {strides = array<i32>} : memref<2x32xf32, #tpu.memory_space<vmem>>, vector<2x32xf32>,
    %c0_140 = arith.constant 0 : index
    %c0_141 = arith.constant 0 : index
    %344 = vector.load %arg7[%c0_140, %c0_141] : memref<2x32xf32, #tpu.memory_space<vmem>>, vector<2x32xf32>
    tpu.vector_store %arg7[%c0_140, %c0_141], %340 {strides = array<i32>} : memref<2x32xf32, #tpu.memory_space<vmem>>, vector<2x32xf32>,
    %345 = arith.truncf %342 : vector<2x32xf32> to vector<2x32xbf16>
    %346 = arith.index_cast %307 : i32 to index
    %c0_142 = arith.constant 0 : index
    %c32_143 = arith.constant 32 : index
    %347 = vector.load %arg3[%346, %c0_142, %c32_143] : memref<8x2x64xbf16, #tpu.memory_space<vmem>>, vector<1x2x32xbf16>
    %348 = vector.shape_cast %347 : vector<1x2x32xbf16> to vector<2x32xbf16>
    %349 = vector.shape_cast %345 : vector<2x32xbf16> to vector<1x2x32xbf16>
    tpu.vector_store %arg3[%346, %c0_142, %c32_143], %349 {strides = array<i32>} : memref<8x2x64xbf16, #tpu.memory_space<vmem>>, vector<1x2x32xbf16>,
    %c4_i32 = arith.constant 4 : i32
    %350 = arith.index_cast %c4_i32 : i32 to index
    %c0_144 = arith.constant 0 : index
    %c0_145 = arith.constant 0 : index
    %351 = vector.load %arg0[%350, %c0_144, %c0_145] : memref<8x2x256xbf16, #tpu.memory_space<vmem>>, vector<1x2x256xbf16>
    %352 = vector.shape_cast %351 : vector<1x2x256xbf16> to vector<2x256xbf16>
    %353 = arith.extf %352 : vector<2x256xbf16> to vector<2x256xf32>
    %354 = vector.extract_strided_slice %353 {offsets = [0, 0], sizes = [2, 128], strides = [1, 1]} : vector<2x256xf32> to vector<2x128xf32>
    %c0_146 = arith.constant 0 : index
    %c0_147 = arith.constant 0 : index
    %355 = vector.load %arg4[%c0_146, %c0_147] : memref<2x32xf32, #tpu.memory_space<vmem>>, vector<2x32xf32>
    %356 = arith.truncf %355 : vector<2x32xf32> to vector<2x32xbf16>
    %cst_148 = arith.constant dense<0.000000e+00> : vector<2x128xf32>
    %357 = tpu.matmul %356, %8, %cst_148 {dimension_numbers = #tpu.dot_dimension_numbers<[1], [0], [0], [1], [0, 0, 1, 1], [], []>} : vector<2x32xbf16>, vector<32x128xbf16>, vector<2x128xf32> -> vector<2x128xf32>
    %358 = arith.addf %354, %357 : vector<2x128xf32>
    %c0_149 = arith.constant 0 : index
    %c0_150 = arith.constant 0 : index
    %359 = vector.load %arg5[%c0_149, %c0_150] : memref<2x32xf32, #tpu.memory_space<vmem>>, vector<2x32xf32>
    %360 = vector.extract_strided_slice %358 {offsets = [0, 0], sizes = [2, 32], strides = [1, 1]} : vector<2x128xf32> to vector<2x32xf32>
    %361 = arith.negf %360 : vector<2x32xf32>
    %362 = math.exp %361 : vector<2x32xf32>
    %cst_151 = arith.constant 1.000000e+00 : f32
    %363 = vector.broadcast %cst_151 : f32 to vector<2x32xf32>
    %364 = arith.addf %363, %362 : vector<2x32xf32>
    %365 = arith.divf %363, %364 : vector<2x32xf32>
    %366 = vector.extract_strided_slice %358 {offsets = [0, 32], sizes = [2, 32], strides = [1, 1]} : vector<2x128xf32> to vector<2x32xf32>
    %367 = arith.negf %366 : vector<2x32xf32>
    %368 = math.exp %367 : vector<2x32xf32>
    %cst_152 = arith.constant 1.000000e+00 : f32
    %369 = vector.broadcast %cst_152 : f32 to vector<2x32xf32>
    %370 = arith.addf %369, %368 : vector<2x32xf32>
    %371 = arith.divf %369, %370 : vector<2x32xf32>
    %372 = vector.extract_strided_slice %358 {offsets = [0, 64], sizes = [2, 32], strides = [1, 1]} : vector<2x128xf32> to vector<2x32xf32>
    %373 = math.tanh %372 : vector<2x32xf32>
    %374 = vector.extract_strided_slice %358 {offsets = [0, 96], sizes = [2, 32], strides = [1, 1]} : vector<2x128xf32> to vector<2x32xf32>
    %375 = arith.negf %374 : vector<2x32xf32>
    %376 = math.exp %375 : vector<2x32xf32>
    %cst_153 = arith.constant 1.000000e+00 : f32
    %377 = vector.broadcast %cst_153 : f32 to vector<2x32xf32>
    %378 = arith.addf %377, %376 : vector<2x32xf32>
    %379 = arith.divf %377, %378 : vector<2x32xf32>
    %380 = arith.mulf %371, %359 : vector<2x32xf32>
    %381 = arith.mulf %365, %373 : vector<2x32xf32>
    %382 = arith.addf %380, %381 : vector<2x32xf32>
    %383 = math.tanh %382 : vector<2x32xf32>
    %384 = arith.mulf %379, %383 : vector<2x32xf32>
    %c0_154 = arith.constant 0 : index
    %c0_155 = arith.constant 0 : index
    %385 = vector.load %arg4[%c0_154, %c0_155] : memref<2x32xf32, #tpu.memory_space<vmem>>, vector<2x32xf32>
    tpu.vector_store %arg4[%c0_154, %c0_155], %384 {strides = array<i32>} : memref<2x32xf32, #tpu.memory_space<vmem>>, vector<2x32xf32>,
    %c0_156 = arith.constant 0 : index
    %c0_157 = arith.constant 0 : index
    %386 = vector.load %arg5[%c0_156, %c0_157] : memref<2x32xf32, #tpu.memory_space<vmem>>, vector<2x32xf32>
    tpu.vector_store %arg5[%c0_156, %c0_157], %382 {strides = array<i32>} : memref<2x32xf32, #tpu.memory_space<vmem>>, vector<2x32xf32>,
    %387 = arith.truncf %384 : vector<2x32xf32> to vector<2x32xbf16>
    %388 = arith.index_cast %c4_i32 : i32 to index
    %c0_158 = arith.constant 0 : index
    %c0_159 = arith.constant 0 : index
    %389 = vector.load %arg3[%388, %c0_158, %c0_159] : memref<8x2x64xbf16, #tpu.memory_space<vmem>>, vector<1x2x32xbf16>
    %390 = vector.shape_cast %389 : vector<1x2x32xbf16> to vector<2x32xbf16>
    %391 = vector.shape_cast %387 : vector<2x32xbf16> to vector<1x2x32xbf16>
    tpu.vector_store %arg3[%388, %c0_158, %c0_159], %391 {strides = array<i32>} : memref<8x2x64xbf16, #tpu.memory_space<vmem>>, vector<1x2x32xbf16>,
    %c7_i32_160 = arith.constant 7 : i32
    %392 = arith.subi %c7_i32_160, %c4_i32 : i32
    %393 = arith.index_cast %392 : i32 to index
    %c0_161 = arith.constant 0 : index
    %c0_162 = arith.constant 0 : index
    %394 = vector.load %arg0[%393, %c0_161, %c0_162] : memref<8x2x256xbf16, #tpu.memory_space<vmem>>, vector<1x2x256xbf16>
    %395 = vector.shape_cast %394 : vector<1x2x256xbf16> to vector<2x256xbf16>
    %396 = arith.extf %395 : vector<2x256xbf16> to vector<2x256xf32>
    %397 = vector.extract_strided_slice %396 {offsets = [0, 128], sizes = [2, 128], strides = [1, 1]} : vector<2x256xf32> to vector<2x128xf32>
    %c0_163 = arith.constant 0 : index
    %c0_164 = arith.constant 0 : index
    %398 = vector.load %arg6[%c0_163, %c0_164] : memref<2x32xf32, #tpu.memory_space<vmem>>, vector<2x32xf32>
    %399 = arith.truncf %398 : vector<2x32xf32> to vector<2x32xbf16>
    %cst_165 = arith.constant dense<0.000000e+00> : vector<2x128xf32>
    %400 = tpu.matmul %399, %9, %cst_165 {dimension_numbers = #tpu.dot_dimension_numbers<[1], [0], [0], [1], [0, 0, 1, 1], [], []>} : vector<2x32xbf16>, vector<32x128xbf16>, vector<2x128xf32> -> vector<2x128xf32>
    %401 = arith.addf %397, %400 : vector<2x128xf32>
    %c0_166 = arith.constant 0 : index
    %c0_167 = arith.constant 0 : index
    %402 = vector.load %arg7[%c0_166, %c0_167] : memref<2x32xf32, #tpu.memory_space<vmem>>, vector<2x32xf32>
    %403 = vector.extract_strided_slice %401 {offsets = [0, 0], sizes = [2, 32], strides = [1, 1]} : vector<2x128xf32> to vector<2x32xf32>
    %404 = arith.negf %403 : vector<2x32xf32>
    %405 = math.exp %404 : vector<2x32xf32>
    %cst_168 = arith.constant 1.000000e+00 : f32
    %406 = vector.broadcast %cst_168 : f32 to vector<2x32xf32>
    %407 = arith.addf %406, %405 : vector<2x32xf32>
    %408 = arith.divf %406, %407 : vector<2x32xf32>
    %409 = vector.extract_strided_slice %401 {offsets = [0, 32], sizes = [2, 32], strides = [1, 1]} : vector<2x128xf32> to vector<2x32xf32>
    %410 = arith.negf %409 : vector<2x32xf32>
    %411 = math.exp %410 : vector<2x32xf32>
    %cst_169 = arith.constant 1.000000e+00 : f32
    %412 = vector.broadcast %cst_169 : f32 to vector<2x32xf32>
    %413 = arith.addf %412, %411 : vector<2x32xf32>
    %414 = arith.divf %412, %413 : vector<2x32xf32>
    %415 = vector.extract_strided_slice %401 {offsets = [0, 64], sizes = [2, 32], strides = [1, 1]} : vector<2x128xf32> to vector<2x32xf32>
    %416 = math.tanh %415 : vector<2x32xf32>
    %417 = vector.extract_strided_slice %401 {offsets = [0, 96], sizes = [2, 32], strides = [1, 1]} : vector<2x128xf32> to vector<2x32xf32>
    %418 = arith.negf %417 : vector<2x32xf32>
    %419 = math.exp %418 : vector<2x32xf32>
    %cst_170 = arith.constant 1.000000e+00 : f32
    %420 = vector.broadcast %cst_170 : f32 to vector<2x32xf32>
    %421 = arith.addf %420, %419 : vector<2x32xf32>
    %422 = arith.divf %420, %421 : vector<2x32xf32>
    %423 = arith.mulf %414, %402 : vector<2x32xf32>
    %424 = arith.mulf %408, %416 : vector<2x32xf32>
    %425 = arith.addf %423, %424 : vector<2x32xf32>
    %426 = math.tanh %425 : vector<2x32xf32>
    %427 = arith.mulf %422, %426 : vector<2x32xf32>
    %c0_171 = arith.constant 0 : index
    %c0_172 = arith.constant 0 : index
    %428 = vector.load %arg6[%c0_171, %c0_172] : memref<2x32xf32, #tpu.memory_space<vmem>>, vector<2x32xf32>
    tpu.vector_store %arg6[%c0_171, %c0_172], %427 {strides = array<i32>} : memref<2x32xf32, #tpu.memory_space<vmem>>, vector<2x32xf32>,
    %c0_173 = arith.constant 0 : index
    %c0_174 = arith.constant 0 : index
    %429 = vector.load %arg7[%c0_173, %c0_174] : memref<2x32xf32, #tpu.memory_space<vmem>>, vector<2x32xf32>
    tpu.vector_store %arg7[%c0_173, %c0_174], %425 {strides = array<i32>} : memref<2x32xf32, #tpu.memory_space<vmem>>, vector<2x32xf32>,
    %430 = arith.truncf %427 : vector<2x32xf32> to vector<2x32xbf16>
    %431 = arith.index_cast %392 : i32 to index
    %c0_175 = arith.constant 0 : index
    %c32_176 = arith.constant 32 : index
    %432 = vector.load %arg3[%431, %c0_175, %c32_176] : memref<8x2x64xbf16, #tpu.memory_space<vmem>>, vector<1x2x32xbf16>
    %433 = vector.shape_cast %432 : vector<1x2x32xbf16> to vector<2x32xbf16>
    %434 = vector.shape_cast %430 : vector<2x32xbf16> to vector<1x2x32xbf16>
    tpu.vector_store %arg3[%431, %c0_175, %c32_176], %434 {strides = array<i32>} : memref<8x2x64xbf16, #tpu.memory_space<vmem>>, vector<1x2x32xbf16>,
    %c5_i32 = arith.constant 5 : i32
    %435 = arith.index_cast %c5_i32 : i32 to index
    %c0_177 = arith.constant 0 : index
    %c0_178 = arith.constant 0 : index
    %436 = vector.load %arg0[%435, %c0_177, %c0_178] : memref<8x2x256xbf16, #tpu.memory_space<vmem>>, vector<1x2x256xbf16>
    %437 = vector.shape_cast %436 : vector<1x2x256xbf16> to vector<2x256xbf16>
    %438 = arith.extf %437 : vector<2x256xbf16> to vector<2x256xf32>
    %439 = vector.extract_strided_slice %438 {offsets = [0, 0], sizes = [2, 128], strides = [1, 1]} : vector<2x256xf32> to vector<2x128xf32>
    %c0_179 = arith.constant 0 : index
    %c0_180 = arith.constant 0 : index
    %440 = vector.load %arg4[%c0_179, %c0_180] : memref<2x32xf32, #tpu.memory_space<vmem>>, vector<2x32xf32>
    %441 = arith.truncf %440 : vector<2x32xf32> to vector<2x32xbf16>
    %cst_181 = arith.constant dense<0.000000e+00> : vector<2x128xf32>
    %442 = tpu.matmul %441, %8, %cst_181 {dimension_numbers = #tpu.dot_dimension_numbers<[1], [0], [0], [1], [0, 0, 1, 1], [], []>} : vector<2x32xbf16>, vector<32x128xbf16>, vector<2x128xf32> -> vector<2x128xf32>
    %443 = arith.addf %439, %442 : vector<2x128xf32>
    %c0_182 = arith.constant 0 : index
    %c0_183 = arith.constant 0 : index
    %444 = vector.load %arg5[%c0_182, %c0_183] : memref<2x32xf32, #tpu.memory_space<vmem>>, vector<2x32xf32>
    %445 = vector.extract_strided_slice %443 {offsets = [0, 0], sizes = [2, 32], strides = [1, 1]} : vector<2x128xf32> to vector<2x32xf32>
    %446 = arith.negf %445 : vector<2x32xf32>
    %447 = math.exp %446 : vector<2x32xf32>
    %cst_184 = arith.constant 1.000000e+00 : f32
    %448 = vector.broadcast %cst_184 : f32 to vector<2x32xf32>
    %449 = arith.addf %448, %447 : vector<2x32xf32>
    %450 = arith.divf %448, %449 : vector<2x32xf32>
    %451 = vector.extract_strided_slice %443 {offsets = [0, 32], sizes = [2, 32], strides = [1, 1]} : vector<2x128xf32> to vector<2x32xf32>
    %452 = arith.negf %451 : vector<2x32xf32>
    %453 = math.exp %452 : vector<2x32xf32>
    %cst_185 = arith.constant 1.000000e+00 : f32
    %454 = vector.broadcast %cst_185 : f32 to vector<2x32xf32>
    %455 = arith.addf %454, %453 : vector<2x32xf32>
    %456 = arith.divf %454, %455 : vector<2x32xf32>
    %457 = vector.extract_strided_slice %443 {offsets = [0, 64], sizes = [2, 32], strides = [1, 1]} : vector<2x128xf32> to vector<2x32xf32>
    %458 = math.tanh %457 : vector<2x32xf32>
    %459 = vector.extract_strided_slice %443 {offsets = [0, 96], sizes = [2, 32], strides = [1, 1]} : vector<2x128xf32> to vector<2x32xf32>
    %460 = arith.negf %459 : vector<2x32xf32>
    %461 = math.exp %460 : vector<2x32xf32>
    %cst_186 = arith.constant 1.000000e+00 : f32
    %462 = vector.broadcast %cst_186 : f32 to vector<2x32xf32>
    %463 = arith.addf %462, %461 : vector<2x32xf32>
    %464 = arith.divf %462, %463 : vector<2x32xf32>
    %465 = arith.mulf %456, %444 : vector<2x32xf32>
    %466 = arith.mulf %450, %458 : vector<2x32xf32>
    %467 = arith.addf %465, %466 : vector<2x32xf32>
    %468 = math.tanh %467 : vector<2x32xf32>
    %469 = arith.mulf %464, %468 : vector<2x32xf32>
    %c0_187 = arith.constant 0 : index
    %c0_188 = arith.constant 0 : index
    %470 = vector.load %arg4[%c0_187, %c0_188] : memref<2x32xf32, #tpu.memory_space<vmem>>, vector<2x32xf32>
    tpu.vector_store %arg4[%c0_187, %c0_188], %469 {strides = array<i32>} : memref<2x32xf32, #tpu.memory_space<vmem>>, vector<2x32xf32>,
    %c0_189 = arith.constant 0 : index
    %c0_190 = arith.constant 0 : index
    %471 = vector.load %arg5[%c0_189, %c0_190] : memref<2x32xf32, #tpu.memory_space<vmem>>, vector<2x32xf32>
    tpu.vector_store %arg5[%c0_189, %c0_190], %467 {strides = array<i32>} : memref<2x32xf32, #tpu.memory_space<vmem>>, vector<2x32xf32>,
    %472 = arith.truncf %469 : vector<2x32xf32> to vector<2x32xbf16>
    %473 = arith.index_cast %c5_i32 : i32 to index
    %c0_191 = arith.constant 0 : index
    %c0_192 = arith.constant 0 : index
    %474 = vector.load %arg3[%473, %c0_191, %c0_192] : memref<8x2x64xbf16, #tpu.memory_space<vmem>>, vector<1x2x32xbf16>
    %475 = vector.shape_cast %474 : vector<1x2x32xbf16> to vector<2x32xbf16>
    %476 = vector.shape_cast %472 : vector<2x32xbf16> to vector<1x2x32xbf16>
    tpu.vector_store %arg3[%473, %c0_191, %c0_192], %476 {strides = array<i32>} : memref<8x2x64xbf16, #tpu.memory_space<vmem>>, vector<1x2x32xbf16>,
    %c7_i32_193 = arith.constant 7 : i32
    %477 = arith.subi %c7_i32_193, %c5_i32 : i32
    %478 = arith.index_cast %477 : i32 to index
    %c0_194 = arith.constant 0 : index
    %c0_195 = arith.constant 0 : index
    %479 = vector.load %arg0[%478, %c0_194, %c0_195] : memref<8x2x256xbf16, #tpu.memory_space<vmem>>, vector<1x2x256xbf16>
    %480 = vector.shape_cast %479 : vector<1x2x256xbf16> to vector<2x256xbf16>
    %481 = arith.extf %480 : vector<2x256xbf16> to vector<2x256xf32>
    %482 = vector.extract_strided_slice %481 {offsets = [0, 128], sizes = [2, 128], strides = [1, 1]} : vector<2x256xf32> to vector<2x128xf32>
    %c0_196 = arith.constant 0 : index
    %c0_197 = arith.constant 0 : index
    %483 = vector.load %arg6[%c0_196, %c0_197] : memref<2x32xf32, #tpu.memory_space<vmem>>, vector<2x32xf32>
    %484 = arith.truncf %483 : vector<2x32xf32> to vector<2x32xbf16>
    %cst_198 = arith.constant dense<0.000000e+00> : vector<2x128xf32>
    %485 = tpu.matmul %484, %9, %cst_198 {dimension_numbers = #tpu.dot_dimension_numbers<[1], [0], [0], [1], [0, 0, 1, 1], [], []>} : vector<2x32xbf16>, vector<32x128xbf16>, vector<2x128xf32> -> vector<2x128xf32>
    %486 = arith.addf %482, %485 : vector<2x128xf32>
    %c0_199 = arith.constant 0 : index
    %c0_200 = arith.constant 0 : index
    %487 = vector.load %arg7[%c0_199, %c0_200] : memref<2x32xf32, #tpu.memory_space<vmem>>, vector<2x32xf32>
    %488 = vector.extract_strided_slice %486 {offsets = [0, 0], sizes = [2, 32], strides = [1, 1]} : vector<2x128xf32> to vector<2x32xf32>
    %489 = arith.negf %488 : vector<2x32xf32>
    %490 = math.exp %489 : vector<2x32xf32>
    %cst_201 = arith.constant 1.000000e+00 : f32
    %491 = vector.broadcast %cst_201 : f32 to vector<2x32xf32>
    %492 = arith.addf %491, %490 : vector<2x32xf32>
    %493 = arith.divf %491, %492 : vector<2x32xf32>
    %494 = vector.extract_strided_slice %486 {offsets = [0, 32], sizes = [2, 32], strides = [1, 1]} : vector<2x128xf32> to vector<2x32xf32>
    %495 = arith.negf %494 : vector<2x32xf32>
    %496 = math.exp %495 : vector<2x32xf32>
    %cst_202 = arith.constant 1.000000e+00 : f32
    %497 = vector.broadcast %cst_202 : f32 to vector<2x32xf32>
    %498 = arith.addf %497, %496 : vector<2x32xf32>
    %499 = arith.divf %497, %498 : vector<2x32xf32>
    %500 = vector.extract_strided_slice %486 {offsets = [0, 64], sizes = [2, 32], strides = [1, 1]} : vector<2x128xf32> to vector<2x32xf32>
    %501 = math.tanh %500 : vector<2x32xf32>
    %502 = vector.extract_strided_slice %486 {offsets = [0, 96], sizes = [2, 32], strides = [1, 1]} : vector<2x128xf32> to vector<2x32xf32>
    %503 = arith.negf %502 : vector<2x32xf32>
    %504 = math.exp %503 : vector<2x32xf32>
    %cst_203 = arith.constant 1.000000e+00 : f32
    %505 = vector.broadcast %cst_203 : f32 to vector<2x32xf32>
    %506 = arith.addf %505, %504 : vector<2x32xf32>
    %507 = arith.divf %505, %506 : vector<2x32xf32>
    %508 = arith.mulf %499, %487 : vector<2x32xf32>
    %509 = arith.mulf %493, %501 : vector<2x32xf32>
    %510 = arith.addf %508, %509 : vector<2x32xf32>
    %511 = math.tanh %510 : vector<2x32xf32>
    %512 = arith.mulf %507, %511 : vector<2x32xf32>
    %c0_204 = arith.constant 0 : index
    %c0_205 = arith.constant 0 : index
    %513 = vector.load %arg6[%c0_204, %c0_205] : memref<2x32xf32, #tpu.memory_space<vmem>>, vector<2x32xf32>
    tpu.vector_store %arg6[%c0_204, %c0_205], %512 {strides = array<i32>} : memref<2x32xf32, #tpu.memory_space<vmem>>, vector<2x32xf32>,
    %c0_206 = arith.constant 0 : index
    %c0_207 = arith.constant 0 : index
    %514 = vector.load %arg7[%c0_206, %c0_207] : memref<2x32xf32, #tpu.memory_space<vmem>>, vector<2x32xf32>
    tpu.vector_store %arg7[%c0_206, %c0_207], %510 {strides = array<i32>} : memref<2x32xf32, #tpu.memory_space<vmem>>, vector<2x32xf32>,
    %515 = arith.truncf %512 : vector<2x32xf32> to vector<2x32xbf16>
    %516 = arith.index_cast %477 : i32 to index
    %c0_208 = arith.constant 0 : index
    %c32_209 = arith.constant 32 : index
    %517 = vector.load %arg3[%516, %c0_208, %c32_209] : memref<8x2x64xbf16, #tpu.memory_space<vmem>>, vector<1x2x32xbf16>
    %518 = vector.shape_cast %517 : vector<1x2x32xbf16> to vector<2x32xbf16>
    %519 = vector.shape_cast %515 : vector<2x32xbf16> to vector<1x2x32xbf16>
    tpu.vector_store %arg3[%516, %c0_208, %c32_209], %519 {strides = array<i32>} : memref<8x2x64xbf16, #tpu.memory_space<vmem>>, vector<1x2x32xbf16>,
    %c6_i32 = arith.constant 6 : i32
    %520 = arith.index_cast %c6_i32 : i32 to index
    %c0_210 = arith.constant 0 : index
    %c0_211 = arith.constant 0 : index
    %521 = vector.load %arg0[%520, %c0_210, %c0_211] : memref<8x2x256xbf16, #tpu.memory_space<vmem>>, vector<1x2x256xbf16>
    %522 = vector.shape_cast %521 : vector<1x2x256xbf16> to vector<2x256xbf16>
    %523 = arith.extf %522 : vector<2x256xbf16> to vector<2x256xf32>
    %524 = vector.extract_strided_slice %523 {offsets = [0, 0], sizes = [2, 128], strides = [1, 1]} : vector<2x256xf32> to vector<2x128xf32>
    %c0_212 = arith.constant 0 : index
    %c0_213 = arith.constant 0 : index
    %525 = vector.load %arg4[%c0_212, %c0_213] : memref<2x32xf32, #tpu.memory_space<vmem>>, vector<2x32xf32>
    %526 = arith.truncf %525 : vector<2x32xf32> to vector<2x32xbf16>
    %cst_214 = arith.constant dense<0.000000e+00> : vector<2x128xf32>
    %527 = tpu.matmul %526, %8, %cst_214 {dimension_numbers = #tpu.dot_dimension_numbers<[1], [0], [0], [1], [0, 0, 1, 1], [], []>} : vector<2x32xbf16>, vector<32x128xbf16>, vector<2x128xf32> -> vector<2x128xf32>
    %528 = arith.addf %524, %527 : vector<2x128xf32>
    %c0_215 = arith.constant 0 : index
    %c0_216 = arith.constant 0 : index
    %529 = vector.load %arg5[%c0_215, %c0_216] : memref<2x32xf32, #tpu.memory_space<vmem>>, vector<2x32xf32>
    %530 = vector.extract_strided_slice %528 {offsets = [0, 0], sizes = [2, 32], strides = [1, 1]} : vector<2x128xf32> to vector<2x32xf32>
    %531 = arith.negf %530 : vector<2x32xf32>
    %532 = math.exp %531 : vector<2x32xf32>
    %cst_217 = arith.constant 1.000000e+00 : f32
    %533 = vector.broadcast %cst_217 : f32 to vector<2x32xf32>
    %534 = arith.addf %533, %532 : vector<2x32xf32>
    %535 = arith.divf %533, %534 : vector<2x32xf32>
    %536 = vector.extract_strided_slice %528 {offsets = [0, 32], sizes = [2, 32], strides = [1, 1]} : vector<2x128xf32> to vector<2x32xf32>
    %537 = arith.negf %536 : vector<2x32xf32>
    %538 = math.exp %537 : vector<2x32xf32>
    %cst_218 = arith.constant 1.000000e+00 : f32
    %539 = vector.broadcast %cst_218 : f32 to vector<2x32xf32>
    %540 = arith.addf %539, %538 : vector<2x32xf32>
    %541 = arith.divf %539, %540 : vector<2x32xf32>
    %542 = vector.extract_strided_slice %528 {offsets = [0, 64], sizes = [2, 32], strides = [1, 1]} : vector<2x128xf32> to vector<2x32xf32>
    %543 = math.tanh %542 : vector<2x32xf32>
    %544 = vector.extract_strided_slice %528 {offsets = [0, 96], sizes = [2, 32], strides = [1, 1]} : vector<2x128xf32> to vector<2x32xf32>
    %545 = arith.negf %544 : vector<2x32xf32>
    %546 = math.exp %545 : vector<2x32xf32>
    %cst_219 = arith.constant 1.000000e+00 : f32
    %547 = vector.broadcast %cst_219 : f32 to vector<2x32xf32>
    %548 = arith.addf %547, %546 : vector<2x32xf32>
    %549 = arith.divf %547, %548 : vector<2x32xf32>
    %550 = arith.mulf %541, %529 : vector<2x32xf32>
    %551 = arith.mulf %535, %543 : vector<2x32xf32>
    %552 = arith.addf %550, %551 : vector<2x32xf32>
    %553 = math.tanh %552 : vector<2x32xf32>
    %554 = arith.mulf %549, %553 : vector<2x32xf32>
    %c0_220 = arith.constant 0 : index
    %c0_221 = arith.constant 0 : index
    %555 = vector.load %arg4[%c0_220, %c0_221] : memref<2x32xf32, #tpu.memory_space<vmem>>, vector<2x32xf32>
    tpu.vector_store %arg4[%c0_220, %c0_221], %554 {strides = array<i32>} : memref<2x32xf32, #tpu.memory_space<vmem>>, vector<2x32xf32>,
    %c0_222 = arith.constant 0 : index
    %c0_223 = arith.constant 0 : index
    %556 = vector.load %arg5[%c0_222, %c0_223] : memref<2x32xf32, #tpu.memory_space<vmem>>, vector<2x32xf32>
    tpu.vector_store %arg5[%c0_222, %c0_223], %552 {strides = array<i32>} : memref<2x32xf32, #tpu.memory_space<vmem>>, vector<2x32xf32>,
    %557 = arith.truncf %554 : vector<2x32xf32> to vector<2x32xbf16>
    %558 = arith.index_cast %c6_i32 : i32 to index
    %c0_224 = arith.constant 0 : index
    %c0_225 = arith.constant 0 : index
    %559 = vector.load %arg3[%558, %c0_224, %c0_225] : memref<8x2x64xbf16, #tpu.memory_space<vmem>>, vector<1x2x32xbf16>
    %560 = vector.shape_cast %559 : vector<1x2x32xbf16> to vector<2x32xbf16>
    %561 = vector.shape_cast %557 : vector<2x32xbf16> to vector<1x2x32xbf16>
    tpu.vector_store %arg3[%558, %c0_224, %c0_225], %561 {strides = array<i32>} : memref<8x2x64xbf16, #tpu.memory_space<vmem>>, vector<1x2x32xbf16>,
    %c7_i32_226 = arith.constant 7 : i32
    %562 = arith.subi %c7_i32_226, %c6_i32 : i32
    %563 = arith.index_cast %562 : i32 to index
    %c0_227 = arith.constant 0 : index
    %c0_228 = arith.constant 0 : index
    %564 = vector.load %arg0[%563, %c0_227, %c0_228] : memref<8x2x256xbf16, #tpu.memory_space<vmem>>, vector<1x2x256xbf16>
    %565 = vector.shape_cast %564 : vector<1x2x256xbf16> to vector<2x256xbf16>
    %566 = arith.extf %565 : vector<2x256xbf16> to vector<2x256xf32>
    %567 = vector.extract_strided_slice %566 {offsets = [0, 128], sizes = [2, 128], strides = [1, 1]} : vector<2x256xf32> to vector<2x128xf32>
    %c0_229 = arith.constant 0 : index
    %c0_230 = arith.constant 0 : index
    %568 = vector.load %arg6[%c0_229, %c0_230] : memref<2x32xf32, #tpu.memory_space<vmem>>, vector<2x32xf32>
    %569 = arith.truncf %568 : vector<2x32xf32> to vector<2x32xbf16>
    %cst_231 = arith.constant dense<0.000000e+00> : vector<2x128xf32>
    %570 = tpu.matmul %569, %9, %cst_231 {dimension_numbers = #tpu.dot_dimension_numbers<[1], [0], [0], [1], [0, 0, 1, 1], [], []>} : vector<2x32xbf16>, vector<32x128xbf16>, vector<2x128xf32> -> vector<2x128xf32>
    %571 = arith.addf %567, %570 : vector<2x128xf32>
    %c0_232 = arith.constant 0 : index
    %c0_233 = arith.constant 0 : index
    %572 = vector.load %arg7[%c0_232, %c0_233] : memref<2x32xf32, #tpu.memory_space<vmem>>, vector<2x32xf32>
    %573 = vector.extract_strided_slice %571 {offsets = [0, 0], sizes = [2, 32], strides = [1, 1]} : vector<2x128xf32> to vector<2x32xf32>
    %574 = arith.negf %573 : vector<2x32xf32>
    %575 = math.exp %574 : vector<2x32xf32>
    %cst_234 = arith.constant 1.000000e+00 : f32
    %576 = vector.broadcast %cst_234 : f32 to vector<2x32xf32>
    %577 = arith.addf %576, %575 : vector<2x32xf32>
    %578 = arith.divf %576, %577 : vector<2x32xf32>
    %579 = vector.extract_strided_slice %571 {offsets = [0, 32], sizes = [2, 32], strides = [1, 1]} : vector<2x128xf32> to vector<2x32xf32>
    %580 = arith.negf %579 : vector<2x32xf32>
    %581 = math.exp %580 : vector<2x32xf32>
    %cst_235 = arith.constant 1.000000e+00 : f32
    %582 = vector.broadcast %cst_235 : f32 to vector<2x32xf32>
    %583 = arith.addf %582, %581 : vector<2x32xf32>
    %584 = arith.divf %582, %583 : vector<2x32xf32>
    %585 = vector.extract_strided_slice %571 {offsets = [0, 64], sizes = [2, 32], strides = [1, 1]} : vector<2x128xf32> to vector<2x32xf32>
    %586 = math.tanh %585 : vector<2x32xf32>
    %587 = vector.extract_strided_slice %571 {offsets = [0, 96], sizes = [2, 32], strides = [1, 1]} : vector<2x128xf32> to vector<2x32xf32>
    %588 = arith.negf %587 : vector<2x32xf32>
    %589 = math.exp %588 : vector<2x32xf32>
    %cst_236 = arith.constant 1.000000e+00 : f32
    %590 = vector.broadcast %cst_236 : f32 to vector<2x32xf32>
    %591 = arith.addf %590, %589 : vector<2x32xf32>
    %592 = arith.divf %590, %591 : vector<2x32xf32>
    %593 = arith.mulf %584, %572 : vector<2x32xf32>
    %594 = arith.mulf %578, %586 : vector<2x32xf32>
    %595 = arith.addf %593, %594 : vector<2x32xf32>
    %596 = math.tanh %595 : vector<2x32xf32>
    %597 = arith.mulf %592, %596 : vector<2x32xf32>
    %c0_237 = arith.constant 0 : index
    %c0_238 = arith.constant 0 : index
    %598 = vector.load %arg6[%c0_237, %c0_238] : memref<2x32xf32, #tpu.memory_space<vmem>>, vector<2x32xf32>
    tpu.vector_store %arg6[%c0_237, %c0_238], %597 {strides = array<i32>} : memref<2x32xf32, #tpu.memory_space<vmem>>, vector<2x32xf32>,
    %c0_239 = arith.constant 0 : index
    %c0_240 = arith.constant 0 : index
    %599 = vector.load %arg7[%c0_239, %c0_240] : memref<2x32xf32, #tpu.memory_space<vmem>>, vector<2x32xf32>
    tpu.vector_store %arg7[%c0_239, %c0_240], %595 {strides = array<i32>} : memref<2x32xf32, #tpu.memory_space<vmem>>, vector<2x32xf32>,
    %600 = arith.truncf %597 : vector<2x32xf32> to vector<2x32xbf16>
    %601 = arith.index_cast %562 : i32 to index
    %c0_241 = arith.constant 0 : index
    %c32_242 = arith.constant 32 : index
    %602 = vector.load %arg3[%601, %c0_241, %c32_242] : memref<8x2x64xbf16, #tpu.memory_space<vmem>>, vector<1x2x32xbf16>
    %603 = vector.shape_cast %602 : vector<1x2x32xbf16> to vector<2x32xbf16>
    %604 = vector.shape_cast %600 : vector<2x32xbf16> to vector<1x2x32xbf16>
    tpu.vector_store %arg3[%601, %c0_241, %c32_242], %604 {strides = array<i32>} : memref<8x2x64xbf16, #tpu.memory_space<vmem>>, vector<1x2x32xbf16>,
    %c7_i32_243 = arith.constant 7 : i32
    %605 = arith.index_cast %c7_i32_243 : i32 to index
    %c0_244 = arith.constant 0 : index
    %c0_245 = arith.constant 0 : index
    %606 = vector.load %arg0[%605, %c0_244, %c0_245] : memref<8x2x256xbf16, #tpu.memory_space<vmem>>, vector<1x2x256xbf16>
    %607 = vector.shape_cast %606 : vector<1x2x256xbf16> to vector<2x256xbf16>
    %608 = arith.extf %607 : vector<2x256xbf16> to vector<2x256xf32>
    %609 = vector.extract_strided_slice %608 {offsets = [0, 0], sizes = [2, 128], strides = [1, 1]} : vector<2x256xf32> to vector<2x128xf32>
    %c0_246 = arith.constant 0 : index
    %c0_247 = arith.constant 0 : index
    %610 = vector.load %arg4[%c0_246, %c0_247] : memref<2x32xf32, #tpu.memory_space<vmem>>, vector<2x32xf32>
    %611 = arith.truncf %610 : vector<2x32xf32> to vector<2x32xbf16>
    %cst_248 = arith.constant dense<0.000000e+00> : vector<2x128xf32>
    %612 = tpu.matmul %611, %8, %cst_248 {dimension_numbers = #tpu.dot_dimension_numbers<[1], [0], [0], [1], [0, 0, 1, 1], [], []>} : vector<2x32xbf16>, vector<32x128xbf16>, vector<2x128xf32> -> vector<2x128xf32>
    %613 = arith.addf %609, %612 : vector<2x128xf32>
    %c0_249 = arith.constant 0 : index
    %c0_250 = arith.constant 0 : index
    %614 = vector.load %arg5[%c0_249, %c0_250] : memref<2x32xf32, #tpu.memory_space<vmem>>, vector<2x32xf32>
    %615 = vector.extract_strided_slice %613 {offsets = [0, 0], sizes = [2, 32], strides = [1, 1]} : vector<2x128xf32> to vector<2x32xf32>
    %616 = arith.negf %615 : vector<2x32xf32>
    %617 = math.exp %616 : vector<2x32xf32>
    %cst_251 = arith.constant 1.000000e+00 : f32
    %618 = vector.broadcast %cst_251 : f32 to vector<2x32xf32>
    %619 = arith.addf %618, %617 : vector<2x32xf32>
    %620 = arith.divf %618, %619 : vector<2x32xf32>
    %621 = vector.extract_strided_slice %613 {offsets = [0, 32], sizes = [2, 32], strides = [1, 1]} : vector<2x128xf32> to vector<2x32xf32>
    %622 = arith.negf %621 : vector<2x32xf32>
    %623 = math.exp %622 : vector<2x32xf32>
    %cst_252 = arith.constant 1.000000e+00 : f32
    %624 = vector.broadcast %cst_252 : f32 to vector<2x32xf32>
    %625 = arith.addf %624, %623 : vector<2x32xf32>
    %626 = arith.divf %624, %625 : vector<2x32xf32>
    %627 = vector.extract_strided_slice %613 {offsets = [0, 64], sizes = [2, 32], strides = [1, 1]} : vector<2x128xf32> to vector<2x32xf32>
    %628 = math.tanh %627 : vector<2x32xf32>
    %629 = vector.extract_strided_slice %613 {offsets = [0, 96], sizes = [2, 32], strides = [1, 1]} : vector<2x128xf32> to vector<2x32xf32>
    %630 = arith.negf %629 : vector<2x32xf32>
    %631 = math.exp %630 : vector<2x32xf32>
    %cst_253 = arith.constant 1.000000e+00 : f32
    %632 = vector.broadcast %cst_253 : f32 to vector<2x32xf32>
    %633 = arith.addf %632, %631 : vector<2x32xf32>
    %634 = arith.divf %632, %633 : vector<2x32xf32>
    %635 = arith.mulf %626, %614 : vector<2x32xf32>
    %636 = arith.mulf %620, %628 : vector<2x32xf32>
    %637 = arith.addf %635, %636 : vector<2x32xf32>
    %638 = math.tanh %637 : vector<2x32xf32>
    %639 = arith.mulf %634, %638 : vector<2x32xf32>
    %c0_254 = arith.constant 0 : index
    %c0_255 = arith.constant 0 : index
    %640 = vector.load %arg4[%c0_254, %c0_255] : memref<2x32xf32, #tpu.memory_space<vmem>>, vector<2x32xf32>
    tpu.vector_store %arg4[%c0_254, %c0_255], %639 {strides = array<i32>} : memref<2x32xf32, #tpu.memory_space<vmem>>, vector<2x32xf32>,
    %c0_256 = arith.constant 0 : index
    %c0_257 = arith.constant 0 : index
    %641 = vector.load %arg5[%c0_256, %c0_257] : memref<2x32xf32, #tpu.memory_space<vmem>>, vector<2x32xf32>
    tpu.vector_store %arg5[%c0_256, %c0_257], %637 {strides = array<i32>} : memref<2x32xf32, #tpu.memory_space<vmem>>, vector<2x32xf32>,
    %642 = arith.truncf %639 : vector<2x32xf32> to vector<2x32xbf16>
    %643 = arith.index_cast %c7_i32_243 : i32 to index
    %c0_258 = arith.constant 0 : index
    %c0_259 = arith.constant 0 : index
    %644 = vector.load %arg3[%643, %c0_258, %c0_259] : memref<8x2x64xbf16, #tpu.memory_space<vmem>>, vector<1x2x32xbf16>
    %645 = vector.shape_cast %644 : vector<1x2x32xbf16> to vector<2x32xbf16>
    %646 = vector.shape_cast %642 : vector<2x32xbf16> to vector<1x2x32xbf16>
    tpu.vector_store %arg3[%643, %c0_258, %c0_259], %646 {strides = array<i32>} : memref<8x2x64xbf16, #tpu.memory_space<vmem>>, vector<1x2x32xbf16>,
    %c7_i32_260 = arith.constant 7 : i32
    %647 = arith.subi %c7_i32_260, %c7_i32_243 : i32
    %648 = arith.index_cast %647 : i32 to index
    %c0_261 = arith.constant 0 : index
    %c0_262 = arith.constant 0 : index
    %649 = vector.load %arg0[%648, %c0_261, %c0_262] : memref<8x2x256xbf16, #tpu.memory_space<vmem>>, vector<1x2x256xbf16>
    %650 = vector.shape_cast %649 : vector<1x2x256xbf16> to vector<2x256xbf16>
    %651 = arith.extf %650 : vector<2x256xbf16> to vector<2x256xf32>
    %652 = vector.extract_strided_slice %651 {offsets = [0, 128], sizes = [2, 128], strides = [1, 1]} : vector<2x256xf32> to vector<2x128xf32>
    %c0_263 = arith.constant 0 : index
    %c0_264 = arith.constant 0 : index
    %653 = vector.load %arg6[%c0_263, %c0_264] : memref<2x32xf32, #tpu.memory_space<vmem>>, vector<2x32xf32>
    %654 = arith.truncf %653 : vector<2x32xf32> to vector<2x32xbf16>
    %cst_265 = arith.constant dense<0.000000e+00> : vector<2x128xf32>
    %655 = tpu.matmul %654, %9, %cst_265 {dimension_numbers = #tpu.dot_dimension_numbers<[1], [0], [0], [1], [0, 0, 1, 1], [], []>} : vector<2x32xbf16>, vector<32x128xbf16>, vector<2x128xf32> -> vector<2x128xf32>
    %656 = arith.addf %652, %655 : vector<2x128xf32>
    %c0_266 = arith.constant 0 : index
    %c0_267 = arith.constant 0 : index
    %657 = vector.load %arg7[%c0_266, %c0_267] : memref<2x32xf32, #tpu.memory_space<vmem>>, vector<2x32xf32>
    %658 = vector.extract_strided_slice %656 {offsets = [0, 0], sizes = [2, 32], strides = [1, 1]} : vector<2x128xf32> to vector<2x32xf32>
    %659 = arith.negf %658 : vector<2x32xf32>
    %660 = math.exp %659 : vector<2x32xf32>
    %cst_268 = arith.constant 1.000000e+00 : f32
    %661 = vector.broadcast %cst_268 : f32 to vector<2x32xf32>
    %662 = arith.addf %661, %660 : vector<2x32xf32>
    %663 = arith.divf %661, %662 : vector<2x32xf32>
    %664 = vector.extract_strided_slice %656 {offsets = [0, 32], sizes = [2, 32], strides = [1, 1]} : vector<2x128xf32> to vector<2x32xf32>
    %665 = arith.negf %664 : vector<2x32xf32>
    %666 = math.exp %665 : vector<2x32xf32>
    %cst_269 = arith.constant 1.000000e+00 : f32
    %667 = vector.broadcast %cst_269 : f32 to vector<2x32xf32>
    %668 = arith.addf %667, %666 : vector<2x32xf32>
    %669 = arith.divf %667, %668 : vector<2x32xf32>
    %670 = vector.extract_strided_slice %656 {offsets = [0, 64], sizes = [2, 32], strides = [1, 1]} : vector<2x128xf32> to vector<2x32xf32>
    %671 = math.tanh %670 : vector<2x32xf32>
    %672 = vector.extract_strided_slice %656 {offsets = [0, 96], sizes = [2, 32], strides = [1, 1]} : vector<2x128xf32> to vector<2x32xf32>
    %673 = arith.negf %672 : vector<2x32xf32>
    %674 = math.exp %673 : vector<2x32xf32>
    %cst_270 = arith.constant 1.000000e+00 : f32
    %675 = vector.broadcast %cst_270 : f32 to vector<2x32xf32>
    %676 = arith.addf %675, %674 : vector<2x32xf32>
    %677 = arith.divf %675, %676 : vector<2x32xf32>
    %678 = arith.mulf %669, %657 : vector<2x32xf32>
    %679 = arith.mulf %663, %671 : vector<2x32xf32>
    %680 = arith.addf %678, %679 : vector<2x32xf32>
    %681 = math.tanh %680 : vector<2x32xf32>
    %682 = arith.mulf %677, %681 : vector<2x32xf32>
    %c0_271 = arith.constant 0 : index
    %c0_272 = arith.constant 0 : index
    %683 = vector.load %arg6[%c0_271, %c0_272] : memref<2x32xf32, #tpu.memory_space<vmem>>, vector<2x32xf32>
    tpu.vector_store %arg6[%c0_271, %c0_272], %682 {strides = array<i32>} : memref<2x32xf32, #tpu.memory_space<vmem>>, vector<2x32xf32>,
    %c0_273 = arith.constant 0 : index
    %c0_274 = arith.constant 0 : index
    %684 = vector.load %arg7[%c0_273, %c0_274] : memref<2x32xf32, #tpu.memory_space<vmem>>, vector<2x32xf32>
    tpu.vector_store %arg7[%c0_273, %c0_274], %680 {strides = array<i32>} : memref<2x32xf32, #tpu.memory_space<vmem>>, vector<2x32xf32>,
    %685 = arith.truncf %682 : vector<2x32xf32> to vector<2x32xbf16>
    %686 = arith.index_cast %647 : i32 to index
    %c0_275 = arith.constant 0 : index
    %c32_276 = arith.constant 32 : index
    %687 = vector.load %arg3[%686, %c0_275, %c32_276] : memref<8x2x64xbf16, #tpu.memory_space<vmem>>, vector<1x2x32xbf16>
    %688 = vector.shape_cast %687 : vector<1x2x32xbf16> to vector<2x32xbf16>
    %689 = vector.shape_cast %685 : vector<2x32xbf16> to vector<1x2x32xbf16>
    tpu.vector_store %arg3[%686, %c0_275, %c32_276], %689 {strides = array<i32>} : memref<8x2x64xbf16, #tpu.memory_space<vmem>>, vector<1x2x32xbf16>,
    %c8_i32 = arith.constant 8 : i32
    return
  }
}

module attributes {stable_mosaic.version = 11 : i64} {
  func.func @_linear_kernel(%arg0: i32, %arg1: memref<16x64xbf16, #tpu.memory_space<vmem>>, %arg2: memref<64x256xbf16, #tpu.memory_space<vmem>>, %arg3: memref<1x256xf32, #tpu.memory_space<vmem>>, %arg4: memref<16x256xbf16, #tpu.memory_space<vmem>>) attributes {dimension_semantics = [#tpu.dimension_semantics<parallel>], iteration_bounds = array<i64: 1>, scalar_prefetch = 0 : i64, scratch_operands = 0 : i64, tpu.core_type = #tpu.core_type<tc>, window_params = [{transform_indices = @transform_0, window_bounds = array<i64: 16, 64>}, {pipeline_mode = #tpu.pipeline_mode<synchronous>, transform_indices = @transform_1, window_bounds = array<i64: 64, 256>}, {pipeline_mode = #tpu.pipeline_mode<synchronous>, transform_indices = @transform_2, window_bounds = array<i64: 1, 256>}, {transform_indices = @transform_3, window_bounds = array<i64: 16, 256>}]} {
    %c0 = arith.constant 0 : index
    %c0_0 = arith.constant 0 : index
    %0 = vector.load %arg1[%c0, %c0_0] : memref<16x64xbf16, #tpu.memory_space<vmem>>, vector<16x64xbf16>
    %c0_1 = arith.constant 0 : index
    %c0_2 = arith.constant 0 : index
    %1 = vector.load %arg2[%c0_1, %c0_2] : memref<64x256xbf16, #tpu.memory_space<vmem>>, vector<64x256xbf16>
    %cst = arith.constant dense<0.000000e+00> : vector<16x256xf32>
    %2 = tpu.matmul %0, %1, %cst {dimension_numbers = #tpu.dot_dimension_numbers<[1], [0], [0], [1], [0, 0, 1, 1], [], []>} : vector<16x64xbf16>, vector<64x256xbf16>, vector<16x256xf32> -> vector<16x256xf32>
    %c0_3 = arith.constant 0 : index
    %c0_4 = arith.constant 0 : index
    %3 = vector.load %arg3[%c0_3, %c0_4] : memref<1x256xf32, #tpu.memory_space<vmem>>, vector<1x256xf32>
    %4 = vector.broadcast %3 : vector<1x256xf32> to vector<16x256xf32>
    %5 = arith.addf %2, %4 : vector<16x256xf32>
    %6 = arith.truncf %5 : vector<16x256xf32> to vector<16x256xbf16>
    %c0_5 = arith.constant 0 : index
    %c0_6 = arith.constant 0 : index
    %7 = vector.load %arg4[%c0_5, %c0_6] : memref<16x256xbf16, #tpu.memory_space<vmem>>, vector<16x256xbf16>
    tpu.vector_store %arg4[%c0_5, %c0_6], %6 {strides = array<i32>} : memref<16x256xbf16, #tpu.memory_space<vmem>>, vector<16x256xbf16>,
    return
  }
  func.func @transform_0(%arg0: i32) -> (i32, i32) {
    %c0_i32 = arith.constant 0 : i32
    %c0_i32_0 = arith.constant 0 : i32
    return %arg0, %c0_i32 : i32, i32
  }
  func.func @transform_1(%arg0: i32) -> (i32, i32) {
    %c0_i32 = arith.constant 0 : i32
    %c0_i32_0 = arith.constant 0 : i32
    %c0_i32_1 = arith.constant 0 : i32
    return %c0_i32, %c0_i32_0 : i32, i32
  }
  func.func @transform_2(%arg0: i32) -> (i32, i32) {
    %c0_i32 = arith.constant 0 : i32
    %c0_i32_0 = arith.constant 0 : i32
    %c0_i32_1 = arith.constant 0 : i32
    return %c0_i32, %c0_i32_0 : i32, i32
  }
  func.func @transform_3(%arg0: i32) -> (i32, i32) {
    %c0_i32 = arith.constant 0 : i32
    %c0_i32_0 = arith.constant 0 : i32
    return %arg0, %c0_i32 : i32, i32
  }
}

module attributes {stable_mosaic.version = 11 : i64} {
  func.func @_bilstm_kernel(%arg0: memref<8x2x256xbf16, #tpu.memory_space<vmem>>, %arg1: memref<32x128xbf16, #tpu.memory_space<vmem>>, %arg2: memref<32x128xbf16, #tpu.memory_space<vmem>>, %arg3: memref<1x2x64xbf16, #tpu.memory_space<vmem>>, %arg4: memref<2x32xf32, #tpu.memory_space<vmem>>, %arg5: memref<2x32xf32, #tpu.memory_space<vmem>>, %arg6: memref<2x32xf32, #tpu.memory_space<vmem>>, %arg7: memref<2x32xf32, #tpu.memory_space<vmem>>) attributes {dimension_semantics = [], scalar_prefetch = 0 : i64, scratch_operands = 4 : i64, tpu.core_type = #tpu.core_type<tc>} {
    %cst = arith.constant 0.000000e+00 : f32
    %0 = vector.broadcast %cst : f32 to vector<2x32xf32>
    %c0 = arith.constant 0 : index
    %c0_0 = arith.constant 0 : index
    %1 = vector.load %arg4[%c0, %c0_0] : memref<2x32xf32, #tpu.memory_space<vmem>>, vector<2x32xf32>
    tpu.vector_store %arg4[%c0, %c0_0], %0 {strides = array<i32>} : memref<2x32xf32, #tpu.memory_space<vmem>>, vector<2x32xf32>,
    %cst_1 = arith.constant 0.000000e+00 : f32
    %2 = vector.broadcast %cst_1 : f32 to vector<2x32xf32>
    %c0_2 = arith.constant 0 : index
    %c0_3 = arith.constant 0 : index
    %3 = vector.load %arg5[%c0_2, %c0_3] : memref<2x32xf32, #tpu.memory_space<vmem>>, vector<2x32xf32>
    tpu.vector_store %arg5[%c0_2, %c0_3], %2 {strides = array<i32>} : memref<2x32xf32, #tpu.memory_space<vmem>>, vector<2x32xf32>,
    %cst_4 = arith.constant 0.000000e+00 : f32
    %4 = vector.broadcast %cst_4 : f32 to vector<2x32xf32>
    %c0_5 = arith.constant 0 : index
    %c0_6 = arith.constant 0 : index
    %5 = vector.load %arg6[%c0_5, %c0_6] : memref<2x32xf32, #tpu.memory_space<vmem>>, vector<2x32xf32>
    tpu.vector_store %arg6[%c0_5, %c0_6], %4 {strides = array<i32>} : memref<2x32xf32, #tpu.memory_space<vmem>>, vector<2x32xf32>,
    %cst_7 = arith.constant 0.000000e+00 : f32
    %6 = vector.broadcast %cst_7 : f32 to vector<2x32xf32>
    %c0_8 = arith.constant 0 : index
    %c0_9 = arith.constant 0 : index
    %7 = vector.load %arg7[%c0_8, %c0_9] : memref<2x32xf32, #tpu.memory_space<vmem>>, vector<2x32xf32>
    tpu.vector_store %arg7[%c0_8, %c0_9], %6 {strides = array<i32>} : memref<2x32xf32, #tpu.memory_space<vmem>>, vector<2x32xf32>,
    %c0_10 = arith.constant 0 : index
    %c0_11 = arith.constant 0 : index
    %8 = vector.load %arg1[%c0_10, %c0_11] : memref<32x128xbf16, #tpu.memory_space<vmem>>, vector<32x128xbf16>
    %c0_12 = arith.constant 0 : index
    %c0_13 = arith.constant 0 : index
    %9 = vector.load %arg2[%c0_12, %c0_13] : memref<32x128xbf16, #tpu.memory_space<vmem>>, vector<32x128xbf16>
    %c0_i32 = arith.constant 0 : i32
    %10 = arith.index_cast %c0_i32 : i32 to index
    %c0_14 = arith.constant 0 : index
    %c0_15 = arith.constant 0 : index
    %11 = vector.load %arg0[%10, %c0_14, %c0_15] : memref<8x2x256xbf16, #tpu.memory_space<vmem>>, vector<1x2x256xbf16>
    %12 = vector.shape_cast %11 : vector<1x2x256xbf16> to vector<2x256xbf16>
    %13 = arith.extf %12 : vector<2x256xbf16> to vector<2x256xf32>
    %14 = vector.extract_strided_slice %13 {offsets = [0, 0], sizes = [2, 128], strides = [1, 1]} : vector<2x256xf32> to vector<2x128xf32>
    %c0_16 = arith.constant 0 : index
    %c0_17 = arith.constant 0 : index
    %15 = vector.load %arg4[%c0_16, %c0_17] : memref<2x32xf32, #tpu.memory_space<vmem>>, vector<2x32xf32>
    %16 = arith.truncf %15 : vector<2x32xf32> to vector<2x32xbf16>
    %cst_18 = arith.constant dense<0.000000e+00> : vector<2x128xf32>
    %17 = tpu.matmul %16, %8, %cst_18 {dimension_numbers = #tpu.dot_dimension_numbers<[1], [0], [0], [1], [0, 0, 1, 1], [], []>} : vector<2x32xbf16>, vector<32x128xbf16>, vector<2x128xf32> -> vector<2x128xf32>
    %18 = arith.addf %14, %17 : vector<2x128xf32>
    %c0_19 = arith.constant 0 : index
    %c0_20 = arith.constant 0 : index
    %19 = vector.load %arg5[%c0_19, %c0_20] : memref<2x32xf32, #tpu.memory_space<vmem>>, vector<2x32xf32>
    %20 = vector.extract_strided_slice %18 {offsets = [0, 0], sizes = [2, 32], strides = [1, 1]} : vector<2x128xf32> to vector<2x32xf32>
    %21 = arith.negf %20 : vector<2x32xf32>
    %22 = math.exp %21 : vector<2x32xf32>
    %cst_21 = arith.constant 1.000000e+00 : f32
    %23 = vector.broadcast %cst_21 : f32 to vector<2x32xf32>
    %24 = arith.addf %23, %22 : vector<2x32xf32>
    %25 = arith.divf %23, %24 : vector<2x32xf32>
    %26 = vector.extract_strided_slice %18 {offsets = [0, 32], sizes = [2, 32], strides = [1, 1]} : vector<2x128xf32> to vector<2x32xf32>
    %27 = arith.negf %26 : vector<2x32xf32>
    %28 = math.exp %27 : vector<2x32xf32>
    %cst_22 = arith.constant 1.000000e+00 : f32
    %29 = vector.broadcast %cst_22 : f32 to vector<2x32xf32>
    %30 = arith.addf %29, %28 : vector<2x32xf32>
    %31 = arith.divf %29, %30 : vector<2x32xf32>
    %32 = vector.extract_strided_slice %18 {offsets = [0, 64], sizes = [2, 32], strides = [1, 1]} : vector<2x128xf32> to vector<2x32xf32>
    %33 = math.tanh %32 : vector<2x32xf32>
    %34 = vector.extract_strided_slice %18 {offsets = [0, 96], sizes = [2, 32], strides = [1, 1]} : vector<2x128xf32> to vector<2x32xf32>
    %35 = arith.negf %34 : vector<2x32xf32>
    %36 = math.exp %35 : vector<2x32xf32>
    %cst_23 = arith.constant 1.000000e+00 : f32
    %37 = vector.broadcast %cst_23 : f32 to vector<2x32xf32>
    %38 = arith.addf %37, %36 : vector<2x32xf32>
    %39 = arith.divf %37, %38 : vector<2x32xf32>
    %40 = arith.mulf %31, %19 : vector<2x32xf32>
    %41 = arith.mulf %25, %33 : vector<2x32xf32>
    %42 = arith.addf %40, %41 : vector<2x32xf32>
    %43 = math.tanh %42 : vector<2x32xf32>
    %44 = arith.mulf %39, %43 : vector<2x32xf32>
    %c0_24 = arith.constant 0 : index
    %c0_25 = arith.constant 0 : index
    %45 = vector.load %arg4[%c0_24, %c0_25] : memref<2x32xf32, #tpu.memory_space<vmem>>, vector<2x32xf32>
    tpu.vector_store %arg4[%c0_24, %c0_25], %44 {strides = array<i32>} : memref<2x32xf32, #tpu.memory_space<vmem>>, vector<2x32xf32>,
    %c0_26 = arith.constant 0 : index
    %c0_27 = arith.constant 0 : index
    %46 = vector.load %arg5[%c0_26, %c0_27] : memref<2x32xf32, #tpu.memory_space<vmem>>, vector<2x32xf32>
    tpu.vector_store %arg5[%c0_26, %c0_27], %42 {strides = array<i32>} : memref<2x32xf32, #tpu.memory_space<vmem>>, vector<2x32xf32>,
    %c7_i32 = arith.constant 7 : i32
    %47 = arith.cmpi eq, %c0_i32, %c7_i32 : i32
    %48 = arith.extui %47 : i1 to i32
    %c0_i32_28 = arith.constant 0 : i32
    %49 = arith.cmpi ne, %48, %c0_i32_28 : i32
    scf.if %49 {
      %658 = arith.truncf %44 : vector<2x32xf32> to vector<2x32xbf16>
      %c0_278 = arith.constant 0 : index
      %c0_279 = arith.constant 0 : index
      %c0_280 = arith.constant 0 : index
      %659 = vector.load %arg3[%c0_278, %c0_279, %c0_280] : memref<1x2x64xbf16, #tpu.memory_space<vmem>>, vector<1x2x32xbf16>
      %660 = vector.shape_cast %659 : vector<1x2x32xbf16> to vector<2x32xbf16>
      %661 = vector.shape_cast %658 : vector<2x32xbf16> to vector<1x2x32xbf16>
      tpu.vector_store %arg3[%c0_278, %c0_279, %c0_280], %661 {strides = array<i32>} : memref<1x2x64xbf16, #tpu.memory_space<vmem>>, vector<1x2x32xbf16>,
    } else {
    }
    %c7_i32_29 = arith.constant 7 : i32
    %50 = arith.subi %c7_i32_29, %c0_i32 : i32
    %51 = arith.index_cast %50 : i32 to index
    %c0_30 = arith.constant 0 : index
    %c0_31 = arith.constant 0 : index
    %52 = vector.load %arg0[%51, %c0_30, %c0_31] : memref<8x2x256xbf16, #tpu.memory_space<vmem>>, vector<1x2x256xbf16>
    %53 = vector.shape_cast %52 : vector<1x2x256xbf16> to vector<2x256xbf16>
    %54 = arith.extf %53 : vector<2x256xbf16> to vector<2x256xf32>
    %55 = vector.extract_strided_slice %54 {offsets = [0, 128], sizes = [2, 128], strides = [1, 1]} : vector<2x256xf32> to vector<2x128xf32>
    %c0_32 = arith.constant 0 : index
    %c0_33 = arith.constant 0 : index
    %56 = vector.load %arg6[%c0_32, %c0_33] : memref<2x32xf32, #tpu.memory_space<vmem>>, vector<2x32xf32>
    %57 = arith.truncf %56 : vector<2x32xf32> to vector<2x32xbf16>
    %cst_34 = arith.constant dense<0.000000e+00> : vector<2x128xf32>
    %58 = tpu.matmul %57, %9, %cst_34 {dimension_numbers = #tpu.dot_dimension_numbers<[1], [0], [0], [1], [0, 0, 1, 1], [], []>} : vector<2x32xbf16>, vector<32x128xbf16>, vector<2x128xf32> -> vector<2x128xf32>
    %59 = arith.addf %55, %58 : vector<2x128xf32>
    %c0_35 = arith.constant 0 : index
    %c0_36 = arith.constant 0 : index
    %60 = vector.load %arg7[%c0_35, %c0_36] : memref<2x32xf32, #tpu.memory_space<vmem>>, vector<2x32xf32>
    %61 = vector.extract_strided_slice %59 {offsets = [0, 0], sizes = [2, 32], strides = [1, 1]} : vector<2x128xf32> to vector<2x32xf32>
    %62 = arith.negf %61 : vector<2x32xf32>
    %63 = math.exp %62 : vector<2x32xf32>
    %cst_37 = arith.constant 1.000000e+00 : f32
    %64 = vector.broadcast %cst_37 : f32 to vector<2x32xf32>
    %65 = arith.addf %64, %63 : vector<2x32xf32>
    %66 = arith.divf %64, %65 : vector<2x32xf32>
    %67 = vector.extract_strided_slice %59 {offsets = [0, 32], sizes = [2, 32], strides = [1, 1]} : vector<2x128xf32> to vector<2x32xf32>
    %68 = arith.negf %67 : vector<2x32xf32>
    %69 = math.exp %68 : vector<2x32xf32>
    %cst_38 = arith.constant 1.000000e+00 : f32
    %70 = vector.broadcast %cst_38 : f32 to vector<2x32xf32>
    %71 = arith.addf %70, %69 : vector<2x32xf32>
    %72 = arith.divf %70, %71 : vector<2x32xf32>
    %73 = vector.extract_strided_slice %59 {offsets = [0, 64], sizes = [2, 32], strides = [1, 1]} : vector<2x128xf32> to vector<2x32xf32>
    %74 = math.tanh %73 : vector<2x32xf32>
    %75 = vector.extract_strided_slice %59 {offsets = [0, 96], sizes = [2, 32], strides = [1, 1]} : vector<2x128xf32> to vector<2x32xf32>
    %76 = arith.negf %75 : vector<2x32xf32>
    %77 = math.exp %76 : vector<2x32xf32>
    %cst_39 = arith.constant 1.000000e+00 : f32
    %78 = vector.broadcast %cst_39 : f32 to vector<2x32xf32>
    %79 = arith.addf %78, %77 : vector<2x32xf32>
    %80 = arith.divf %78, %79 : vector<2x32xf32>
    %81 = arith.mulf %72, %60 : vector<2x32xf32>
    %82 = arith.mulf %66, %74 : vector<2x32xf32>
    %83 = arith.addf %81, %82 : vector<2x32xf32>
    %84 = math.tanh %83 : vector<2x32xf32>
    %85 = arith.mulf %80, %84 : vector<2x32xf32>
    %c0_40 = arith.constant 0 : index
    %c0_41 = arith.constant 0 : index
    %86 = vector.load %arg6[%c0_40, %c0_41] : memref<2x32xf32, #tpu.memory_space<vmem>>, vector<2x32xf32>
    tpu.vector_store %arg6[%c0_40, %c0_41], %85 {strides = array<i32>} : memref<2x32xf32, #tpu.memory_space<vmem>>, vector<2x32xf32>,
    %c0_42 = arith.constant 0 : index
    %c0_43 = arith.constant 0 : index
    %87 = vector.load %arg7[%c0_42, %c0_43] : memref<2x32xf32, #tpu.memory_space<vmem>>, vector<2x32xf32>
    tpu.vector_store %arg7[%c0_42, %c0_43], %83 {strides = array<i32>} : memref<2x32xf32, #tpu.memory_space<vmem>>, vector<2x32xf32>,
    %c0_i32_44 = arith.constant 0 : i32
    %88 = arith.cmpi eq, %c0_i32, %c0_i32_44 : i32
    %89 = arith.extui %88 : i1 to i32
    %c0_i32_45 = arith.constant 0 : i32
    %90 = arith.cmpi ne, %89, %c0_i32_45 : i32
    scf.if %90 {
      %658 = arith.truncf %85 : vector<2x32xf32> to vector<2x32xbf16>
      %c0_278 = arith.constant 0 : index
      %c0_279 = arith.constant 0 : index
      %c32 = arith.constant 32 : index
      %659 = vector.load %arg3[%c0_278, %c0_279, %c32] : memref<1x2x64xbf16, #tpu.memory_space<vmem>>, vector<1x2x32xbf16>
      %660 = vector.shape_cast %659 : vector<1x2x32xbf16> to vector<2x32xbf16>
      %661 = vector.shape_cast %658 : vector<2x32xbf16> to vector<1x2x32xbf16>
      tpu.vector_store %arg3[%c0_278, %c0_279, %c32], %661 {strides = array<i32>} : memref<1x2x64xbf16, #tpu.memory_space<vmem>>, vector<1x2x32xbf16>,
    } else {
    }
    %c1_i32 = arith.constant 1 : i32
    %91 = arith.index_cast %c1_i32 : i32 to index
    %c0_46 = arith.constant 0 : index
    %c0_47 = arith.constant 0 : index
    %92 = vector.load %arg0[%91, %c0_46, %c0_47] : memref<8x2x256xbf16, #tpu.memory_space<vmem>>, vector<1x2x256xbf16>
    %93 = vector.shape_cast %92 : vector<1x2x256xbf16> to vector<2x256xbf16>
    %94 = arith.extf %93 : vector<2x256xbf16> to vector<2x256xf32>
    %95 = vector.extract_strided_slice %94 {offsets = [0, 0], sizes = [2, 128], strides = [1, 1]} : vector<2x256xf32> to vector<2x128xf32>
    %c0_48 = arith.constant 0 : index
    %c0_49 = arith.constant 0 : index
    %96 = vector.load %arg4[%c0_48, %c0_49] : memref<2x32xf32, #tpu.memory_space<vmem>>, vector<2x32xf32>
    %97 = arith.truncf %96 : vector<2x32xf32> to vector<2x32xbf16>
    %cst_50 = arith.constant dense<0.000000e+00> : vector<2x128xf32>
    %98 = tpu.matmul %97, %8, %cst_50 {dimension_numbers = #tpu.dot_dimension_numbers<[1], [0], [0], [1], [0, 0, 1, 1], [], []>} : vector<2x32xbf16>, vector<32x128xbf16>, vector<2x128xf32> -> vector<2x128xf32>
    %99 = arith.addf %95, %98 : vector<2x128xf32>
    %c0_51 = arith.constant 0 : index
    %c0_52 = arith.constant 0 : index
    %100 = vector.load %arg5[%c0_51, %c0_52] : memref<2x32xf32, #tpu.memory_space<vmem>>, vector<2x32xf32>
    %101 = vector.extract_strided_slice %99 {offsets = [0, 0], sizes = [2, 32], strides = [1, 1]} : vector<2x128xf32> to vector<2x32xf32>
    %102 = arith.negf %101 : vector<2x32xf32>
    %103 = math.exp %102 : vector<2x32xf32>
    %cst_53 = arith.constant 1.000000e+00 : f32
    %104 = vector.broadcast %cst_53 : f32 to vector<2x32xf32>
    %105 = arith.addf %104, %103 : vector<2x32xf32>
    %106 = arith.divf %104, %105 : vector<2x32xf32>
    %107 = vector.extract_strided_slice %99 {offsets = [0, 32], sizes = [2, 32], strides = [1, 1]} : vector<2x128xf32> to vector<2x32xf32>
    %108 = arith.negf %107 : vector<2x32xf32>
    %109 = math.exp %108 : vector<2x32xf32>
    %cst_54 = arith.constant 1.000000e+00 : f32
    %110 = vector.broadcast %cst_54 : f32 to vector<2x32xf32>
    %111 = arith.addf %110, %109 : vector<2x32xf32>
    %112 = arith.divf %110, %111 : vector<2x32xf32>
    %113 = vector.extract_strided_slice %99 {offsets = [0, 64], sizes = [2, 32], strides = [1, 1]} : vector<2x128xf32> to vector<2x32xf32>
    %114 = math.tanh %113 : vector<2x32xf32>
    %115 = vector.extract_strided_slice %99 {offsets = [0, 96], sizes = [2, 32], strides = [1, 1]} : vector<2x128xf32> to vector<2x32xf32>
    %116 = arith.negf %115 : vector<2x32xf32>
    %117 = math.exp %116 : vector<2x32xf32>
    %cst_55 = arith.constant 1.000000e+00 : f32
    %118 = vector.broadcast %cst_55 : f32 to vector<2x32xf32>
    %119 = arith.addf %118, %117 : vector<2x32xf32>
    %120 = arith.divf %118, %119 : vector<2x32xf32>
    %121 = arith.mulf %112, %100 : vector<2x32xf32>
    %122 = arith.mulf %106, %114 : vector<2x32xf32>
    %123 = arith.addf %121, %122 : vector<2x32xf32>
    %124 = math.tanh %123 : vector<2x32xf32>
    %125 = arith.mulf %120, %124 : vector<2x32xf32>
    %c0_56 = arith.constant 0 : index
    %c0_57 = arith.constant 0 : index
    %126 = vector.load %arg4[%c0_56, %c0_57] : memref<2x32xf32, #tpu.memory_space<vmem>>, vector<2x32xf32>
    tpu.vector_store %arg4[%c0_56, %c0_57], %125 {strides = array<i32>} : memref<2x32xf32, #tpu.memory_space<vmem>>, vector<2x32xf32>,
    %c0_58 = arith.constant 0 : index
    %c0_59 = arith.constant 0 : index
    %127 = vector.load %arg5[%c0_58, %c0_59] : memref<2x32xf32, #tpu.memory_space<vmem>>, vector<2x32xf32>
    tpu.vector_store %arg5[%c0_58, %c0_59], %123 {strides = array<i32>} : memref<2x32xf32, #tpu.memory_space<vmem>>, vector<2x32xf32>,
    %c7_i32_60 = arith.constant 7 : i32
    %128 = arith.cmpi eq, %c1_i32, %c7_i32_60 : i32
    %129 = arith.extui %128 : i1 to i32
    %c0_i32_61 = arith.constant 0 : i32
    %130 = arith.cmpi ne, %129, %c0_i32_61 : i32
    scf.if %130 {
      %658 = arith.truncf %125 : vector<2x32xf32> to vector<2x32xbf16>
      %c0_278 = arith.constant 0 : index
      %c0_279 = arith.constant 0 : index
      %c0_280 = arith.constant 0 : index
      %659 = vector.load %arg3[%c0_278, %c0_279, %c0_280] : memref<1x2x64xbf16, #tpu.memory_space<vmem>>, vector<1x2x32xbf16>
      %660 = vector.shape_cast %659 : vector<1x2x32xbf16> to vector<2x32xbf16>
      %661 = vector.shape_cast %658 : vector<2x32xbf16> to vector<1x2x32xbf16>
      tpu.vector_store %arg3[%c0_278, %c0_279, %c0_280], %661 {strides = array<i32>} : memref<1x2x64xbf16, #tpu.memory_space<vmem>>, vector<1x2x32xbf16>,
    } else {
    }
    %c7_i32_62 = arith.constant 7 : i32
    %131 = arith.subi %c7_i32_62, %c1_i32 : i32
    %132 = arith.index_cast %131 : i32 to index
    %c0_63 = arith.constant 0 : index
    %c0_64 = arith.constant 0 : index
    %133 = vector.load %arg0[%132, %c0_63, %c0_64] : memref<8x2x256xbf16, #tpu.memory_space<vmem>>, vector<1x2x256xbf16>
    %134 = vector.shape_cast %133 : vector<1x2x256xbf16> to vector<2x256xbf16>
    %135 = arith.extf %134 : vector<2x256xbf16> to vector<2x256xf32>
    %136 = vector.extract_strided_slice %135 {offsets = [0, 128], sizes = [2, 128], strides = [1, 1]} : vector<2x256xf32> to vector<2x128xf32>
    %c0_65 = arith.constant 0 : index
    %c0_66 = arith.constant 0 : index
    %137 = vector.load %arg6[%c0_65, %c0_66] : memref<2x32xf32, #tpu.memory_space<vmem>>, vector<2x32xf32>
    %138 = arith.truncf %137 : vector<2x32xf32> to vector<2x32xbf16>
    %cst_67 = arith.constant dense<0.000000e+00> : vector<2x128xf32>
    %139 = tpu.matmul %138, %9, %cst_67 {dimension_numbers = #tpu.dot_dimension_numbers<[1], [0], [0], [1], [0, 0, 1, 1], [], []>} : vector<2x32xbf16>, vector<32x128xbf16>, vector<2x128xf32> -> vector<2x128xf32>
    %140 = arith.addf %136, %139 : vector<2x128xf32>
    %c0_68 = arith.constant 0 : index
    %c0_69 = arith.constant 0 : index
    %141 = vector.load %arg7[%c0_68, %c0_69] : memref<2x32xf32, #tpu.memory_space<vmem>>, vector<2x32xf32>
    %142 = vector.extract_strided_slice %140 {offsets = [0, 0], sizes = [2, 32], strides = [1, 1]} : vector<2x128xf32> to vector<2x32xf32>
    %143 = arith.negf %142 : vector<2x32xf32>
    %144 = math.exp %143 : vector<2x32xf32>
    %cst_70 = arith.constant 1.000000e+00 : f32
    %145 = vector.broadcast %cst_70 : f32 to vector<2x32xf32>
    %146 = arith.addf %145, %144 : vector<2x32xf32>
    %147 = arith.divf %145, %146 : vector<2x32xf32>
    %148 = vector.extract_strided_slice %140 {offsets = [0, 32], sizes = [2, 32], strides = [1, 1]} : vector<2x128xf32> to vector<2x32xf32>
    %149 = arith.negf %148 : vector<2x32xf32>
    %150 = math.exp %149 : vector<2x32xf32>
    %cst_71 = arith.constant 1.000000e+00 : f32
    %151 = vector.broadcast %cst_71 : f32 to vector<2x32xf32>
    %152 = arith.addf %151, %150 : vector<2x32xf32>
    %153 = arith.divf %151, %152 : vector<2x32xf32>
    %154 = vector.extract_strided_slice %140 {offsets = [0, 64], sizes = [2, 32], strides = [1, 1]} : vector<2x128xf32> to vector<2x32xf32>
    %155 = math.tanh %154 : vector<2x32xf32>
    %156 = vector.extract_strided_slice %140 {offsets = [0, 96], sizes = [2, 32], strides = [1, 1]} : vector<2x128xf32> to vector<2x32xf32>
    %157 = arith.negf %156 : vector<2x32xf32>
    %158 = math.exp %157 : vector<2x32xf32>
    %cst_72 = arith.constant 1.000000e+00 : f32
    %159 = vector.broadcast %cst_72 : f32 to vector<2x32xf32>
    %160 = arith.addf %159, %158 : vector<2x32xf32>
    %161 = arith.divf %159, %160 : vector<2x32xf32>
    %162 = arith.mulf %153, %141 : vector<2x32xf32>
    %163 = arith.mulf %147, %155 : vector<2x32xf32>
    %164 = arith.addf %162, %163 : vector<2x32xf32>
    %165 = math.tanh %164 : vector<2x32xf32>
    %166 = arith.mulf %161, %165 : vector<2x32xf32>
    %c0_73 = arith.constant 0 : index
    %c0_74 = arith.constant 0 : index
    %167 = vector.load %arg6[%c0_73, %c0_74] : memref<2x32xf32, #tpu.memory_space<vmem>>, vector<2x32xf32>
    tpu.vector_store %arg6[%c0_73, %c0_74], %166 {strides = array<i32>} : memref<2x32xf32, #tpu.memory_space<vmem>>, vector<2x32xf32>,
    %c0_75 = arith.constant 0 : index
    %c0_76 = arith.constant 0 : index
    %168 = vector.load %arg7[%c0_75, %c0_76] : memref<2x32xf32, #tpu.memory_space<vmem>>, vector<2x32xf32>
    tpu.vector_store %arg7[%c0_75, %c0_76], %164 {strides = array<i32>} : memref<2x32xf32, #tpu.memory_space<vmem>>, vector<2x32xf32>,
    %c0_i32_77 = arith.constant 0 : i32
    %169 = arith.cmpi eq, %c1_i32, %c0_i32_77 : i32
    %170 = arith.extui %169 : i1 to i32
    %c0_i32_78 = arith.constant 0 : i32
    %171 = arith.cmpi ne, %170, %c0_i32_78 : i32
    scf.if %171 {
      %658 = arith.truncf %166 : vector<2x32xf32> to vector<2x32xbf16>
      %c0_278 = arith.constant 0 : index
      %c0_279 = arith.constant 0 : index
      %c32 = arith.constant 32 : index
      %659 = vector.load %arg3[%c0_278, %c0_279, %c32] : memref<1x2x64xbf16, #tpu.memory_space<vmem>>, vector<1x2x32xbf16>
      %660 = vector.shape_cast %659 : vector<1x2x32xbf16> to vector<2x32xbf16>
      %661 = vector.shape_cast %658 : vector<2x32xbf16> to vector<1x2x32xbf16>
      tpu.vector_store %arg3[%c0_278, %c0_279, %c32], %661 {strides = array<i32>} : memref<1x2x64xbf16, #tpu.memory_space<vmem>>, vector<1x2x32xbf16>,
    } else {
    }
    %c2_i32 = arith.constant 2 : i32
    %172 = arith.index_cast %c2_i32 : i32 to index
    %c0_79 = arith.constant 0 : index
    %c0_80 = arith.constant 0 : index
    %173 = vector.load %arg0[%172, %c0_79, %c0_80] : memref<8x2x256xbf16, #tpu.memory_space<vmem>>, vector<1x2x256xbf16>
    %174 = vector.shape_cast %173 : vector<1x2x256xbf16> to vector<2x256xbf16>
    %175 = arith.extf %174 : vector<2x256xbf16> to vector<2x256xf32>
    %176 = vector.extract_strided_slice %175 {offsets = [0, 0], sizes = [2, 128], strides = [1, 1]} : vector<2x256xf32> to vector<2x128xf32>
    %c0_81 = arith.constant 0 : index
    %c0_82 = arith.constant 0 : index
    %177 = vector.load %arg4[%c0_81, %c0_82] : memref<2x32xf32, #tpu.memory_space<vmem>>, vector<2x32xf32>
    %178 = arith.truncf %177 : vector<2x32xf32> to vector<2x32xbf16>
    %cst_83 = arith.constant dense<0.000000e+00> : vector<2x128xf32>
    %179 = tpu.matmul %178, %8, %cst_83 {dimension_numbers = #tpu.dot_dimension_numbers<[1], [0], [0], [1], [0, 0, 1, 1], [], []>} : vector<2x32xbf16>, vector<32x128xbf16>, vector<2x128xf32> -> vector<2x128xf32>
    %180 = arith.addf %176, %179 : vector<2x128xf32>
    %c0_84 = arith.constant 0 : index
    %c0_85 = arith.constant 0 : index
    %181 = vector.load %arg5[%c0_84, %c0_85] : memref<2x32xf32, #tpu.memory_space<vmem>>, vector<2x32xf32>
    %182 = vector.extract_strided_slice %180 {offsets = [0, 0], sizes = [2, 32], strides = [1, 1]} : vector<2x128xf32> to vector<2x32xf32>
    %183 = arith.negf %182 : vector<2x32xf32>
    %184 = math.exp %183 : vector<2x32xf32>
    %cst_86 = arith.constant 1.000000e+00 : f32
    %185 = vector.broadcast %cst_86 : f32 to vector<2x32xf32>
    %186 = arith.addf %185, %184 : vector<2x32xf32>
    %187 = arith.divf %185, %186 : vector<2x32xf32>
    %188 = vector.extract_strided_slice %180 {offsets = [0, 32], sizes = [2, 32], strides = [1, 1]} : vector<2x128xf32> to vector<2x32xf32>
    %189 = arith.negf %188 : vector<2x32xf32>
    %190 = math.exp %189 : vector<2x32xf32>
    %cst_87 = arith.constant 1.000000e+00 : f32
    %191 = vector.broadcast %cst_87 : f32 to vector<2x32xf32>
    %192 = arith.addf %191, %190 : vector<2x32xf32>
    %193 = arith.divf %191, %192 : vector<2x32xf32>
    %194 = vector.extract_strided_slice %180 {offsets = [0, 64], sizes = [2, 32], strides = [1, 1]} : vector<2x128xf32> to vector<2x32xf32>
    %195 = math.tanh %194 : vector<2x32xf32>
    %196 = vector.extract_strided_slice %180 {offsets = [0, 96], sizes = [2, 32], strides = [1, 1]} : vector<2x128xf32> to vector<2x32xf32>
    %197 = arith.negf %196 : vector<2x32xf32>
    %198 = math.exp %197 : vector<2x32xf32>
    %cst_88 = arith.constant 1.000000e+00 : f32
    %199 = vector.broadcast %cst_88 : f32 to vector<2x32xf32>
    %200 = arith.addf %199, %198 : vector<2x32xf32>
    %201 = arith.divf %199, %200 : vector<2x32xf32>
    %202 = arith.mulf %193, %181 : vector<2x32xf32>
    %203 = arith.mulf %187, %195 : vector<2x32xf32>
    %204 = arith.addf %202, %203 : vector<2x32xf32>
    %205 = math.tanh %204 : vector<2x32xf32>
    %206 = arith.mulf %201, %205 : vector<2x32xf32>
    %c0_89 = arith.constant 0 : index
    %c0_90 = arith.constant 0 : index
    %207 = vector.load %arg4[%c0_89, %c0_90] : memref<2x32xf32, #tpu.memory_space<vmem>>, vector<2x32xf32>
    tpu.vector_store %arg4[%c0_89, %c0_90], %206 {strides = array<i32>} : memref<2x32xf32, #tpu.memory_space<vmem>>, vector<2x32xf32>,
    %c0_91 = arith.constant 0 : index
    %c0_92 = arith.constant 0 : index
    %208 = vector.load %arg5[%c0_91, %c0_92] : memref<2x32xf32, #tpu.memory_space<vmem>>, vector<2x32xf32>
    tpu.vector_store %arg5[%c0_91, %c0_92], %204 {strides = array<i32>} : memref<2x32xf32, #tpu.memory_space<vmem>>, vector<2x32xf32>,
    %c7_i32_93 = arith.constant 7 : i32
    %209 = arith.cmpi eq, %c2_i32, %c7_i32_93 : i32
    %210 = arith.extui %209 : i1 to i32
    %c0_i32_94 = arith.constant 0 : i32
    %211 = arith.cmpi ne, %210, %c0_i32_94 : i32
    scf.if %211 {
      %658 = arith.truncf %206 : vector<2x32xf32> to vector<2x32xbf16>
      %c0_278 = arith.constant 0 : index
      %c0_279 = arith.constant 0 : index
      %c0_280 = arith.constant 0 : index
      %659 = vector.load %arg3[%c0_278, %c0_279, %c0_280] : memref<1x2x64xbf16, #tpu.memory_space<vmem>>, vector<1x2x32xbf16>
      %660 = vector.shape_cast %659 : vector<1x2x32xbf16> to vector<2x32xbf16>
      %661 = vector.shape_cast %658 : vector<2x32xbf16> to vector<1x2x32xbf16>
      tpu.vector_store %arg3[%c0_278, %c0_279, %c0_280], %661 {strides = array<i32>} : memref<1x2x64xbf16, #tpu.memory_space<vmem>>, vector<1x2x32xbf16>,
    } else {
    }
    %c7_i32_95 = arith.constant 7 : i32
    %212 = arith.subi %c7_i32_95, %c2_i32 : i32
    %213 = arith.index_cast %212 : i32 to index
    %c0_96 = arith.constant 0 : index
    %c0_97 = arith.constant 0 : index
    %214 = vector.load %arg0[%213, %c0_96, %c0_97] : memref<8x2x256xbf16, #tpu.memory_space<vmem>>, vector<1x2x256xbf16>
    %215 = vector.shape_cast %214 : vector<1x2x256xbf16> to vector<2x256xbf16>
    %216 = arith.extf %215 : vector<2x256xbf16> to vector<2x256xf32>
    %217 = vector.extract_strided_slice %216 {offsets = [0, 128], sizes = [2, 128], strides = [1, 1]} : vector<2x256xf32> to vector<2x128xf32>
    %c0_98 = arith.constant 0 : index
    %c0_99 = arith.constant 0 : index
    %218 = vector.load %arg6[%c0_98, %c0_99] : memref<2x32xf32, #tpu.memory_space<vmem>>, vector<2x32xf32>
    %219 = arith.truncf %218 : vector<2x32xf32> to vector<2x32xbf16>
    %cst_100 = arith.constant dense<0.000000e+00> : vector<2x128xf32>
    %220 = tpu.matmul %219, %9, %cst_100 {dimension_numbers = #tpu.dot_dimension_numbers<[1], [0], [0], [1], [0, 0, 1, 1], [], []>} : vector<2x32xbf16>, vector<32x128xbf16>, vector<2x128xf32> -> vector<2x128xf32>
    %221 = arith.addf %217, %220 : vector<2x128xf32>
    %c0_101 = arith.constant 0 : index
    %c0_102 = arith.constant 0 : index
    %222 = vector.load %arg7[%c0_101, %c0_102] : memref<2x32xf32, #tpu.memory_space<vmem>>, vector<2x32xf32>
    %223 = vector.extract_strided_slice %221 {offsets = [0, 0], sizes = [2, 32], strides = [1, 1]} : vector<2x128xf32> to vector<2x32xf32>
    %224 = arith.negf %223 : vector<2x32xf32>
    %225 = math.exp %224 : vector<2x32xf32>
    %cst_103 = arith.constant 1.000000e+00 : f32
    %226 = vector.broadcast %cst_103 : f32 to vector<2x32xf32>
    %227 = arith.addf %226, %225 : vector<2x32xf32>
    %228 = arith.divf %226, %227 : vector<2x32xf32>
    %229 = vector.extract_strided_slice %221 {offsets = [0, 32], sizes = [2, 32], strides = [1, 1]} : vector<2x128xf32> to vector<2x32xf32>
    %230 = arith.negf %229 : vector<2x32xf32>
    %231 = math.exp %230 : vector<2x32xf32>
    %cst_104 = arith.constant 1.000000e+00 : f32
    %232 = vector.broadcast %cst_104 : f32 to vector<2x32xf32>
    %233 = arith.addf %232, %231 : vector<2x32xf32>
    %234 = arith.divf %232, %233 : vector<2x32xf32>
    %235 = vector.extract_strided_slice %221 {offsets = [0, 64], sizes = [2, 32], strides = [1, 1]} : vector<2x128xf32> to vector<2x32xf32>
    %236 = math.tanh %235 : vector<2x32xf32>
    %237 = vector.extract_strided_slice %221 {offsets = [0, 96], sizes = [2, 32], strides = [1, 1]} : vector<2x128xf32> to vector<2x32xf32>
    %238 = arith.negf %237 : vector<2x32xf32>
    %239 = math.exp %238 : vector<2x32xf32>
    %cst_105 = arith.constant 1.000000e+00 : f32
    %240 = vector.broadcast %cst_105 : f32 to vector<2x32xf32>
    %241 = arith.addf %240, %239 : vector<2x32xf32>
    %242 = arith.divf %240, %241 : vector<2x32xf32>
    %243 = arith.mulf %234, %222 : vector<2x32xf32>
    %244 = arith.mulf %228, %236 : vector<2x32xf32>
    %245 = arith.addf %243, %244 : vector<2x32xf32>
    %246 = math.tanh %245 : vector<2x32xf32>
    %247 = arith.mulf %242, %246 : vector<2x32xf32>
    %c0_106 = arith.constant 0 : index
    %c0_107 = arith.constant 0 : index
    %248 = vector.load %arg6[%c0_106, %c0_107] : memref<2x32xf32, #tpu.memory_space<vmem>>, vector<2x32xf32>
    tpu.vector_store %arg6[%c0_106, %c0_107], %247 {strides = array<i32>} : memref<2x32xf32, #tpu.memory_space<vmem>>, vector<2x32xf32>,
    %c0_108 = arith.constant 0 : index
    %c0_109 = arith.constant 0 : index
    %249 = vector.load %arg7[%c0_108, %c0_109] : memref<2x32xf32, #tpu.memory_space<vmem>>, vector<2x32xf32>
    tpu.vector_store %arg7[%c0_108, %c0_109], %245 {strides = array<i32>} : memref<2x32xf32, #tpu.memory_space<vmem>>, vector<2x32xf32>,
    %c0_i32_110 = arith.constant 0 : i32
    %250 = arith.cmpi eq, %c2_i32, %c0_i32_110 : i32
    %251 = arith.extui %250 : i1 to i32
    %c0_i32_111 = arith.constant 0 : i32
    %252 = arith.cmpi ne, %251, %c0_i32_111 : i32
    scf.if %252 {
      %658 = arith.truncf %247 : vector<2x32xf32> to vector<2x32xbf16>
      %c0_278 = arith.constant 0 : index
      %c0_279 = arith.constant 0 : index
      %c32 = arith.constant 32 : index
      %659 = vector.load %arg3[%c0_278, %c0_279, %c32] : memref<1x2x64xbf16, #tpu.memory_space<vmem>>, vector<1x2x32xbf16>
      %660 = vector.shape_cast %659 : vector<1x2x32xbf16> to vector<2x32xbf16>
      %661 = vector.shape_cast %658 : vector<2x32xbf16> to vector<1x2x32xbf16>
      tpu.vector_store %arg3[%c0_278, %c0_279, %c32], %661 {strides = array<i32>} : memref<1x2x64xbf16, #tpu.memory_space<vmem>>, vector<1x2x32xbf16>,
    } else {
    }
    %c3_i32 = arith.constant 3 : i32
    %253 = arith.index_cast %c3_i32 : i32 to index
    %c0_112 = arith.constant 0 : index
    %c0_113 = arith.constant 0 : index
    %254 = vector.load %arg0[%253, %c0_112, %c0_113] : memref<8x2x256xbf16, #tpu.memory_space<vmem>>, vector<1x2x256xbf16>
    %255 = vector.shape_cast %254 : vector<1x2x256xbf16> to vector<2x256xbf16>
    %256 = arith.extf %255 : vector<2x256xbf16> to vector<2x256xf32>
    %257 = vector.extract_strided_slice %256 {offsets = [0, 0], sizes = [2, 128], strides = [1, 1]} : vector<2x256xf32> to vector<2x128xf32>
    %c0_114 = arith.constant 0 : index
    %c0_115 = arith.constant 0 : index
    %258 = vector.load %arg4[%c0_114, %c0_115] : memref<2x32xf32, #tpu.memory_space<vmem>>, vector<2x32xf32>
    %259 = arith.truncf %258 : vector<2x32xf32> to vector<2x32xbf16>
    %cst_116 = arith.constant dense<0.000000e+00> : vector<2x128xf32>
    %260 = tpu.matmul %259, %8, %cst_116 {dimension_numbers = #tpu.dot_dimension_numbers<[1], [0], [0], [1], [0, 0, 1, 1], [], []>} : vector<2x32xbf16>, vector<32x128xbf16>, vector<2x128xf32> -> vector<2x128xf32>
    %261 = arith.addf %257, %260 : vector<2x128xf32>
    %c0_117 = arith.constant 0 : index
    %c0_118 = arith.constant 0 : index
    %262 = vector.load %arg5[%c0_117, %c0_118] : memref<2x32xf32, #tpu.memory_space<vmem>>, vector<2x32xf32>
    %263 = vector.extract_strided_slice %261 {offsets = [0, 0], sizes = [2, 32], strides = [1, 1]} : vector<2x128xf32> to vector<2x32xf32>
    %264 = arith.negf %263 : vector<2x32xf32>
    %265 = math.exp %264 : vector<2x32xf32>
    %cst_119 = arith.constant 1.000000e+00 : f32
    %266 = vector.broadcast %cst_119 : f32 to vector<2x32xf32>
    %267 = arith.addf %266, %265 : vector<2x32xf32>
    %268 = arith.divf %266, %267 : vector<2x32xf32>
    %269 = vector.extract_strided_slice %261 {offsets = [0, 32], sizes = [2, 32], strides = [1, 1]} : vector<2x128xf32> to vector<2x32xf32>
    %270 = arith.negf %269 : vector<2x32xf32>
    %271 = math.exp %270 : vector<2x32xf32>
    %cst_120 = arith.constant 1.000000e+00 : f32
    %272 = vector.broadcast %cst_120 : f32 to vector<2x32xf32>
    %273 = arith.addf %272, %271 : vector<2x32xf32>
    %274 = arith.divf %272, %273 : vector<2x32xf32>
    %275 = vector.extract_strided_slice %261 {offsets = [0, 64], sizes = [2, 32], strides = [1, 1]} : vector<2x128xf32> to vector<2x32xf32>
    %276 = math.tanh %275 : vector<2x32xf32>
    %277 = vector.extract_strided_slice %261 {offsets = [0, 96], sizes = [2, 32], strides = [1, 1]} : vector<2x128xf32> to vector<2x32xf32>
    %278 = arith.negf %277 : vector<2x32xf32>
    %279 = math.exp %278 : vector<2x32xf32>
    %cst_121 = arith.constant 1.000000e+00 : f32
    %280 = vector.broadcast %cst_121 : f32 to vector<2x32xf32>
    %281 = arith.addf %280, %279 : vector<2x32xf32>
    %282 = arith.divf %280, %281 : vector<2x32xf32>
    %283 = arith.mulf %274, %262 : vector<2x32xf32>
    %284 = arith.mulf %268, %276 : vector<2x32xf32>
    %285 = arith.addf %283, %284 : vector<2x32xf32>
    %286 = math.tanh %285 : vector<2x32xf32>
    %287 = arith.mulf %282, %286 : vector<2x32xf32>
    %c0_122 = arith.constant 0 : index
    %c0_123 = arith.constant 0 : index
    %288 = vector.load %arg4[%c0_122, %c0_123] : memref<2x32xf32, #tpu.memory_space<vmem>>, vector<2x32xf32>
    tpu.vector_store %arg4[%c0_122, %c0_123], %287 {strides = array<i32>} : memref<2x32xf32, #tpu.memory_space<vmem>>, vector<2x32xf32>,
    %c0_124 = arith.constant 0 : index
    %c0_125 = arith.constant 0 : index
    %289 = vector.load %arg5[%c0_124, %c0_125] : memref<2x32xf32, #tpu.memory_space<vmem>>, vector<2x32xf32>
    tpu.vector_store %arg5[%c0_124, %c0_125], %285 {strides = array<i32>} : memref<2x32xf32, #tpu.memory_space<vmem>>, vector<2x32xf32>,
    %c7_i32_126 = arith.constant 7 : i32
    %290 = arith.cmpi eq, %c3_i32, %c7_i32_126 : i32
    %291 = arith.extui %290 : i1 to i32
    %c0_i32_127 = arith.constant 0 : i32
    %292 = arith.cmpi ne, %291, %c0_i32_127 : i32
    scf.if %292 {
      %658 = arith.truncf %287 : vector<2x32xf32> to vector<2x32xbf16>
      %c0_278 = arith.constant 0 : index
      %c0_279 = arith.constant 0 : index
      %c0_280 = arith.constant 0 : index
      %659 = vector.load %arg3[%c0_278, %c0_279, %c0_280] : memref<1x2x64xbf16, #tpu.memory_space<vmem>>, vector<1x2x32xbf16>
      %660 = vector.shape_cast %659 : vector<1x2x32xbf16> to vector<2x32xbf16>
      %661 = vector.shape_cast %658 : vector<2x32xbf16> to vector<1x2x32xbf16>
      tpu.vector_store %arg3[%c0_278, %c0_279, %c0_280], %661 {strides = array<i32>} : memref<1x2x64xbf16, #tpu.memory_space<vmem>>, vector<1x2x32xbf16>,
    } else {
    }
    %c7_i32_128 = arith.constant 7 : i32
    %293 = arith.subi %c7_i32_128, %c3_i32 : i32
    %294 = arith.index_cast %293 : i32 to index
    %c0_129 = arith.constant 0 : index
    %c0_130 = arith.constant 0 : index
    %295 = vector.load %arg0[%294, %c0_129, %c0_130] : memref<8x2x256xbf16, #tpu.memory_space<vmem>>, vector<1x2x256xbf16>
    %296 = vector.shape_cast %295 : vector<1x2x256xbf16> to vector<2x256xbf16>
    %297 = arith.extf %296 : vector<2x256xbf16> to vector<2x256xf32>
    %298 = vector.extract_strided_slice %297 {offsets = [0, 128], sizes = [2, 128], strides = [1, 1]} : vector<2x256xf32> to vector<2x128xf32>
    %c0_131 = arith.constant 0 : index
    %c0_132 = arith.constant 0 : index
    %299 = vector.load %arg6[%c0_131, %c0_132] : memref<2x32xf32, #tpu.memory_space<vmem>>, vector<2x32xf32>
    %300 = arith.truncf %299 : vector<2x32xf32> to vector<2x32xbf16>
    %cst_133 = arith.constant dense<0.000000e+00> : vector<2x128xf32>
    %301 = tpu.matmul %300, %9, %cst_133 {dimension_numbers = #tpu.dot_dimension_numbers<[1], [0], [0], [1], [0, 0, 1, 1], [], []>} : vector<2x32xbf16>, vector<32x128xbf16>, vector<2x128xf32> -> vector<2x128xf32>
    %302 = arith.addf %298, %301 : vector<2x128xf32>
    %c0_134 = arith.constant 0 : index
    %c0_135 = arith.constant 0 : index
    %303 = vector.load %arg7[%c0_134, %c0_135] : memref<2x32xf32, #tpu.memory_space<vmem>>, vector<2x32xf32>
    %304 = vector.extract_strided_slice %302 {offsets = [0, 0], sizes = [2, 32], strides = [1, 1]} : vector<2x128xf32> to vector<2x32xf32>
    %305 = arith.negf %304 : vector<2x32xf32>
    %306 = math.exp %305 : vector<2x32xf32>
    %cst_136 = arith.constant 1.000000e+00 : f32
    %307 = vector.broadcast %cst_136 : f32 to vector<2x32xf32>
    %308 = arith.addf %307, %306 : vector<2x32xf32>
    %309 = arith.divf %307, %308 : vector<2x32xf32>
    %310 = vector.extract_strided_slice %302 {offsets = [0, 32], sizes = [2, 32], strides = [1, 1]} : vector<2x128xf32> to vector<2x32xf32>
    %311 = arith.negf %310 : vector<2x32xf32>
    %312 = math.exp %311 : vector<2x32xf32>
    %cst_137 = arith.constant 1.000000e+00 : f32
    %313 = vector.broadcast %cst_137 : f32 to vector<2x32xf32>
    %314 = arith.addf %313, %312 : vector<2x32xf32>
    %315 = arith.divf %313, %314 : vector<2x32xf32>
    %316 = vector.extract_strided_slice %302 {offsets = [0, 64], sizes = [2, 32], strides = [1, 1]} : vector<2x128xf32> to vector<2x32xf32>
    %317 = math.tanh %316 : vector<2x32xf32>
    %318 = vector.extract_strided_slice %302 {offsets = [0, 96], sizes = [2, 32], strides = [1, 1]} : vector<2x128xf32> to vector<2x32xf32>
    %319 = arith.negf %318 : vector<2x32xf32>
    %320 = math.exp %319 : vector<2x32xf32>
    %cst_138 = arith.constant 1.000000e+00 : f32
    %321 = vector.broadcast %cst_138 : f32 to vector<2x32xf32>
    %322 = arith.addf %321, %320 : vector<2x32xf32>
    %323 = arith.divf %321, %322 : vector<2x32xf32>
    %324 = arith.mulf %315, %303 : vector<2x32xf32>
    %325 = arith.mulf %309, %317 : vector<2x32xf32>
    %326 = arith.addf %324, %325 : vector<2x32xf32>
    %327 = math.tanh %326 : vector<2x32xf32>
    %328 = arith.mulf %323, %327 : vector<2x32xf32>
    %c0_139 = arith.constant 0 : index
    %c0_140 = arith.constant 0 : index
    %329 = vector.load %arg6[%c0_139, %c0_140] : memref<2x32xf32, #tpu.memory_space<vmem>>, vector<2x32xf32>
    tpu.vector_store %arg6[%c0_139, %c0_140], %328 {strides = array<i32>} : memref<2x32xf32, #tpu.memory_space<vmem>>, vector<2x32xf32>,
    %c0_141 = arith.constant 0 : index
    %c0_142 = arith.constant 0 : index
    %330 = vector.load %arg7[%c0_141, %c0_142] : memref<2x32xf32, #tpu.memory_space<vmem>>, vector<2x32xf32>
    tpu.vector_store %arg7[%c0_141, %c0_142], %326 {strides = array<i32>} : memref<2x32xf32, #tpu.memory_space<vmem>>, vector<2x32xf32>,
    %c0_i32_143 = arith.constant 0 : i32
    %331 = arith.cmpi eq, %c3_i32, %c0_i32_143 : i32
    %332 = arith.extui %331 : i1 to i32
    %c0_i32_144 = arith.constant 0 : i32
    %333 = arith.cmpi ne, %332, %c0_i32_144 : i32
    scf.if %333 {
      %658 = arith.truncf %328 : vector<2x32xf32> to vector<2x32xbf16>
      %c0_278 = arith.constant 0 : index
      %c0_279 = arith.constant 0 : index
      %c32 = arith.constant 32 : index
      %659 = vector.load %arg3[%c0_278, %c0_279, %c32] : memref<1x2x64xbf16, #tpu.memory_space<vmem>>, vector<1x2x32xbf16>
      %660 = vector.shape_cast %659 : vector<1x2x32xbf16> to vector<2x32xbf16>
      %661 = vector.shape_cast %658 : vector<2x32xbf16> to vector<1x2x32xbf16>
      tpu.vector_store %arg3[%c0_278, %c0_279, %c32], %661 {strides = array<i32>} : memref<1x2x64xbf16, #tpu.memory_space<vmem>>, vector<1x2x32xbf16>,
    } else {
    }
    %c4_i32 = arith.constant 4 : i32
    %334 = arith.index_cast %c4_i32 : i32 to index
    %c0_145 = arith.constant 0 : index
    %c0_146 = arith.constant 0 : index
    %335 = vector.load %arg0[%334, %c0_145, %c0_146] : memref<8x2x256xbf16, #tpu.memory_space<vmem>>, vector<1x2x256xbf16>
    %336 = vector.shape_cast %335 : vector<1x2x256xbf16> to vector<2x256xbf16>
    %337 = arith.extf %336 : vector<2x256xbf16> to vector<2x256xf32>
    %338 = vector.extract_strided_slice %337 {offsets = [0, 0], sizes = [2, 128], strides = [1, 1]} : vector<2x256xf32> to vector<2x128xf32>
    %c0_147 = arith.constant 0 : index
    %c0_148 = arith.constant 0 : index
    %339 = vector.load %arg4[%c0_147, %c0_148] : memref<2x32xf32, #tpu.memory_space<vmem>>, vector<2x32xf32>
    %340 = arith.truncf %339 : vector<2x32xf32> to vector<2x32xbf16>
    %cst_149 = arith.constant dense<0.000000e+00> : vector<2x128xf32>
    %341 = tpu.matmul %340, %8, %cst_149 {dimension_numbers = #tpu.dot_dimension_numbers<[1], [0], [0], [1], [0, 0, 1, 1], [], []>} : vector<2x32xbf16>, vector<32x128xbf16>, vector<2x128xf32> -> vector<2x128xf32>
    %342 = arith.addf %338, %341 : vector<2x128xf32>
    %c0_150 = arith.constant 0 : index
    %c0_151 = arith.constant 0 : index
    %343 = vector.load %arg5[%c0_150, %c0_151] : memref<2x32xf32, #tpu.memory_space<vmem>>, vector<2x32xf32>
    %344 = vector.extract_strided_slice %342 {offsets = [0, 0], sizes = [2, 32], strides = [1, 1]} : vector<2x128xf32> to vector<2x32xf32>
    %345 = arith.negf %344 : vector<2x32xf32>
    %346 = math.exp %345 : vector<2x32xf32>
    %cst_152 = arith.constant 1.000000e+00 : f32
    %347 = vector.broadcast %cst_152 : f32 to vector<2x32xf32>
    %348 = arith.addf %347, %346 : vector<2x32xf32>
    %349 = arith.divf %347, %348 : vector<2x32xf32>
    %350 = vector.extract_strided_slice %342 {offsets = [0, 32], sizes = [2, 32], strides = [1, 1]} : vector<2x128xf32> to vector<2x32xf32>
    %351 = arith.negf %350 : vector<2x32xf32>
    %352 = math.exp %351 : vector<2x32xf32>
    %cst_153 = arith.constant 1.000000e+00 : f32
    %353 = vector.broadcast %cst_153 : f32 to vector<2x32xf32>
    %354 = arith.addf %353, %352 : vector<2x32xf32>
    %355 = arith.divf %353, %354 : vector<2x32xf32>
    %356 = vector.extract_strided_slice %342 {offsets = [0, 64], sizes = [2, 32], strides = [1, 1]} : vector<2x128xf32> to vector<2x32xf32>
    %357 = math.tanh %356 : vector<2x32xf32>
    %358 = vector.extract_strided_slice %342 {offsets = [0, 96], sizes = [2, 32], strides = [1, 1]} : vector<2x128xf32> to vector<2x32xf32>
    %359 = arith.negf %358 : vector<2x32xf32>
    %360 = math.exp %359 : vector<2x32xf32>
    %cst_154 = arith.constant 1.000000e+00 : f32
    %361 = vector.broadcast %cst_154 : f32 to vector<2x32xf32>
    %362 = arith.addf %361, %360 : vector<2x32xf32>
    %363 = arith.divf %361, %362 : vector<2x32xf32>
    %364 = arith.mulf %355, %343 : vector<2x32xf32>
    %365 = arith.mulf %349, %357 : vector<2x32xf32>
    %366 = arith.addf %364, %365 : vector<2x32xf32>
    %367 = math.tanh %366 : vector<2x32xf32>
    %368 = arith.mulf %363, %367 : vector<2x32xf32>
    %c0_155 = arith.constant 0 : index
    %c0_156 = arith.constant 0 : index
    %369 = vector.load %arg4[%c0_155, %c0_156] : memref<2x32xf32, #tpu.memory_space<vmem>>, vector<2x32xf32>
    tpu.vector_store %arg4[%c0_155, %c0_156], %368 {strides = array<i32>} : memref<2x32xf32, #tpu.memory_space<vmem>>, vector<2x32xf32>,
    %c0_157 = arith.constant 0 : index
    %c0_158 = arith.constant 0 : index
    %370 = vector.load %arg5[%c0_157, %c0_158] : memref<2x32xf32, #tpu.memory_space<vmem>>, vector<2x32xf32>
    tpu.vector_store %arg5[%c0_157, %c0_158], %366 {strides = array<i32>} : memref<2x32xf32, #tpu.memory_space<vmem>>, vector<2x32xf32>,
    %c7_i32_159 = arith.constant 7 : i32
    %371 = arith.cmpi eq, %c4_i32, %c7_i32_159 : i32
    %372 = arith.extui %371 : i1 to i32
    %c0_i32_160 = arith.constant 0 : i32
    %373 = arith.cmpi ne, %372, %c0_i32_160 : i32
    scf.if %373 {
      %658 = arith.truncf %368 : vector<2x32xf32> to vector<2x32xbf16>
      %c0_278 = arith.constant 0 : index
      %c0_279 = arith.constant 0 : index
      %c0_280 = arith.constant 0 : index
      %659 = vector.load %arg3[%c0_278, %c0_279, %c0_280] : memref<1x2x64xbf16, #tpu.memory_space<vmem>>, vector<1x2x32xbf16>
      %660 = vector.shape_cast %659 : vector<1x2x32xbf16> to vector<2x32xbf16>
      %661 = vector.shape_cast %658 : vector<2x32xbf16> to vector<1x2x32xbf16>
      tpu.vector_store %arg3[%c0_278, %c0_279, %c0_280], %661 {strides = array<i32>} : memref<1x2x64xbf16, #tpu.memory_space<vmem>>, vector<1x2x32xbf16>,
    } else {
    }
    %c7_i32_161 = arith.constant 7 : i32
    %374 = arith.subi %c7_i32_161, %c4_i32 : i32
    %375 = arith.index_cast %374 : i32 to index
    %c0_162 = arith.constant 0 : index
    %c0_163 = arith.constant 0 : index
    %376 = vector.load %arg0[%375, %c0_162, %c0_163] : memref<8x2x256xbf16, #tpu.memory_space<vmem>>, vector<1x2x256xbf16>
    %377 = vector.shape_cast %376 : vector<1x2x256xbf16> to vector<2x256xbf16>
    %378 = arith.extf %377 : vector<2x256xbf16> to vector<2x256xf32>
    %379 = vector.extract_strided_slice %378 {offsets = [0, 128], sizes = [2, 128], strides = [1, 1]} : vector<2x256xf32> to vector<2x128xf32>
    %c0_164 = arith.constant 0 : index
    %c0_165 = arith.constant 0 : index
    %380 = vector.load %arg6[%c0_164, %c0_165] : memref<2x32xf32, #tpu.memory_space<vmem>>, vector<2x32xf32>
    %381 = arith.truncf %380 : vector<2x32xf32> to vector<2x32xbf16>
    %cst_166 = arith.constant dense<0.000000e+00> : vector<2x128xf32>
    %382 = tpu.matmul %381, %9, %cst_166 {dimension_numbers = #tpu.dot_dimension_numbers<[1], [0], [0], [1], [0, 0, 1, 1], [], []>} : vector<2x32xbf16>, vector<32x128xbf16>, vector<2x128xf32> -> vector<2x128xf32>
    %383 = arith.addf %379, %382 : vector<2x128xf32>
    %c0_167 = arith.constant 0 : index
    %c0_168 = arith.constant 0 : index
    %384 = vector.load %arg7[%c0_167, %c0_168] : memref<2x32xf32, #tpu.memory_space<vmem>>, vector<2x32xf32>
    %385 = vector.extract_strided_slice %383 {offsets = [0, 0], sizes = [2, 32], strides = [1, 1]} : vector<2x128xf32> to vector<2x32xf32>
    %386 = arith.negf %385 : vector<2x32xf32>
    %387 = math.exp %386 : vector<2x32xf32>
    %cst_169 = arith.constant 1.000000e+00 : f32
    %388 = vector.broadcast %cst_169 : f32 to vector<2x32xf32>
    %389 = arith.addf %388, %387 : vector<2x32xf32>
    %390 = arith.divf %388, %389 : vector<2x32xf32>
    %391 = vector.extract_strided_slice %383 {offsets = [0, 32], sizes = [2, 32], strides = [1, 1]} : vector<2x128xf32> to vector<2x32xf32>
    %392 = arith.negf %391 : vector<2x32xf32>
    %393 = math.exp %392 : vector<2x32xf32>
    %cst_170 = arith.constant 1.000000e+00 : f32
    %394 = vector.broadcast %cst_170 : f32 to vector<2x32xf32>
    %395 = arith.addf %394, %393 : vector<2x32xf32>
    %396 = arith.divf %394, %395 : vector<2x32xf32>
    %397 = vector.extract_strided_slice %383 {offsets = [0, 64], sizes = [2, 32], strides = [1, 1]} : vector<2x128xf32> to vector<2x32xf32>
    %398 = math.tanh %397 : vector<2x32xf32>
    %399 = vector.extract_strided_slice %383 {offsets = [0, 96], sizes = [2, 32], strides = [1, 1]} : vector<2x128xf32> to vector<2x32xf32>
    %400 = arith.negf %399 : vector<2x32xf32>
    %401 = math.exp %400 : vector<2x32xf32>
    %cst_171 = arith.constant 1.000000e+00 : f32
    %402 = vector.broadcast %cst_171 : f32 to vector<2x32xf32>
    %403 = arith.addf %402, %401 : vector<2x32xf32>
    %404 = arith.divf %402, %403 : vector<2x32xf32>
    %405 = arith.mulf %396, %384 : vector<2x32xf32>
    %406 = arith.mulf %390, %398 : vector<2x32xf32>
    %407 = arith.addf %405, %406 : vector<2x32xf32>
    %408 = math.tanh %407 : vector<2x32xf32>
    %409 = arith.mulf %404, %408 : vector<2x32xf32>
    %c0_172 = arith.constant 0 : index
    %c0_173 = arith.constant 0 : index
    %410 = vector.load %arg6[%c0_172, %c0_173] : memref<2x32xf32, #tpu.memory_space<vmem>>, vector<2x32xf32>
    tpu.vector_store %arg6[%c0_172, %c0_173], %409 {strides = array<i32>} : memref<2x32xf32, #tpu.memory_space<vmem>>, vector<2x32xf32>,
    %c0_174 = arith.constant 0 : index
    %c0_175 = arith.constant 0 : index
    %411 = vector.load %arg7[%c0_174, %c0_175] : memref<2x32xf32, #tpu.memory_space<vmem>>, vector<2x32xf32>
    tpu.vector_store %arg7[%c0_174, %c0_175], %407 {strides = array<i32>} : memref<2x32xf32, #tpu.memory_space<vmem>>, vector<2x32xf32>,
    %c0_i32_176 = arith.constant 0 : i32
    %412 = arith.cmpi eq, %c4_i32, %c0_i32_176 : i32
    %413 = arith.extui %412 : i1 to i32
    %c0_i32_177 = arith.constant 0 : i32
    %414 = arith.cmpi ne, %413, %c0_i32_177 : i32
    scf.if %414 {
      %658 = arith.truncf %409 : vector<2x32xf32> to vector<2x32xbf16>
      %c0_278 = arith.constant 0 : index
      %c0_279 = arith.constant 0 : index
      %c32 = arith.constant 32 : index
      %659 = vector.load %arg3[%c0_278, %c0_279, %c32] : memref<1x2x64xbf16, #tpu.memory_space<vmem>>, vector<1x2x32xbf16>
      %660 = vector.shape_cast %659 : vector<1x2x32xbf16> to vector<2x32xbf16>
      %661 = vector.shape_cast %658 : vector<2x32xbf16> to vector<1x2x32xbf16>
      tpu.vector_store %arg3[%c0_278, %c0_279, %c32], %661 {strides = array<i32>} : memref<1x2x64xbf16, #tpu.memory_space<vmem>>, vector<1x2x32xbf16>,
    } else {
    }
    %c5_i32 = arith.constant 5 : i32
    %415 = arith.index_cast %c5_i32 : i32 to index
    %c0_178 = arith.constant 0 : index
    %c0_179 = arith.constant 0 : index
    %416 = vector.load %arg0[%415, %c0_178, %c0_179] : memref<8x2x256xbf16, #tpu.memory_space<vmem>>, vector<1x2x256xbf16>
    %417 = vector.shape_cast %416 : vector<1x2x256xbf16> to vector<2x256xbf16>
    %418 = arith.extf %417 : vector<2x256xbf16> to vector<2x256xf32>
    %419 = vector.extract_strided_slice %418 {offsets = [0, 0], sizes = [2, 128], strides = [1, 1]} : vector<2x256xf32> to vector<2x128xf32>
    %c0_180 = arith.constant 0 : index
    %c0_181 = arith.constant 0 : index
    %420 = vector.load %arg4[%c0_180, %c0_181] : memref<2x32xf32, #tpu.memory_space<vmem>>, vector<2x32xf32>
    %421 = arith.truncf %420 : vector<2x32xf32> to vector<2x32xbf16>
    %cst_182 = arith.constant dense<0.000000e+00> : vector<2x128xf32>
    %422 = tpu.matmul %421, %8, %cst_182 {dimension_numbers = #tpu.dot_dimension_numbers<[1], [0], [0], [1], [0, 0, 1, 1], [], []>} : vector<2x32xbf16>, vector<32x128xbf16>, vector<2x128xf32> -> vector<2x128xf32>
    %423 = arith.addf %419, %422 : vector<2x128xf32>
    %c0_183 = arith.constant 0 : index
    %c0_184 = arith.constant 0 : index
    %424 = vector.load %arg5[%c0_183, %c0_184] : memref<2x32xf32, #tpu.memory_space<vmem>>, vector<2x32xf32>
    %425 = vector.extract_strided_slice %423 {offsets = [0, 0], sizes = [2, 32], strides = [1, 1]} : vector<2x128xf32> to vector<2x32xf32>
    %426 = arith.negf %425 : vector<2x32xf32>
    %427 = math.exp %426 : vector<2x32xf32>
    %cst_185 = arith.constant 1.000000e+00 : f32
    %428 = vector.broadcast %cst_185 : f32 to vector<2x32xf32>
    %429 = arith.addf %428, %427 : vector<2x32xf32>
    %430 = arith.divf %428, %429 : vector<2x32xf32>
    %431 = vector.extract_strided_slice %423 {offsets = [0, 32], sizes = [2, 32], strides = [1, 1]} : vector<2x128xf32> to vector<2x32xf32>
    %432 = arith.negf %431 : vector<2x32xf32>
    %433 = math.exp %432 : vector<2x32xf32>
    %cst_186 = arith.constant 1.000000e+00 : f32
    %434 = vector.broadcast %cst_186 : f32 to vector<2x32xf32>
    %435 = arith.addf %434, %433 : vector<2x32xf32>
    %436 = arith.divf %434, %435 : vector<2x32xf32>
    %437 = vector.extract_strided_slice %423 {offsets = [0, 64], sizes = [2, 32], strides = [1, 1]} : vector<2x128xf32> to vector<2x32xf32>
    %438 = math.tanh %437 : vector<2x32xf32>
    %439 = vector.extract_strided_slice %423 {offsets = [0, 96], sizes = [2, 32], strides = [1, 1]} : vector<2x128xf32> to vector<2x32xf32>
    %440 = arith.negf %439 : vector<2x32xf32>
    %441 = math.exp %440 : vector<2x32xf32>
    %cst_187 = arith.constant 1.000000e+00 : f32
    %442 = vector.broadcast %cst_187 : f32 to vector<2x32xf32>
    %443 = arith.addf %442, %441 : vector<2x32xf32>
    %444 = arith.divf %442, %443 : vector<2x32xf32>
    %445 = arith.mulf %436, %424 : vector<2x32xf32>
    %446 = arith.mulf %430, %438 : vector<2x32xf32>
    %447 = arith.addf %445, %446 : vector<2x32xf32>
    %448 = math.tanh %447 : vector<2x32xf32>
    %449 = arith.mulf %444, %448 : vector<2x32xf32>
    %c0_188 = arith.constant 0 : index
    %c0_189 = arith.constant 0 : index
    %450 = vector.load %arg4[%c0_188, %c0_189] : memref<2x32xf32, #tpu.memory_space<vmem>>, vector<2x32xf32>
    tpu.vector_store %arg4[%c0_188, %c0_189], %449 {strides = array<i32>} : memref<2x32xf32, #tpu.memory_space<vmem>>, vector<2x32xf32>,
    %c0_190 = arith.constant 0 : index
    %c0_191 = arith.constant 0 : index
    %451 = vector.load %arg5[%c0_190, %c0_191] : memref<2x32xf32, #tpu.memory_space<vmem>>, vector<2x32xf32>
    tpu.vector_store %arg5[%c0_190, %c0_191], %447 {strides = array<i32>} : memref<2x32xf32, #tpu.memory_space<vmem>>, vector<2x32xf32>,
    %c7_i32_192 = arith.constant 7 : i32
    %452 = arith.cmpi eq, %c5_i32, %c7_i32_192 : i32
    %453 = arith.extui %452 : i1 to i32
    %c0_i32_193 = arith.constant 0 : i32
    %454 = arith.cmpi ne, %453, %c0_i32_193 : i32
    scf.if %454 {
      %658 = arith.truncf %449 : vector<2x32xf32> to vector<2x32xbf16>
      %c0_278 = arith.constant 0 : index
      %c0_279 = arith.constant 0 : index
      %c0_280 = arith.constant 0 : index
      %659 = vector.load %arg3[%c0_278, %c0_279, %c0_280] : memref<1x2x64xbf16, #tpu.memory_space<vmem>>, vector<1x2x32xbf16>
      %660 = vector.shape_cast %659 : vector<1x2x32xbf16> to vector<2x32xbf16>
      %661 = vector.shape_cast %658 : vector<2x32xbf16> to vector<1x2x32xbf16>
      tpu.vector_store %arg3[%c0_278, %c0_279, %c0_280], %661 {strides = array<i32>} : memref<1x2x64xbf16, #tpu.memory_space<vmem>>, vector<1x2x32xbf16>,
    } else {
    }
    %c7_i32_194 = arith.constant 7 : i32
    %455 = arith.subi %c7_i32_194, %c5_i32 : i32
    %456 = arith.index_cast %455 : i32 to index
    %c0_195 = arith.constant 0 : index
    %c0_196 = arith.constant 0 : index
    %457 = vector.load %arg0[%456, %c0_195, %c0_196] : memref<8x2x256xbf16, #tpu.memory_space<vmem>>, vector<1x2x256xbf16>
    %458 = vector.shape_cast %457 : vector<1x2x256xbf16> to vector<2x256xbf16>
    %459 = arith.extf %458 : vector<2x256xbf16> to vector<2x256xf32>
    %460 = vector.extract_strided_slice %459 {offsets = [0, 128], sizes = [2, 128], strides = [1, 1]} : vector<2x256xf32> to vector<2x128xf32>
    %c0_197 = arith.constant 0 : index
    %c0_198 = arith.constant 0 : index
    %461 = vector.load %arg6[%c0_197, %c0_198] : memref<2x32xf32, #tpu.memory_space<vmem>>, vector<2x32xf32>
    %462 = arith.truncf %461 : vector<2x32xf32> to vector<2x32xbf16>
    %cst_199 = arith.constant dense<0.000000e+00> : vector<2x128xf32>
    %463 = tpu.matmul %462, %9, %cst_199 {dimension_numbers = #tpu.dot_dimension_numbers<[1], [0], [0], [1], [0, 0, 1, 1], [], []>} : vector<2x32xbf16>, vector<32x128xbf16>, vector<2x128xf32> -> vector<2x128xf32>
    %464 = arith.addf %460, %463 : vector<2x128xf32>
    %c0_200 = arith.constant 0 : index
    %c0_201 = arith.constant 0 : index
    %465 = vector.load %arg7[%c0_200, %c0_201] : memref<2x32xf32, #tpu.memory_space<vmem>>, vector<2x32xf32>
    %466 = vector.extract_strided_slice %464 {offsets = [0, 0], sizes = [2, 32], strides = [1, 1]} : vector<2x128xf32> to vector<2x32xf32>
    %467 = arith.negf %466 : vector<2x32xf32>
    %468 = math.exp %467 : vector<2x32xf32>
    %cst_202 = arith.constant 1.000000e+00 : f32
    %469 = vector.broadcast %cst_202 : f32 to vector<2x32xf32>
    %470 = arith.addf %469, %468 : vector<2x32xf32>
    %471 = arith.divf %469, %470 : vector<2x32xf32>
    %472 = vector.extract_strided_slice %464 {offsets = [0, 32], sizes = [2, 32], strides = [1, 1]} : vector<2x128xf32> to vector<2x32xf32>
    %473 = arith.negf %472 : vector<2x32xf32>
    %474 = math.exp %473 : vector<2x32xf32>
    %cst_203 = arith.constant 1.000000e+00 : f32
    %475 = vector.broadcast %cst_203 : f32 to vector<2x32xf32>
    %476 = arith.addf %475, %474 : vector<2x32xf32>
    %477 = arith.divf %475, %476 : vector<2x32xf32>
    %478 = vector.extract_strided_slice %464 {offsets = [0, 64], sizes = [2, 32], strides = [1, 1]} : vector<2x128xf32> to vector<2x32xf32>
    %479 = math.tanh %478 : vector<2x32xf32>
    %480 = vector.extract_strided_slice %464 {offsets = [0, 96], sizes = [2, 32], strides = [1, 1]} : vector<2x128xf32> to vector<2x32xf32>
    %481 = arith.negf %480 : vector<2x32xf32>
    %482 = math.exp %481 : vector<2x32xf32>
    %cst_204 = arith.constant 1.000000e+00 : f32
    %483 = vector.broadcast %cst_204 : f32 to vector<2x32xf32>
    %484 = arith.addf %483, %482 : vector<2x32xf32>
    %485 = arith.divf %483, %484 : vector<2x32xf32>
    %486 = arith.mulf %477, %465 : vector<2x32xf32>
    %487 = arith.mulf %471, %479 : vector<2x32xf32>
    %488 = arith.addf %486, %487 : vector<2x32xf32>
    %489 = math.tanh %488 : vector<2x32xf32>
    %490 = arith.mulf %485, %489 : vector<2x32xf32>
    %c0_205 = arith.constant 0 : index
    %c0_206 = arith.constant 0 : index
    %491 = vector.load %arg6[%c0_205, %c0_206] : memref<2x32xf32, #tpu.memory_space<vmem>>, vector<2x32xf32>
    tpu.vector_store %arg6[%c0_205, %c0_206], %490 {strides = array<i32>} : memref<2x32xf32, #tpu.memory_space<vmem>>, vector<2x32xf32>,
    %c0_207 = arith.constant 0 : index
    %c0_208 = arith.constant 0 : index
    %492 = vector.load %arg7[%c0_207, %c0_208] : memref<2x32xf32, #tpu.memory_space<vmem>>, vector<2x32xf32>
    tpu.vector_store %arg7[%c0_207, %c0_208], %488 {strides = array<i32>} : memref<2x32xf32, #tpu.memory_space<vmem>>, vector<2x32xf32>,
    %c0_i32_209 = arith.constant 0 : i32
    %493 = arith.cmpi eq, %c5_i32, %c0_i32_209 : i32
    %494 = arith.extui %493 : i1 to i32
    %c0_i32_210 = arith.constant 0 : i32
    %495 = arith.cmpi ne, %494, %c0_i32_210 : i32
    scf.if %495 {
      %658 = arith.truncf %490 : vector<2x32xf32> to vector<2x32xbf16>
      %c0_278 = arith.constant 0 : index
      %c0_279 = arith.constant 0 : index
      %c32 = arith.constant 32 : index
      %659 = vector.load %arg3[%c0_278, %c0_279, %c32] : memref<1x2x64xbf16, #tpu.memory_space<vmem>>, vector<1x2x32xbf16>
      %660 = vector.shape_cast %659 : vector<1x2x32xbf16> to vector<2x32xbf16>
      %661 = vector.shape_cast %658 : vector<2x32xbf16> to vector<1x2x32xbf16>
      tpu.vector_store %arg3[%c0_278, %c0_279, %c32], %661 {strides = array<i32>} : memref<1x2x64xbf16, #tpu.memory_space<vmem>>, vector<1x2x32xbf16>,
    } else {
    }
    %c6_i32 = arith.constant 6 : i32
    %496 = arith.index_cast %c6_i32 : i32 to index
    %c0_211 = arith.constant 0 : index
    %c0_212 = arith.constant 0 : index
    %497 = vector.load %arg0[%496, %c0_211, %c0_212] : memref<8x2x256xbf16, #tpu.memory_space<vmem>>, vector<1x2x256xbf16>
    %498 = vector.shape_cast %497 : vector<1x2x256xbf16> to vector<2x256xbf16>
    %499 = arith.extf %498 : vector<2x256xbf16> to vector<2x256xf32>
    %500 = vector.extract_strided_slice %499 {offsets = [0, 0], sizes = [2, 128], strides = [1, 1]} : vector<2x256xf32> to vector<2x128xf32>
    %c0_213 = arith.constant 0 : index
    %c0_214 = arith.constant 0 : index
    %501 = vector.load %arg4[%c0_213, %c0_214] : memref<2x32xf32, #tpu.memory_space<vmem>>, vector<2x32xf32>
    %502 = arith.truncf %501 : vector<2x32xf32> to vector<2x32xbf16>
    %cst_215 = arith.constant dense<0.000000e+00> : vector<2x128xf32>
    %503 = tpu.matmul %502, %8, %cst_215 {dimension_numbers = #tpu.dot_dimension_numbers<[1], [0], [0], [1], [0, 0, 1, 1], [], []>} : vector<2x32xbf16>, vector<32x128xbf16>, vector<2x128xf32> -> vector<2x128xf32>
    %504 = arith.addf %500, %503 : vector<2x128xf32>
    %c0_216 = arith.constant 0 : index
    %c0_217 = arith.constant 0 : index
    %505 = vector.load %arg5[%c0_216, %c0_217] : memref<2x32xf32, #tpu.memory_space<vmem>>, vector<2x32xf32>
    %506 = vector.extract_strided_slice %504 {offsets = [0, 0], sizes = [2, 32], strides = [1, 1]} : vector<2x128xf32> to vector<2x32xf32>
    %507 = arith.negf %506 : vector<2x32xf32>
    %508 = math.exp %507 : vector<2x32xf32>
    %cst_218 = arith.constant 1.000000e+00 : f32
    %509 = vector.broadcast %cst_218 : f32 to vector<2x32xf32>
    %510 = arith.addf %509, %508 : vector<2x32xf32>
    %511 = arith.divf %509, %510 : vector<2x32xf32>
    %512 = vector.extract_strided_slice %504 {offsets = [0, 32], sizes = [2, 32], strides = [1, 1]} : vector<2x128xf32> to vector<2x32xf32>
    %513 = arith.negf %512 : vector<2x32xf32>
    %514 = math.exp %513 : vector<2x32xf32>
    %cst_219 = arith.constant 1.000000e+00 : f32
    %515 = vector.broadcast %cst_219 : f32 to vector<2x32xf32>
    %516 = arith.addf %515, %514 : vector<2x32xf32>
    %517 = arith.divf %515, %516 : vector<2x32xf32>
    %518 = vector.extract_strided_slice %504 {offsets = [0, 64], sizes = [2, 32], strides = [1, 1]} : vector<2x128xf32> to vector<2x32xf32>
    %519 = math.tanh %518 : vector<2x32xf32>
    %520 = vector.extract_strided_slice %504 {offsets = [0, 96], sizes = [2, 32], strides = [1, 1]} : vector<2x128xf32> to vector<2x32xf32>
    %521 = arith.negf %520 : vector<2x32xf32>
    %522 = math.exp %521 : vector<2x32xf32>
    %cst_220 = arith.constant 1.000000e+00 : f32
    %523 = vector.broadcast %cst_220 : f32 to vector<2x32xf32>
    %524 = arith.addf %523, %522 : vector<2x32xf32>
    %525 = arith.divf %523, %524 : vector<2x32xf32>
    %526 = arith.mulf %517, %505 : vector<2x32xf32>
    %527 = arith.mulf %511, %519 : vector<2x32xf32>
    %528 = arith.addf %526, %527 : vector<2x32xf32>
    %529 = math.tanh %528 : vector<2x32xf32>
    %530 = arith.mulf %525, %529 : vector<2x32xf32>
    %c0_221 = arith.constant 0 : index
    %c0_222 = arith.constant 0 : index
    %531 = vector.load %arg4[%c0_221, %c0_222] : memref<2x32xf32, #tpu.memory_space<vmem>>, vector<2x32xf32>
    tpu.vector_store %arg4[%c0_221, %c0_222], %530 {strides = array<i32>} : memref<2x32xf32, #tpu.memory_space<vmem>>, vector<2x32xf32>,
    %c0_223 = arith.constant 0 : index
    %c0_224 = arith.constant 0 : index
    %532 = vector.load %arg5[%c0_223, %c0_224] : memref<2x32xf32, #tpu.memory_space<vmem>>, vector<2x32xf32>
    tpu.vector_store %arg5[%c0_223, %c0_224], %528 {strides = array<i32>} : memref<2x32xf32, #tpu.memory_space<vmem>>, vector<2x32xf32>,
    %c7_i32_225 = arith.constant 7 : i32
    %533 = arith.cmpi eq, %c6_i32, %c7_i32_225 : i32
    %534 = arith.extui %533 : i1 to i32
    %c0_i32_226 = arith.constant 0 : i32
    %535 = arith.cmpi ne, %534, %c0_i32_226 : i32
    scf.if %535 {
      %658 = arith.truncf %530 : vector<2x32xf32> to vector<2x32xbf16>
      %c0_278 = arith.constant 0 : index
      %c0_279 = arith.constant 0 : index
      %c0_280 = arith.constant 0 : index
      %659 = vector.load %arg3[%c0_278, %c0_279, %c0_280] : memref<1x2x64xbf16, #tpu.memory_space<vmem>>, vector<1x2x32xbf16>
      %660 = vector.shape_cast %659 : vector<1x2x32xbf16> to vector<2x32xbf16>
      %661 = vector.shape_cast %658 : vector<2x32xbf16> to vector<1x2x32xbf16>
      tpu.vector_store %arg3[%c0_278, %c0_279, %c0_280], %661 {strides = array<i32>} : memref<1x2x64xbf16, #tpu.memory_space<vmem>>, vector<1x2x32xbf16>,
    } else {
    }
    %c7_i32_227 = arith.constant 7 : i32
    %536 = arith.subi %c7_i32_227, %c6_i32 : i32
    %537 = arith.index_cast %536 : i32 to index
    %c0_228 = arith.constant 0 : index
    %c0_229 = arith.constant 0 : index
    %538 = vector.load %arg0[%537, %c0_228, %c0_229] : memref<8x2x256xbf16, #tpu.memory_space<vmem>>, vector<1x2x256xbf16>
    %539 = vector.shape_cast %538 : vector<1x2x256xbf16> to vector<2x256xbf16>
    %540 = arith.extf %539 : vector<2x256xbf16> to vector<2x256xf32>
    %541 = vector.extract_strided_slice %540 {offsets = [0, 128], sizes = [2, 128], strides = [1, 1]} : vector<2x256xf32> to vector<2x128xf32>
    %c0_230 = arith.constant 0 : index
    %c0_231 = arith.constant 0 : index
    %542 = vector.load %arg6[%c0_230, %c0_231] : memref<2x32xf32, #tpu.memory_space<vmem>>, vector<2x32xf32>
    %543 = arith.truncf %542 : vector<2x32xf32> to vector<2x32xbf16>
    %cst_232 = arith.constant dense<0.000000e+00> : vector<2x128xf32>
    %544 = tpu.matmul %543, %9, %cst_232 {dimension_numbers = #tpu.dot_dimension_numbers<[1], [0], [0], [1], [0, 0, 1, 1], [], []>} : vector<2x32xbf16>, vector<32x128xbf16>, vector<2x128xf32> -> vector<2x128xf32>
    %545 = arith.addf %541, %544 : vector<2x128xf32>
    %c0_233 = arith.constant 0 : index
    %c0_234 = arith.constant 0 : index
    %546 = vector.load %arg7[%c0_233, %c0_234] : memref<2x32xf32, #tpu.memory_space<vmem>>, vector<2x32xf32>
    %547 = vector.extract_strided_slice %545 {offsets = [0, 0], sizes = [2, 32], strides = [1, 1]} : vector<2x128xf32> to vector<2x32xf32>
    %548 = arith.negf %547 : vector<2x32xf32>
    %549 = math.exp %548 : vector<2x32xf32>
    %cst_235 = arith.constant 1.000000e+00 : f32
    %550 = vector.broadcast %cst_235 : f32 to vector<2x32xf32>
    %551 = arith.addf %550, %549 : vector<2x32xf32>
    %552 = arith.divf %550, %551 : vector<2x32xf32>
    %553 = vector.extract_strided_slice %545 {offsets = [0, 32], sizes = [2, 32], strides = [1, 1]} : vector<2x128xf32> to vector<2x32xf32>
    %554 = arith.negf %553 : vector<2x32xf32>
    %555 = math.exp %554 : vector<2x32xf32>
    %cst_236 = arith.constant 1.000000e+00 : f32
    %556 = vector.broadcast %cst_236 : f32 to vector<2x32xf32>
    %557 = arith.addf %556, %555 : vector<2x32xf32>
    %558 = arith.divf %556, %557 : vector<2x32xf32>
    %559 = vector.extract_strided_slice %545 {offsets = [0, 64], sizes = [2, 32], strides = [1, 1]} : vector<2x128xf32> to vector<2x32xf32>
    %560 = math.tanh %559 : vector<2x32xf32>
    %561 = vector.extract_strided_slice %545 {offsets = [0, 96], sizes = [2, 32], strides = [1, 1]} : vector<2x128xf32> to vector<2x32xf32>
    %562 = arith.negf %561 : vector<2x32xf32>
    %563 = math.exp %562 : vector<2x32xf32>
    %cst_237 = arith.constant 1.000000e+00 : f32
    %564 = vector.broadcast %cst_237 : f32 to vector<2x32xf32>
    %565 = arith.addf %564, %563 : vector<2x32xf32>
    %566 = arith.divf %564, %565 : vector<2x32xf32>
    %567 = arith.mulf %558, %546 : vector<2x32xf32>
    %568 = arith.mulf %552, %560 : vector<2x32xf32>
    %569 = arith.addf %567, %568 : vector<2x32xf32>
    %570 = math.tanh %569 : vector<2x32xf32>
    %571 = arith.mulf %566, %570 : vector<2x32xf32>
    %c0_238 = arith.constant 0 : index
    %c0_239 = arith.constant 0 : index
    %572 = vector.load %arg6[%c0_238, %c0_239] : memref<2x32xf32, #tpu.memory_space<vmem>>, vector<2x32xf32>
    tpu.vector_store %arg6[%c0_238, %c0_239], %571 {strides = array<i32>} : memref<2x32xf32, #tpu.memory_space<vmem>>, vector<2x32xf32>,
    %c0_240 = arith.constant 0 : index
    %c0_241 = arith.constant 0 : index
    %573 = vector.load %arg7[%c0_240, %c0_241] : memref<2x32xf32, #tpu.memory_space<vmem>>, vector<2x32xf32>
    tpu.vector_store %arg7[%c0_240, %c0_241], %569 {strides = array<i32>} : memref<2x32xf32, #tpu.memory_space<vmem>>, vector<2x32xf32>,
    %c0_i32_242 = arith.constant 0 : i32
    %574 = arith.cmpi eq, %c6_i32, %c0_i32_242 : i32
    %575 = arith.extui %574 : i1 to i32
    %c0_i32_243 = arith.constant 0 : i32
    %576 = arith.cmpi ne, %575, %c0_i32_243 : i32
    scf.if %576 {
      %658 = arith.truncf %571 : vector<2x32xf32> to vector<2x32xbf16>
      %c0_278 = arith.constant 0 : index
      %c0_279 = arith.constant 0 : index
      %c32 = arith.constant 32 : index
      %659 = vector.load %arg3[%c0_278, %c0_279, %c32] : memref<1x2x64xbf16, #tpu.memory_space<vmem>>, vector<1x2x32xbf16>
      %660 = vector.shape_cast %659 : vector<1x2x32xbf16> to vector<2x32xbf16>
      %661 = vector.shape_cast %658 : vector<2x32xbf16> to vector<1x2x32xbf16>
      tpu.vector_store %arg3[%c0_278, %c0_279, %c32], %661 {strides = array<i32>} : memref<1x2x64xbf16, #tpu.memory_space<vmem>>, vector<1x2x32xbf16>,
    } else {
    }
    %c7_i32_244 = arith.constant 7 : i32
    %577 = arith.index_cast %c7_i32_244 : i32 to index
    %c0_245 = arith.constant 0 : index
    %c0_246 = arith.constant 0 : index
    %578 = vector.load %arg0[%577, %c0_245, %c0_246] : memref<8x2x256xbf16, #tpu.memory_space<vmem>>, vector<1x2x256xbf16>
    %579 = vector.shape_cast %578 : vector<1x2x256xbf16> to vector<2x256xbf16>
    %580 = arith.extf %579 : vector<2x256xbf16> to vector<2x256xf32>
    %581 = vector.extract_strided_slice %580 {offsets = [0, 0], sizes = [2, 128], strides = [1, 1]} : vector<2x256xf32> to vector<2x128xf32>
    %c0_247 = arith.constant 0 : index
    %c0_248 = arith.constant 0 : index
    %582 = vector.load %arg4[%c0_247, %c0_248] : memref<2x32xf32, #tpu.memory_space<vmem>>, vector<2x32xf32>
    %583 = arith.truncf %582 : vector<2x32xf32> to vector<2x32xbf16>
    %cst_249 = arith.constant dense<0.000000e+00> : vector<2x128xf32>
    %584 = tpu.matmul %583, %8, %cst_249 {dimension_numbers = #tpu.dot_dimension_numbers<[1], [0], [0], [1], [0, 0, 1, 1], [], []>} : vector<2x32xbf16>, vector<32x128xbf16>, vector<2x128xf32> -> vector<2x128xf32>
    %585 = arith.addf %581, %584 : vector<2x128xf32>
    %c0_250 = arith.constant 0 : index
    %c0_251 = arith.constant 0 : index
    %586 = vector.load %arg5[%c0_250, %c0_251] : memref<2x32xf32, #tpu.memory_space<vmem>>, vector<2x32xf32>
    %587 = vector.extract_strided_slice %585 {offsets = [0, 0], sizes = [2, 32], strides = [1, 1]} : vector<2x128xf32> to vector<2x32xf32>
    %588 = arith.negf %587 : vector<2x32xf32>
    %589 = math.exp %588 : vector<2x32xf32>
    %cst_252 = arith.constant 1.000000e+00 : f32
    %590 = vector.broadcast %cst_252 : f32 to vector<2x32xf32>
    %591 = arith.addf %590, %589 : vector<2x32xf32>
    %592 = arith.divf %590, %591 : vector<2x32xf32>
    %593 = vector.extract_strided_slice %585 {offsets = [0, 32], sizes = [2, 32], strides = [1, 1]} : vector<2x128xf32> to vector<2x32xf32>
    %594 = arith.negf %593 : vector<2x32xf32>
    %595 = math.exp %594 : vector<2x32xf32>
    %cst_253 = arith.constant 1.000000e+00 : f32
    %596 = vector.broadcast %cst_253 : f32 to vector<2x32xf32>
    %597 = arith.addf %596, %595 : vector<2x32xf32>
    %598 = arith.divf %596, %597 : vector<2x32xf32>
    %599 = vector.extract_strided_slice %585 {offsets = [0, 64], sizes = [2, 32], strides = [1, 1]} : vector<2x128xf32> to vector<2x32xf32>
    %600 = math.tanh %599 : vector<2x32xf32>
    %601 = vector.extract_strided_slice %585 {offsets = [0, 96], sizes = [2, 32], strides = [1, 1]} : vector<2x128xf32> to vector<2x32xf32>
    %602 = arith.negf %601 : vector<2x32xf32>
    %603 = math.exp %602 : vector<2x32xf32>
    %cst_254 = arith.constant 1.000000e+00 : f32
    %604 = vector.broadcast %cst_254 : f32 to vector<2x32xf32>
    %605 = arith.addf %604, %603 : vector<2x32xf32>
    %606 = arith.divf %604, %605 : vector<2x32xf32>
    %607 = arith.mulf %598, %586 : vector<2x32xf32>
    %608 = arith.mulf %592, %600 : vector<2x32xf32>
    %609 = arith.addf %607, %608 : vector<2x32xf32>
    %610 = math.tanh %609 : vector<2x32xf32>
    %611 = arith.mulf %606, %610 : vector<2x32xf32>
    %c0_255 = arith.constant 0 : index
    %c0_256 = arith.constant 0 : index
    %612 = vector.load %arg4[%c0_255, %c0_256] : memref<2x32xf32, #tpu.memory_space<vmem>>, vector<2x32xf32>
    tpu.vector_store %arg4[%c0_255, %c0_256], %611 {strides = array<i32>} : memref<2x32xf32, #tpu.memory_space<vmem>>, vector<2x32xf32>,
    %c0_257 = arith.constant 0 : index
    %c0_258 = arith.constant 0 : index
    %613 = vector.load %arg5[%c0_257, %c0_258] : memref<2x32xf32, #tpu.memory_space<vmem>>, vector<2x32xf32>
    tpu.vector_store %arg5[%c0_257, %c0_258], %609 {strides = array<i32>} : memref<2x32xf32, #tpu.memory_space<vmem>>, vector<2x32xf32>,
    %c7_i32_259 = arith.constant 7 : i32
    %614 = arith.cmpi eq, %c7_i32_244, %c7_i32_259 : i32
    %615 = arith.extui %614 : i1 to i32
    %c0_i32_260 = arith.constant 0 : i32
    %616 = arith.cmpi ne, %615, %c0_i32_260 : i32
    scf.if %616 {
      %658 = arith.truncf %611 : vector<2x32xf32> to vector<2x32xbf16>
      %c0_278 = arith.constant 0 : index
      %c0_279 = arith.constant 0 : index
      %c0_280 = arith.constant 0 : index
      %659 = vector.load %arg3[%c0_278, %c0_279, %c0_280] : memref<1x2x64xbf16, #tpu.memory_space<vmem>>, vector<1x2x32xbf16>
      %660 = vector.shape_cast %659 : vector<1x2x32xbf16> to vector<2x32xbf16>
      %661 = vector.shape_cast %658 : vector<2x32xbf16> to vector<1x2x32xbf16>
      tpu.vector_store %arg3[%c0_278, %c0_279, %c0_280], %661 {strides = array<i32>} : memref<1x2x64xbf16, #tpu.memory_space<vmem>>, vector<1x2x32xbf16>,
    } else {
    }
    %c7_i32_261 = arith.constant 7 : i32
    %617 = arith.subi %c7_i32_261, %c7_i32_244 : i32
    %618 = arith.index_cast %617 : i32 to index
    %c0_262 = arith.constant 0 : index
    %c0_263 = arith.constant 0 : index
    %619 = vector.load %arg0[%618, %c0_262, %c0_263] : memref<8x2x256xbf16, #tpu.memory_space<vmem>>, vector<1x2x256xbf16>
    %620 = vector.shape_cast %619 : vector<1x2x256xbf16> to vector<2x256xbf16>
    %621 = arith.extf %620 : vector<2x256xbf16> to vector<2x256xf32>
    %622 = vector.extract_strided_slice %621 {offsets = [0, 128], sizes = [2, 128], strides = [1, 1]} : vector<2x256xf32> to vector<2x128xf32>
    %c0_264 = arith.constant 0 : index
    %c0_265 = arith.constant 0 : index
    %623 = vector.load %arg6[%c0_264, %c0_265] : memref<2x32xf32, #tpu.memory_space<vmem>>, vector<2x32xf32>
    %624 = arith.truncf %623 : vector<2x32xf32> to vector<2x32xbf16>
    %cst_266 = arith.constant dense<0.000000e+00> : vector<2x128xf32>
    %625 = tpu.matmul %624, %9, %cst_266 {dimension_numbers = #tpu.dot_dimension_numbers<[1], [0], [0], [1], [0, 0, 1, 1], [], []>} : vector<2x32xbf16>, vector<32x128xbf16>, vector<2x128xf32> -> vector<2x128xf32>
    %626 = arith.addf %622, %625 : vector<2x128xf32>
    %c0_267 = arith.constant 0 : index
    %c0_268 = arith.constant 0 : index
    %627 = vector.load %arg7[%c0_267, %c0_268] : memref<2x32xf32, #tpu.memory_space<vmem>>, vector<2x32xf32>
    %628 = vector.extract_strided_slice %626 {offsets = [0, 0], sizes = [2, 32], strides = [1, 1]} : vector<2x128xf32> to vector<2x32xf32>
    %629 = arith.negf %628 : vector<2x32xf32>
    %630 = math.exp %629 : vector<2x32xf32>
    %cst_269 = arith.constant 1.000000e+00 : f32
    %631 = vector.broadcast %cst_269 : f32 to vector<2x32xf32>
    %632 = arith.addf %631, %630 : vector<2x32xf32>
    %633 = arith.divf %631, %632 : vector<2x32xf32>
    %634 = vector.extract_strided_slice %626 {offsets = [0, 32], sizes = [2, 32], strides = [1, 1]} : vector<2x128xf32> to vector<2x32xf32>
    %635 = arith.negf %634 : vector<2x32xf32>
    %636 = math.exp %635 : vector<2x32xf32>
    %cst_270 = arith.constant 1.000000e+00 : f32
    %637 = vector.broadcast %cst_270 : f32 to vector<2x32xf32>
    %638 = arith.addf %637, %636 : vector<2x32xf32>
    %639 = arith.divf %637, %638 : vector<2x32xf32>
    %640 = vector.extract_strided_slice %626 {offsets = [0, 64], sizes = [2, 32], strides = [1, 1]} : vector<2x128xf32> to vector<2x32xf32>
    %641 = math.tanh %640 : vector<2x32xf32>
    %642 = vector.extract_strided_slice %626 {offsets = [0, 96], sizes = [2, 32], strides = [1, 1]} : vector<2x128xf32> to vector<2x32xf32>
    %643 = arith.negf %642 : vector<2x32xf32>
    %644 = math.exp %643 : vector<2x32xf32>
    %cst_271 = arith.constant 1.000000e+00 : f32
    %645 = vector.broadcast %cst_271 : f32 to vector<2x32xf32>
    %646 = arith.addf %645, %644 : vector<2x32xf32>
    %647 = arith.divf %645, %646 : vector<2x32xf32>
    %648 = arith.mulf %639, %627 : vector<2x32xf32>
    %649 = arith.mulf %633, %641 : vector<2x32xf32>
    %650 = arith.addf %648, %649 : vector<2x32xf32>
    %651 = math.tanh %650 : vector<2x32xf32>
    %652 = arith.mulf %647, %651 : vector<2x32xf32>
    %c0_272 = arith.constant 0 : index
    %c0_273 = arith.constant 0 : index
    %653 = vector.load %arg6[%c0_272, %c0_273] : memref<2x32xf32, #tpu.memory_space<vmem>>, vector<2x32xf32>
    tpu.vector_store %arg6[%c0_272, %c0_273], %652 {strides = array<i32>} : memref<2x32xf32, #tpu.memory_space<vmem>>, vector<2x32xf32>,
    %c0_274 = arith.constant 0 : index
    %c0_275 = arith.constant 0 : index
    %654 = vector.load %arg7[%c0_274, %c0_275] : memref<2x32xf32, #tpu.memory_space<vmem>>, vector<2x32xf32>
    tpu.vector_store %arg7[%c0_274, %c0_275], %650 {strides = array<i32>} : memref<2x32xf32, #tpu.memory_space<vmem>>, vector<2x32xf32>,
    %c0_i32_276 = arith.constant 0 : i32
    %655 = arith.cmpi eq, %c7_i32_244, %c0_i32_276 : i32
    %656 = arith.extui %655 : i1 to i32
    %c0_i32_277 = arith.constant 0 : i32
    %657 = arith.cmpi ne, %656, %c0_i32_277 : i32
    scf.if %657 {
      %658 = arith.truncf %652 : vector<2x32xf32> to vector<2x32xbf16>
      %c0_278 = arith.constant 0 : index
      %c0_279 = arith.constant 0 : index
      %c32 = arith.constant 32 : index
      %659 = vector.load %arg3[%c0_278, %c0_279, %c32] : memref<1x2x64xbf16, #tpu.memory_space<vmem>>, vector<1x2x32xbf16>
      %660 = vector.shape_cast %659 : vector<1x2x32xbf16> to vector<2x32xbf16>
      %661 = vector.shape_cast %658 : vector<2x32xbf16> to vector<1x2x32xbf16>
      tpu.vector_store %arg3[%c0_278, %c0_279, %c32], %661 {strides = array<i32>} : memref<1x2x64xbf16, #tpu.memory_space<vmem>>, vector<1x2x32xbf16>,
    } else {
    }
    %c8_i32 = arith.constant 8 : i32
    return
  }
}

module attributes {stable_mosaic.version = 11 : i64} {
  func.func @_linear_kernel(%arg0: i32, %arg1: memref<2x64xbf16, #tpu.memory_space<vmem>>, %arg2: memref<64x4xbf16, #tpu.memory_space<vmem>>, %arg3: memref<1x4xf32, #tpu.memory_space<vmem>>, %arg4: memref<2x4xf32, #tpu.memory_space<vmem>>) attributes {dimension_semantics = [#tpu.dimension_semantics<parallel>], iteration_bounds = array<i64: 1>, scalar_prefetch = 0 : i64, scratch_operands = 0 : i64, tpu.core_type = #tpu.core_type<tc>, window_params = [{transform_indices = @transform_0, window_bounds = array<i64: 2, 64>}, {pipeline_mode = #tpu.pipeline_mode<synchronous>, transform_indices = @transform_1, window_bounds = array<i64: 64, 4>}, {pipeline_mode = #tpu.pipeline_mode<synchronous>, transform_indices = @transform_2, window_bounds = array<i64: 1, 4>}, {transform_indices = @transform_3, window_bounds = array<i64: 2, 4>}]} {
    %c0 = arith.constant 0 : index
    %c0_0 = arith.constant 0 : index
    %0 = vector.load %arg1[%c0, %c0_0] : memref<2x64xbf16, #tpu.memory_space<vmem>>, vector<2x64xbf16>
    %c0_1 = arith.constant 0 : index
    %c0_2 = arith.constant 0 : index
    %1 = vector.load %arg2[%c0_1, %c0_2] : memref<64x4xbf16, #tpu.memory_space<vmem>>, vector<64x4xbf16>
    %cst = arith.constant dense<0.000000e+00> : vector<2x4xf32>
    %2 = tpu.matmul %0, %1, %cst {dimension_numbers = #tpu.dot_dimension_numbers<[1], [0], [0], [1], [0, 0, 1, 1], [], []>} : vector<2x64xbf16>, vector<64x4xbf16>, vector<2x4xf32> -> vector<2x4xf32>
    %c0_3 = arith.constant 0 : index
    %c0_4 = arith.constant 0 : index
    %3 = vector.load %arg3[%c0_3, %c0_4] : memref<1x4xf32, #tpu.memory_space<vmem>>, vector<1x4xf32>
    %4 = vector.broadcast %3 : vector<1x4xf32> to vector<2x4xf32>
    %5 = arith.addf %2, %4 : vector<2x4xf32>
    %c0_5 = arith.constant 0 : index
    %c0_6 = arith.constant 0 : index
    %6 = vector.load %arg4[%c0_5, %c0_6] : memref<2x4xf32, #tpu.memory_space<vmem>>, vector<2x4xf32>
    tpu.vector_store %arg4[%c0_5, %c0_6], %5 {strides = array<i32>} : memref<2x4xf32, #tpu.memory_space<vmem>>, vector<2x4xf32>,
    return
  }
  func.func @transform_0(%arg0: i32) -> (i32, i32) {
    %c0_i32 = arith.constant 0 : i32
    %c0_i32_0 = arith.constant 0 : i32
    return %arg0, %c0_i32 : i32, i32
  }
  func.func @transform_1(%arg0: i32) -> (i32, i32) {
    %c0_i32 = arith.constant 0 : i32
    %c0_i32_0 = arith.constant 0 : i32
    %c0_i32_1 = arith.constant 0 : i32
    return %c0_i32, %c0_i32_0 : i32, i32
  }
  func.func @transform_2(%arg0: i32) -> (i32, i32) {
    %c0_i32 = arith.constant 0 : i32
    %c0_i32_0 = arith.constant 0 : i32
    %c0_i32_1 = arith.constant 0 : i32
    return %c0_i32, %c0_i32_0 : i32, i32
  }
  func.func @transform_3(%arg0: i32) -> (i32, i32) {
    %c0_i32 = arith.constant 0 : i32
    %c0_i32_0 = arith.constant 0 : i32
    return %arg0, %c0_i32 : i32, i32
  }
}

</mosaic_0001>

<llo_original>
// kernel: robert_lstm_forward.7
$region0: #{robert_lstm_forward.7}
  #allocation0 [shape = 'u32[]', space=smem, size = 0x4, offset = 0x4, fixed_abs, tag = 'smem constant byte address 0x4 - core index']
  #allocation1 [shape = 'u32[144,128]{1,0:T(1,128)}', space=vmem, size = 0x12000, scoped, tag = 'internal scratch']
  %s0 = inlined_call_operand.vmem [shape: bf16[16,32], index: 0, kind: input, shape index: {}]
  %s1 = inlined_call_operand.vmem [shape: f32[1,32], index: 1, kind: input, shape index: {}]
  %s2 = inlined_call_operand.vmem [shape: f32[1,32], index: 2, kind: input, shape index: {}]
  %s3 = inlined_call_operand.vmem [shape: bf16[16,32], index: 3, kind: output, shape index: {}]
  %s4 = sld [smem:[#allocation0]]
  $region22: #{robert_lstm_forward.7} parent=0
    _
  %s6 = ssub.s32 1, %s4
  %s7 = scalar_select 0, %s6, %s4
  // Predicated region
  $region2: #{robert_lstm_forward.7} parent=0 // pred_check
    _
  $region3: #{robert_lstm_forward.7} parent=0 // pred_check_branch
    %9 = sbr.rel (0) target = $region5
  $region4: #{robert_lstm_forward.7} parent=0 // pred_region
    _
  $region5: #{robert_lstm_forward.7} parent=0 // pred_fallthru
    _
  // Predicated region
  $region6: #{robert_lstm_forward.7} parent=0 // pred_check
    _
  $region7: #{robert_lstm_forward.7} parent=0 // pred_check_branch
    %11 = sbr.rel (0) target = $region9
  $region8: #{robert_lstm_forward.7} parent=0 // pred_region
    _
  $region9: #{robert_lstm_forward.7} parent=0 // pred_fallthru
    _
  // Predicated region
  $region10: #{robert_lstm_forward.7} parent=0 // pred_check
    _
  $region11: #{robert_lstm_forward.7} parent=0 // pred_check_branch
    %13 = sbr.rel (0) target = $region13
  $region12: #{robert_lstm_forward.7} parent=0 // pred_region
    _
  $region13: #{robert_lstm_forward.7} parent=0 // pred_fallthru
    _
  %v14 = vld [vmem:[%s0] sm:$0xf]
  %v15 = vld [vmem:[%s0 + $0x4] sm:$0xf]
  %v16 = vunpack.c.l.bf16 %v14
  %v17 = vunpack.c.l.bf16 %v15
  %v18 = vld [vmem:[%s1] sm:$0x1]
  %v19 = vld [vmem:[%s2] sm:$0x1]
  %vm20 = vcmask 261120
  %v21 = vsel %vm20, %v16, 0.0
  %22 = vadd.xlane.f32.xlu0 %v21
  %v23 = vpop.xlane.xlu0 %22
  %v24 = vsel %vm20, %v17, 0.0
  %25 = vadd.xlane.f32.xlu0 %v24
  %v26 = vpop.xlane.xlu0 %25
  %v27 = vrcp.pop 32.0
  %v28 = vmul.f32 %v23, %v27
  %v29 = vmul.f32 %v26, %v27
  %v30 = vsub.f32 %v16, %v28
  %v31 = vsub.f32 %v17, %v29
  %v32 = vmul.f32 %v30, %v30
  %v33 = vmul.f32 %v31, %v31
  %v34 = vsel %vm20, %v32, 0.0
  %35 = vadd.xlane.f32.xlu0 %v34
  %v36 = vpop.xlane.xlu0 %35
  %v37 = vsel %vm20, %v33, 0.0
  %38 = vadd.xlane.f32.xlu0 %v37
  %v39 = vpop.xlane.xlu0 %38
  %v40 = vmul.f32 %v36, %v27
  %v41 = vmul.f32 %v39, %v27
  %v42 = vadd.f32 %v40, 1e-12
  %v43 = vadd.f32 %v41, 1e-12
  %v44 = vrsqrt.pop %v42
  %v45 = vrsqrt.pop %v43
  %v46 = vmul.f32 %v30, %v44
  %v47 = vmul.f32 %v31, %v45
  %v49 = vlaneseq
  %v50 = vshrl.u32 %v49, 7
  %v51 = vsub.s32 0, %v50
  %v52 = vrot.slane %v18, %v51
  %v54 = vmul.f32 %v46, %v52
  %v55 = vmul.f32 %v47, %v52
  %v57 = vlaneseq
  %v58 = vshrl.u32 %v57, 7
  %v59 = vsub.s32 0, %v58
  %v60 = vrot.slane %v19, %v59
  %v62 = vadd.f32 %v54, %v60
  %v63 = vadd.f32 %v55, %v60
  %v64 = vpack.c.bf16 %v63, %v62
  %v66 = vunpack.c.l.b16 %v64
  %v67 = vunpack.c.h.b16 %v64
  %v68 = vpack.c.b16 %v66, %v66
  %v69 = vpack.c.b16 %v67, %v67
  %vm72 = vcmask 257024
  %73 = vst.msk [vmem:[%s3] sm:$0xf] %vm72, %v68
  %74 = vst.msk [vmem:[%s3 + $0x4] sm:$0xf] %vm72, %v69
  // Predicated region
  $region14: #{robert_lstm_forward.7} parent=0 // pred_check
    _
  $region15: #{robert_lstm_forward.7} parent=0 // pred_check_branch
    %76 = sbr.rel (0) target = $region17
  $region16: #{robert_lstm_forward.7} parent=0 // pred_region
    _
  $region17: #{robert_lstm_forward.7} parent=0 // pred_fallthru
    _
  // Predicated region
  $region18: #{robert_lstm_forward.7} parent=0 // pred_check
    _
  $region19: #{robert_lstm_forward.7} parent=0 // pred_check_branch
    %78 = sbr.rel (0) target = $region21
  $region20: #{robert_lstm_forward.7} parent=0 // pred_region
    _
  $region21: #{robert_lstm_forward.7} parent=0 // pred_fallthru
    _

// kernel: robert_lstm_forward.9
$region0: #{robert_lstm_forward.9}
  #allocation0 [shape = 'u32[]', space=smem, size = 0x4, offset = 0x4, fixed_abs, tag = 'smem constant byte address 0x4 - core index']
  #allocation1 [shape = 'u32[144,128]{1,0:T(1,128)}', space=vmem, size = 0x12000, scoped, tag = 'internal scratch']
  %s0 = inlined_call_operand.vmem [shape: bf16[16,32], index: 0, kind: input, shape index: {}]
  %s1 = inlined_call_operand.vmem [shape: bf16[32,256], index: 1, kind: input, shape index: {}]
  %s2 = inlined_call_operand.vmem [shape: f32[1,256], index: 2, kind: input, shape index: {}]
  %s3 = inlined_call_operand.vmem [shape: bf16[16,256], index: 3, kind: output, shape index: {}]
  %s4 = sld [smem:[#allocation0]]
  $region22: #{robert_lstm_forward.9} parent=0
    _
  %s6 = ssub.s32 1, %s4
  %s7 = scalar_select 0, %s6, %s4
  // Predicated region
  $region2: #{robert_lstm_forward.9} parent=0 // pred_check
    _
  $region3: #{robert_lstm_forward.9} parent=0 // pred_check_branch
    %9 = sbr.rel (0) target = $region5
  $region4: #{robert_lstm_forward.9} parent=0 // pred_region
    _
  $region5: #{robert_lstm_forward.9} parent=0 // pred_fallthru
    _
  // Predicated region
  $region6: #{robert_lstm_forward.9} parent=0 // pred_check
    _
  $region7: #{robert_lstm_forward.9} parent=0 // pred_check_branch
    %11 = sbr.rel (0) target = $region9
  $region8: #{robert_lstm_forward.9} parent=0 // pred_region
    _
  $region9: #{robert_lstm_forward.9} parent=0 // pred_fallthru
    _
  // Predicated region
  $region10: #{robert_lstm_forward.9} parent=0 // pred_check
    _
  $region11: #{robert_lstm_forward.9} parent=0 // pred_check_branch
    %13 = sbr.rel (0) target = $region13
  $region12: #{robert_lstm_forward.9} parent=0 // pred_region
    _
  $region13: #{robert_lstm_forward.9} parent=0 // pred_fallthru
    _
  %v15 = vld [vmem:[%s0] sm:$0xf]
  %v16 = vld [vmem:[%s0 + $0x4] sm:$0xf]
  %v17 = vld [vmem:[%s1] sm:$0xff]
  %v18 = vld [vmem:[%s1 + $0x8] sm:$0xff]
  %v19 = vld [vmem:[%s1 + $0x10] sm:$0xff]
  %v20 = vld [vmem:[%s1 + $0x18] sm:$0xff]
  %v21 = vld [vmem:[%s2] sm:$0x3]
  %v23 = vlaneseq
  %v24 = vshrl.u32 %v23, 7
  %v25 = vsub.s32 0, %v24
  %v26 = vrot.slane %v21, %v25
  %v27 = vlaneseq
  %v28 = vshrl.u32 %v27, 7
  %v29 = vsub.s32 1, %v28
  %v30 = vrot.slane %v21, %v29
  %v35 = vunpack.c.l.b16 %v15
  %v36 = vunpack.c.l.b16 %v16
  %v37 = vpack.c.b16 %v36, %v35
  %v42 = vunpack.c.l.b16 %v17
  %v43 = vunpack.c.h.b16 %v17
  %v44 = vunpack.c.l.b16 %v18
  %v45 = vunpack.c.h.b16 %v18
  %v46 = vunpack.c.l.b16 %v19
  %v47 = vunpack.c.h.b16 %v19
  %v48 = vunpack.c.l.b16 %v20
  %v49 = vunpack.c.h.b16 %v20
  %v50 = vpack.c.b16 %v44, %v42
  %v51 = vpack.c.b16 %v45, %v43
  %v52 = vpack.c.b16 %v48, %v46
  %v53 = vpack.c.b16 %v49, %v47
  %vm58 = vcmask 261120
  %v60 = vsel %vm58, %v37, 0
  %62 = vmatprep.subr.bf16.mxu0 %v51
  %63 = vmatpush1.bf16.msra.mxu0 %v50
  %64 = vmatprep.subr.bf16.mxu0 %v53
  %65 = vmatpush1.bf16.msra.mxu0 %v52
  %66 = vmatprep.subr.bf16.mxu0 0
  %67 = vmatpush1.bf16.msra.mxu0 0
  %68 = vmatprep.subr.bf16.mxu0 0
  %69 = vmatpush1.bf16.msra.mxu0 0
  %70 = vmatprep.subr.bf16.mxu0 0
  %71 = vmatpush1.bf16.msra.mxu0 0
  %72 = vmatprep.subr.bf16.mxu0 0
  %73 = vmatpush1.bf16.msra.mxu0 0
  %74 = vmatprep.subr.bf16.mxu0 0
  %75 = vmatpush1.bf16.msra.mxu0 0
  %76 = vmatprep.subr.bf16.mxu0 0
  %77 = vmatpush1.bf16.msra.mxu0 0
  %78 = vmatprep.subr.bf16.mxu0 0
  %79 = vmatpush1.bf16.msra.mxu0 0
  %80 = vmatprep.subr.bf16.mxu0 0
  %81 = vmatpush1.bf16.msra.mxu0 0
  %82 = vmatprep.subr.bf16.mxu0 0
  %83 = vmatpush1.bf16.msra.mxu0 0
  %84 = vmatprep.subr.bf16.mxu0 0
  %85 = vmatpush1.bf16.msra.mxu0 0
  %86 = vmatprep.subr.bf16.mxu0 0
  %87 = vmatpush1.bf16.msra.mxu0 0
  %88 = vmatprep.subr.bf16.mxu0 0
  %89 = vmatpush1.bf16.msra.mxu0 0
  %90 = vmatprep.subr.bf16.mxu0 0
  %91 = vmatpush1.bf16.msra.mxu0 0
  %92 = vmatprep.subr.bf16.mxu0 0
  %93 = vmatpush1.bf16.msra.mxu0 0
  %94 = vmatprep.mubr.bf16.mxu0 0
  %95 = vmatmul.mubr.bf16.gmra.mrb[0].mxu0 %v60
  %v96 = vpop.f32.mrb[0].mxu0
  %v97 = vadd.f32 %v26, %v96
  %v98 = vpop.f32.mrb[0].mxu0
  %v99 = vadd.f32 %v30, %v98
  %v100 = vpop.f32.mrb[0].mxu0
  %v101 = vadd.f32 %v26, %v100
  %v102 = vpop.f32.mrb[0].mxu0
  %v103 = vadd.f32 %v30, %v102
  %104 = vdwg.mxu0
  %v105 = vpack.c.bf16 %v101, %v97
  %v106 = vpack.c.bf16 %v103, %v99
  %v109 = vunpack.c.l.b16 %v105
  %v110 = vunpack.c.l.b16 %v106
  %v111 = vunpack.c.h.b16 %v105
  %v112 = vunpack.c.h.b16 %v106
  %v113 = vpack.c.b16 %v110, %v109
  %v114 = vpack.c.b16 %v112, %v111
  %117 = vst [vmem:[%s3] sm:$0xff] %v113
  %118 = vst [vmem:[%s3 + $0x8] sm:$0xff] %v114
  // Predicated region
  $region14: #{robert_lstm_forward.9} parent=0 // pred_check
    _
  $region15: #{robert_lstm_forward.9} parent=0 // pred_check_branch
    %120 = sbr.rel (0) target = $region17
  $region16: #{robert_lstm_forward.9} parent=0 // pred_region
    _
  $region17: #{robert_lstm_forward.9} parent=0 // pred_fallthru
    _
  // Predicated region
  $region18: #{robert_lstm_forward.9} parent=0 // pred_check
    _
  $region19: #{robert_lstm_forward.9} parent=0 // pred_check_branch
    %122 = sbr.rel (0) target = $region21
  $region20: #{robert_lstm_forward.9} parent=0 // pred_region
    _
  $region21: #{robert_lstm_forward.9} parent=0 // pred_fallthru
    _

// kernel: robert_lstm_forward.8
$region0: #{robert_lstm_forward.8}
  #allocation0 [shape = 'u32[]', space=smem, size = 0x4, offset = 0x4, fixed_abs, tag = 'smem constant byte address 0x4 - core index']
  #allocation1 [shape = 'u32[144,128]{1,0:T(1,128)}', space=vmem, size = 0x12000, scoped, tag = 'internal scratch']
  %s0 = inlined_call_operand.vmem [shape: bf16[2,8,32], index: 0, kind: input, shape index: {}]
  %s1 = inlined_call_operand.vmem [shape: f32[2,1,8], index: 1, kind: input, shape index: {}]
  %s2 = inlined_call_operand.vmem [shape: bf16[32,96], index: 2, kind: input, shape index: {}]
  %s3 = inlined_call_operand.vmem [shape: f32[1,96], index: 3, kind: input, shape index: {}]
  %s4 = inlined_call_operand.vmem [shape: bf16[32,32], index: 4, kind: input, shape index: {}]
  %s5 = inlined_call_operand.vmem [shape: f32[1,32], index: 5, kind: input, shape index: {}]
  %s6 = inlined_call_operand.vmem [shape: f32[1,32], index: 6, kind: input, shape index: {}]
  %s7 = inlined_call_operand.vmem [shape: f32[1,32], index: 7, kind: input, shape index: {}]
  %s8 = inlined_call_operand.vmem [shape: bf16[32,128], index: 8, kind: input, shape index: {}]
  %s9 = inlined_call_operand.vmem [shape: f32[1,128], index: 9, kind: input, shape index: {}]
  %s10 = inlined_call_operand.vmem [shape: bf16[128,32], index: 10, kind: input, shape index: {}]
  %s11 = inlined_call_operand.vmem [shape: f32[1,32], index: 11, kind: input, shape index: {}]
  %s12 = inlined_call_operand.vmem [shape: f32[1,32], index: 12, kind: input, shape index: {}]
  %s13 = inlined_call_operand.vmem [shape: f32[1,32], index: 13, kind: input, shape index: {}]
  %s14 = inlined_call_operand.vmem [shape: bf16[2,8,32], index: 14, kind: output, shape index: {}]
  %s15 = sld [smem:[#allocation0]]
  $region89: #{robert_lstm_forward.8} parent=0
    _
  %s17 = ssub.s32 1, %s15
  %s18 = scalar_select 0, %s17, %s15
  loop: start=0, step=1, limit=4
  $region2: #{robert_lstm_forward.8} parent=0 // loop_pre_header
    _
  $region3: #{robert_lstm_forward.8} parent=0 // loop_header
    %s20 = sphi 0, %s24
    %p21 = scmp.ge.s32.totalorder %s20, 4
    %s30 = sphi 0, %s32
    %s33 = sphi 0, %s30
    %s34 = sphi 0, %s33
    %s50 = sphi 0, %s34
    %s56 = sphi 0, %s58
    %s59 = sphi 0, %s56
    %s60 = sphi 0, %s59
    %s76 = sphi 0, %s60
    %s80 = sphi 0, %s80
    %s82 = sphi 0, %s80
    %s83 = sphi 0, %s82
    %s97 = sphi 0, %s83
    %s101 = sphi 0, %s101
    %s103 = sphi 0, %s101
    %s104 = sphi 0, %s103
    %s118 = sphi 0, %s104
    %s122 = sphi 0, %s122
    %s124 = sphi 0, %s122
    %s125 = sphi 0, %s124
    %s139 = sphi 0, %s125
    %s143 = sphi 0, %s143
    %s145 = sphi 0, %s143
    %s146 = sphi 0, %s145
    %s160 = sphi 0, %s146
    %s164 = sphi 0, %s164
    %s166 = sphi 0, %s164
    %s167 = sphi 0, %s166
    %s181 = sphi 0, %s167
    %s185 = sphi 0, %s185
    %s187 = sphi 0, %s185
    %s188 = sphi 0, %s187
    %s202 = sphi 0, %s188
    %s206 = sphi 0, %s206
    %s208 = sphi 0, %s206
    %s209 = sphi 0, %s208
    %s223 = sphi 0, %s209
    %s227 = sphi 0, %s227
    %s229 = sphi 0, %s227
    %s230 = sphi 0, %s229
    %s244 = sphi 0, %s230
    %s248 = sphi 0, %s248
    %s250 = sphi 0, %s248
    %s251 = sphi 0, %s250
    %s265 = sphi 0, %s251
    %s269 = sphi 0, %s269
    %s271 = sphi 0, %s269
    %s272 = sphi 0, %s271
    %s286 = sphi 0, %s272
    %s290 = sphi 0, %s290
    %s292 = sphi 0, %s290
    %s293 = sphi 0, %s292
    %s307 = sphi 0, %s293
    %s311 = sphi 0, %s311
    %s313 = sphi 0, %s311
    %s314 = sphi 0, %s313
    %s328 = sphi 0, %s314
    %s334 = sphi 0, %s336
    %s337 = sphi 0, %s334
    %s338 = sphi 0, %s337
    %s354 = sphi 0, %s338
  $region4: #{robert_lstm_forward.8} parent=0 // loop_header_branch
    %23 = sbr.rel (%p21) target = $region8
  $region5: #{robert_lstm_forward.8} parent=0 // loop_body
    %s25 = ssub.s32 %s20, 1
    %s26 = ssub.s32 %s20, 2
    %s27 = sadd.s32 %s20, 1
    %s28 = ssub.s32 %s20, %s27
    %p29 = scmp.eq.s32.totalorder %s28, 0
    %s31 = sadd.s32 %s30, 1
    %s32 = scalar_select %p29, %s30, %s31
    %p35 = pneg %p29
    %p36 = scmp.eq.s32.totalorder %s20, 1
    %p37 = por %p35, %p36
    %p38 = scmp.ne.s32.totalorder %s30, %s33
    %p39 = scmp.eq.s32.totalorder %s20, 0
    %p40 = por %p38, %p39
    %p41 = scmp.ne.s32.totalorder %s30, %s33
    %p42 = scmp.eq.s32.totalorder %s25, 1
    %p43 = por %p41, %p42
    %p44 = scmp.ne.s32.totalorder %s33, %s34
    %p45 = scmp.eq.s32.totalorder %s25, 0
    %p46 = por %p44, %p45
    %p47 = scmp.ne.s32.totalorder %s33, %s34
    %p48 = scmp.eq.s32.totalorder %s26, 1
    %p49 = por %p47, %p48
    %p51 = scmp.ne.s32.totalorder %s34, %s50
    %p52 = scmp.eq.s32.totalorder %s26, 0
    %p53 = por %p51, %p52
    %s54 = ssub.s32 %s20, %s27
    %p55 = scmp.eq.s32.totalorder %s54, 0
    %s57 = sadd.s32 %s56, 1
    %s58 = scalar_select %p55, %s56, %s57
    %p61 = pneg %p55
    %p62 = scmp.eq.s32.totalorder %s20, 1
    %p63 = por %p61, %p62
    %p64 = scmp.ne.s32.totalorder %s56, %s59
    %p65 = scmp.eq.s32.totalorder %s20, 0
    %p66 = por %p64, %p65
    %p67 = scmp.ne.s32.totalorder %s56, %s59
    %p68 = scmp.eq.s32.totalorder %s25, 1
    %p69 = por %p67, %p68
    %p70 = scmp.ne.s32.totalorder %s59, %s60
    %p71 = scmp.eq.s32.totalorder %s25, 0
    %p72 = por %p70, %p71
    %p73 = scmp.ne.s32.totalorder %s59, %s60
    %p74 = scmp.eq.s32.totalorder %s26, 1
    %p75 = por %p73, %p74
    %p77 = scmp.ne.s32.totalorder %s60, %s76
    %p78 = scmp.eq.s32.totalorder %s26, 0
    %p79 = por %p77, %p78
    %s81 = sadd.s32 %s80, 1
    %p84 = scmp.eq.s32.totalorder %s20, 1
    %p85 = scmp.ne.s32.totalorder %s80, %s82
    %p86 = scmp.eq.s32.totalorder %s20, 0
    %p87 = por %p85, %p86
    %p88 = scmp.ne.s32.totalorder %s80, %s82
    %p89 = scmp.eq.s32.totalorder %s25, 1
    %p90 = por %p88, %p89
    %p91 = scmp.ne.s32.totalorder %s82, %s83
    %p92 = scmp.eq.s32.totalorder %s25, 0
    %p93 = por %p91, %p92
    %p94 = scmp.ne.s32.totalorder %s82, %s83
    %p95 = scmp.eq.s32.totalorder %s26, 1
    %p96 = por %p94, %p95
    %p98 = scmp.ne.s32.totalorder %s83, %s97
    %p99 = scmp.eq.s32.totalorder %s26, 0
    %p100 = por %p98, %p99
    %s102 = sadd.s32 %s101, 1
    %p105 = scmp.eq.s32.totalorder %s20, 1
    %p106 = scmp.ne.s32.totalorder %s101, %s103
    %p107 = scmp.eq.s32.totalorder %s20, 0
    %p108 = por %p106, %p107
    %p109 = scmp.ne.s32.totalorder %s101, %s103
    %p110 = scmp.eq.s32.totalorder %s25, 1
    %p111 = por %p109, %p110
    %p112 = scmp.ne.s32.totalorder %s103, %s104
    %p113 = scmp.eq.s32.totalorder %s25, 0
    %p114 = por %p112, %p113
    %p115 = scmp.ne.s32.totalorder %s103, %s104
    %p116 = scmp.eq.s32.totalorder %s26, 1
    %p117 = por %p115, %p116
    %p119 = scmp.ne.s32.totalorder %s104, %s118
    %p120 = scmp.eq.s32.totalorder %s26, 0
    %p121 = por %p119, %p120
    %s123 = sadd.s32 %s122, 1
    %p126 = scmp.eq.s32.totalorder %s20, 1
    %p127 = scmp.ne.s32.totalorder %s122, %s124
    %p128 = scmp.eq.s32.totalorder %s20, 0
    %p129 = por %p127, %p128
    %p130 = scmp.ne.s32.totalorder %s122, %s124
    %p131 = scmp.eq.s32.totalorder %s25, 1
    %p132 = por %p130, %p131
    %p133 = scmp.ne.s32.totalorder %s124, %s125
    %p134 = scmp.eq.s32.totalorder %s25, 0
    %p135 = por %p133, %p134
    %p136 = scmp.ne.s32.totalorder %s124, %s125
    %p137 = scmp.eq.s32.totalorder %s26, 1
    %p138 = por %p136, %p137
    %p140 = scmp.ne.s32.totalorder %s125, %s139
    %p141 = scmp.eq.s32.totalorder %s26, 0
    %p142 = por %p140, %p141
    %s144 = sadd.s32 %s143, 1
    %p147 = scmp.eq.s32.totalorder %s20, 1
    %p148 = scmp.ne.s32.totalorder %s143, %s145
    %p149 = scmp.eq.s32.totalorder %s20, 0
    %p150 = por %p148, %p149
    %p151 = scmp.ne.s32.totalorder %s143, %s145
    %p152 = scmp.eq.s32.totalorder %s25, 1
    %p153 = por %p151, %p152
    %p154 = scmp.ne.s32.totalorder %s145, %s146
    %p155 = scmp.eq.s32.totalorder %s25, 0
    %p156 = por %p154, %p155
    %p157 = scmp.ne.s32.totalorder %s145, %s146
    %p158 = scmp.eq.s32.totalorder %s26, 1
    %p159 = por %p157, %p158
    %p161 = scmp.ne.s32.totalorder %s146, %s160
    %p162 = scmp.eq.s32.totalorder %s26, 0
    %p163 = por %p161, %p162
    %s165 = sadd.s32 %s164, 1
    %p168 = scmp.eq.s32.totalorder %s20, 1
    %p169 = scmp.ne.s32.totalorder %s164, %s166
    %p170 = scmp.eq.s32.totalorder %s20, 0
    %p171 = por %p169, %p170
    %p172 = scmp.ne.s32.totalorder %s164, %s166
    %p173 = scmp.eq.s32.totalorder %s25, 1
    %p174 = por %p172, %p173
    %p175 = scmp.ne.s32.totalorder %s166, %s167
    %p176 = scmp.eq.s32.totalorder %s25, 0
    %p177 = por %p175, %p176
    %p178 = scmp.ne.s32.totalorder %s166, %s167
    %p179 = scmp.eq.s32.totalorder %s26, 1
    %p180 = por %p178, %p179
    %p182 = scmp.ne.s32.totalorder %s167, %s181
    %p183 = scmp.eq.s32.totalorder %s26, 0
    %p184 = por %p182, %p183
    %s186 = sadd.s32 %s185, 1
    %p189 = scmp.eq.s32.totalorder %s20, 1
    %p190 = scmp.ne.s32.totalorder %s185, %s187
    %p191 = scmp.eq.s32.totalorder %s20, 0
    %p192 = por %p190, %p191
    %p193 = scmp.ne.s32.totalorder %s185, %s187
    %p194 = scmp.eq.s32.totalorder %s25, 1
    %p195 = por %p193, %p194
    %p196 = scmp.ne.s32.totalorder %s187, %s188
    %p197 = scmp.eq.s32.totalorder %s25, 0
    %p198 = por %p196, %p197
    %p199 = scmp.ne.s32.totalorder %s187, %s188
    %p200 = scmp.eq.s32.totalorder %s26, 1
    %p201 = por %p199, %p200
    %p203 = scmp.ne.s32.totalorder %s188, %s202
    %p204 = scmp.eq.s32.totalorder %s26, 0
    %p205 = por %p203, %p204
    %s207 = sadd.s32 %s206, 1
    %p210 = scmp.eq.s32.totalorder %s20, 1
    %p211 = scmp.ne.s32.totalorder %s206, %s208
    %p212 = scmp.eq.s32.totalorder %s20, 0
    %p213 = por %p211, %p212
    %p214 = scmp.ne.s32.totalorder %s206, %s208
    %p215 = scmp.eq.s32.totalorder %s25, 1
    %p216 = por %p214, %p215
    %p217 = scmp.ne.s32.totalorder %s208, %s209
    %p218 = scmp.eq.s32.totalorder %s25, 0
    %p219 = por %p217, %p218
    %p220 = scmp.ne.s32.totalorder %s208, %s209
    %p221 = scmp.eq.s32.totalorder %s26, 1
    %p222 = por %p220, %p221
    %p224 = scmp.ne.s32.totalorder %s209, %s223
    %p225 = scmp.eq.s32.totalorder %s26, 0
    %p226 = por %p224, %p225
    %s228 = sadd.s32 %s227, 1
    %p231 = scmp.eq.s32.totalorder %s20, 1
    %p232 = scmp.ne.s32.totalorder %s227, %s229
    %p233 = scmp.eq.s32.totalorder %s20, 0
    %p234 = por %p232, %p233
    %p235 = scmp.ne.s32.totalorder %s227, %s229
    %p236 = scmp.eq.s32.totalorder %s25, 1
    %p237 = por %p235, %p236
    %p238 = scmp.ne.s32.totalorder %s229, %s230
    %p239 = scmp.eq.s32.totalorder %s25, 0
    %p240 = por %p238, %p239
    %p241 = scmp.ne.s32.totalorder %s229, %s230
    %p242 = scmp.eq.s32.totalorder %s26, 1
    %p243 = por %p241, %p242
    %p245 = scmp.ne.s32.totalorder %s230, %s244
    %p246 = scmp.eq.s32.totalorder %s26, 0
    %p247 = por %p245, %p246
    %s249 = sadd.s32 %s248, 1
    %p252 = scmp.eq.s32.totalorder %s20, 1
    %p253 = scmp.ne.s32.totalorder %s248, %s250
    %p254 = scmp.eq.s32.totalorder %s20, 0
    %p255 = por %p253, %p254
    %p256 = scmp.ne.s32.totalorder %s248, %s250
    %p257 = scmp.eq.s32.totalorder %s25, 1
    %p258 = por %p256, %p257
    %p259 = scmp.ne.s32.totalorder %s250, %s251
    %p260 = scmp.eq.s32.totalorder %s25, 0
    %p261 = por %p259, %p260
    %p262 = scmp.ne.s32.totalorder %s250, %s251
    %p263 = scmp.eq.s32.totalorder %s26, 1
    %p264 = por %p262, %p263
    %p266 = scmp.ne.s32.totalorder %s251, %s265
    %p267 = scmp.eq.s32.totalorder %s26, 0
    %p268 = por %p266, %p267
    %s270 = sadd.s32 %s269, 1
    %p273 = scmp.eq.s32.totalorder %s20, 1
    %p274 = scmp.ne.s32.totalorder %s269, %s271
    %p275 = scmp.eq.s32.totalorder %s20, 0
    %p276 = por %p274, %p275
    %p277 = scmp.ne.s32.totalorder %s269, %s271
    %p278 = scmp.eq.s32.totalorder %s25, 1
    %p279 = por %p277, %p278
    %p280 = scmp.ne.s32.totalorder %s271, %s272
    %p281 = scmp.eq.s32.totalorder %s25, 0
    %p282 = por %p280, %p281
    %p283 = scmp.ne.s32.totalorder %s271, %s272
    %p284 = scmp.eq.s32.totalorder %s26, 1
    %p285 = por %p283, %p284
    %p287 = scmp.ne.s32.totalorder %s272, %s286
    %p288 = scmp.eq.s32.totalorder %s26, 0
    %p289 = por %p287, %p288
    %s291 = sadd.s32 %s290, 1
    %p294 = scmp.eq.s32.totalorder %s20, 1
    %p295 = scmp.ne.s32.totalorder %s290, %s292
    %p296 = scmp.eq.s32.totalorder %s20, 0
    %p297 = por %p295, %p296
    %p298 = scmp.ne.s32.totalorder %s290, %s292
    %p299 = scmp.eq.s32.totalorder %s25, 1
    %p300 = por %p298, %p299
    %p301 = scmp.ne.s32.totalorder %s292, %s293
    %p302 = scmp.eq.s32.totalorder %s25, 0
    %p303 = por %p301, %p302
    %p304 = scmp.ne.s32.totalorder %s292, %s293
    %p305 = scmp.eq.s32.totalorder %s26, 1
    %p306 = por %p304, %p305
    %p308 = scmp.ne.s32.totalorder %s293, %s307
    %p309 = scmp.eq.s32.totalorder %s26, 0
    %p310 = por %p308, %p309
    %s312 = sadd.s32 %s311, 1
    %p315 = scmp.eq.s32.totalorder %s20, 1
    %p316 = scmp.ne.s32.totalorder %s311, %s313
    %p317 = scmp.eq.s32.totalorder %s20, 0
    %p318 = por %p316, %p317
    %p319 = scmp.ne.s32.totalorder %s311, %s313
    %p320 = scmp.eq.s32.totalorder %s25, 1
    %p321 = por %p319, %p320
    %p322 = scmp.ne.s32.totalorder %s313, %s314
    %p323 = scmp.eq.s32.totalorder %s25, 0
    %p324 = por %p322, %p323
    %p325 = scmp.ne.s32.totalorder %s313, %s314
    %p326 = scmp.eq.s32.totalorder %s26, 1
    %p327 = por %p325, %p326
    %p329 = scmp.ne.s32.totalorder %s314, %s328
    %p330 = scmp.eq.s32.totalorder %s26, 0
    %p331 = por %p329, %p330
    %s332 = ssub.s32 %s20, %s27
    %p333 = scmp.eq.s32.totalorder %s332, 0
    %s335 = sadd.s32 %s334, 1
    %s336 = scalar_select %p333, %s334, %s335
    %p339 = pneg %p333
    %p340 = scmp.eq.s32.totalorder %s20, 1
    %p341 = por %p339, %p340
    %p342 = scmp.ne.s32.totalorder %s334, %s337
    %p343 = scmp.eq.s32.totalorder %s20, 0
    %p344 = por %p342, %p343
    %p345 = scmp.ne.s32.totalorder %s334, %s337
    %p346 = scmp.eq.s32.totalorder %s25, 1
    %p347 = por %p345, %p346
    %p348 = scmp.ne.s32.totalorder %s337, %s338
    %p349 = scmp.eq.s32.totalorder %s25, 0
    %p350 = por %p348, %p349
    %p351 = scmp.ne.s32.totalorder %s337, %s338
    %p352 = scmp.eq.s32.totalorder %s26, 1
    %p353 = por %p351, %p352
    %p355 = scmp.ne.s32.totalorder %s338, %s354
    %p356 = scmp.eq.s32.totalorder %s26, 0
    %p357 = por %p355, %p356
    %p358 = scmp.le.s32.totalorder 1, %s20
    %p359 = scmp.lt.s32.totalorder %s20, 3
    %p360 = pnand %p358, %p359
    %p361 = pneg %p360
    // Predicated region
    $region9: #{robert_lstm_forward.8} parent=5 // pred_check
      _
    $region10: #{robert_lstm_forward.8} parent=5 // pred_check_branch
      %363 = sbr.rel (%p360) target = $region12
    $region11: #{robert_lstm_forward.8} parent=5 // pred_region
      %s364 = ssub.s32 %s20, 1
      // Predicated region
      $region13: #{robert_lstm_forward.8} parent=11 // pred_check
        %p365 = pneg %p93
      $region14: #{robert_lstm_forward.8} parent=11 // pred_check_branch
        %367 = sbr.rel (%p365) target = $region16
      $region15: #{robert_lstm_forward.8} parent=11 // pred_region
        _
      $region16: #{robert_lstm_forward.8} parent=11 // pred_fallthru
        _
      // Predicated region
      $region17: #{robert_lstm_forward.8} parent=11 // pred_check
        %p368 = pneg %p114
      $region18: #{robert_lstm_forward.8} parent=11 // pred_check_branch
        %370 = sbr.rel (%p368) target = $region20
      $region19: #{robert_lstm_forward.8} parent=11 // pred_region
        _
      $region20: #{robert_lstm_forward.8} parent=11 // pred_fallthru
        _
      // Predicated region
      $region21: #{robert_lstm_forward.8} parent=11 // pred_check
        %p371 = pneg %p135
      $region22: #{robert_lstm_forward.8} parent=11 // pred_check_branch
        %373 = sbr.rel (%p371) target = $region24
      $region23: #{robert_lstm_forward.8} parent=11 // pred_region
        _
      $region24: #{robert_lstm_forward.8} parent=11 // pred_fallthru
        _
      // Predicated region
      $region25: #{robert_lstm_forward.8} parent=11 // pred_check
        %p374 = pneg %p156
      $region26: #{robert_lstm_forward.8} parent=11 // pred_check_branch
        %376 = sbr.rel (%p374) target = $region28
      $region27: #{robert_lstm_forward.8} parent=11 // pred_region
        _
      $region28: #{robert_lstm_forward.8} parent=11 // pred_fallthru
        _
      // Predicated region
      $region29: #{robert_lstm_forward.8} parent=11 // pred_check
        %p377 = pneg %p177
      $region30: #{robert_lstm_forward.8} parent=11 // pred_check_branch
        %379 = sbr.rel (%p377) target = $region32
      $region31: #{robert_lstm_forward.8} parent=11 // pred_region
        _
      $region32: #{robert_lstm_forward.8} parent=11 // pred_fallthru
        _
      // Predicated region
      $region33: #{robert_lstm_forward.8} parent=11 // pred_check
        %p380 = pneg %p198
      $region34: #{robert_lstm_forward.8} parent=11 // pred_check_branch
        %382 = sbr.rel (%p380) target = $region36
      $region35: #{robert_lstm_forward.8} parent=11 // pred_region
        _
      $region36: #{robert_lstm_forward.8} parent=11 // pred_fallthru
        _
      // Predicated region
      $region37: #{robert_lstm_forward.8} parent=11 // pred_check
        %p383 = pneg %p219
      $region38: #{robert_lstm_forward.8} parent=11 // pred_check_branch
        %385 = sbr.rel (%p383) target = $region40
      $region39: #{robert_lstm_forward.8} parent=11 // pred_region
        _
      $region40: #{robert_lstm_forward.8} parent=11 // pred_fallthru
        _
      // Predicated region
      $region41: #{robert_lstm_forward.8} parent=11 // pred_check
        %p386 = pneg %p240
      $region42: #{robert_lstm_forward.8} parent=11 // pred_check_branch
        %388 = sbr.rel (%p386) target = $region44
      $region43: #{robert_lstm_forward.8} parent=11 // pred_region
        _
      $region44: #{robert_lstm_forward.8} parent=11 // pred_fallthru
        _
      // Predicated region
      $region45: #{robert_lstm_forward.8} parent=11 // pred_check
        %p389 = pneg %p261
      $region46: #{robert_lstm_forward.8} parent=11 // pred_check_branch
        %391 = sbr.rel (%p389) target = $region48
      $region47: #{robert_lstm_forward.8} parent=11 // pred_region
        _
      $region48: #{robert_lstm_forward.8} parent=11 // pred_fallthru
        _
      // Predicated region
      $region49: #{robert_lstm_forward.8} parent=11 // pred_check
        %p392 = pneg %p282
      $region50: #{robert_lstm_forward.8} parent=11 // pred_check_branch
        %394 = sbr.rel (%p392) target = $region52
      $region51: #{robert_lstm_forward.8} parent=11 // pred_region
        _
      $region52: #{robert_lstm_forward.8} parent=11 // pred_fallthru
        _
      // Predicated region
      $region53: #{robert_lstm_forward.8} parent=11 // pred_check
        %p395 = pneg %p303
      $region54: #{robert_lstm_forward.8} parent=11 // pred_check_branch
        %397 = sbr.rel (%p395) target = $region56
      $region55: #{robert_lstm_forward.8} parent=11 // pred_region
        _
      $region56: #{robert_lstm_forward.8} parent=11 // pred_fallthru
        _
      // Predicated region
      $region57: #{robert_lstm_forward.8} parent=11 // pred_check
        %p398 = pneg %p324
      $region58: #{robert_lstm_forward.8} parent=11 // pred_check_branch
        %400 = sbr.rel (%p398) target = $region60
      $region59: #{robert_lstm_forward.8} parent=11 // pred_region
        _
      $region60: #{robert_lstm_forward.8} parent=11 // pred_fallthru
        _
    $region12: #{robert_lstm_forward.8} parent=5 // pred_fallthru
      _
    %p401 = scmp.lt.s32.totalorder %s20, 2
    // Predicated region
    $region61: #{robert_lstm_forward.8} parent=5 // pred_check
      %p402 = pneg %p401
    $region62: #{robert_lstm_forward.8} parent=5 // pred_check_branch
      %404 = sbr.rel (%p402) target = $region64
    $region63: #{robert_lstm_forward.8} parent=5 // pred_region
      // Predicated region
      $region65: #{robert_lstm_forward.8} parent=63 // pred_check
        %p405 = pneg %p40
      $region66: #{robert_lstm_forward.8} parent=63 // pred_check_branch
        %407 = sbr.rel (%p405) target = $region68
      $region67: #{robert_lstm_forward.8} parent=63 // pred_region
        %p408 = scmp.lt.s32.totalorder %s20, 1
        %s409 = scalar_select %p408, %s20, 1
        %s410 = smul.addr %s409, 4
        %s411 = scalar_lea.vmem %s0, %s410
      $region68: #{robert_lstm_forward.8} parent=63 // pred_fallthru
        _
      // Predicated region
      $region69: #{robert_lstm_forward.8} parent=63 // pred_check
        %p412 = pneg %p66
      $region70: #{robert_lstm_forward.8} parent=63 // pred_check_branch
        %414 = sbr.rel (%p412) target = $region72
      $region71: #{robert_lstm_forward.8} parent=63 // pred_region
        %p415 = scmp.lt.s32.totalorder %s20, 1
        %s416 = scalar_select %p415, %s20, 1
        %s417 = scalar_lea.vmem %s1, %s416
      $region72: #{robert_lstm_forward.8} parent=63 // pred_fallthru
        _
    $region64: #{robert_lstm_forward.8} parent=5 // pred_fallthru
      _
    %p418 = scmp.le.s32.totalorder 1, %s20
    %p419 = scmp.lt.s32.totalorder %s20, 3
    %p420 = pnand %p418, %p419
    %p421 = pneg %p420
    // Predicated region
    $region73: #{robert_lstm_forward.8} parent=5 // pred_check
      _
    $region74: #{robert_lstm_forward.8} parent=5 // pred_check_branch
      %423 = sbr.rel (%p420) target = $region76
    $region75: #{robert_lstm_forward.8} parent=5 // pred_region
      %s424 = ssub.s32 %s20, 1
      %p425 = scmp.lt.s32.totalorder %s25, 1
      %s426 = scalar_select %p425, %s25, 1
      %s427 = smul.addr %s426, 4
      %s428 = scalar_lea.vmem %s0, %s427
      %p429 = pneg %p46
      %p430 = pneg %p43
      %p431 = scmp.lt.s32.totalorder %s25, 1
      %s432 = scalar_select %p431, %s25, 1
      %s433 = scalar_lea.vmem %s1, %s432
      %p434 = pneg %p72
      %p435 = pneg %p69
      %p436 = pneg %p93
      %p437 = pneg %p90
      %p438 = pneg %p114
      %p439 = pneg %p111
      %p440 = pneg %p135
      %p441 = pneg %p132
      %p442 = pneg %p156
      %p443 = pneg %p153
      %p444 = pneg %p177
      %p445 = pneg %p174
      %p446 = pneg %p198
      %p447 = pneg %p195
      %p448 = pneg %p219
      %p449 = pneg %p216
      %p450 = pneg %p240
      %p451 = pneg %p237
      %p452 = pneg %p261
      %p453 = pneg %p258
      %p454 = pneg %p282
      %p455 = pneg %p279
      %p456 = pneg %p303
      %p457 = pneg %p300
      %p458 = pneg %p324
      %p459 = pneg %p321
      %p460 = pneg %p350
      %p461 = pneg %p347
      %p462 = scmp.lt.s32.totalorder %s25, 1
      %s463 = scalar_select %p462, %s25, 1
      %s464 = smul.addr %s463, 4
      %s465 = scalar_lea.vmem %s14, %s464
      %p466 = scmp.lt.s32.totalorder %s25, 1
      %s467 = scalar_select %p466, %s25, 1
      %s468 = smul.addr %s467, 4
      %s469 = scalar_lea.vmem %s0, %s468
      %p470 = scmp.lt.s32.totalorder %s25, 1
      %s471 = scalar_select %p470, %s25, 1
      %s472 = scalar_lea.vmem %s1, %s471
      %p473 = scmp.lt.s32.totalorder %s25, 1
      %s474 = scalar_select %p473, %s25, 1
      %s475 = smul.addr %s474, 4
      %s476 = scalar_lea.vmem %s14, %s475
      %v478 = vld [vmem:[%s469] sm:$0xf]
      %v479 = vunpack.c.l.bf16 %v478
      %v480 = vld [vmem:[%s2] sm:$0xf]
      %v481 = vld [vmem:[%s2 + $0x4] sm:$0xf]
      %v482 = vld [vmem:[%s2 + $0x8] sm:$0xf]
      %v483 = vld [vmem:[%s2 + $0xc] sm:$0xf]
      %v484 = vld [vmem:[%s3] sm:$0x1]
      %v486 = vlaneseq
      %v487 = vshrl.u32 %v486, 7
      %v488 = vsub.s32 0, %v487
      %v489 = vrot.slane %v484, %v488
      %v495 = vunpack.c.l.b16 %v480
      %v496 = vunpack.c.l.b16 %v481
      %v497 = vunpack.c.l.b16 %v482
      %v498 = vunpack.c.l.b16 %v483
      %v499 = vpack.c.b16 %v496, %v495
      %v500 = vpack.c.b16 %v498, %v497
      %vm503 = vcmask 261120
      %v505 = vsel %vm503, %v478, 0
      %507 = vmatprep.subr.bf16.mxu0 0
      %508 = vmatpush1.bf16.msra.mxu0 %v499
      %509 = vmatprep.subr.bf16.mxu0 0
      %510 = vmatpush1.bf16.msra.mxu0 %v500
      %511 = vmatprep.subr.bf16.mxu0 0
      %512 = vmatpush1.bf16.msra.mxu0 0
      %513 = vmatprep.subr.bf16.mxu0 0
      %514 = vmatpush1.bf16.msra.mxu0 0
      %515 = vmatprep.subr.bf16.mxu0 0
      %516 = vmatpush1.bf16.msra.mxu0 0
      %517 = vmatprep.subr.bf16.mxu0 0
      %518 = vmatpush1.bf16.msra.mxu0 0
      %519 = vmatprep.subr.bf16.mxu0 0
      %520 = vmatpush1.bf16.msra.mxu0 0
      %521 = vmatprep.subr.bf16.mxu0 0
      %522 = vmatpush1.bf16.msra.mxu0 0
      %523 = vmatprep.subr.bf16.mxu0 0
      %524 = vmatpush1.bf16.msra.mxu0 0
      %525 = vmatprep.subr.bf16.mxu0 0
      %526 = vmatpush1.bf16.msra.mxu0 0
      %527 = vmatprep.subr.bf16.mxu0 0
      %528 = vmatpush1.bf16.msra.mxu0 0
      %529 = vmatprep.subr.bf16.mxu0 0
      %530 = vmatpush1.bf16.msra.mxu0 0
      %531 = vmatprep.subr.bf16.mxu0 0
      %532 = vmatpush1.bf16.msra.mxu0 0
      %533 = vmatprep.subr.bf16.mxu0 0
      %534 = vmatpush1.bf16.msra.mxu0 0
      %535 = vmatprep.subr.bf16.mxu0 0
      %536 = vmatpush1.bf16.msra.mxu0 0
      %537 = vmatprep.subr.bf16.mxu0 0
      %538 = vmatpush1.bf16.msra.mxu0 0
      %539 = vmatprep.mubr.bf16.mxu0 0
      %540 = vmatmul.mubr.bf16.gmra.mrb[0].mxu0 %v505
      %v541 = vpop.f32.mrb[0].mxu0
      %v542 = vadd.f32 %v489, %v541
      %v543 = vpop.f32.mrb[0].mxu0
      %v544 = vpop.f32.mrb[0].mxu0
      %v545 = vpop.f32.mrb[0].mxu0
      %546 = vdwg.mxu0
      %v547 = vld [vmem:[%s472] sm:$0x1]
      %v549 = vlaneseq
      %v550 = vshrl.u32 %v549, 7
      %v551 = vsub.s32 0, %v550
      %v552 = vrot.slane %v547, %v551
      %v554 = vpack.c.bf16 %v542, %v542
      %556 = vrot.lane.b32.xlu0 %v554, 96
      %v557 = vpop.permute.xlu0 %556
      %vm558 = vcmask 130048
      %v560 = vsel %vm558, %v554, 0
      %v563 = vsel %vm558, %v557, 0
      %565 = vmatprep.subr.bf16.mxu0 0
      %566 = vmatpush1.bf16.xpose.msra.mxu0 %v563
      %567 = vmatprep.subr.bf16.mxu0 0
      %568 = vmatpush1.bf16.xpose.msra.mxu0 0
      %569 = vmatprep.subr.bf16.mxu0 0
      %570 = vmatpush1.bf16.xpose.msra.mxu0 0
      %571 = vmatprep.subr.bf16.mxu0 0
      %572 = vmatpush1.bf16.xpose.msra.mxu0 0
      %573 = vmatprep.subr.bf16.mxu0 0
      %574 = vmatpush1.bf16.xpose.msra.mxu0 0
      %575 = vmatprep.subr.bf16.mxu0 0
      %576 = vmatpush1.bf16.xpose.msra.mxu0 0
      %577 = vmatprep.subr.bf16.mxu0 0
      %578 = vmatpush1.bf16.xpose.msra.mxu0 0
      %579 = vmatprep.subr.bf16.mxu0 0
      %580 = vmatpush1.bf16.xpose.msra.mxu0 0
      %581 = vmatprep.subr.bf16.mxu0 0
      %582 = vmatpush1.bf16.xpose.msra.mxu0 0
      %583 = vmatprep.subr.bf16.mxu0 0
      %584 = vmatpush1.bf16.xpose.msra.mxu0 0
      %585 = vmatprep.subr.bf16.mxu0 0
      %586 = vmatpush1.bf16.xpose.msra.mxu0 0
      %587 = vmatprep.subr.bf16.mxu0 0
      %588 = vmatpush1.bf16.xpose.msra.mxu0 0
      %589 = vmatprep.subr.bf16.mxu0 0
      %590 = vmatpush1.bf16.xpose.msra.mxu0 0
      %591 = vmatprep.subr.bf16.mxu0 0
      %592 = vmatpush1.bf16.xpose.msra.mxu0 0
      %593 = vmatprep.subr.bf16.mxu0 0
      %594 = vmatpush1.bf16.xpose.msra.mxu0 0
      %595 = vmatprep.subr.bf16.mxu0 0
      %596 = vmatpush1.bf16.xpose.msra.mxu0 0
      %597 = vmatprep.mubr.bf16.mxu0 0
      %598 = vmatmul.mubr.bf16.gmra.mrb[0].mxu0 %v560
      %v599 = vpop.f32.mrb[0].mxu0
      %v600 = vadd.f32 0.0, %v599
      %v601 = vpop.f32.mrb[0].mxu0
      %v602 = vpop.f32.mrb[0].mxu0
      %v603 = vpop.f32.mrb[0].mxu0
      %604 = vdwg.mxu0
      %v605 = vmul.f32 %v600, 0.25
      %v606 = vadd.f32 %v605, %v552
      %vm607 = vcmask 64512
      %v608 = vsel %vm607, %v606, -inf
      %609 = vmax.xlane.f32.xlu0 %v608
      %v610 = vpop.xlane.xlu0 %609
      %v611 = vsub.f32 %v606, %v610
      %v612 = vmul.f32 %v611, 1.442695
      %v613 = vpow.pop %v612
      %v614 = vsel %vm607, %v613, 0.0
      %615 = vadd.xlane.f32.xlu0 %v614
      %v616 = vpop.xlane.xlu0 %615
      %v617 = vrcp.pop %v616
      %v618 = vmul.f32 %v613, %v617
      %v619 = vpack.c.bf16 %v618, %v618
      %620 = vrot.lane.b32.xlu0 %v554, 64
      %v621 = vpop.permute.xlu0 %620
      %v623 = vsel %vm607, %v619, 0
      %vm625 = vcmask 1043456
      %v627 = vsel %vm625, %v621, 0
      %629 = vmatprep.subr.bf16.mxu0 0
      %630 = vmatpush1.bf16.msra.mxu0 %v627
      %631 = vmatprep.subr.bf16.mxu0 0
      %632 = vmatpush1.bf16.msra.mxu0 0
      %633 = vmatprep.subr.bf16.mxu0 0
      %634 = vmatpush1.bf16.msra.mxu0 0
      %635 = vmatprep.subr.bf16.mxu0 0
      %636 = vmatpush1.bf16.msra.mxu0 0
      %637 = vmatprep.subr.bf16.mxu0 0
      %638 = vmatpush1.bf16.msra.mxu0 0
      %639 = vmatprep.subr.bf16.mxu0 0
      %640 = vmatpush1.bf16.msra.mxu0 0
      %641 = vmatprep.subr.bf16.mxu0 0
      %642 = vmatpush1.bf16.msra.mxu0 0
      %643 = vmatprep.subr.bf16.mxu0 0
      %644 = vmatpush1.bf16.msra.mxu0 0
      %645 = vmatprep.subr.bf16.mxu0 0
      %646 = vmatpush1.bf16.msra.mxu0 0
      %647 = vmatprep.subr.bf16.mxu0 0
      %648 = vmatpush1.bf16.msra.mxu0 0
      %649 = vmatprep.subr.bf16.mxu0 0
      %650 = vmatpush1.bf16.msra.mxu0 0
      %651 = vmatprep.subr.bf16.mxu0 0
      %652 = vmatpush1.bf16.msra.mxu0 0
      %653 = vmatprep.subr.bf16.mxu0 0
      %654 = vmatpush1.bf16.msra.mxu0 0
      %655 = vmatprep.subr.bf16.mxu0 0
      %656 = vmatpush1.bf16.msra.mxu0 0
      %657 = vmatprep.subr.bf16.mxu0 0
      %658 = vmatpush1.bf16.msra.mxu0 0
      %659 = vmatprep.subr.bf16.mxu0 0
      %660 = vmatpush1.bf16.msra.mxu0 0
      %661 = vmatprep.mubr.bf16.mxu0 0
      %662 = vmatmul.mubr.bf16.gmra.mrb[0].mxu0 %v623
      %v663 = vpop.f32.mrb[0].mxu0
      %v664 = vadd.f32 0.0, %v663
      %v665 = vpop.f32.mrb[0].mxu0
      %v666 = vpop.f32.mrb[0].mxu0
      %v667 = vpop.f32.mrb[0].mxu0
      %668 = vdwg.mxu0
      %669 = vrot.lane.b32.xlu0 %v554, 112
      %v670 = vpop.permute.xlu0 %669
      %671 = vrot.lane.b32.xlu0 %v554, 80
      %v672 = vpop.permute.xlu0 %671
      %v674 = vsel %vm558, %v670, 0
      %v677 = vsel %vm558, %v672, 0
      %679 = vmatprep.subr.bf16.mxu0 0
      %680 = vmatpush1.bf16.xpose.msra.mxu0 %v677
      %681 = vmatprep.subr.bf16.mxu0 0
      %682 = vmatpush1.bf16.xpose.msra.mxu0 0
      %683 = vmatprep.subr.bf16.mxu0 0
      %684 = vmatpush1.bf16.xpose.msra.mxu0 0
      %685 = vmatprep.subr.bf16.mxu0 0
      %686 = vmatpush1.bf16.xpose.msra.mxu0 0
      %687 = vmatprep.subr.bf16.mxu0 0
      %688 = vmatpush1.bf16.xpose.msra.mxu0 0
      %689 = vmatprep.subr.bf16.mxu0 0
      %690 = vmatpush1.bf16.xpose.msra.mxu0 0
      %691 = vmatprep.subr.bf16.mxu0 0
      %692 = vmatpush1.bf16.xpose.msra.mxu0 0
      %693 = vmatprep.subr.bf16.mxu0 0
      %694 = vmatpush1.bf16.xpose.msra.mxu0 0
      %695 = vmatprep.subr.bf16.mxu0 0
      %696 = vmatpush1.bf16.xpose.msra.mxu0 0
      %697 = vmatprep.subr.bf16.mxu0 0
      %698 = vmatpush1.bf16.xpose.msra.mxu0 0
      %699 = vmatprep.subr.bf16.mxu0 0
      %700 = vmatpush1.bf16.xpose.msra.mxu0 0
      %701 = vmatprep.subr.bf16.mxu0 0
      %702 = vmatpush1.bf16.xpose.msra.mxu0 0
      %703 = vmatprep.subr.bf16.mxu0 0
      %704 = vmatpush1.bf16.xpose.msra.mxu0 0
      %705 = vmatprep.subr.bf16.mxu0 0
      %706 = vmatpush1.bf16.xpose.msra.mxu0 0
      %707 = vmatprep.subr.bf16.mxu0 0
      %708 = vmatpush1.bf16.xpose.msra.mxu0 0
      %709 = vmatprep.subr.bf16.mxu0 0
      %710 = vmatpush1.bf16.xpose.msra.mxu0 0
      %711 = vmatprep.mubr.bf16.mxu0 0
      %712 = vmatmul.mubr.bf16.gmra.mrb[0].mxu0 %v674
      %v713 = vpop.f32.mrb[0].mxu0
      %v714 = vadd.f32 0.0, %v713
      %v715 = vpop.f32.mrb[0].mxu0
      %v716 = vpop.f32.mrb[0].mxu0
      %v717 = vpop.f32.mrb[0].mxu0
      %718 = vdwg.mxu0
      %v719 = vmul.f32 %v714, 0.25
      %v720 = vadd.f32 %v719, %v552
      %v721 = vsel %vm607, %v720, -inf
      %722 = vmax.xlane.f32.xlu0 %v721
      %v723 = vpop.xlane.xlu0 %722
      %v724 = vsub.f32 %v720, %v723
      %v725 = vmul.f32 %v724, 1.442695
      %v726 = vpow.pop %v725
      %v727 = vsel %vm607, %v726, 0.0
      %728 = vadd.xlane.f32.xlu0 %v727
      %v729 = vpop.xlane.xlu0 %728
      %v730 = vrcp.pop %v729
      %v731 = vmul.f32 %v726, %v730
      %v732 = vpack.c.bf16 %v731, %v731
      %733 = vrot.lane.b32.xlu0 %v554, 48
      %v734 = vpop.permute.xlu0 %733
      %v736 = vsel %vm607, %v732, 0
      %v739 = vsel %vm625, %v734, 0
      %741 = vmatprep.subr.bf16.mxu0 0
      %742 = vmatpush1.bf16.msra.mxu0 %v739
      %743 = vmatprep.subr.bf16.mxu0 0
      %744 = vmatpush1.bf16.msra.mxu0 0
      %745 = vmatprep.subr.bf16.mxu0 0
      %746 = vmatpush1.bf16.msra.mxu0 0
      %747 = vmatprep.subr.bf16.mxu0 0
      %748 = vmatpush1.bf16.msra.mxu0 0
      %749 = vmatprep.subr.bf16.mxu0 0
      %750 = vmatpush1.bf16.msra.mxu0 0
      %751 = vmatprep.subr.bf16.mxu0 0
      %752 = vmatpush1.bf16.msra.mxu0 0
      %753 = vmatprep.subr.bf16.mxu0 0
      %754 = vmatpush1.bf16.msra.mxu0 0
      %755 = vmatprep.subr.bf16.mxu0 0
      %756 = vmatpush1.bf16.msra.mxu0 0
      %757 = vmatprep.subr.bf16.mxu0 0
      %758 = vmatpush1.bf16.msra.mxu0 0
      %759 = vmatprep.subr.bf16.mxu0 0
      %760 = vmatpush1.bf16.msra.mxu0 0
      %761 = vmatprep.subr.bf16.mxu0 0
      %762 = vmatpush1.bf16.msra.mxu0 0
      %763 = vmatprep.subr.bf16.mxu0 0
      %764 = vmatpush1.bf16.msra.mxu0 0
      %765 = vmatprep.subr.bf16.mxu0 0
      %766 = vmatpush1.bf16.msra.mxu0 0
      %767 = vmatprep.subr.bf16.mxu0 0
      %768 = vmatpush1.bf16.msra.mxu0 0
      %769 = vmatprep.subr.bf16.mxu0 0
      %770 = vmatpush1.bf16.msra.mxu0 0
      %771 = vmatprep.subr.bf16.mxu0 0
      %772 = vmatpush1.bf16.msra.mxu0 0
      %773 = vmatprep.mubr.bf16.mxu0 0
      %774 = vmatmul.mubr.bf16.gmra.mrb[0].mxu0 %v736
      %v775 = vpop.f32.mrb[0].mxu0
      %v776 = vadd.f32 0.0, %v775
      %v777 = vpop.f32.mrb[0].mxu0
      %v778 = vpop.f32.mrb[0].mxu0
      %v779 = vpop.f32.mrb[0].mxu0
      %780 = vdwg.mxu0
      %782 = vrot.lane.b32.xlu0 %v776, 16
      %v783 = vpop.permute.xlu0 %782
      %v785 = vsel %vm558, %v664, %v783
      %v786 = vpack.c.bf16 %v785, %v785
      %v787 = vld [vmem:[%s4] sm:$0xf]
      %v788 = vld [vmem:[%s4 + $0x4] sm:$0xf]
      %v789 = vld [vmem:[%s4 + $0x8] sm:$0xf]
      %v790 = vld [vmem:[%s4 + $0xc] sm:$0xf]
      %v795 = vunpack.c.l.b16 %v787
      %v796 = vunpack.c.l.b16 %v788
      %v797 = vunpack.c.l.b16 %v789
      %v798 = vunpack.c.l.b16 %v790
      %v799 = vpack.c.b16 %v796, %v795
      %v800 = vpack.c.b16 %v798, %v797
      %v804 = vsel %vm503, %v786, 0
      %806 = vmatprep.subr.bf16.mxu0 0
      %807 = vmatpush1.bf16.msra.mxu0 %v799
      %808 = vmatprep.subr.bf16.mxu0 0
      %809 = vmatpush1.bf16.msra.mxu0 %v800
      %810 = vmatprep.subr.bf16.mxu0 0
      %811 = vmatpush1.bf16.msra.mxu0 0
      %812 = vmatprep.subr.bf16.mxu0 0
      %813 = vmatpush1.bf16.msra.mxu0 0
      %814 = vmatprep.subr.bf16.mxu0 0
      %815 = vmatpush1.bf16.msra.mxu0 0
      %816 = vmatprep.subr.bf16.mxu0 0
      %817 = vmatpush1.bf16.msra.mxu0 0
      %818 = vmatprep.subr.bf16.mxu0 0
      %819 = vmatpush1.bf16.msra.mxu0 0
      %820 = vmatprep.subr.bf16.mxu0 0
      %821 = vmatpush1.bf16.msra.mxu0 0
      %822 = vmatprep.subr.bf16.mxu0 0
      %823 = vmatpush1.bf16.msra.mxu0 0
      %824 = vmatprep.subr.bf16.mxu0 0
      %825 = vmatpush1.bf16.msra.mxu0 0
      %826 = vmatprep.subr.bf16.mxu0 0
      %827 = vmatpush1.bf16.msra.mxu0 0
      %828 = vmatprep.subr.bf16.mxu0 0
      %829 = vmatpush1.bf16.msra.mxu0 0
      %830 = vmatprep.subr.bf16.mxu0 0
      %831 = vmatpush1.bf16.msra.mxu0 0
      %832 = vmatprep.subr.bf16.mxu0 0
      %833 = vmatpush1.bf16.msra.mxu0 0
      %834 = vmatprep.subr.bf16.mxu0 0
      %835 = vmatpush1.bf16.msra.mxu0 0
      %836 = vmatprep.subr.bf16.mxu0 0
      %837 = vmatpush1.bf16.msra.mxu0 0
      %838 = vmatprep.mubr.bf16.mxu0 0
      %839 = vmatmul.mubr.bf16.gmra.mrb[0].mxu0 %v804
      %v840 = vpop.f32.mrb[0].mxu0
      %v841 = vadd.f32 0.0, %v840
      %v842 = vpop.f32.mrb[0].mxu0
      %v843 = vpop.f32.mrb[0].mxu0
      %v844 = vpop.f32.mrb[0].mxu0
      %845 = vdwg.mxu0
      %v846 = vadd.f32 %v479, %v841
      %v847 = vld [vmem:[%s5] sm:$0x1]
      %v849 = vlaneseq
      %v850 = vshrl.u32 %v849, 7
      %v851 = vsub.s32 0, %v850
      %v852 = vrot.slane %v847, %v851
      %v854 = vadd.f32 %v846, %v852
      %v855 = vld [vmem:[%s6] sm:$0x1]
      %v856 = vld [vmem:[%s7] sm:$0x1]
      %v857 = vsel %vm503, %v854, 0.0
      %858 = vadd.xlane.f32.xlu0 %v857
      %v859 = vpop.xlane.xlu0 %858
      %v860 = vrcp.pop 32.0
      %v861 = vmul.f32 %v859, %v860
      %v862 = vsub.f32 %v854, %v861
      %v863 = vmul.f32 %v862, %v862
      %v864 = vsel %vm503, %v863, 0.0
      %865 = vadd.xlane.f32.xlu0 %v864
      %v866 = vpop.xlane.xlu0 %865
      %v867 = vmul.f32 %v866, %v860
      %v868 = vadd.f32 %v867, 1e-12
      %v869 = vrsqrt.pop %v868
      %v870 = vmul.f32 %v862, %v869
      %v872 = vlaneseq
      %v873 = vshrl.u32 %v872, 7
      %v874 = vsub.s32 0, %v873
      %v875 = vrot.slane %v855, %v874
      %v877 = vmul.f32 %v870, %v875
      %v879 = vlaneseq
      %v880 = vshrl.u32 %v879, 7
      %v881 = vsub.s32 0, %v880
      %v882 = vrot.slane %v856, %v881
      %v884 = vadd.f32 %v877, %v882
      %v885 = vpack.c.bf16 %v884, %v884
      %v886 = vld [vmem:[%s8] sm:$0xf]
      %v887 = vld [vmem:[%s8 + $0x4] sm:$0xf]
      %v888 = vld [vmem:[%s8 + $0x8] sm:$0xf]
      %v889 = vld [vmem:[%s8 + $0xc] sm:$0xf]
      %v890 = vld [vmem:[%s9] sm:$0x1]
      %v892 = vlaneseq
      %v893 = vshrl.u32 %v892, 7
      %v894 = vsub.s32 0, %v893
      %v895 = vrot.slane %v890, %v894
      %v901 = vunpack.c.l.b16 %v886
      %v902 = vunpack.c.l.b16 %v887
      %v903 = vunpack.c.l.b16 %v888
      %v904 = vunpack.c.l.b16 %v889
      %v905 = vpack.c.b16 %v902, %v901
      %v906 = vpack.c.b16 %v904, %v903
      %v910 = vsel %vm503, %v885, 0
      %912 = vmatprep.subr.bf16.mxu0 0
      %913 = vmatpush1.bf16.msra.mxu0 %v905
      %914 = vmatprep.subr.bf16.mxu0 0
      %915 = vmatpush1.bf16.msra.mxu0 %v906
      %916 = vmatprep.subr.bf16.mxu0 0
      %917 = vmatpush1.bf16.msra.mxu0 0
      %918 = vmatprep.subr.bf16.mxu0 0
      %919 = vmatpush1.bf16.msra.mxu0 0
      %920 = vmatprep.subr.bf16.mxu0 0
      %921 = vmatpush1.bf16.msra.mxu0 0
      %922 = vmatprep.subr.bf16.mxu0 0
      %923 = vmatpush1.bf16.msra.mxu0 0
      %924 = vmatprep.subr.bf16.mxu0 0
      %925 = vmatpush1.bf16.msra.mxu0 0
      %926 = vmatprep.subr.bf16.mxu0 0
      %927 = vmatpush1.bf16.msra.mxu0 0
      %928 = vmatprep.subr.bf16.mxu0 0
      %929 = vmatpush1.bf16.msra.mxu0 0
      %930 = vmatprep.subr.bf16.mxu0 0
      %931 = vmatpush1.bf16.msra.mxu0 0
      %932 = vmatprep.subr.bf16.mxu0 0
      %933 = vmatpush1.bf16.msra.mxu0 0
      %934 = vmatprep.subr.bf16.mxu0 0
      %935 = vmatpush1.bf16.msra.mxu0 0
      %936 = vmatprep.subr.bf16.mxu0 0
      %937 = vmatpush1.bf16.msra.mxu0 0
      %938 = vmatprep.subr.bf16.mxu0 0
      %939 = vmatpush1.bf16.msra.mxu0 0
      %940 = vmatprep.subr.bf16.mxu0 0
      %941 = vmatpush1.bf16.msra.mxu0 0
      %942 = vmatprep.subr.bf16.mxu0 0
      %943 = vmatpush1.bf16.msra.mxu0 0
      %944 = vmatprep.mubr.bf16.mxu0 0
      %945 = vmatmul.mubr.bf16.gmra.mrb[0].mxu0 %v910
      %v946 = vpop.f32.mrb[0].mxu0
      %v947 = vadd.f32 %v895, %v946
      %v948 = vpop.f32.mrb[0].mxu0
      %v949 = vpop.f32.mrb[0].mxu0
      %v950 = vpop.f32.mrb[0].mxu0
      %951 = vdwg.mxu0
      %v952 = vmul.f32 %v947, %v947
      %v953 = vmul.f32 %v947, %v952
      %v954 = vmul.f32 %v953, 0.044715
      %v955 = vadd.f32 %v947, %v954
      %v956 = vmul.f32 %v955, 0.7978846
      %v957 = vtanh.pop %v956
      %v958 = vadd.f32 %v957, 1.0
      %v959 = vmul.f32 %v958, 0.5
      %v960 = vmul.f32 %v947, %v959
      %v961 = vpack.c.bf16 %v960, %v960
      %v962 = vld [vmem:[%s10] sm:$0xf]
      %v963 = vld [vmem:[%s10 + $0x4] sm:$0xf]
      %v964 = vld [vmem:[%s10 + $0x8] sm:$0xf]
      %v965 = vld [vmem:[%s10 + $0xc] sm:$0xf]
      %v966 = vld [vmem:[%s10 + $0x10] sm:$0xf]
      %v967 = vld [vmem:[%s10 + $0x14] sm:$0xf]
      %v968 = vld [vmem:[%s10 + $0x18] sm:$0xf]
      %v969 = vld [vmem:[%s10 + $0x1c] sm:$0xf]
      %v970 = vld [vmem:[%s10 + $0x20] sm:$0xf]
      %v971 = vld [vmem:[%s10 + $0x24] sm:$0xf]
      %v972 = vld [vmem:[%s10 + $0x28] sm:$0xf]
      %v973 = vld [vmem:[%s10 + $0x2c] sm:$0xf]
      %v974 = vld [vmem:[%s10 + $0x30] sm:$0xf]
      %v975 = vld [vmem:[%s10 + $0x34] sm:$0xf]
      %v976 = vld [vmem:[%s10 + $0x38] sm:$0xf]
      %v977 = vld [vmem:[%s10 + $0x3c] sm:$0xf]
      %v978 = vld [vmem:[%s11] sm:$0x1]
      %v980 = vlaneseq
      %v981 = vshrl.u32 %v980, 7
      %v982 = vsub.s32 0, %v981
      %v983 = vrot.slane %v978, %v982
      %v1001 = vunpack.c.l.b16 %v962
      %v1002 = vunpack.c.l.b16 %v963
      %v1003 = vunpack.c.l.b16 %v964
      %v1004 = vunpack.c.l.b16 %v965
      %v1005 = vunpack.c.l.b16 %v966
      %v1006 = vunpack.c.l.b16 %v967
      %v1007 = vunpack.c.l.b16 %v968
      %v1008 = vunpack.c.l.b16 %v969
      %v1009 = vunpack.c.l.b16 %v970
      %v1010 = vunpack.c.l.b16 %v971
      %v1011 = vunpack.c.l.b16 %v972
      %v1012 = vunpack.c.l.b16 %v973
      %v1013 = vunpack.c.l.b16 %v974
      %v1014 = vunpack.c.l.b16 %v975
      %v1015 = vunpack.c.l.b16 %v976
      %v1016 = vunpack.c.l.b16 %v977
      %v1017 = vpack.c.b16 %v1002, %v1001
      %v1018 = vpack.c.b16 %v1004, %v1003
      %v1019 = vpack.c.b16 %v1006, %v1005
      %v1020 = vpack.c.b16 %v1008, %v1007
      %v1021 = vpack.c.b16 %v1010, %v1009
      %v1022 = vpack.c.b16 %v1012, %v1011
      %v1023 = vpack.c.b16 %v1014, %v1013
      %v1024 = vpack.c.b16 %v1016, %v1015
      %1033 = vmatprep.subr.bf16.mxu0 0
      %1034 = vmatpush1.bf16.msra.mxu0 %v1017
      %1035 = vmatprep.subr.bf16.mxu0 0
      %1036 = vmatpush1.bf16.msra.mxu0 %v1018
      %1037 = vmatprep.subr.bf16.mxu0 0
      %1038 = vmatpush1.bf16.msra.mxu0 %v1019
      %1039 = vmatprep.subr.bf16.mxu0 0
      %1040 = vmatpush1.bf16.msra.mxu0 %v1020
      %1041 = vmatprep.subr.bf16.mxu0 0
      %1042 = vmatpush1.bf16.msra.mxu0 %v1021
      %1043 = vmatprep.subr.bf16.mxu0 0
      %1044 = vmatpush1.bf16.msra.mxu0 %v1022
      %1045 = vmatprep.subr.bf16.mxu0 0
      %1046 = vmatpush1.bf16.msra.mxu0 %v1023
      %1047 = vmatprep.subr.bf16.mxu0 0
      %1048 = vmatpush1.bf16.msra.mxu0 %v1024
      %1049 = vmatprep.subr.bf16.mxu0 0
      %1050 = vmatpush1.bf16.msra.mxu0 0
      %1051 = vmatprep.subr.bf16.mxu0 0
      %1052 = vmatpush1.bf16.msra.mxu0 0
      %1053 = vmatprep.subr.bf16.mxu0 0
      %1054 = vmatpush1.bf16.msra.mxu0 0
      %1055 = vmatprep.subr.bf16.mxu0 0
      %1056 = vmatpush1.bf16.msra.mxu0 0
      %1057 = vmatprep.subr.bf16.mxu0 0
      %1058 = vmatpush1.bf16.msra.mxu0 0
      %1059 = vmatprep.subr.bf16.mxu0 0
      %1060 = vmatpush1.bf16.msra.mxu0 0
      %1061 = vmatprep.subr.bf16.mxu0 0
      %1062 = vmatpush1.bf16.msra.mxu0 0
      %1063 = vmatprep.subr.bf16.mxu0 0
      %1064 = vmatpush1.bf16.msra.mxu0 0
      %1065 = vmatprep.mubr.bf16.mxu0 0
      %1066 = vmatmul.mubr.bf16.gmra.mrb[0].mxu0 %v961
      %v1067 = vpop.f32.mrb[0].mxu0
      %v1068 = vadd.f32 %v983, %v1067
      %v1069 = vpop.f32.mrb[0].mxu0
      %v1070 = vpop.f32.mrb[0].mxu0
      %v1071 = vpop.f32.mrb[0].mxu0
      %1072 = vdwg.mxu0
      %v1073 = vadd.f32 %v884, %v1068
      %v1074 = vld [vmem:[%s12] sm:$0x1]
      %v1075 = vld [vmem:[%s13] sm:$0x1]
      %v1076 = vsel %vm503, %v1073, 0.0
      %1077 = vadd.xlane.f32.xlu0 %v1076
      %v1078 = vpop.xlane.xlu0 %1077
      %v1079 = vmul.f32 %v1078, %v860
      %v1080 = vsub.f32 %v1073, %v1079
      %v1081 = vmul.f32 %v1080, %v1080
      %v1082 = vsel %vm503, %v1081, 0.0
      %1083 = vadd.xlane.f32.xlu0 %v1082
      %v1084 = vpop.xlane.xlu0 %1083
      %v1085 = vmul.f32 %v1084, %v860
      %v1086 = vadd.f32 %v1085, 1e-12
      %v1087 = vrsqrt.pop %v1086
      %v1088 = vmul.f32 %v1080, %v1087
      %v1090 = vlaneseq
      %v1091 = vshrl.u32 %v1090, 7
      %v1092 = vsub.s32 0, %v1091
      %v1093 = vrot.slane %v1074, %v1092
      %v1095 = vmul.f32 %v1088, %v1093
      %v1097 = vlaneseq
      %v1098 = vshrl.u32 %v1097, 7
      %v1099 = vsub.s32 0, %v1098
      %v1100 = vrot.slane %v1075, %v1099
      %v1102 = vadd.f32 %v1095, %v1100
      %v1103 = vpack.c.bf16 %v1102, %v1102
      %vm1104 = vcmask 257024
      %1105 = vst.msk [vmem:[%s476] sm:$0xf] %vm1104, %v1103
      %p1106 = scmp.lt.s32.totalorder %s25, 1
      %s1107 = scalar_select %p1106, %s25, 1
      %s1108 = smul.addr %s1107, 4
      %s1109 = scalar_lea.vmem %s14, %s1108
      // Predicated region
      $region77: #{robert_lstm_forward.8} parent=75 // pred_check
        %p1110 = pneg %p347
      $region78: #{robert_lstm_forward.8} parent=75 // pred_check_branch
        %1112 = sbr.rel (%p1110) target = $region80
      $region79: #{robert_lstm_forward.8} parent=75 // pred_region
        _
      $region80: #{robert_lstm_forward.8} parent=75 // pred_fallthru
        _
    $region76: #{robert_lstm_forward.8} parent=5 // pred_fallthru
      _
    %p1113 = scmp.le.s32.totalorder 2, %s20
    // Predicated region
    $region81: #{robert_lstm_forward.8} parent=5 // pred_check
      %p1114 = pneg %p1113
    $region82: #{robert_lstm_forward.8} parent=5 // pred_check_branch
      %1116 = sbr.rel (%p1114) target = $region84
    $region83: #{robert_lstm_forward.8} parent=5 // pred_region
      %s1117 = ssub.s32 %s20, 2
      // Predicated region
      $region85: #{robert_lstm_forward.8} parent=83 // pred_check
        %p1118 = pneg %p353
      $region86: #{robert_lstm_forward.8} parent=83 // pred_check_branch
        %1120 = sbr.rel (%p1118) target = $region88
      $region87: #{robert_lstm_forward.8} parent=83 // pred_region
        %p1121 = scmp.lt.s32.totalorder %s26, 1
        %s1122 = scalar_select %p1121, %s26, 1
        %s1123 = smul.addr %s1122, 4
        %s1124 = scalar_lea.vmem %s14, %s1123
      $region88: #{robert_lstm_forward.8} parent=83 // pred_fallthru
        _
    $region84: #{robert_lstm_forward.8} parent=5 // pred_fallthru
      _
  $region6: #{robert_lstm_forward.8} parent=0 // loop_footer
    %s24 = sadd.s32 1, %s20
  $region7: #{robert_lstm_forward.8} parent=0 // loop_footer_branch
    %19 = sbr.rel target = $region3
  $region8: #{robert_lstm_forward.8} parent=0 // loop_exit
    _

// kernel: robert_lstm_forward.11
$region0: #{robert_lstm_forward.11}
  #allocation0 [shape = 'u32[]', space=smem, size = 0x4, offset = 0x4, fixed_abs, tag = 'smem constant byte address 0x4 - core index']
  #allocation1 [shape = 'u32[144,128]{1,0:T(1,128)}', space=vmem, size = 0x12000, scoped, tag = 'internal scratch']
  %s0 = inlined_call_operand.vmem [shape: bf16[16,64], index: 0, kind: input, shape index: {}]
  %s1 = inlined_call_operand.vmem [shape: bf16[64,256], index: 1, kind: input, shape index: {}]
  %s2 = inlined_call_operand.vmem [shape: f32[1,256], index: 2, kind: input, shape index: {}]
  %s3 = inlined_call_operand.vmem [shape: bf16[16,256], index: 3, kind: output, shape index: {}]
  %s4 = sld [smem:[#allocation0]]
  $region22: #{robert_lstm_forward.11} parent=0
    _
  %s6 = ssub.s32 1, %s4
  %s7 = scalar_select 0, %s6, %s4
  // Predicated region
  $region2: #{robert_lstm_forward.11} parent=0 // pred_check
    _
  $region3: #{robert_lstm_forward.11} parent=0 // pred_check_branch
    %9 = sbr.rel (0) target = $region5
  $region4: #{robert_lstm_forward.11} parent=0 // pred_region
    _
  $region5: #{robert_lstm_forward.11} parent=0 // pred_fallthru
    _
  // Predicated region
  $region6: #{robert_lstm_forward.11} parent=0 // pred_check
    _
  $region7: #{robert_lstm_forward.11} parent=0 // pred_check_branch
    %11 = sbr.rel (0) target = $region9
  $region8: #{robert_lstm_forward.11} parent=0 // pred_region
    _
  $region9: #{robert_lstm_forward.11} parent=0 // pred_fallthru
    _
  // Predicated region
  $region10: #{robert_lstm_forward.11} parent=0 // pred_check
    _
  $region11: #{robert_lstm_forward.11} parent=0 // pred_check_branch
    %13 = sbr.rel (0) target = $region13
  $region12: #{robert_lstm_forward.11} parent=0 // pred_region
    _
  $region13: #{robert_lstm_forward.11} parent=0 // pred_fallthru
    _
  %v15 = vld [vmem:[%s0] sm:$0xf]
  %v16 = vld [vmem:[%s0 + $0x4] sm:$0xf]
  %v17 = vld [vmem:[%s1] sm:$0xff]
  %v18 = vld [vmem:[%s1 + $0x8] sm:$0xff]
  %v19 = vld [vmem:[%s1 + $0x10] sm:$0xff]
  %v20 = vld [vmem:[%s1 + $0x18] sm:$0xff]
  %v21 = vld [vmem:[%s1 + $0x20] sm:$0xff]
  %v22 = vld [vmem:[%s1 + $0x28] sm:$0xff]
  %v23 = vld [vmem:[%s1 + $0x30] sm:$0xff]
  %v24 = vld [vmem:[%s1 + $0x38] sm:$0xff]
  %v25 = vld [vmem:[%s2] sm:$0x3]
  %v27 = vlaneseq
  %v28 = vshrl.u32 %v27, 7
  %v29 = vsub.s32 0, %v28
  %v30 = vrot.slane %v25, %v29
  %v31 = vlaneseq
  %v32 = vshrl.u32 %v31, 7
  %v33 = vsub.s32 1, %v32
  %v34 = vrot.slane %v25, %v33
  %v39 = vunpack.c.l.b16 %v15
  %v40 = vunpack.c.l.b16 %v16
  %v41 = vpack.c.b16 %v40, %v39
  %v50 = vunpack.c.l.b16 %v17
  %v51 = vunpack.c.h.b16 %v17
  %v52 = vunpack.c.l.b16 %v18
  %v53 = vunpack.c.h.b16 %v18
  %v54 = vunpack.c.l.b16 %v19
  %v55 = vunpack.c.h.b16 %v19
  %v56 = vunpack.c.l.b16 %v20
  %v57 = vunpack.c.h.b16 %v20
  %v58 = vunpack.c.l.b16 %v21
  %v59 = vunpack.c.h.b16 %v21
  %v60 = vunpack.c.l.b16 %v22
  %v61 = vunpack.c.h.b16 %v22
  %v62 = vunpack.c.l.b16 %v23
  %v63 = vunpack.c.h.b16 %v23
  %v64 = vunpack.c.l.b16 %v24
  %v65 = vunpack.c.h.b16 %v24
  %v66 = vpack.c.b16 %v52, %v50
  %v67 = vpack.c.b16 %v53, %v51
  %v68 = vpack.c.b16 %v56, %v54
  %v69 = vpack.c.b16 %v57, %v55
  %v70 = vpack.c.b16 %v60, %v58
  %v71 = vpack.c.b16 %v61, %v59
  %v72 = vpack.c.b16 %v64, %v62
  %v73 = vpack.c.b16 %v65, %v63
  %vm82 = vcmask 523264
  %v84 = vsel %vm82, %v41, 0
  %86 = vmatprep.subr.bf16.mxu0 %v67
  %87 = vmatpush1.bf16.msra.mxu0 %v66
  %88 = vmatprep.subr.bf16.mxu0 %v69
  %89 = vmatpush1.bf16.msra.mxu0 %v68
  %90 = vmatprep.subr.bf16.mxu0 %v71
  %91 = vmatpush1.bf16.msra.mxu0 %v70
  %92 = vmatprep.subr.bf16.mxu0 %v73
  %93 = vmatpush1.bf16.msra.mxu0 %v72
  %94 = vmatprep.subr.bf16.mxu0 0
  %95 = vmatpush1.bf16.msra.mxu0 0
  %96 = vmatprep.subr.bf16.mxu0 0
  %97 = vmatpush1.bf16.msra.mxu0 0
  %98 = vmatprep.subr.bf16.mxu0 0
  %99 = vmatpush1.bf16.msra.mxu0 0
  %100 = vmatprep.subr.bf16.mxu0 0
  %101 = vmatpush1.bf16.msra.mxu0 0
  %102 = vmatprep.subr.bf16.mxu0 0
  %103 = vmatpush1.bf16.msra.mxu0 0
  %104 = vmatprep.subr.bf16.mxu0 0
  %105 = vmatpush1.bf16.msra.mxu0 0
  %106 = vmatprep.subr.bf16.mxu0 0
  %107 = vmatpush1.bf16.msra.mxu0 0
  %108 = vmatprep.subr.bf16.mxu0 0
  %109 = vmatpush1.bf16.msra.mxu0 0
  %110 = vmatprep.subr.bf16.mxu0 0
  %111 = vmatpush1.bf16.msra.mxu0 0
  %112 = vmatprep.subr.bf16.mxu0 0
  %113 = vmatpush1.bf16.msra.mxu0 0
  %114 = vmatprep.subr.bf16.mxu0 0
  %115 = vmatpush1.bf16.msra.mxu0 0
  %116 = vmatprep.subr.bf16.mxu0 0
  %117 = vmatpush1.bf16.msra.mxu0 0
  %118 = vmatprep.mubr.bf16.mxu0 0
  %119 = vmatmul.mubr.bf16.gmra.mrb[0].mxu0 %v84
  %v120 = vpop.f32.mrb[0].mxu0
  %v121 = vadd.f32 %v30, %v120
  %v122 = vpop.f32.mrb[0].mxu0
  %v123 = vadd.f32 %v34, %v122
  %v124 = vpop.f32.mrb[0].mxu0
  %v125 = vadd.f32 %v30, %v124
  %v126 = vpop.f32.mrb[0].mxu0
  %v127 = vadd.f32 %v34, %v126
  %128 = vdwg.mxu0
  %v129 = vpack.c.bf16 %v125, %v121
  %v130 = vpack.c.bf16 %v127, %v123
  %v133 = vunpack.c.l.b16 %v129
  %v134 = vunpack.c.l.b16 %v130
  %v135 = vunpack.c.h.b16 %v129
  %v136 = vunpack.c.h.b16 %v130
  %v137 = vpack.c.b16 %v134, %v133
  %v138 = vpack.c.b16 %v136, %v135
  %141 = vst [vmem:[%s3] sm:$0xff] %v137
  %142 = vst [vmem:[%s3 + $0x8] sm:$0xff] %v138
  // Predicated region
  $region14: #{robert_lstm_forward.11} parent=0 // pred_check
    _
  $region15: #{robert_lstm_forward.11} parent=0 // pred_check_branch
    %144 = sbr.rel (0) target = $region17
  $region16: #{robert_lstm_forward.11} parent=0 // pred_region
    _
  $region17: #{robert_lstm_forward.11} parent=0 // pred_fallthru
    _
  // Predicated region
  $region18: #{robert_lstm_forward.11} parent=0 // pred_check
    _
  $region19: #{robert_lstm_forward.11} parent=0 // pred_check_branch
    %146 = sbr.rel (0) target = $region21
  $region20: #{robert_lstm_forward.11} parent=0 // pred_region
    _
  $region21: #{robert_lstm_forward.11} parent=0 // pred_fallthru
    _

// kernel: robert_lstm_forward.13
$region0: #{robert_lstm_forward.13}
  #allocation0 [shape = 'u32[]', space=smem, size = 0x4, offset = 0x4, fixed_abs, tag = 'smem constant byte address 0x4 - core index']
  #allocation1 [shape = 'u32[144,128]{1,0:T(1,128)}', space=vmem, size = 0x12000, scoped, tag = 'internal scratch']
  %s0 = inlined_call_operand.vmem [shape: bf16[2,64], index: 0, kind: input, shape index: {}]
  %s1 = inlined_call_operand.vmem [shape: bf16[64,4], index: 1, kind: input, shape index: {}]
  %s2 = inlined_call_operand.vmem [shape: f32[1,4], index: 2, kind: input, shape index: {}]
  %s3 = inlined_call_operand.hbm [shape: f32[2,4], index: 3, kind: output, shape index: {}]
  %s4 = sld [smem:[#allocation0]]
  $region22: #{robert_lstm_forward.13} parent=0
    _
  %s6 = ssub.s32 1, %s4
  %s7 = scalar_select 0, %s6, %s4
  $region1: #{robert_lstm_forward.13} parent=0
    #allocation2 [shape = 'u8[1024]{0}', space=vmem, size = 0x400, scoped, tag = 'output window, operand 0, single buffered']
    #allocation3 [shape = 's32[1]{0}', space=sflag, size = 0x4, scoped, tag = 'scoped memory for robert_lstm_forward.13']
    %8 = vsyncpa [#allocation3], 0
    // Predicated region
    $region2: #{robert_lstm_forward.13} parent=1 // pred_check
      _
    $region3: #{robert_lstm_forward.13} parent=1 // pred_check_branch
      %10 = sbr.rel (0) target = $region5
    $region4: #{robert_lstm_forward.13} parent=1 // pred_region
      _
    $region5: #{robert_lstm_forward.13} parent=1 // pred_fallthru
      _
    // Predicated region
    $region6: #{robert_lstm_forward.13} parent=1 // pred_check
      _
    $region7: #{robert_lstm_forward.13} parent=1 // pred_check_branch
      %12 = sbr.rel (0) target = $region9
    $region8: #{robert_lstm_forward.13} parent=1 // pred_region
      _
    $region9: #{robert_lstm_forward.13} parent=1 // pred_fallthru
      _
    // Predicated region
    $region10: #{robert_lstm_forward.13} parent=1 // pred_check
      _
    $region11: #{robert_lstm_forward.13} parent=1 // pred_check_branch
      %14 = sbr.rel (0) target = $region13
    $region12: #{robert_lstm_forward.13} parent=1 // pred_region
      _
    $region13: #{robert_lstm_forward.13} parent=1 // pred_fallthru
      _
    %v16 = vld [vmem:[%s0] sm:$0x1]
    %v17 = vld [vmem:[%s1] sm:$0xf]
    %v18 = vld [vmem:[%s1 + $0x4] sm:$0xf]
    %v19 = vld [vmem:[%s1 + $0x8] sm:$0xf]
    %v20 = vld [vmem:[%s1 + $0xc] sm:$0xf]
    %v21 = vld [vmem:[%s1 + $0x10] sm:$0xf]
    %v22 = vld [vmem:[%s1 + $0x14] sm:$0xf]
    %v23 = vld [vmem:[%s1 + $0x18] sm:$0xf]
    %v24 = vld [vmem:[%s1 + $0x1c] sm:$0xf]
    %v25 = vld [vmem:[%s2] sm:$0x1]
    %v27 = vlaneseq
    %v28 = vshrl.u32 %v27, 7
    %v29 = vsub.s32 0, %v28
    %v30 = vrot.slane %v25, %v29
    %v40 = vunpack.c.l.b16 %v17
    %v41 = vunpack.c.l.b16 %v18
    %v42 = vunpack.c.l.b16 %v19
    %v43 = vunpack.c.l.b16 %v20
    %v44 = vunpack.c.l.b16 %v21
    %v45 = vunpack.c.l.b16 %v22
    %v46 = vunpack.c.l.b16 %v23
    %v47 = vunpack.c.l.b16 %v24
    %v48 = vpack.c.b16 %v41, %v40
    %v49 = vpack.c.b16 %v43, %v42
    %v50 = vpack.c.b16 %v45, %v44
    %v51 = vpack.c.b16 %v47, %v46
    %vm56 = vcmask 523264
    %v58 = vsel %vm56, %v16, 0
    %60 = vmatprep.subr.bf16.mxu0 0
    %61 = vmatpush1.bf16.msra.mxu0 %v48
    %62 = vmatprep.subr.bf16.mxu0 0
    %63 = vmatpush1.bf16.msra.mxu0 %v49
    %64 = vmatprep.subr.bf16.mxu0 0
    %65 = vmatpush1.bf16.msra.mxu0 %v50
    %66 = vmatprep.subr.bf16.mxu0 0
    %67 = vmatpush1.bf16.msra.mxu0 %v51
    %68 = vmatprep.subr.bf16.mxu0 0
    %69 = vmatpush1.bf16.msra.mxu0 0
    %70 = vmatprep.subr.bf16.mxu0 0
    %71 = vmatpush1.bf16.msra.mxu0 0
    %72 = vmatprep.subr.bf16.mxu0 0
    %73 = vmatpush1.bf16.msra.mxu0 0
    %74 = vmatprep.subr.bf16.mxu0 0
    %75 = vmatpush1.bf16.msra.mxu0 0
    %76 = vmatprep.subr.bf16.mxu0 0
    %77 = vmatpush1.bf16.msra.mxu0 0
    %78 = vmatprep.subr.bf16.mxu0 0
    %79 = vmatpush1.bf16.msra.mxu0 0
    %80 = vmatprep.subr.bf16.mxu0 0
    %81 = vmatpush1.bf16.msra.mxu0 0
    %82 = vmatprep.subr.bf16.mxu0 0
    %83 = vmatpush1.bf16.msra.mxu0 0
    %84 = vmatprep.subr.bf16.mxu0 0
    %85 = vmatpush1.bf16.msra.mxu0 0
    %86 = vmatprep.subr.bf16.mxu0 0
    %87 = vmatpush1.bf16.msra.mxu0 0
    %88 = vmatprep.subr.bf16.mxu0 0
    %89 = vmatpush1.bf16.msra.mxu0 0
    %90 = vmatprep.subr.bf16.mxu0 0
    %91 = vmatpush1.bf16.msra.mxu0 0
    %92 = vmatprep.mubr.bf16.mxu0 0
    %93 = vmatmul.mubr.bf16.gmra.mrb[0].mxu0 %v58
    %v94 = vpop.f32.mrb[0].mxu0
    %v95 = vadd.f32 %v30, %v94
    %v96 = vpop.f32.mrb[0].mxu0
    %v97 = vpop.f32.mrb[0].mxu0
    %v98 = vpop.f32.mrb[0].mxu0
    %99 = vdwg.mxu0
    %vm100 = vcmask 25600
    %101 = vst.msk [vmem:[#allocation2] sm:$0x3] %vm100, %v95
    // Predicated region
    $region14: #{robert_lstm_forward.13} parent=1 // pred_check
      _
    $region15: #{robert_lstm_forward.13} parent=1 // pred_check_branch
      %103 = sbr.rel (0) target = $region17
    $region16: #{robert_lstm_forward.13} parent=1 // pred_region
      %s105 = ssub.s32 32, 32
      %106 = vsyncadd [#allocation3], %s105
      %s108 = sshll.u32 [#allocation2], 4
      %s109 = int_to_ptr.vmem [resolvable:$true] %s108
      %111 = dma.vmem_to_hbm [thread:$0]  %s109, 32, %s3, [#allocation3]
    $region17: #{robert_lstm_forward.13} parent=1 // pred_fallthru
      _
    // Predicated region
    $region18: #{robert_lstm_forward.13} parent=1 // pred_check
      _
    $region19: #{robert_lstm_forward.13} parent=1 // pred_check_branch
      %113 = sbr.rel (0) target = $region21
    $region20: #{robert_lstm_forward.13} parent=1 // pred_region
      %114 = dma.done [#allocation3], 32
    $region21: #{robert_lstm_forward.13} parent=1 // pred_fallthru
      _
    %115 = vsyncpa [#allocation3], 1

// kernel: robert_lstm_forward.10
$region0: #{robert_lstm_forward.10}
  #allocation0 [shape = 'u32[]', space=smem, size = 0x4, offset = 0x4, fixed_abs, tag = 'smem constant byte address 0x4 - core index']
  #allocation1 [shape = 'u32[144,128]{1,0:T(1,128)}', space=vmem, size = 0x12000, scoped, tag = 'internal scratch']
  #allocation2 [shape = 'f32[2,32]{1,0:T(2,128)}', space=vmem, size = 0x400, scoped, tag = 'scratch operand']
  #allocation3 [shape = 'f32[2,32]{1,0:T(2,128)}', space=vmem, size = 0x400, scoped, tag = 'scratch operand']
  #allocation4 [shape = 'f32[2,32]{1,0:T(2,128)}', space=vmem, size = 0x400, scoped, tag = 'scratch operand']
  #allocation5 [shape = 'f32[2,32]{1,0:T(2,128)}', space=vmem, size = 0x400, scoped, tag = 'scratch operand']
  %s0 = inlined_call_operand.vmem [shape: bf16[8,2,256], index: 0, kind: input, shape index: {}]
  %s1 = inlined_call_operand.vmem [shape: bf16[32,128], index: 1, kind: input, shape index: {}]
  %s2 = inlined_call_operand.vmem [shape: bf16[32,128], index: 2, kind: input, shape index: {}]
  %s3 = inlined_call_operand.vmem [shape: bf16[8,2,64], index: 3, kind: output, shape index: {}]
  %s4 = sld [smem:[#allocation0]]
  $region22: #{robert_lstm_forward.10} parent=0
    _
  %s6 = ssub.s32 1, %s4
  %s7 = scalar_select 0, %s6, %s4
  // Predicated region
  $region2: #{robert_lstm_forward.10} parent=0 // pred_check
    _
  $region3: #{robert_lstm_forward.10} parent=0 // pred_check_branch
    %9 = sbr.rel (0) target = $region5
  $region4: #{robert_lstm_forward.10} parent=0 // pred_region
    _
  $region5: #{robert_lstm_forward.10} parent=0 // pred_fallthru
    _
  // Predicated region
  $region6: #{robert_lstm_forward.10} parent=0 // pred_check
    _
  $region7: #{robert_lstm_forward.10} parent=0 // pred_check_branch
    %11 = sbr.rel (0) target = $region9
  $region8: #{robert_lstm_forward.10} parent=0 // pred_region
    _
  $region9: #{robert_lstm_forward.10} parent=0 // pred_fallthru
    _
  // Predicated region
  $region10: #{robert_lstm_forward.10} parent=0 // pred_check
    _
  $region11: #{robert_lstm_forward.10} parent=0 // pred_check_branch
    %13 = sbr.rel (0) target = $region13
  $region12: #{robert_lstm_forward.10} parent=0 // pred_region
    _
  $region13: #{robert_lstm_forward.10} parent=0 // pred_fallthru
    _
  %vm15 = vcmask 254976
  %16 = vst.msk [vmem:[#allocation2] sm:$0x3] %vm15, 0.0
  %17 = vst.msk [vmem:[#allocation3] sm:$0x3] %vm15, 0.0
  %18 = vst.msk [vmem:[#allocation4] sm:$0x3] %vm15, 0.0
  %19 = vst.msk [vmem:[#allocation5] sm:$0x3] %vm15, 0.0
  %v20 = vld [vmem:[%s1] sm:$0xf]
  %v21 = vld [vmem:[%s1 + $0x4] sm:$0xf]
  %v22 = vld [vmem:[%s1 + $0x8] sm:$0xf]
  %v23 = vld [vmem:[%s1 + $0xc] sm:$0xf]
  %v24 = vld [vmem:[%s2] sm:$0xf]
  %v25 = vld [vmem:[%s2 + $0x4] sm:$0xf]
  %v26 = vld [vmem:[%s2 + $0x8] sm:$0xf]
  %v27 = vld [vmem:[%s2 + $0xc] sm:$0xf]
  %v28 = vld [vmem:[%s0] sm:$0x3]
  %v29 = vunpack.c.l.bf16 %v28
  %v30 = vld [vmem:[#allocation2] sm:$0x3]
  %v31 = vpack.c.bf16 %v30, %v30
  %v36 = vunpack.c.l.b16 %v20
  %v37 = vunpack.c.l.b16 %v21
  %v38 = vunpack.c.l.b16 %v22
  %v39 = vunpack.c.l.b16 %v23
  %v40 = vpack.c.b16 %v37, %v36
  %v41 = vpack.c.b16 %v39, %v38
  %vm44 = vcmask 261120
  %v46 = vsel %vm44, %v31, 0
  %48 = vmatprep.subr.bf16.mxu0 0
  %49 = vmatpush1.bf16.msra.mxu0 %v40
  %50 = vmatprep.subr.bf16.mxu0 0
  %51 = vmatpush1.bf16.msra.mxu0 %v41
  %52 = vmatprep.subr.bf16.mxu0 0
  %53 = vmatpush1.bf16.msra.mxu0 0
  %54 = vmatprep.subr.bf16.mxu0 0
  %55 = vmatpush1.bf16.msra.mxu0 0
  %56 = vmatprep.subr.bf16.mxu0 0
  %57 = vmatpush1.bf16.msra.mxu0 0
  %58 = vmatprep.subr.bf16.mxu0 0
  %59 = vmatpush1.bf16.msra.mxu0 0
  %60 = vmatprep.subr.bf16.mxu0 0
  %61 = vmatpush1.bf16.msra.mxu0 0
  %62 = vmatprep.subr.bf16.mxu0 0
  %63 = vmatpush1.bf16.msra.mxu0 0
  %64 = vmatprep.subr.bf16.mxu0 0
  %65 = vmatpush1.bf16.msra.mxu0 0
  %66 = vmatprep.subr.bf16.mxu0 0
  %67 = vmatpush1.bf16.msra.mxu0 0
  %68 = vmatprep.subr.bf16.mxu0 0
  %69 = vmatpush1.bf16.msra.mxu0 0
  %70 = vmatprep.subr.bf16.mxu0 0
  %71 = vmatpush1.bf16.msra.mxu0 0
  %72 = vmatprep.subr.bf16.mxu0 0
  %73 = vmatpush1.bf16.msra.mxu0 0
  %74 = vmatprep.subr.bf16.mxu0 0
  %75 = vmatpush1.bf16.msra.mxu0 0
  %76 = vmatprep.subr.bf16.mxu0 0
  %77 = vmatpush1.bf16.msra.mxu0 0
  %78 = vmatprep.subr.bf16.mxu0 0
  %79 = vmatpush1.bf16.msra.mxu0 0
  %80 = vmatprep.mubr.bf16.mxu0 0
  %81 = vmatmul.mubr.bf16.gmra.mrb[0].mxu0 %v46
  %v82 = vpop.f32.mrb[0].mxu0
  %v83 = vadd.f32 0.0, %v82
  %v84 = vpop.f32.mrb[0].mxu0
  %v85 = vpop.f32.mrb[0].mxu0
  %v86 = vpop.f32.mrb[0].mxu0
  %87 = vdwg.mxu0
  %v88 = vadd.f32 %v29, %v83
  %v89 = vld [vmem:[#allocation3] sm:$0x3]
  %v90 = vxor.u32 %v88, 2147483648
  %v91 = vmul.f32 %v90, 1.442695
  %v92 = vpow.pop %v91
  %v93 = vadd.f32 %v92, 1.0
  %v94 = vrcp.pop %v93
  %v95 = vmul.f32 1.0, %v94
  %v96 = vtanh.pop %v88
  %v99 = vunpack.c.l.s4 1983009808
  %v100 = vunpack.c.0.s8 %v99
  %v101 = vlaneseq
  %v102 = vshrl.u32 %v101, 7
  %v103 = vsub.s32 %v100, %v102
  %v104 = vrot.slane %v89, %v103
  %105 = vrot.lane.b32.xlu0 %v104, 32
  %v106 = vpop.permute.xlu0 %105
  %v108 = vmul.f32 %v95, %v106
  %110 = vrot.lane.b32.xlu0 %v96, 64
  %v111 = vpop.permute.xlu0 %110
  %v113 = vmul.f32 %v95, %v111
  %115 = vrot.lane.b32.xlu0 %v113, 32
  %v116 = vpop.permute.xlu0 %115
  %v118 = vadd.f32 %v108, %v116
  %v119 = vtanh.pop %v118
  %121 = vrot.lane.b32.xlu0 %v119, 64
  %v122 = vpop.permute.xlu0 %121
  %v124 = vmul.f32 %v95, %v122
  %v127 = vunpack.c.l.s4 1983009808
  %v128 = vunpack.c.0.s8 %v127
  %v129 = vlaneseq
  %v130 = vshrl.u32 %v129, 7
  %v131 = vsub.s32 %v128, %v130
  %v132 = vrot.slane %v124, %v131
  %133 = vrot.lane.b32.xlu0 %v132, 32
  %v134 = vpop.permute.xlu0 %133
  %136 = vst.msk [vmem:[#allocation2] sm:$0x3] %vm15, %v134
  %v139 = vunpack.c.l.s4 1983009808
  %v140 = vunpack.c.0.s8 %v139
  %v141 = vlaneseq
  %v142 = vshrl.u32 %v141, 7
  %v143 = vsub.s32 %v140, %v142
  %v144 = vrot.slane %v118, %v143
  %145 = vrot.lane.b32.xlu0 %v144, 96
  %v146 = vpop.permute.xlu0 %145
  %148 = vst.msk [vmem:[#allocation3] sm:$0x3] %vm15, %v146
  %v149 = vpack.c.bf16 %v124, %v124
  %v152 = vunpack.c.l.s4 1966171168
  %v153 = vunpack.c.0.s8 %v152
  %v154 = vlaneseq
  %v155 = vshrl.u32 %v154, 7
  %v156 = vsub.s32 %v153, %v155
  %v157 = vrot.slane %v149, %v156
  %v159 = vunpack.c.l.s4 1966171168
  %v160 = vunpack.c.0.s8 %v159
  %v161 = vlaneseq
  %v162 = vshrl.u32 %v161, 7
  %v163 = vsub.s32 %v160, %v162
  %v164 = vrot.slane %v157, %v163
  %165 = vrot.lane.b32.xlu0 %v164, 32
  %v166 = vpop.permute.xlu0 %165
  %vm168 = vcmask 253952
  %169 = vst.msk [vmem:[%s3] sm:$0x1] %vm168, %v166
  %s170 = scalar_lea.vmem %s0, 14
  %v171 = vld [vmem:[%s170] sm:$0x3]
  %v172 = vunpack.c.l.bf16 %v171
  %v173 = vld [vmem:[#allocation4] sm:$0x3]
  %v174 = vpack.c.bf16 %v173, %v173
  %v179 = vunpack.c.l.b16 %v24
  %v180 = vunpack.c.l.b16 %v25
  %v181 = vunpack.c.l.b16 %v26
  %v182 = vunpack.c.l.b16 %v27
  %v183 = vpack.c.b16 %v180, %v179
  %v184 = vpack.c.b16 %v182, %v181
  %v188 = vsel %vm44, %v174, 0
  %190 = vmatprep.subr.bf16.mxu0 0
  %191 = vmatpush1.bf16.msra.mxu0 %v183
  %192 = vmatprep.subr.bf16.mxu0 0
  %193 = vmatpush1.bf16.msra.mxu0 %v184
  %194 = vmatprep.subr.bf16.mxu0 0
  %195 = vmatpush1.bf16.msra.mxu0 0
  %196 = vmatprep.subr.bf16.mxu0 0
  %197 = vmatpush1.bf16.msra.mxu0 0
  %198 = vmatprep.subr.bf16.mxu0 0
  %199 = vmatpush1.bf16.msra.mxu0 0
  %200 = vmatprep.subr.bf16.mxu0 0
  %201 = vmatpush1.bf16.msra.mxu0 0
  %202 = vmatprep.subr.bf16.mxu0 0
  %203 = vmatpush1.bf16.msra.mxu0 0
  %204 = vmatprep.subr.bf16.mxu0 0
  %205 = vmatpush1.bf16.msra.mxu0 0
  %206 = vmatprep.subr.bf16.mxu0 0
  %207 = vmatpush1.bf16.msra.mxu0 0
  %208 = vmatprep.subr.bf16.mxu0 0
  %209 = vmatpush1.bf16.msra.mxu0 0
  %210 = vmatprep.subr.bf16.mxu0 0
  %211 = vmatpush1.bf16.msra.mxu0 0
  %212 = vmatprep.subr.bf16.mxu0 0
  %213 = vmatpush1.bf16.msra.mxu0 0
  %214 = vmatprep.subr.bf16.mxu0 0
  %215 = vmatpush1.bf16.msra.mxu0 0
  %216 = vmatprep.subr.bf16.mxu0 0
  %217 = vmatpush1.bf16.msra.mxu0 0
  %218 = vmatprep.subr.bf16.mxu0 0
  %219 = vmatpush1.bf16.msra.mxu0 0
  %220 = vmatprep.subr.bf16.mxu0 0
  %221 = vmatpush1.bf16.msra.mxu0 0
  %222 = vmatprep.mubr.bf16.mxu0 0
  %223 = vmatmul.mubr.bf16.gmra.mrb[0].mxu0 %v188
  %v224 = vpop.f32.mrb[0].mxu0
  %v225 = vadd.f32 0.0, %v224
  %v226 = vpop.f32.mrb[0].mxu0
  %v227 = vpop.f32.mrb[0].mxu0
  %v228 = vpop.f32.mrb[0].mxu0
  %229 = vdwg.mxu0
  %v231 = vrot.slane %v172, 2
  %v233 = vadd.f32 %v231, %v225
  %v234 = vld [vmem:[#allocation5] sm:$0x3]
  %v235 = vxor.u32 %v233, 2147483648
  %v236 = vmul.f32 %v235, 1.442695
  %v237 = vpow.pop %v236
  %v238 = vadd.f32 %v237, 1.0
  %v239 = vrcp.pop %v238
  %v240 = vmul.f32 1.0, %v239
  %v241 = vtanh.pop %v233
  %v244 = vunpack.c.l.s4 1983009808
  %v245 = vunpack.c.0.s8 %v244
  %v246 = vlaneseq
  %v247 = vshrl.u32 %v246, 7
  %v248 = vsub.s32 %v245, %v247
  %v249 = vrot.slane %v234, %v248
  %250 = vrot.lane.b32.xlu0 %v249, 32
  %v251 = vpop.permute.xlu0 %250
  %v253 = vmul.f32 %v240, %v251
  %255 = vrot.lane.b32.xlu0 %v241, 64
  %v256 = vpop.permute.xlu0 %255
  %v258 = vmul.f32 %v240, %v256
  %260 = vrot.lane.b32.xlu0 %v258, 32
  %v261 = vpop.permute.xlu0 %260
  %v263 = vadd.f32 %v253, %v261
  %v264 = vtanh.pop %v263
  %266 = vrot.lane.b32.xlu0 %v264, 64
  %v267 = vpop.permute.xlu0 %266
  %v269 = vmul.f32 %v240, %v267
  %v272 = vunpack.c.l.s4 1983009808
  %v273 = vunpack.c.0.s8 %v272
  %v274 = vlaneseq
  %v275 = vshrl.u32 %v274, 7
  %v276 = vsub.s32 %v273, %v275
  %v277 = vrot.slane %v269, %v276
  %278 = vrot.lane.b32.xlu0 %v277, 32
  %v279 = vpop.permute.xlu0 %278
  %281 = vst.msk [vmem:[#allocation4] sm:$0x3] %vm15, %v279
  %v284 = vunpack.c.l.s4 1983009808
  %v285 = vunpack.c.0.s8 %v284
  %v286 = vlaneseq
  %v287 = vshrl.u32 %v286, 7
  %v288 = vsub.s32 %v285, %v287
  %v289 = vrot.slane %v263, %v288
  %290 = vrot.lane.b32.xlu0 %v289, 96
  %v291 = vpop.permute.xlu0 %290
  %293 = vst.msk [vmem:[#allocation5] sm:$0x3] %vm15, %v291
  %v294 = vpack.c.bf16 %v269, %v269
  %v297 = vunpack.c.l.s4 1966171168
  %v298 = vunpack.c.0.s8 %v297
  %v299 = vlaneseq
  %v300 = vshrl.u32 %v299, 7
  %v301 = vsub.s32 %v298, %v300
  %v302 = vrot.slane %v294, %v301
  %v304 = vunpack.c.l.s4 1966171168
  %v305 = vunpack.c.0.s8 %v304
  %v306 = vlaneseq
  %v307 = vshrl.u32 %v306, 7
  %v308 = vsub.s32 %v305, %v307
  %v309 = vrot.slane %v302, %v308
  %310 = vrot.lane.b32.xlu0 %v309, 64
  %v311 = vpop.permute.xlu0 %310
  %s313 = scalar_lea.vmem %s3, 7
  %vm314 = vcmask 516352
  %315 = vst.msk [vmem:[%s313] sm:$0x1] %vm314, %v311
  %s316 = scalar_lea.vmem %s0, 2
  %v317 = vld [vmem:[%s316] sm:$0x3]
  %v318 = vunpack.c.l.bf16 %v317
  %v319 = vld [vmem:[#allocation2] sm:$0x3]
  %v320 = vpack.c.bf16 %v319, %v319
  %v322 = vsel %vm44, %v320, 0
  %324 = vmatprep.subr.bf16.mxu0 0
  %325 = vmatpush1.bf16.msra.mxu0 %v40
  %326 = vmatprep.subr.bf16.mxu0 0
  %327 = vmatpush1.bf16.msra.mxu0 %v41
  %328 = vmatprep.subr.bf16.mxu0 0
  %329 = vmatpush1.bf16.msra.mxu0 0
  %330 = vmatprep.subr.bf16.mxu0 0
  %331 = vmatpush1.bf16.msra.mxu0 0
  %332 = vmatprep.subr.bf16.mxu0 0
  %333 = vmatpush1.bf16.msra.mxu0 0
  %334 = vmatprep.subr.bf16.mxu0 0
  %335 = vmatpush1.bf16.msra.mxu0 0
  %336 = vmatprep.subr.bf16.mxu0 0
  %337 = vmatpush1.bf16.msra.mxu0 0
  %338 = vmatprep.subr.bf16.mxu0 0
  %339 = vmatpush1.bf16.msra.mxu0 0
  %340 = vmatprep.subr.bf16.mxu0 0
  %341 = vmatpush1.bf16.msra.mxu0 0
  %342 = vmatprep.subr.bf16.mxu0 0
  %343 = vmatpush1.bf16.msra.mxu0 0
  %344 = vmatprep.subr.bf16.mxu0 0
  %345 = vmatpush1.bf16.msra.mxu0 0
  %346 = vmatprep.subr.bf16.mxu0 0
  %347 = vmatpush1.bf16.msra.mxu0 0
  %348 = vmatprep.subr.bf16.mxu0 0
  %349 = vmatpush1.bf16.msra.mxu0 0
  %350 = vmatprep.subr.bf16.mxu0 0
  %351 = vmatpush1.bf16.msra.mxu0 0
  %352 = vmatprep.subr.bf16.mxu0 0
  %353 = vmatpush1.bf16.msra.mxu0 0
  %354 = vmatprep.subr.bf16.mxu0 0
  %355 = vmatpush1.bf16.msra.mxu0 0
  %356 = vmatprep.mubr.bf16.mxu0 0
  %357 = vmatmul.mubr.bf16.gmra.mrb[0].mxu0 %v322
  %v358 = vpop.f32.mrb[0].mxu0
  %v359 = vadd.f32 0.0, %v358
  %v360 = vpop.f32.mrb[0].mxu0
  %v361 = vpop.f32.mrb[0].mxu0
  %v362 = vpop.f32.mrb[0].mxu0
  %363 = vdwg.mxu0
  %v364 = vadd.f32 %v318, %v359
  %v365 = vld [vmem:[#allocation3] sm:$0x3]
  %v366 = vxor.u32 %v364, 2147483648
  %v367 = vmul.f32 %v366, 1.442695
  %v368 = vpow.pop %v367
  %v369 = vadd.f32 %v368, 1.0
  %v370 = vrcp.pop %v369
  %v371 = vmul.f32 1.0, %v370
  %v372 = vtanh.pop %v364
  %v375 = vunpack.c.l.s4 1983009808
  %v376 = vunpack.c.0.s8 %v375
  %v377 = vlaneseq
  %v378 = vshrl.u32 %v377, 7
  %v379 = vsub.s32 %v376, %v378
  %v380 = vrot.slane %v365, %v379
  %381 = vrot.lane.b32.xlu0 %v380, 32
  %v382 = vpop.permute.xlu0 %381
  %v384 = vmul.f32 %v371, %v382
  %386 = vrot.lane.b32.xlu0 %v372, 64
  %v387 = vpop.permute.xlu0 %386
  %v389 = vmul.f32 %v371, %v387
  %391 = vrot.lane.b32.xlu0 %v389, 32
  %v392 = vpop.permute.xlu0 %391
  %v394 = vadd.f32 %v384, %v392
  %v395 = vtanh.pop %v394
  %397 = vrot.lane.b32.xlu0 %v395, 64
  %v398 = vpop.permute.xlu0 %397
  %v400 = vmul.f32 %v371, %v398
  %v403 = vunpack.c.l.s4 1983009808
  %v404 = vunpack.c.0.s8 %v403
  %v405 = vlaneseq
  %v406 = vshrl.u32 %v405, 7
  %v407 = vsub.s32 %v404, %v406
  %v408 = vrot.slane %v400, %v407
  %409 = vrot.lane.b32.xlu0 %v408, 32
  %v410 = vpop.permute.xlu0 %409
  %412 = vst.msk [vmem:[#allocation2] sm:$0x3] %vm15, %v410
  %v415 = vunpack.c.l.s4 1983009808
  %v416 = vunpack.c.0.s8 %v415
  %v417 = vlaneseq
  %v418 = vshrl.u32 %v417, 7
  %v419 = vsub.s32 %v416, %v418
  %v420 = vrot.slane %v394, %v419
  %421 = vrot.lane.b32.xlu0 %v420, 96
  %v422 = vpop.permute.xlu0 %421
  %424 = vst.msk [vmem:[#allocation3] sm:$0x3] %vm15, %v422
  %v425 = vpack.c.bf16 %v400, %v400
  %v428 = vunpack.c.l.s4 1966171168
  %v429 = vunpack.c.0.s8 %v428
  %v430 = vlaneseq
  %v431 = vshrl.u32 %v430, 7
  %v432 = vsub.s32 %v429, %v431
  %v433 = vrot.slane %v425, %v432
  %v435 = vunpack.c.l.s4 1966171168
  %v436 = vunpack.c.0.s8 %v435
  %v437 = vlaneseq
  %v438 = vshrl.u32 %v437, 7
  %v439 = vsub.s32 %v436, %v438
  %v440 = vrot.slane %v433, %v439
  %441 = vrot.lane.b32.xlu0 %v440, 32
  %v442 = vpop.permute.xlu0 %441
  %s444 = scalar_lea.vmem %s3, 1
  %445 = vst.msk [vmem:[%s444] sm:$0x1] %vm168, %v442
  %s446 = scalar_lea.vmem %s0, 12
  %v447 = vld [vmem:[%s446] sm:$0x3]
  %v448 = vunpack.c.l.bf16 %v447
  %v449 = vld [vmem:[#allocation4] sm:$0x3]
  %v450 = vpack.c.bf16 %v449, %v449
  %v452 = vsel %vm44, %v450, 0
  %454 = vmatprep.subr.bf16.mxu0 0
  %455 = vmatpush1.bf16.msra.mxu0 %v183
  %456 = vmatprep.subr.bf16.mxu0 0
  %457 = vmatpush1.bf16.msra.mxu0 %v184
  %458 = vmatprep.subr.bf16.mxu0 0
  %459 = vmatpush1.bf16.msra.mxu0 0
  %460 = vmatprep.subr.bf16.mxu0 0
  %461 = vmatpush1.bf16.msra.mxu0 0
  %462 = vmatprep.subr.bf16.mxu0 0
  %463 = vmatpush1.bf16.msra.mxu0 0
  %464 = vmatprep.subr.bf16.mxu0 0
  %465 = vmatpush1.bf16.msra.mxu0 0
  %466 = vmatprep.subr.bf16.mxu0 0
  %467 = vmatpush1.bf16.msra.mxu0 0
  %468 = vmatprep.subr.bf16.mxu0 0
  %469 = vmatpush1.bf16.msra.mxu0 0
  %470 = vmatprep.subr.bf16.mxu0 0
  %471 = vmatpush1.bf16.msra.mxu0 0
  %472 = vmatprep.subr.bf16.mxu0 0
  %473 = vmatpush1.bf16.msra.mxu0 0
  %474 = vmatprep.subr.bf16.mxu0 0
  %475 = vmatpush1.bf16.msra.mxu0 0
  %476 = vmatprep.subr.bf16.mxu0 0
  %477 = vmatpush1.bf16.msra.mxu0 0
  %478 = vmatprep.subr.bf16.mxu0 0
  %479 = vmatpush1.bf16.msra.mxu0 0
  %480 = vmatprep.subr.bf16.mxu0 0
  %481 = vmatpush1.bf16.msra.mxu0 0
  %482 = vmatprep.subr.bf16.mxu0 0
  %483 = vmatpush1.bf16.msra.mxu0 0
  %484 = vmatprep.subr.bf16.mxu0 0
  %485 = vmatpush1.bf16.msra.mxu0 0
  %486 = vmatprep.mubr.bf16.mxu0 0
  %487 = vmatmul.mubr.bf16.gmra.mrb[0].mxu0 %v452
  %v488 = vpop.f32.mrb[0].mxu0
  %v489 = vadd.f32 0.0, %v488
  %v490 = vpop.f32.mrb[0].mxu0
  %v491 = vpop.f32.mrb[0].mxu0
  %v492 = vpop.f32.mrb[0].mxu0
  %493 = vdwg.mxu0
  %v495 = vrot.slane %v448, 2
  %v497 = vadd.f32 %v495, %v489
  %v498 = vld [vmem:[#allocation5] sm:$0x3]
  %v499 = vxor.u32 %v497, 2147483648
  %v500 = vmul.f32 %v499, 1.442695
  %v501 = vpow.pop %v500
  %v502 = vadd.f32 %v501, 1.0
  %v503 = vrcp.pop %v502
  %v504 = vmul.f32 1.0, %v503
  %v505 = vtanh.pop %v497
  %v508 = vunpack.c.l.s4 1983009808
  %v509 = vunpack.c.0.s8 %v508
  %v510 = vlaneseq
  %v511 = vshrl.u32 %v510, 7
  %v512 = vsub.s32 %v509, %v511
  %v513 = vrot.slane %v498, %v512
  %514 = vrot.lane.b32.xlu0 %v513, 32
  %v515 = vpop.permute.xlu0 %514
  %v517 = vmul.f32 %v504, %v515
  %519 = vrot.lane.b32.xlu0 %v505, 64
  %v520 = vpop.permute.xlu0 %519
  %v522 = vmul.f32 %v504, %v520
  %524 = vrot.lane.b32.xlu0 %v522, 32
  %v525 = vpop.permute.xlu0 %524
  %v527 = vadd.f32 %v517, %v525
  %v528 = vtanh.pop %v527
  %530 = vrot.lane.b32.xlu0 %v528, 64
  %v531 = vpop.permute.xlu0 %530
  %v533 = vmul.f32 %v504, %v531
  %v536 = vunpack.c.l.s4 1983009808
  %v537 = vunpack.c.0.s8 %v536
  %v538 = vlaneseq
  %v539 = vshrl.u32 %v538, 7
  %v540 = vsub.s32 %v537, %v539
  %v541 = vrot.slane %v533, %v540
  %542 = vrot.lane.b32.xlu0 %v541, 32
  %v543 = vpop.permute.xlu0 %542
  %545 = vst.msk [vmem:[#allocation4] sm:$0x3] %vm15, %v543
  %v548 = vunpack.c.l.s4 1983009808
  %v549 = vunpack.c.0.s8 %v548
  %v550 = vlaneseq
  %v551 = vshrl.u32 %v550, 7
  %v552 = vsub.s32 %v549, %v551
  %v553 = vrot.slane %v527, %v552
  %554 = vrot.lane.b32.xlu0 %v553, 96
  %v555 = vpop.permute.xlu0 %554
  %557 = vst.msk [vmem:[#allocation5] sm:$0x3] %vm15, %v555
  %v558 = vpack.c.bf16 %v533, %v533
  %v561 = vunpack.c.l.s4 1966171168
  %v562 = vunpack.c.0.s8 %v561
  %v563 = vlaneseq
  %v564 = vshrl.u32 %v563, 7
  %v565 = vsub.s32 %v562, %v564
  %v566 = vrot.slane %v558, %v565
  %v568 = vunpack.c.l.s4 1966171168
  %v569 = vunpack.c.0.s8 %v568
  %v570 = vlaneseq
  %v571 = vshrl.u32 %v570, 7
  %v572 = vsub.s32 %v569, %v571
  %v573 = vrot.slane %v566, %v572
  %574 = vrot.lane.b32.xlu0 %v573, 64
  %v575 = vpop.permute.xlu0 %574
  %s577 = scalar_lea.vmem %s3, 6
  %578 = vst.msk [vmem:[%s577] sm:$0x1] %vm314, %v575
  %s579 = scalar_lea.vmem %s0, 4
  %v580 = vld [vmem:[%s579] sm:$0x3]
  %v581 = vunpack.c.l.bf16 %v580
  %v582 = vld [vmem:[#allocation2] sm:$0x3]
  %v583 = vpack.c.bf16 %v582, %v582
  %v585 = vsel %vm44, %v583, 0
  %587 = vmatprep.subr.bf16.mxu0 0
  %588 = vmatpush1.bf16.msra.mxu0 %v40
  %589 = vmatprep.subr.bf16.mxu0 0
  %590 = vmatpush1.bf16.msra.mxu0 %v41
  %591 = vmatprep.subr.bf16.mxu0 0
  %592 = vmatpush1.bf16.msra.mxu0 0
  %593 = vmatprep.subr.bf16.mxu0 0
  %594 = vmatpush1.bf16.msra.mxu0 0
  %595 = vmatprep.subr.bf16.mxu0 0
  %596 = vmatpush1.bf16.msra.mxu0 0
  %597 = vmatprep.subr.bf16.mxu0 0
  %598 = vmatpush1.bf16.msra.mxu0 0
  %599 = vmatprep.subr.bf16.mxu0 0
  %600 = vmatpush1.bf16.msra.mxu0 0
  %601 = vmatprep.subr.bf16.mxu0 0
  %602 = vmatpush1.bf16.msra.mxu0 0
  %603 = vmatprep.subr.bf16.mxu0 0
  %604 = vmatpush1.bf16.msra.mxu0 0
  %605 = vmatprep.subr.bf16.mxu0 0
  %606 = vmatpush1.bf16.msra.mxu0 0
  %607 = vmatprep.subr.bf16.mxu0 0
  %608 = vmatpush1.bf16.msra.mxu0 0
  %609 = vmatprep.subr.bf16.mxu0 0
  %610 = vmatpush1.bf16.msra.mxu0 0
  %611 = vmatprep.subr.bf16.mxu0 0
  %612 = vmatpush1.bf16.msra.mxu0 0
  %613 = vmatprep.subr.bf16.mxu0 0
  %614 = vmatpush1.bf16.msra.mxu0 0
  %615 = vmatprep.subr.bf16.mxu0 0
  %616 = vmatpush1.bf16.msra.mxu0 0
  %617 = vmatprep.subr.bf16.mxu0 0
  %618 = vmatpush1.bf16.msra.mxu0 0
  %619 = vmatprep.mubr.bf16.mxu0 0
  %620 = vmatmul.mubr.bf16.gmra.mrb[0].mxu0 %v585
  %v621 = vpop.f32.mrb[0].mxu0
  %v622 = vadd.f32 0.0, %v621
  %v623 = vpop.f32.mrb[0].mxu0
  %v624 = vpop.f32.mrb[0].mxu0
  %v625 = vpop.f32.mrb[0].mxu0
  %626 = vdwg.mxu0
  %v627 = vadd.f32 %v581, %v622
  %v628 = vld [vmem:[#allocation3] sm:$0x3]
  %v629 = vxor.u32 %v627, 2147483648
  %v630 = vmul.f32 %v629, 1.442695
  %v631 = vpow.pop %v630
  %v632 = vadd.f32 %v631, 1.0
  %v633 = vrcp.pop %v632
  %v634 = vmul.f32 1.0, %v633
  %v635 = vtanh.pop %v627
  %v638 = vunpack.c.l.s4 1983009808
  %v639 = vunpack.c.0.s8 %v638
  %v640 = vlaneseq
  %v641 = vshrl.u32 %v640, 7
  %v642 = vsub.s32 %v639, %v641
  %v643 = vrot.slane %v628, %v642
  %644 = vrot.lane.b32.xlu0 %v643, 32
  %v645 = vpop.permute.xlu0 %644
  %v647 = vmul.f32 %v634, %v645
  %649 = vrot.lane.b32.xlu0 %v635, 64
  %v650 = vpop.permute.xlu0 %649
  %v652 = vmul.f32 %v634, %v650
  %654 = vrot.lane.b32.xlu0 %v652, 32
  %v655 = vpop.permute.xlu0 %654
  %v657 = vadd.f32 %v647, %v655
  %v658 = vtanh.pop %v657
  %660 = vrot.lane.b32.xlu0 %v658, 64
  %v661 = vpop.permute.xlu0 %660
  %v663 = vmul.f32 %v634, %v661
  %v666 = vunpack.c.l.s4 1983009808
  %v667 = vunpack.c.0.s8 %v666
  %v668 = vlaneseq
  %v669 = vshrl.u32 %v668, 7
  %v670 = vsub.s32 %v667, %v669
  %v671 = vrot.slane %v663, %v670
  %672 = vrot.lane.b32.xlu0 %v671, 32
  %v673 = vpop.permute.xlu0 %672
  %675 = vst.msk [vmem:[#allocation2] sm:$0x3] %vm15, %v673
  %v678 = vunpack.c.l.s4 1983009808
  %v679 = vunpack.c.0.s8 %v678
  %v680 = vlaneseq
  %v681 = vshrl.u32 %v680, 7
  %v682 = vsub.s32 %v679, %v681
  %v683 = vrot.slane %v657, %v682
  %684 = vrot.lane.b32.xlu0 %v683, 96
  %v685 = vpop.permute.xlu0 %684
  %687 = vst.msk [vmem:[#allocation3] sm:$0x3] %vm15, %v685
  %v688 = vpack.c.bf16 %v663, %v663
  %v691 = vunpack.c.l.s4 1966171168
  %v692 = vunpack.c.0.s8 %v691
  %v693 = vlaneseq
  %v694 = vshrl.u32 %v693, 7
  %v695 = vsub.s32 %v692, %v694
  %v696 = vrot.slane %v688, %v695
  %v698 = vunpack.c.l.s4 1966171168
  %v699 = vunpack.c.0.s8 %v698
  %v700 = vlaneseq
  %v701 = vshrl.u32 %v700, 7
  %v702 = vsub.s32 %v699, %v701
  %v703 = vrot.slane %v696, %v702
  %704 = vrot.lane.b32.xlu0 %v703, 32
  %v705 = vpop.permute.xlu0 %704
  %s707 = scalar_lea.vmem %s3, 2
  %708 = vst.msk [vmem:[%s707] sm:$0x1] %vm168, %v705
  %s709 = scalar_lea.vmem %s0, 10
  %v710 = vld [vmem:[%s709] sm:$0x3]
  %v711 = vunpack.c.l.bf16 %v710
  %v712 = vld [vmem:[#allocation4] sm:$0x3]
  %v713 = vpack.c.bf16 %v712, %v712
  %v715 = vsel %vm44, %v713, 0
  %717 = vmatprep.subr.bf16.mxu0 0
  %718 = vmatpush1.bf16.msra.mxu0 %v183
  %719 = vmatprep.subr.bf16.mxu0 0
  %720 = vmatpush1.bf16.msra.mxu0 %v184
  %721 = vmatprep.subr.bf16.mxu0 0
  %722 = vmatpush1.bf16.msra.mxu0 0
  %723 = vmatprep.subr.bf16.mxu0 0
  %724 = vmatpush1.bf16.msra.mxu0 0
  %725 = vmatprep.subr.bf16.mxu0 0
  %726 = vmatpush1.bf16.msra.mxu0 0
  %727 = vmatprep.subr.bf16.mxu0 0
  %728 = vmatpush1.bf16.msra.mxu0 0
  %729 = vmatprep.subr.bf16.mxu0 0
  %730 = vmatpush1.bf16.msra.mxu0 0
  %731 = vmatprep.subr.bf16.mxu0 0
  %732 = vmatpush1.bf16.msra.mxu0 0
  %733 = vmatprep.subr.bf16.mxu0 0
  %734 = vmatpush1.bf16.msra.mxu0 0
  %735 = vmatprep.subr.bf16.mxu0 0
  %736 = vmatpush1.bf16.msra.mxu0 0
  %737 = vmatprep.subr.bf16.mxu0 0
  %738 = vmatpush1.bf16.msra.mxu0 0
  %739 = vmatprep.subr.bf16.mxu0 0
  %740 = vmatpush1.bf16.msra.mxu0 0
  %741 = vmatprep.subr.bf16.mxu0 0
  %742 = vmatpush1.bf16.msra.mxu0 0
  %743 = vmatprep.subr.bf16.mxu0 0
  %744 = vmatpush1.bf16.msra.mxu0 0
  %745 = vmatprep.subr.bf16.mxu0 0
  %746 = vmatpush1.bf16.msra.mxu0 0
  %747 = vmatprep.subr.bf16.mxu0 0
  %748 = vmatpush1.bf16.msra.mxu0 0
  %749 = vmatprep.mubr.bf16.mxu0 0
  %750 = vmatmul.mubr.bf16.gmra.mrb[0].mxu0 %v715
  %v751 = vpop.f32.mrb[0].mxu0
  %v752 = vadd.f32 0.0, %v751
  %v753 = vpop.f32.mrb[0].mxu0
  %v754 = vpop.f32.mrb[0].mxu0
  %v755 = vpop.f32.mrb[0].mxu0
  %756 = vdwg.mxu0
  %v758 = vrot.slane %v711, 2
  %v760 = vadd.f32 %v758, %v752
  %v761 = vld [vmem:[#allocation5] sm:$0x3]
  %v762 = vxor.u32 %v760, 2147483648
  %v763 = vmul.f32 %v762, 1.442695
  %v764 = vpow.pop %v763
  %v765 = vadd.f32 %v764, 1.0
  %v766 = vrcp.pop %v765
  %v767 = vmul.f32 1.0, %v766
  %v768 = vtanh.pop %v760
  %v771 = vunpack.c.l.s4 1983009808
  %v772 = vunpack.c.0.s8 %v771
  %v773 = vlaneseq
  %v774 = vshrl.u32 %v773, 7
  %v775 = vsub.s32 %v772, %v774
  %v776 = vrot.slane %v761, %v775
  %777 = vrot.lane.b32.xlu0 %v776, 32
  %v778 = vpop.permute.xlu0 %777
  %v780 = vmul.f32 %v767, %v778
  %782 = vrot.lane.b32.xlu0 %v768, 64
  %v783 = vpop.permute.xlu0 %782
  %v785 = vmul.f32 %v767, %v783
  %787 = vrot.lane.b32.xlu0 %v785, 32
  %v788 = vpop.permute.xlu0 %787
  %v790 = vadd.f32 %v780, %v788
  %v791 = vtanh.pop %v790
  %793 = vrot.lane.b32.xlu0 %v791, 64
  %v794 = vpop.permute.xlu0 %793
  %v796 = vmul.f32 %v767, %v794
  %v799 = vunpack.c.l.s4 1983009808
  %v800 = vunpack.c.0.s8 %v799
  %v801 = vlaneseq
  %v802 = vshrl.u32 %v801, 7
  %v803 = vsub.s32 %v800, %v802
  %v804 = vrot.slane %v796, %v803
  %805 = vrot.lane.b32.xlu0 %v804, 32
  %v806 = vpop.permute.xlu0 %805
  %808 = vst.msk [vmem:[#allocation4] sm:$0x3] %vm15, %v806
  %v811 = vunpack.c.l.s4 1983009808
  %v812 = vunpack.c.0.s8 %v811
  %v813 = vlaneseq
  %v814 = vshrl.u32 %v813, 7
  %v815 = vsub.s32 %v812, %v814
  %v816 = vrot.slane %v790, %v815
  %817 = vrot.lane.b32.xlu0 %v816, 96
  %v818 = vpop.permute.xlu0 %817
  %820 = vst.msk [vmem:[#allocation5] sm:$0x3] %vm15, %v818
  %v821 = vpack.c.bf16 %v796, %v796
  %v824 = vunpack.c.l.s4 1966171168
  %v825 = vunpack.c.0.s8 %v824
  %v826 = vlaneseq
  %v827 = vshrl.u32 %v826, 7
  %v828 = vsub.s32 %v825, %v827
  %v829 = vrot.slane %v821, %v828
  %v831 = vunpack.c.l.s4 1966171168
  %v832 = vunpack.c.0.s8 %v831
  %v833 = vlaneseq
  %v834 = vshrl.u32 %v833, 7
  %v835 = vsub.s32 %v832, %v834
  %v836 = vrot.slane %v829, %v835
  %837 = vrot.lane.b32.xlu0 %v836, 64
  %v838 = vpop.permute.xlu0 %837
  %s840 = scalar_lea.vmem %s3, 5
  %841 = vst.msk [vmem:[%s840] sm:$0x1] %vm314, %v838
  %s842 = scalar_lea.vmem %s0, 6
  %v843 = vld [vmem:[%s842] sm:$0x3]
  %v844 = vunpack.c.l.bf16 %v843
  %v845 = vld [vmem:[#allocation2] sm:$0x3]
  %v846 = vpack.c.bf16 %v845, %v845
  %v848 = vsel %vm44, %v846, 0
  %850 = vmatprep.subr.bf16.mxu0 0
  %851 = vmatpush1.bf16.msra.mxu0 %v40
  %852 = vmatprep.subr.bf16.mxu0 0
  %853 = vmatpush1.bf16.msra.mxu0 %v41
  %854 = vmatprep.subr.bf16.mxu0 0
  %855 = vmatpush1.bf16.msra.mxu0 0
  %856 = vmatprep.subr.bf16.mxu0 0
  %857 = vmatpush1.bf16.msra.mxu0 0
  %858 = vmatprep.subr.bf16.mxu0 0
  %859 = vmatpush1.bf16.msra.mxu0 0
  %860 = vmatprep.subr.bf16.mxu0 0
  %861 = vmatpush1.bf16.msra.mxu0 0
  %862 = vmatprep.subr.bf16.mxu0 0
  %863 = vmatpush1.bf16.msra.mxu0 0
  %864 = vmatprep.subr.bf16.mxu0 0
  %865 = vmatpush1.bf16.msra.mxu0 0
  %866 = vmatprep.subr.bf16.mxu0 0
  %867 = vmatpush1.bf16.msra.mxu0 0
  %868 = vmatprep.subr.bf16.mxu0 0
  %869 = vmatpush1.bf16.msra.mxu0 0
  %870 = vmatprep.subr.bf16.mxu0 0
  %871 = vmatpush1.bf16.msra.mxu0 0
  %872 = vmatprep.subr.bf16.mxu0 0
  %873 = vmatpush1.bf16.msra.mxu0 0
  %874 = vmatprep.subr.bf16.mxu0 0
  %875 = vmatpush1.bf16.msra.mxu0 0
  %876 = vmatprep.subr.bf16.mxu0 0
  %877 = vmatpush1.bf16.msra.mxu0 0
  %878 = vmatprep.subr.bf16.mxu0 0
  %879 = vmatpush1.bf16.msra.mxu0 0
  %880 = vmatprep.subr.bf16.mxu0 0
  %881 = vmatpush1.bf16.msra.mxu0 0
  %882 = vmatprep.mubr.bf16.mxu0 0
  %883 = vmatmul.mubr.bf16.gmra.mrb[0].mxu0 %v848
  %v884 = vpop.f32.mrb[0].mxu0
  %v885 = vadd.f32 0.0, %v884
  %v886 = vpop.f32.mrb[0].mxu0
  %v887 = vpop.f32.mrb[0].mxu0
  %v888 = vpop.f32.mrb[0].mxu0
  %889 = vdwg.mxu0
  %v890 = vadd.f32 %v844, %v885
  %v891 = vld [vmem:[#allocation3] sm:$0x3]
  %v892 = vxor.u32 %v890, 2147483648
  %v893 = vmul.f32 %v892, 1.442695
  %v894 = vpow.pop %v893
  %v895 = vadd.f32 %v894, 1.0
  %v896 = vrcp.pop %v895
  %v897 = vmul.f32 1.0, %v896
  %v898 = vtanh.pop %v890
  %v901 = vunpack.c.l.s4 1983009808
  %v902 = vunpack.c.0.s8 %v901
  %v903 = vlaneseq
  %v904 = vshrl.u32 %v903, 7
  %v905 = vsub.s32 %v902, %v904
  %v906 = vrot.slane %v891, %v905
  %907 = vrot.lane.b32.xlu0 %v906, 32
  %v908 = vpop.permute.xlu0 %907
  %v910 = vmul.f32 %v897, %v908
  %912 = vrot.lane.b32.xlu0 %v898, 64
  %v913 = vpop.permute.xlu0 %912
  %v915 = vmul.f32 %v897, %v913
  %917 = vrot.lane.b32.xlu0 %v915, 32
  %v918 = vpop.permute.xlu0 %917
  %v920 = vadd.f32 %v910, %v918
  %v921 = vtanh.pop %v920
  %923 = vrot.lane.b32.xlu0 %v921, 64
  %v924 = vpop.permute.xlu0 %923
  %v926 = vmul.f32 %v897, %v924
  %v929 = vunpack.c.l.s4 1983009808
  %v930 = vunpack.c.0.s8 %v929
  %v931 = vlaneseq
  %v932 = vshrl.u32 %v931, 7
  %v933 = vsub.s32 %v930, %v932
  %v934 = vrot.slane %v926, %v933
  %935 = vrot.lane.b32.xlu0 %v934, 32
  %v936 = vpop.permute.xlu0 %935
  %938 = vst.msk [vmem:[#allocation2] sm:$0x3] %vm15, %v936
  %v941 = vunpack.c.l.s4 1983009808
  %v942 = vunpack.c.0.s8 %v941
  %v943 = vlaneseq
  %v944 = vshrl.u32 %v943, 7
  %v945 = vsub.s32 %v942, %v944
  %v946 = vrot.slane %v920, %v945
  %947 = vrot.lane.b32.xlu0 %v946, 96
  %v948 = vpop.permute.xlu0 %947
  %950 = vst.msk [vmem:[#allocation3] sm:$0x3] %vm15, %v948
  %v951 = vpack.c.bf16 %v926, %v926
  %v954 = vunpack.c.l.s4 1966171168
  %v955 = vunpack.c.0.s8 %v954
  %v956 = vlaneseq
  %v957 = vshrl.u32 %v956, 7
  %v958 = vsub.s32 %v955, %v957
  %v959 = vrot.slane %v951, %v958
  %v961 = vunpack.c.l.s4 1966171168
  %v962 = vunpack.c.0.s8 %v961
  %v963 = vlaneseq
  %v964 = vshrl.u32 %v963, 7
  %v965 = vsub.s32 %v962, %v964
  %v966 = vrot.slane %v959, %v965
  %967 = vrot.lane.b32.xlu0 %v966, 32
  %v968 = vpop.permute.xlu0 %967
  %s970 = scalar_lea.vmem %s3, 3
  %971 = vst.msk [vmem:[%s970] sm:$0x1] %vm168, %v968
  %s972 = scalar_lea.vmem %s0, 8
  %v973 = vld [vmem:[%s972] sm:$0x3]
  %v974 = vunpack.c.l.bf16 %v973
  %v975 = vld [vmem:[#allocation4] sm:$0x3]
  %v976 = vpack.c.bf16 %v975, %v975
  %v978 = vsel %vm44, %v976, 0
  %980 = vmatprep.subr.bf16.mxu0 0
  %981 = vmatpush1.bf16.msra.mxu0 %v183
  %982 = vmatprep.subr.bf16.mxu0 0
  %983 = vmatpush1.bf16.msra.mxu0 %v184
  %984 = vmatprep.subr.bf16.mxu0 0
  %985 = vmatpush1.bf16.msra.mxu0 0
  %986 = vmatprep.subr.bf16.mxu0 0
  %987 = vmatpush1.bf16.msra.mxu0 0
  %988 = vmatprep.subr.bf16.mxu0 0
  %989 = vmatpush1.bf16.msra.mxu0 0
  %990 = vmatprep.subr.bf16.mxu0 0
  %991 = vmatpush1.bf16.msra.mxu0 0
  %992 = vmatprep.subr.bf16.mxu0 0
  %993 = vmatpush1.bf16.msra.mxu0 0
  %994 = vmatprep.subr.bf16.mxu0 0
  %995 = vmatpush1.bf16.msra.mxu0 0
  %996 = vmatprep.subr.bf16.mxu0 0
  %997 = vmatpush1.bf16.msra.mxu0 0
  %998 = vmatprep.subr.bf16.mxu0 0
  %999 = vmatpush1.bf16.msra.mxu0 0
  %1000 = vmatprep.subr.bf16.mxu0 0
  %1001 = vmatpush1.bf16.msra.mxu0 0
  %1002 = vmatprep.subr.bf16.mxu0 0
  %1003 = vmatpush1.bf16.msra.mxu0 0
  %1004 = vmatprep.subr.bf16.mxu0 0
  %1005 = vmatpush1.bf16.msra.mxu0 0
  %1006 = vmatprep.subr.bf16.mxu0 0
  %1007 = vmatpush1.bf16.msra.mxu0 0
  %1008 = vmatprep.subr.bf16.mxu0 0
  %1009 = vmatpush1.bf16.msra.mxu0 0
  %1010 = vmatprep.subr.bf16.mxu0 0
  %1011 = vmatpush1.bf16.msra.mxu0 0
  %1012 = vmatprep.mubr.bf16.mxu0 0
  %1013 = vmatmul.mubr.bf16.gmra.mrb[0].mxu0 %v978
  %v1014 = vpop.f32.mrb[0].mxu0
  %v1015 = vadd.f32 0.0, %v1014
  %v1016 = vpop.f32.mrb[0].mxu0
  %v1017 = vpop.f32.mrb[0].mxu0
  %v1018 = vpop.f32.mrb[0].mxu0
  %1019 = vdwg.mxu0
  %v1021 = vrot.slane %v974, 2
  %v1023 = vadd.f32 %v1021, %v1015
  %v1024 = vld [vmem:[#allocation5] sm:$0x3]
  %v1025 = vxor.u32 %v1023, 2147483648
  %v1026 = vmul.f32 %v1025, 1.442695
  %v1027 = vpow.pop %v1026
  %v1028 = vadd.f32 %v1027, 1.0
  %v1029 = vrcp.pop %v1028
  %v1030 = vmul.f32 1.0, %v1029
  %v1031 = vtanh.pop %v1023
  %v1034 = vunpack.c.l.s4 1983009808
  %v1035 = vunpack.c.0.s8 %v1034
  %v1036 = vlaneseq
  %v1037 = vshrl.u32 %v1036, 7
  %v1038 = vsub.s32 %v1035, %v1037
  %v1039 = vrot.slane %v1024, %v1038
  %1040 = vrot.lane.b32.xlu0 %v1039, 32
  %v1041 = vpop.permute.xlu0 %1040
  %v1043 = vmul.f32 %v1030, %v1041
  %1045 = vrot.lane.b32.xlu0 %v1031, 64
  %v1046 = vpop.permute.xlu0 %1045
  %v1048 = vmul.f32 %v1030, %v1046
  %1050 = vrot.lane.b32.xlu0 %v1048, 32
  %v1051 = vpop.permute.xlu0 %1050
  %v1053 = vadd.f32 %v1043, %v1051
  %v1054 = vtanh.pop %v1053
  %1056 = vrot.lane.b32.xlu0 %v1054, 64
  %v1057 = vpop.permute.xlu0 %1056
  %v1059 = vmul.f32 %v1030, %v1057
  %v1062 = vunpack.c.l.s4 1983009808
  %v1063 = vunpack.c.0.s8 %v1062
  %v1064 = vlaneseq
  %v1065 = vshrl.u32 %v1064, 7
  %v1066 = vsub.s32 %v1063, %v1065
  %v1067 = vrot.slane %v1059, %v1066
  %1068 = vrot.lane.b32.xlu0 %v1067, 32
  %v1069 = vpop.permute.xlu0 %1068
  %1071 = vst.msk [vmem:[#allocation4] sm:$0x3] %vm15, %v1069
  %v1074 = vunpack.c.l.s4 1983009808
  %v1075 = vunpack.c.0.s8 %v1074
  %v1076 = vlaneseq
  %v1077 = vshrl.u32 %v1076, 7
  %v1078 = vsub.s32 %v1075, %v1077
  %v1079 = vrot.slane %v1053, %v1078
  %1080 = vrot.lane.b32.xlu0 %v1079, 96
  %v1081 = vpop.permute.xlu0 %1080
  %1083 = vst.msk [vmem:[#allocation5] sm:$0x3] %vm15, %v1081
  %v1084 = vpack.c.bf16 %v1059, %v1059
  %v1087 = vunpack.c.l.s4 1966171168
  %v1088 = vunpack.c.0.s8 %v1087
  %v1089 = vlaneseq
  %v1090 = vshrl.u32 %v1089, 7
  %v1091 = vsub.s32 %v1088, %v1090
  %v1092 = vrot.slane %v1084, %v1091
  %v1094 = vunpack.c.l.s4 1966171168
  %v1095 = vunpack.c.0.s8 %v1094
  %v1096 = vlaneseq
  %v1097 = vshrl.u32 %v1096, 7
  %v1098 = vsub.s32 %v1095, %v1097
  %v1099 = vrot.slane %v1092, %v1098
  %1100 = vrot.lane.b32.xlu0 %v1099, 64
  %v1101 = vpop.permute.xlu0 %1100
  %s1103 = scalar_lea.vmem %s3, 4
  %1104 = vst.msk [vmem:[%s1103] sm:$0x1] %vm314, %v1101
  %v1105 = vld [vmem:[%s972] sm:$0x3]
  %v1106 = vunpack.c.l.bf16 %v1105
  %v1107 = vld [vmem:[#allocation2] sm:$0x3]
  %v1108 = vpack.c.bf16 %v1107, %v1107
  %v1110 = vsel %vm44, %v1108, 0
  %1112 = vmatprep.subr.bf16.mxu0 0
  %1113 = vmatpush1.bf16.msra.mxu0 %v40
  %1114 = vmatprep.subr.bf16.mxu0 0
  %1115 = vmatpush1.bf16.msra.mxu0 %v41
  %1116 = vmatprep.subr.bf16.mxu0 0
  %1117 = vmatpush1.bf16.msra.mxu0 0
  %1118 = vmatprep.subr.bf16.mxu0 0
  %1119 = vmatpush1.bf16.msra.mxu0 0
  %1120 = vmatprep.subr.bf16.mxu0 0
  %1121 = vmatpush1.bf16.msra.mxu0 0
  %1122 = vmatprep.subr.bf16.mxu0 0
  %1123 = vmatpush1.bf16.msra.mxu0 0
  %1124 = vmatprep.subr.bf16.mxu0 0
  %1125 = vmatpush1.bf16.msra.mxu0 0
  %1126 = vmatprep.subr.bf16.mxu0 0
  %1127 = vmatpush1.bf16.msra.mxu0 0
  %1128 = vmatprep.subr.bf16.mxu0 0
  %1129 = vmatpush1.bf16.msra.mxu0 0
  %1130 = vmatprep.subr.bf16.mxu0 0
  %1131 = vmatpush1.bf16.msra.mxu0 0
  %1132 = vmatprep.subr.bf16.mxu0 0
  %1133 = vmatpush1.bf16.msra.mxu0 0
  %1134 = vmatprep.subr.bf16.mxu0 0
  %1135 = vmatpush1.bf16.msra.mxu0 0
  %1136 = vmatprep.subr.bf16.mxu0 0
  %1137 = vmatpush1.bf16.msra.mxu0 0
  %1138 = vmatprep.subr.bf16.mxu0 0
  %1139 = vmatpush1.bf16.msra.mxu0 0
  %1140 = vmatprep.subr.bf16.mxu0 0
  %1141 = vmatpush1.bf16.msra.mxu0 0
  %1142 = vmatprep.subr.bf16.mxu0 0
  %1143 = vmatpush1.bf16.msra.mxu0 0
  %1144 = vmatprep.mubr.bf16.mxu0 0
  %1145 = vmatmul.mubr.bf16.gmra.mrb[0].mxu0 %v1110
  %v1146 = vpop.f32.mrb[0].mxu0
  %v1147 = vadd.f32 0.0, %v1146
  %v1148 = vpop.f32.mrb[0].mxu0
  %v1149 = vpop.f32.mrb[0].mxu0
  %v1150 = vpop.f32.mrb[0].mxu0
  %1151 = vdwg.mxu0
  %v1152 = vadd.f32 %v1106, %v1147
  %v1153 = vld [vmem:[#allocation3] sm:$0x3]
  %v1154 = vxor.u32 %v1152, 2147483648
  %v1155 = vmul.f32 %v1154, 1.442695
  %v1156 = vpow.pop %v1155
  %v1157 = vadd.f32 %v1156, 1.0
  %v1158 = vrcp.pop %v1157
  %v1159 = vmul.f32 1.0, %v1158
  %v1160 = vtanh.pop %v1152
  %v1163 = vunpack.c.l.s4 1983009808
  %v1164 = vunpack.c.0.s8 %v1163
  %v1165 = vlaneseq
  %v1166 = vshrl.u32 %v1165, 7
  %v1167 = vsub.s32 %v1164, %v1166
  %v1168 = vrot.slane %v1153, %v1167
  %1169 = vrot.lane.b32.xlu0 %v1168, 32
  %v1170 = vpop.permute.xlu0 %1169
  %v1172 = vmul.f32 %v1159, %v1170
  %1174 = vrot.lane.b32.xlu0 %v1160, 64
  %v1175 = vpop.permute.xlu0 %1174
  %v1177 = vmul.f32 %v1159, %v1175
  %1179 = vrot.lane.b32.xlu0 %v1177, 32
  %v1180 = vpop.permute.xlu0 %1179
  %v1182 = vadd.f32 %v1172, %v1180
  %v1183 = vtanh.pop %v1182
  %1185 = vrot.lane.b32.xlu0 %v1183, 64
  %v1186 = vpop.permute.xlu0 %1185
  %v1188 = vmul.f32 %v1159, %v1186
  %v1191 = vunpack.c.l.s4 1983009808
  %v1192 = vunpack.c.0.s8 %v1191
  %v1193 = vlaneseq
  %v1194 = vshrl.u32 %v1193, 7
  %v1195 = vsub.s32 %v1192, %v1194
  %v1196 = vrot.slane %v1188, %v1195
  %1197 = vrot.lane.b32.xlu0 %v1196, 32
  %v1198 = vpop.permute.xlu0 %1197
  %1200 = vst.msk [vmem:[#allocation2] sm:$0x3] %vm15, %v1198
  %v1203 = vunpack.c.l.s4 1983009808
  %v1204 = vunpack.c.0.s8 %v1203
  %v1205 = vlaneseq
  %v1206 = vshrl.u32 %v1205, 7
  %v1207 = vsub.s32 %v1204, %v1206
  %v1208 = vrot.slane %v1182, %v1207
  %1209 = vrot.lane.b32.xlu0 %v1208, 96
  %v1210 = vpop.permute.xlu0 %1209
  %1212 = vst.msk [vmem:[#allocation3] sm:$0x3] %vm15, %v1210
  %v1213 = vpack.c.bf16 %v1188, %v1188
  %v1216 = vunpack.c.l.s4 1966171168
  %v1217 = vunpack.c.0.s8 %v1216
  %v1218 = vlaneseq
  %v1219 = vshrl.u32 %v1218, 7
  %v1220 = vsub.s32 %v1217, %v1219
  %v1221 = vrot.slane %v1213, %v1220
  %v1223 = vunpack.c.l.s4 1966171168
  %v1224 = vunpack.c.0.s8 %v1223
  %v1225 = vlaneseq
  %v1226 = vshrl.u32 %v1225, 7
  %v1227 = vsub.s32 %v1224, %v1226
  %v1228 = vrot.slane %v1221, %v1227
  %1229 = vrot.lane.b32.xlu0 %v1228, 32
  %v1230 = vpop.permute.xlu0 %1229
  %1232 = vst.msk [vmem:[%s1103] sm:$0x1] %vm168, %v1230
  %v1233 = vld [vmem:[%s842] sm:$0x3]
  %v1234 = vunpack.c.l.bf16 %v1233
  %v1235 = vld [vmem:[#allocation4] sm:$0x3]
  %v1236 = vpack.c.bf16 %v1235, %v1235
  %v1238 = vsel %vm44, %v1236, 0
  %1240 = vmatprep.subr.bf16.mxu0 0
  %1241 = vmatpush1.bf16.msra.mxu0 %v183
  %1242 = vmatprep.subr.bf16.mxu0 0
  %1243 = vmatpush1.bf16.msra.mxu0 %v184
  %1244 = vmatprep.subr.bf16.mxu0 0
  %1245 = vmatpush1.bf16.msra.mxu0 0
  %1246 = vmatprep.subr.bf16.mxu0 0
  %1247 = vmatpush1.bf16.msra.mxu0 0
  %1248 = vmatprep.subr.bf16.mxu0 0
  %1249 = vmatpush1.bf16.msra.mxu0 0
  %1250 = vmatprep.subr.bf16.mxu0 0
  %1251 = vmatpush1.bf16.msra.mxu0 0
  %1252 = vmatprep.subr.bf16.mxu0 0
  %1253 = vmatpush1.bf16.msra.mxu0 0
  %1254 = vmatprep.subr.bf16.mxu0 0
  %1255 = vmatpush1.bf16.msra.mxu0 0
  %1256 = vmatprep.subr.bf16.mxu0 0
  %1257 = vmatpush1.bf16.msra.mxu0 0
  %1258 = vmatprep.subr.bf16.mxu0 0
  %1259 = vmatpush1.bf16.msra.mxu0 0
  %1260 = vmatprep.subr.bf16.mxu0 0
  %1261 = vmatpush1.bf16.msra.mxu0 0
  %1262 = vmatprep.subr.bf16.mxu0 0
  %1263 = vmatpush1.bf16.msra.mxu0 0
  %1264 = vmatprep.subr.bf16.mxu0 0
  %1265 = vmatpush1.bf16.msra.mxu0 0
  %1266 = vmatprep.subr.bf16.mxu0 0
  %1267 = vmatpush1.bf16.msra.mxu0 0
  %1268 = vmatprep.subr.bf16.mxu0 0
  %1269 = vmatpush1.bf16.msra.mxu0 0
  %1270 = vmatprep.subr.bf16.mxu0 0
  %1271 = vmatpush1.bf16.msra.mxu0 0
  %1272 = vmatprep.mubr.bf16.mxu0 0
  %1273 = vmatmul.mubr.bf16.gmra.mrb[0].mxu0 %v1238
  %v1274 = vpop.f32.mrb[0].mxu0
  %v1275 = vadd.f32 0.0, %v1274
  %v1276 = vpop.f32.mrb[0].mxu0
  %v1277 = vpop.f32.mrb[0].mxu0
  %v1278 = vpop.f32.mrb[0].mxu0
  %1279 = vdwg.mxu0
  %v1281 = vrot.slane %v1234, 2
  %v1283 = vadd.f32 %v1281, %v1275
  %v1284 = vld [vmem:[#allocation5] sm:$0x3]
  %v1285 = vxor.u32 %v1283, 2147483648
  %v1286 = vmul.f32 %v1285, 1.442695
  %v1287 = vpow.pop %v1286
  %v1288 = vadd.f32 %v1287, 1.0
  %v1289 = vrcp.pop %v1288
  %v1290 = vmul.f32 1.0, %v1289
  %v1291 = vtanh.pop %v1283
  %v1294 = vunpack.c.l.s4 1983009808
  %v1295 = vunpack.c.0.s8 %v1294
  %v1296 = vlaneseq
  %v1297 = vshrl.u32 %v1296, 7
  %v1298 = vsub.s32 %v1295, %v1297
  %v1299 = vrot.slane %v1284, %v1298
  %1300 = vrot.lane.b32.xlu0 %v1299, 32
  %v1301 = vpop.permute.xlu0 %1300
  %v1303 = vmul.f32 %v1290, %v1301
  %1305 = vrot.lane.b32.xlu0 %v1291, 64
  %v1306 = vpop.permute.xlu0 %1305
  %v1308 = vmul.f32 %v1290, %v1306
  %1310 = vrot.lane.b32.xlu0 %v1308, 32
  %v1311 = vpop.permute.xlu0 %1310
  %v1313 = vadd.f32 %v1303, %v1311
  %v1314 = vtanh.pop %v1313
  %1316 = vrot.lane.b32.xlu0 %v1314, 64
  %v1317 = vpop.permute.xlu0 %1316
  %v1319 = vmul.f32 %v1290, %v1317
  %v1322 = vunpack.c.l.s4 1983009808
  %v1323 = vunpack.c.0.s8 %v1322
  %v1324 = vlaneseq
  %v1325 = vshrl.u32 %v1324, 7
  %v1326 = vsub.s32 %v1323, %v1325
  %v1327 = vrot.slane %v1319, %v1326
  %1328 = vrot.lane.b32.xlu0 %v1327, 32
  %v1329 = vpop.permute.xlu0 %1328
  %1331 = vst.msk [vmem:[#allocation4] sm:$0x3] %vm15, %v1329
  %v1334 = vunpack.c.l.s4 1983009808
  %v1335 = vunpack.c.0.s8 %v1334
  %v1336 = vlaneseq
  %v1337 = vshrl.u32 %v1336, 7
  %v1338 = vsub.s32 %v1335, %v1337
  %v1339 = vrot.slane %v1313, %v1338
  %1340 = vrot.lane.b32.xlu0 %v1339, 96
  %v1341 = vpop.permute.xlu0 %1340
  %1343 = vst.msk [vmem:[#allocation5] sm:$0x3] %vm15, %v1341
  %v1344 = vpack.c.bf16 %v1319, %v1319
  %v1347 = vunpack.c.l.s4 1966171168
  %v1348 = vunpack.c.0.s8 %v1347
  %v1349 = vlaneseq
  %v1350 = vshrl.u32 %v1349, 7
  %v1351 = vsub.s32 %v1348, %v1350
  %v1352 = vrot.slane %v1344, %v1351
  %v1354 = vunpack.c.l.s4 1966171168
  %v1355 = vunpack.c.0.s8 %v1354
  %v1356 = vlaneseq
  %v1357 = vshrl.u32 %v1356, 7
  %v1358 = vsub.s32 %v1355, %v1357
  %v1359 = vrot.slane %v1352, %v1358
  %1360 = vrot.lane.b32.xlu0 %v1359, 64
  %v1361 = vpop.permute.xlu0 %1360
  %1363 = vst.msk [vmem:[%s970] sm:$0x1] %vm314, %v1361
  %v1364 = vld [vmem:[%s709] sm:$0x3]
  %v1365 = vunpack.c.l.bf16 %v1364
  %v1366 = vld [vmem:[#allocation2] sm:$0x3]
  %v1367 = vpack.c.bf16 %v1366, %v1366
  %v1369 = vsel %vm44, %v1367, 0
  %1371 = vmatprep.subr.bf16.mxu0 0
  %1372 = vmatpush1.bf16.msra.mxu0 %v40
  %1373 = vmatprep.subr.bf16.mxu0 0
  %1374 = vmatpush1.bf16.msra.mxu0 %v41
  %1375 = vmatprep.subr.bf16.mxu0 0
  %1376 = vmatpush1.bf16.msra.mxu0 0
  %1377 = vmatprep.subr.bf16.mxu0 0
  %1378 = vmatpush1.bf16.msra.mxu0 0
  %1379 = vmatprep.subr.bf16.mxu0 0
  %1380 = vmatpush1.bf16.msra.mxu0 0
  %1381 = vmatprep.subr.bf16.mxu0 0
  %1382 = vmatpush1.bf16.msra.mxu0 0
  %1383 = vmatprep.subr.bf16.mxu0 0
  %1384 = vmatpush1.bf16.msra.mxu0 0
  %1385 = vmatprep.subr.bf16.mxu0 0
  %1386 = vmatpush1.bf16.msra.mxu0 0
  %1387 = vmatprep.subr.bf16.mxu0 0
  %1388 = vmatpush1.bf16.msra.mxu0 0
  %1389 = vmatprep.subr.bf16.mxu0 0
  %1390 = vmatpush1.bf16.msra.mxu0 0
  %1391 = vmatprep.subr.bf16.mxu0 0
  %1392 = vmatpush1.bf16.msra.mxu0 0
  %1393 = vmatprep.subr.bf16.mxu0 0
  %1394 = vmatpush1.bf16.msra.mxu0 0
  %1395 = vmatprep.subr.bf16.mxu0 0
  %1396 = vmatpush1.bf16.msra.mxu0 0
  %1397 = vmatprep.subr.bf16.mxu0 0
  %1398 = vmatpush1.bf16.msra.mxu0 0
  %1399 = vmatprep.subr.bf16.mxu0 0
  %1400 = vmatpush1.bf16.msra.mxu0 0
  %1401 = vmatprep.subr.bf16.mxu0 0
  %1402 = vmatpush1.bf16.msra.mxu0 0
  %1403 = vmatprep.mubr.bf16.mxu0 0
  %1404 = vmatmul.mubr.bf16.gmra.mrb[0].mxu0 %v1369
  %v1405 = vpop.f32.mrb[0].mxu0
  %v1406 = vadd.f32 0.0, %v1405
  %v1407 = vpop.f32.mrb[0].mxu0
  %v1408 = vpop.f32.mrb[0].mxu0
  %v1409 = vpop.f32.mrb[0].mxu0
  %1410 = vdwg.mxu0
  %v1411 = vadd.f32 %v1365, %v1406
  %v1412 = vld [vmem:[#allocation3] sm:$0x3]
  %v1413 = vxor.u32 %v1411, 2147483648
  %v1414 = vmul.f32 %v1413, 1.442695
  %v1415 = vpow.pop %v1414
  %v1416 = vadd.f32 %v1415, 1.0
  %v1417 = vrcp.pop %v1416
  %v1418 = vmul.f32 1.0, %v1417
  %v1419 = vtanh.pop %v1411
  %v1422 = vunpack.c.l.s4 1983009808
  %v1423 = vunpack.c.0.s8 %v1422
  %v1424 = vlaneseq
  %v1425 = vshrl.u32 %v1424, 7
  %v1426 = vsub.s32 %v1423, %v1425
  %v1427 = vrot.slane %v1412, %v1426
  %1428 = vrot.lane.b32.xlu0 %v1427, 32
  %v1429 = vpop.permute.xlu0 %1428
  %v1431 = vmul.f32 %v1418, %v1429
  %1433 = vrot.lane.b32.xlu0 %v1419, 64
  %v1434 = vpop.permute.xlu0 %1433
  %v1436 = vmul.f32 %v1418, %v1434
  %1438 = vrot.lane.b32.xlu0 %v1436, 32
  %v1439 = vpop.permute.xlu0 %1438
  %v1441 = vadd.f32 %v1431, %v1439
  %v1442 = vtanh.pop %v1441
  %1444 = vrot.lane.b32.xlu0 %v1442, 64
  %v1445 = vpop.permute.xlu0 %1444
  %v1447 = vmul.f32 %v1418, %v1445
  %v1450 = vunpack.c.l.s4 1983009808
  %v1451 = vunpack.c.0.s8 %v1450
  %v1452 = vlaneseq
  %v1453 = vshrl.u32 %v1452, 7
  %v1454 = vsub.s32 %v1451, %v1453
  %v1455 = vrot.slane %v1447, %v1454
  %1456 = vrot.lane.b32.xlu0 %v1455, 32
  %v1457 = vpop.permute.xlu0 %1456
  %1459 = vst.msk [vmem:[#allocation2] sm:$0x3] %vm15, %v1457
  %v1462 = vunpack.c.l.s4 1983009808
  %v1463 = vunpack.c.0.s8 %v1462
  %v1464 = vlaneseq
  %v1465 = vshrl.u32 %v1464, 7
  %v1466 = vsub.s32 %v1463, %v1465
  %v1467 = vrot.slane %v1441, %v1466
  %1468 = vrot.lane.b32.xlu0 %v1467, 96
  %v1469 = vpop.permute.xlu0 %1468
  %1471 = vst.msk [vmem:[#allocation3] sm:$0x3] %vm15, %v1469
  %v1472 = vpack.c.bf16 %v1447, %v1447
  %v1475 = vunpack.c.l.s4 1966171168
  %v1476 = vunpack.c.0.s8 %v1475
  %v1477 = vlaneseq
  %v1478 = vshrl.u32 %v1477, 7
  %v1479 = vsub.s32 %v1476, %v1478
  %v1480 = vrot.slane %v1472, %v1479
  %v1482 = vunpack.c.l.s4 1966171168
  %v1483 = vunpack.c.0.s8 %v1482
  %v1484 = vlaneseq
  %v1485 = vshrl.u32 %v1484, 7
  %v1486 = vsub.s32 %v1483, %v1485
  %v1487 = vrot.slane %v1480, %v1486
  %1488 = vrot.lane.b32.xlu0 %v1487, 32
  %v1489 = vpop.permute.xlu0 %1488
  %1491 = vst.msk [vmem:[%s840] sm:$0x1] %vm168, %v1489
  %v1492 = vld [vmem:[%s579] sm:$0x3]
  %v1493 = vunpack.c.l.bf16 %v1492
  %v1494 = vld [vmem:[#allocation4] sm:$0x3]
  %v1495 = vpack.c.bf16 %v1494, %v1494
  %v1497 = vsel %vm44, %v1495, 0
  %1499 = vmatprep.subr.bf16.mxu0 0
  %1500 = vmatpush1.bf16.msra.mxu0 %v183
  %1501 = vmatprep.subr.bf16.mxu0 0
  %1502 = vmatpush1.bf16.msra.mxu0 %v184
  %1503 = vmatprep.subr.bf16.mxu0 0
  %1504 = vmatpush1.bf16.msra.mxu0 0
  %1505 = vmatprep.subr.bf16.mxu0 0
  %1506 = vmatpush1.bf16.msra.mxu0 0
  %1507 = vmatprep.subr.bf16.mxu0 0
  %1508 = vmatpush1.bf16.msra.mxu0 0
  %1509 = vmatprep.subr.bf16.mxu0 0
  %1510 = vmatpush1.bf16.msra.mxu0 0
  %1511 = vmatprep.subr.bf16.mxu0 0
  %1512 = vmatpush1.bf16.msra.mxu0 0
  %1513 = vmatprep.subr.bf16.mxu0 0
  %1514 = vmatpush1.bf16.msra.mxu0 0
  %1515 = vmatprep.subr.bf16.mxu0 0
  %1516 = vmatpush1.bf16.msra.mxu0 0
  %1517 = vmatprep.subr.bf16.mxu0 0
  %1518 = vmatpush1.bf16.msra.mxu0 0
  %1519 = vmatprep.subr.bf16.mxu0 0
  %1520 = vmatpush1.bf16.msra.mxu0 0
  %1521 = vmatprep.subr.bf16.mxu0 0
  %1522 = vmatpush1.bf16.msra.mxu0 0
  %1523 = vmatprep.subr.bf16.mxu0 0
  %1524 = vmatpush1.bf16.msra.mxu0 0
  %1525 = vmatprep.subr.bf16.mxu0 0
  %1526 = vmatpush1.bf16.msra.mxu0 0
  %1527 = vmatprep.subr.bf16.mxu0 0
  %1528 = vmatpush1.bf16.msra.mxu0 0
  %1529 = vmatprep.subr.bf16.mxu0 0
  %1530 = vmatpush1.bf16.msra.mxu0 0
  %1531 = vmatprep.mubr.bf16.mxu0 0
  %1532 = vmatmul.mubr.bf16.gmra.mrb[0].mxu0 %v1497
  %v1533 = vpop.f32.mrb[0].mxu0
  %v1534 = vadd.f32 0.0, %v1533
  %v1535 = vpop.f32.mrb[0].mxu0
  %v1536 = vpop.f32.mrb[0].mxu0
  %v1537 = vpop.f32.mrb[0].mxu0
  %1538 = vdwg.mxu0
  %v1540 = vrot.slane %v1493, 2
  %v1542 = vadd.f32 %v1540, %v1534
  %v1543 = vld [vmem:[#allocation5] sm:$0x3]
  %v1544 = vxor.u32 %v1542, 2147483648
  %v1545 = vmul.f32 %v1544, 1.442695
  %v1546 = vpow.pop %v1545
  %v1547 = vadd.f32 %v1546, 1.0
  %v1548 = vrcp.pop %v1547
  %v1549 = vmul.f32 1.0, %v1548
  %v1550 = vtanh.pop %v1542
  %v1553 = vunpack.c.l.s4 1983009808
  %v1554 = vunpack.c.0.s8 %v1553
  %v1555 = vlaneseq
  %v1556 = vshrl.u32 %v1555, 7
  %v1557 = vsub.s32 %v1554, %v1556
  %v1558 = vrot.slane %v1543, %v1557
  %1559 = vrot.lane.b32.xlu0 %v1558, 32
  %v1560 = vpop.permute.xlu0 %1559
  %v1562 = vmul.f32 %v1549, %v1560
  %1564 = vrot.lane.b32.xlu0 %v1550, 64
  %v1565 = vpop.permute.xlu0 %1564
  %v1567 = vmul.f32 %v1549, %v1565
  %1569 = vrot.lane.b32.xlu0 %v1567, 32
  %v1570 = vpop.permute.xlu0 %1569
  %v1572 = vadd.f32 %v1562, %v1570
  %v1573 = vtanh.pop %v1572
  %1575 = vrot.lane.b32.xlu0 %v1573, 64
  %v1576 = vpop.permute.xlu0 %1575
  %v1578 = vmul.f32 %v1549, %v1576
  %v1581 = vunpack.c.l.s4 1983009808
  %v1582 = vunpack.c.0.s8 %v1581
  %v1583 = vlaneseq
  %v1584 = vshrl.u32 %v1583, 7
  %v1585 = vsub.s32 %v1582, %v1584
  %v1586 = vrot.slane %v1578, %v1585
  %1587 = vrot.lane.b32.xlu0 %v1586, 32
  %v1588 = vpop.permute.xlu0 %1587
  %1590 = vst.msk [vmem:[#allocation4] sm:$0x3] %vm15, %v1588
  %v1593 = vunpack.c.l.s4 1983009808
  %v1594 = vunpack.c.0.s8 %v1593
  %v1595 = vlaneseq
  %v1596 = vshrl.u32 %v1595, 7
  %v1597 = vsub.s32 %v1594, %v1596
  %v1598 = vrot.slane %v1572, %v1597
  %1599 = vrot.lane.b32.xlu0 %v1598, 96
  %v1600 = vpop.permute.xlu0 %1599
  %1602 = vst.msk [vmem:[#allocation5] sm:$0x3] %vm15, %v1600
  %v1603 = vpack.c.bf16 %v1578, %v1578
  %v1606 = vunpack.c.l.s4 1966171168
  %v1607 = vunpack.c.0.s8 %v1606
  %v1608 = vlaneseq
  %v1609 = vshrl.u32 %v1608, 7
  %v1610 = vsub.s32 %v1607, %v1609
  %v1611 = vrot.slane %v1603, %v1610
  %v1613 = vunpack.c.l.s4 1966171168
  %v1614 = vunpack.c.0.s8 %v1613
  %v1615 = vlaneseq
  %v1616 = vshrl.u32 %v1615, 7
  %v1617 = vsub.s32 %v1614, %v1616
  %v1618 = vrot.slane %v1611, %v1617
  %1619 = vrot.lane.b32.xlu0 %v1618, 64
  %v1620 = vpop.permute.xlu0 %1619
  %1622 = vst.msk [vmem:[%s707] sm:$0x1] %vm314, %v1620
  %v1623 = vld [vmem:[%s446] sm:$0x3]
  %v1624 = vunpack.c.l.bf16 %v1623
  %v1625 = vld [vmem:[#allocation2] sm:$0x3]
  %v1626 = vpack.c.bf16 %v1625, %v1625
  %v1628 = vsel %vm44, %v1626, 0
  %1630 = vmatprep.subr.bf16.mxu0 0
  %1631 = vmatpush1.bf16.msra.mxu0 %v40
  %1632 = vmatprep.subr.bf16.mxu0 0
  %1633 = vmatpush1.bf16.msra.mxu0 %v41
  %1634 = vmatprep.subr.bf16.mxu0 0
  %1635 = vmatpush1.bf16.msra.mxu0 0
  %1636 = vmatprep.subr.bf16.mxu0 0
  %1637 = vmatpush1.bf16.msra.mxu0 0
  %1638 = vmatprep.subr.bf16.mxu0 0
  %1639 = vmatpush1.bf16.msra.mxu0 0
  %1640 = vmatprep.subr.bf16.mxu0 0
  %1641 = vmatpush1.bf16.msra.mxu0 0
  %1642 = vmatprep.subr.bf16.mxu0 0
  %1643 = vmatpush1.bf16.msra.mxu0 0
  %1644 = vmatprep.subr.bf16.mxu0 0
  %1645 = vmatpush1.bf16.msra.mxu0 0
  %1646 = vmatprep.subr.bf16.mxu0 0
  %1647 = vmatpush1.bf16.msra.mxu0 0
  %1648 = vmatprep.subr.bf16.mxu0 0
  %1649 = vmatpush1.bf16.msra.mxu0 0
  %1650 = vmatprep.subr.bf16.mxu0 0
  %1651 = vmatpush1.bf16.msra.mxu0 0
  %1652 = vmatprep.subr.bf16.mxu0 0
  %1653 = vmatpush1.bf16.msra.mxu0 0
  %1654 = vmatprep.subr.bf16.mxu0 0
  %1655 = vmatpush1.bf16.msra.mxu0 0
  %1656 = vmatprep.subr.bf16.mxu0 0
  %1657 = vmatpush1.bf16.msra.mxu0 0
  %1658 = vmatprep.subr.bf16.mxu0 0
  %1659 = vmatpush1.bf16.msra.mxu0 0
  %1660 = vmatprep.subr.bf16.mxu0 0
  %1661 = vmatpush1.bf16.msra.mxu0 0
  %1662 = vmatprep.mubr.bf16.mxu0 0
  %1663 = vmatmul.mubr.bf16.gmra.mrb[0].mxu0 %v1628
  %v1664 = vpop.f32.mrb[0].mxu0
  %v1665 = vadd.f32 0.0, %v1664
  %v1666 = vpop.f32.mrb[0].mxu0
  %v1667 = vpop.f32.mrb[0].mxu0
  %v1668 = vpop.f32.mrb[0].mxu0
  %1669 = vdwg.mxu0
  %v1670 = vadd.f32 %v1624, %v1665
  %v1671 = vld [vmem:[#allocation3] sm:$0x3]
  %v1672 = vxor.u32 %v1670, 2147483648
  %v1673 = vmul.f32 %v1672, 1.442695
  %v1674 = vpow.pop %v1673
  %v1675 = vadd.f32 %v1674, 1.0
  %v1676 = vrcp.pop %v1675
  %v1677 = vmul.f32 1.0, %v1676
  %v1678 = vtanh.pop %v1670
  %v1681 = vunpack.c.l.s4 1983009808
  %v1682 = vunpack.c.0.s8 %v1681
  %v1683 = vlaneseq
  %v1684 = vshrl.u32 %v1683, 7
  %v1685 = vsub.s32 %v1682, %v1684
  %v1686 = vrot.slane %v1671, %v1685
  %1687 = vrot.lane.b32.xlu0 %v1686, 32
  %v1688 = vpop.permute.xlu0 %1687
  %v1690 = vmul.f32 %v1677, %v1688
  %1692 = vrot.lane.b32.xlu0 %v1678, 64
  %v1693 = vpop.permute.xlu0 %1692
  %v1695 = vmul.f32 %v1677, %v1693
  %1697 = vrot.lane.b32.xlu0 %v1695, 32
  %v1698 = vpop.permute.xlu0 %1697
  %v1700 = vadd.f32 %v1690, %v1698
  %v1701 = vtanh.pop %v1700
  %1703 = vrot.lane.b32.xlu0 %v1701, 64
  %v1704 = vpop.permute.xlu0 %1703
  %v1706 = vmul.f32 %v1677, %v1704
  %v1709 = vunpack.c.l.s4 1983009808
  %v1710 = vunpack.c.0.s8 %v1709
  %v1711 = vlaneseq
  %v1712 = vshrl.u32 %v1711, 7
  %v1713 = vsub.s32 %v1710, %v1712
  %v1714 = vrot.slane %v1706, %v1713
  %1715 = vrot.lane.b32.xlu0 %v1714, 32
  %v1716 = vpop.permute.xlu0 %1715
  %1718 = vst.msk [vmem:[#allocation2] sm:$0x3] %vm15, %v1716
  %v1721 = vunpack.c.l.s4 1983009808
  %v1722 = vunpack.c.0.s8 %v1721
  %v1723 = vlaneseq
  %v1724 = vshrl.u32 %v1723, 7
  %v1725 = vsub.s32 %v1722, %v1724
  %v1726 = vrot.slane %v1700, %v1725
  %1727 = vrot.lane.b32.xlu0 %v1726, 96
  %v1728 = vpop.permute.xlu0 %1727
  %1730 = vst.msk [vmem:[#allocation3] sm:$0x3] %vm15, %v1728
  %v1731 = vpack.c.bf16 %v1706, %v1706
  %v1734 = vunpack.c.l.s4 1966171168
  %v1735 = vunpack.c.0.s8 %v1734
  %v1736 = vlaneseq
  %v1737 = vshrl.u32 %v1736, 7
  %v1738 = vsub.s32 %v1735, %v1737
  %v1739 = vrot.slane %v1731, %v1738
  %v1741 = vunpack.c.l.s4 1966171168
  %v1742 = vunpack.c.0.s8 %v1741
  %v1743 = vlaneseq
  %v1744 = vshrl.u32 %v1743, 7
  %v1745 = vsub.s32 %v1742, %v1744
  %v1746 = vrot.slane %v1739, %v1745
  %1747 = vrot.lane.b32.xlu0 %v1746, 32
  %v1748 = vpop.permute.xlu0 %1747
  %1750 = vst.msk [vmem:[%s577] sm:$0x1] %vm168, %v1748
  %v1751 = vld [vmem:[%s316] sm:$0x3]
  %v1752 = vunpack.c.l.bf16 %v1751
  %v1753 = vld [vmem:[#allocation4] sm:$0x3]
  %v1754 = vpack.c.bf16 %v1753, %v1753
  %v1756 = vsel %vm44, %v1754, 0
  %1758 = vmatprep.subr.bf16.mxu0 0
  %1759 = vmatpush1.bf16.msra.mxu0 %v183
  %1760 = vmatprep.subr.bf16.mxu0 0
  %1761 = vmatpush1.bf16.msra.mxu0 %v184
  %1762 = vmatprep.subr.bf16.mxu0 0
  %1763 = vmatpush1.bf16.msra.mxu0 0
  %1764 = vmatprep.subr.bf16.mxu0 0
  %1765 = vmatpush1.bf16.msra.mxu0 0
  %1766 = vmatprep.subr.bf16.mxu0 0
  %1767 = vmatpush1.bf16.msra.mxu0 0
  %1768 = vmatprep.subr.bf16.mxu0 0
  %1769 = vmatpush1.bf16.msra.mxu0 0
  %1770 = vmatprep.subr.bf16.mxu0 0
  %1771 = vmatpush1.bf16.msra.mxu0 0
  %1772 = vmatprep.subr.bf16.mxu0 0
  %1773 = vmatpush1.bf16.msra.mxu0 0
  %1774 = vmatprep.subr.bf16.mxu0 0
  %1775 = vmatpush1.bf16.msra.mxu0 0
  %1776 = vmatprep.subr.bf16.mxu0 0
  %1777 = vmatpush1.bf16.msra.mxu0 0
  %1778 = vmatprep.subr.bf16.mxu0 0
  %1779 = vmatpush1.bf16.msra.mxu0 0
  %1780 = vmatprep.subr.bf16.mxu0 0
  %1781 = vmatpush1.bf16.msra.mxu0 0
  %1782 = vmatprep.subr.bf16.mxu0 0
  %1783 = vmatpush1.bf16.msra.mxu0 0
  %1784 = vmatprep.subr.bf16.mxu0 0
  %1785 = vmatpush1.bf16.msra.mxu0 0
  %1786 = vmatprep.subr.bf16.mxu0 0
  %1787 = vmatpush1.bf16.msra.mxu0 0
  %1788 = vmatprep.subr.bf16.mxu0 0
  %1789 = vmatpush1.bf16.msra.mxu0 0
  %1790 = vmatprep.mubr.bf16.mxu0 0
  %1791 = vmatmul.mubr.bf16.gmra.mrb[0].mxu0 %v1756
  %v1792 = vpop.f32.mrb[0].mxu0
  %v1793 = vadd.f32 0.0, %v1792
  %v1794 = vpop.f32.mrb[0].mxu0
  %v1795 = vpop.f32.mrb[0].mxu0
  %v1796 = vpop.f32.mrb[0].mxu0
  %1797 = vdwg.mxu0
  %v1799 = vrot.slane %v1752, 2
  %v1801 = vadd.f32 %v1799, %v1793
  %v1802 = vld [vmem:[#allocation5] sm:$0x3]
  %v1803 = vxor.u32 %v1801, 2147483648
  %v1804 = vmul.f32 %v1803, 1.442695
  %v1805 = vpow.pop %v1804
  %v1806 = vadd.f32 %v1805, 1.0
  %v1807 = vrcp.pop %v1806
  %v1808 = vmul.f32 1.0, %v1807
  %v1809 = vtanh.pop %v1801
  %v1812 = vunpack.c.l.s4 1983009808
  %v1813 = vunpack.c.0.s8 %v1812
  %v1814 = vlaneseq
  %v1815 = vshrl.u32 %v1814, 7
  %v1816 = vsub.s32 %v1813, %v1815
  %v1817 = vrot.slane %v1802, %v1816
  %1818 = vrot.lane.b32.xlu0 %v1817, 32
  %v1819 = vpop.permute.xlu0 %1818
  %v1821 = vmul.f32 %v1808, %v1819
  %1823 = vrot.lane.b32.xlu0 %v1809, 64
  %v1824 = vpop.permute.xlu0 %1823
  %v1826 = vmul.f32 %v1808, %v1824
  %1828 = vrot.lane.b32.xlu0 %v1826, 32
  %v1829 = vpop.permute.xlu0 %1828
  %v1831 = vadd.f32 %v1821, %v1829
  %v1832 = vtanh.pop %v1831
  %1834 = vrot.lane.b32.xlu0 %v1832, 64
  %v1835 = vpop.permute.xlu0 %1834
  %v1837 = vmul.f32 %v1808, %v1835
  %v1840 = vunpack.c.l.s4 1983009808
  %v1841 = vunpack.c.0.s8 %v1840
  %v1842 = vlaneseq
  %v1843 = vshrl.u32 %v1842, 7
  %v1844 = vsub.s32 %v1841, %v1843
  %v1845 = vrot.slane %v1837, %v1844
  %1846 = vrot.lane.b32.xlu0 %v1845, 32
  %v1847 = vpop.permute.xlu0 %1846
  %1849 = vst.msk [vmem:[#allocation4] sm:$0x3] %vm15, %v1847
  %v1852 = vunpack.c.l.s4 1983009808
  %v1853 = vunpack.c.0.s8 %v1852
  %v1854 = vlaneseq
  %v1855 = vshrl.u32 %v1854, 7
  %v1856 = vsub.s32 %v1853, %v1855
  %v1857 = vrot.slane %v1831, %v1856
  %1858 = vrot.lane.b32.xlu0 %v1857, 96
  %v1859 = vpop.permute.xlu0 %1858
  %1861 = vst.msk [vmem:[#allocation5] sm:$0x3] %vm15, %v1859
  %v1862 = vpack.c.bf16 %v1837, %v1837
  %v1865 = vunpack.c.l.s4 1966171168
  %v1866 = vunpack.c.0.s8 %v1865
  %v1867 = vlaneseq
  %v1868 = vshrl.u32 %v1867, 7
  %v1869 = vsub.s32 %v1866, %v1868
  %v1870 = vrot.slane %v1862, %v1869
  %v1872 = vunpack.c.l.s4 1966171168
  %v1873 = vunpack.c.0.s8 %v1872
  %v1874 = vlaneseq
  %v1875 = vshrl.u32 %v1874, 7
  %v1876 = vsub.s32 %v1873, %v1875
  %v1877 = vrot.slane %v1870, %v1876
  %1878 = vrot.lane.b32.xlu0 %v1877, 64
  %v1879 = vpop.permute.xlu0 %1878
  %1881 = vst.msk [vmem:[%s444] sm:$0x1] %vm314, %v1879
  %v1882 = vld [vmem:[%s170] sm:$0x3]
  %v1883 = vunpack.c.l.bf16 %v1882
  %v1884 = vld [vmem:[#allocation2] sm:$0x3]
  %v1885 = vpack.c.bf16 %v1884, %v1884
  %v1887 = vsel %vm44, %v1885, 0
  %1889 = vmatprep.subr.bf16.mxu0 0
  %1890 = vmatpush1.bf16.msra.mxu0 %v40
  %1891 = vmatprep.subr.bf16.mxu0 0
  %1892 = vmatpush1.bf16.msra.mxu0 %v41
  %1893 = vmatprep.subr.bf16.mxu0 0
  %1894 = vmatpush1.bf16.msra.mxu0 0
  %1895 = vmatprep.subr.bf16.mxu0 0
  %1896 = vmatpush1.bf16.msra.mxu0 0
  %1897 = vmatprep.subr.bf16.mxu0 0
  %1898 = vmatpush1.bf16.msra.mxu0 0
  %1899 = vmatprep.subr.bf16.mxu0 0
  %1900 = vmatpush1.bf16.msra.mxu0 0
  %1901 = vmatprep.subr.bf16.mxu0 0
  %1902 = vmatpush1.bf16.msra.mxu0 0
  %1903 = vmatprep.subr.bf16.mxu0 0
  %1904 = vmatpush1.bf16.msra.mxu0 0
  %1905 = vmatprep.subr.bf16.mxu0 0
  %1906 = vmatpush1.bf16.msra.mxu0 0
  %1907 = vmatprep.subr.bf16.mxu0 0
  %1908 = vmatpush1.bf16.msra.mxu0 0
  %1909 = vmatprep.subr.bf16.mxu0 0
  %1910 = vmatpush1.bf16.msra.mxu0 0
  %1911 = vmatprep.subr.bf16.mxu0 0
  %1912 = vmatpush1.bf16.msra.mxu0 0
  %1913 = vmatprep.subr.bf16.mxu0 0
  %1914 = vmatpush1.bf16.msra.mxu0 0
  %1915 = vmatprep.subr.bf16.mxu0 0
  %1916 = vmatpush1.bf16.msra.mxu0 0
  %1917 = vmatprep.subr.bf16.mxu0 0
  %1918 = vmatpush1.bf16.msra.mxu0 0
  %1919 = vmatprep.subr.bf16.mxu0 0
  %1920 = vmatpush1.bf16.msra.mxu0 0
  %1921 = vmatprep.mubr.bf16.mxu0 0
  %1922 = vmatmul.mubr.bf16.gmra.mrb[0].mxu0 %v1887
  %v1923 = vpop.f32.mrb[0].mxu0
  %v1924 = vadd.f32 0.0, %v1923
  %v1925 = vpop.f32.mrb[0].mxu0
  %v1926 = vpop.f32.mrb[0].mxu0
  %v1927 = vpop.f32.mrb[0].mxu0
  %1928 = vdwg.mxu0
  %v1929 = vadd.f32 %v1883, %v1924
  %v1930 = vld [vmem:[#allocation3] sm:$0x3]
  %v1931 = vxor.u32 %v1929, 2147483648
  %v1932 = vmul.f32 %v1931, 1.442695
  %v1933 = vpow.pop %v1932
  %v1934 = vadd.f32 %v1933, 1.0
  %v1935 = vrcp.pop %v1934
  %v1936 = vmul.f32 1.0, %v1935
  %v1937 = vtanh.pop %v1929
  %v1940 = vunpack.c.l.s4 1983009808
  %v1941 = vunpack.c.0.s8 %v1940
  %v1942 = vlaneseq
  %v1943 = vshrl.u32 %v1942, 7
  %v1944 = vsub.s32 %v1941, %v1943
  %v1945 = vrot.slane %v1930, %v1944
  %1946 = vrot.lane.b32.xlu0 %v1945, 32
  %v1947 = vpop.permute.xlu0 %1946
  %v1949 = vmul.f32 %v1936, %v1947
  %1951 = vrot.lane.b32.xlu0 %v1937, 64
  %v1952 = vpop.permute.xlu0 %1951
  %v1954 = vmul.f32 %v1936, %v1952
  %1956 = vrot.lane.b32.xlu0 %v1954, 32
  %v1957 = vpop.permute.xlu0 %1956
  %v1959 = vadd.f32 %v1949, %v1957
  %v1960 = vtanh.pop %v1959
  %1962 = vrot.lane.b32.xlu0 %v1960, 64
  %v1963 = vpop.permute.xlu0 %1962
  %v1965 = vmul.f32 %v1936, %v1963
  %v1968 = vunpack.c.l.s4 1983009808
  %v1969 = vunpack.c.0.s8 %v1968
  %v1970 = vlaneseq
  %v1971 = vshrl.u32 %v1970, 7
  %v1972 = vsub.s32 %v1969, %v1971
  %v1973 = vrot.slane %v1965, %v1972
  %1974 = vrot.lane.b32.xlu0 %v1973, 32
  %v1975 = vpop.permute.xlu0 %1974
  %1977 = vst.msk [vmem:[#allocation2] sm:$0x3] %vm15, %v1975
  %v1980 = vunpack.c.l.s4 1983009808
  %v1981 = vunpack.c.0.s8 %v1980
  %v1982 = vlaneseq
  %v1983 = vshrl.u32 %v1982, 7
  %v1984 = vsub.s32 %v1981, %v1983
  %v1985 = vrot.slane %v1959, %v1984
  %1986 = vrot.lane.b32.xlu0 %v1985, 96
  %v1987 = vpop.permute.xlu0 %1986
  %1989 = vst.msk [vmem:[#allocation3] sm:$0x3] %vm15, %v1987
  %v1990 = vpack.c.bf16 %v1965, %v1965
  %v1993 = vunpack.c.l.s4 1966171168
  %v1994 = vunpack.c.0.s8 %v1993
  %v1995 = vlaneseq
  %v1996 = vshrl.u32 %v1995, 7
  %v1997 = vsub.s32 %v1994, %v1996
  %v1998 = vrot.slane %v1990, %v1997
  %v2000 = vunpack.c.l.s4 1966171168
  %v2001 = vunpack.c.0.s8 %v2000
  %v2002 = vlaneseq
  %v2003 = vshrl.u32 %v2002, 7
  %v2004 = vsub.s32 %v2001, %v2003
  %v2005 = vrot.slane %v1998, %v2004
  %2006 = vrot.lane.b32.xlu0 %v2005, 32
  %v2007 = vpop.permute.xlu0 %2006
  %2009 = vst.msk [vmem:[%s313] sm:$0x1] %vm168, %v2007
  %v2010 = vld [vmem:[%s0] sm:$0x3]
  %v2011 = vunpack.c.l.bf16 %v2010
  %v2012 = vld [vmem:[#allocation4] sm:$0x3]
  %v2013 = vpack.c.bf16 %v2012, %v2012
  %v2015 = vsel %vm44, %v2013, 0
  %2017 = vmatprep.subr.bf16.mxu0 0
  %2018 = vmatpush1.bf16.msra.mxu0 %v183
  %2019 = vmatprep.subr.bf16.mxu0 0
  %2020 = vmatpush1.bf16.msra.mxu0 %v184
  %2021 = vmatprep.subr.bf16.mxu0 0
  %2022 = vmatpush1.bf16.msra.mxu0 0
  %2023 = vmatprep.subr.bf16.mxu0 0
  %2024 = vmatpush1.bf16.msra.mxu0 0
  %2025 = vmatprep.subr.bf16.mxu0 0
  %2026 = vmatpush1.bf16.msra.mxu0 0
  %2027 = vmatprep.subr.bf16.mxu0 0
  %2028 = vmatpush1.bf16.msra.mxu0 0
  %2029 = vmatprep.subr.bf16.mxu0 0
  %2030 = vmatpush1.bf16.msra.mxu0 0
  %2031 = vmatprep.subr.bf16.mxu0 0
  %2032 = vmatpush1.bf16.msra.mxu0 0
  %2033 = vmatprep.subr.bf16.mxu0 0
  %2034 = vmatpush1.bf16.msra.mxu0 0
  %2035 = vmatprep.subr.bf16.mxu0 0
  %2036 = vmatpush1.bf16.msra.mxu0 0
  %2037 = vmatprep.subr.bf16.mxu0 0
  %2038 = vmatpush1.bf16.msra.mxu0 0
  %2039 = vmatprep.subr.bf16.mxu0 0
  %2040 = vmatpush1.bf16.msra.mxu0 0
  %2041 = vmatprep.subr.bf16.mxu0 0
  %2042 = vmatpush1.bf16.msra.mxu0 0
  %2043 = vmatprep.subr.bf16.mxu0 0
  %2044 = vmatpush1.bf16.msra.mxu0 0
  %2045 = vmatprep.subr.bf16.mxu0 0
  %2046 = vmatpush1.bf16.msra.mxu0 0
  %2047 = vmatprep.subr.bf16.mxu0 0
  %2048 = vmatpush1.bf16.msra.mxu0 0
  %2049 = vmatprep.mubr.bf16.mxu0 0
  %2050 = vmatmul.mubr.bf16.gmra.mrb[0].mxu0 %v2015
  %v2051 = vpop.f32.mrb[0].mxu0
  %v2052 = vadd.f32 0.0, %v2051
  %v2053 = vpop.f32.mrb[0].mxu0
  %v2054 = vpop.f32.mrb[0].mxu0
  %v2055 = vpop.f32.mrb[0].mxu0
  %2056 = vdwg.mxu0
  %v2058 = vrot.slane %v2011, 2
  %v2060 = vadd.f32 %v2058, %v2052
  %v2061 = vld [vmem:[#allocation5] sm:$0x3]
  %v2062 = vxor.u32 %v2060, 2147483648
  %v2063 = vmul.f32 %v2062, 1.442695
  %v2064 = vpow.pop %v2063
  %v2065 = vadd.f32 %v2064, 1.0
  %v2066 = vrcp.pop %v2065
  %v2067 = vmul.f32 1.0, %v2066
  %v2068 = vtanh.pop %v2060
  %v2071 = vunpack.c.l.s4 1983009808
  %v2072 = vunpack.c.0.s8 %v2071
  %v2073 = vlaneseq
  %v2074 = vshrl.u32 %v2073, 7
  %v2075 = vsub.s32 %v2072, %v2074
  %v2076 = vrot.slane %v2061, %v2075
  %2077 = vrot.lane.b32.xlu0 %v2076, 32
  %v2078 = vpop.permute.xlu0 %2077
  %v2080 = vmul.f32 %v2067, %v2078
  %2082 = vrot.lane.b32.xlu0 %v2068, 64
  %v2083 = vpop.permute.xlu0 %2082
  %v2085 = vmul.f32 %v2067, %v2083
  %2087 = vrot.lane.b32.xlu0 %v2085, 32
  %v2088 = vpop.permute.xlu0 %2087
  %v2090 = vadd.f32 %v2080, %v2088
  %v2091 = vtanh.pop %v2090
  %2093 = vrot.lane.b32.xlu0 %v2091, 64
  %v2094 = vpop.permute.xlu0 %2093
  %v2096 = vmul.f32 %v2067, %v2094
  %v2099 = vunpack.c.l.s4 1983009808
  %v2100 = vunpack.c.0.s8 %v2099
  %v2101 = vlaneseq
  %v2102 = vshrl.u32 %v2101, 7
  %v2103 = vsub.s32 %v2100, %v2102
  %v2104 = vrot.slane %v2096, %v2103
  %2105 = vrot.lane.b32.xlu0 %v2104, 32
  %v2106 = vpop.permute.xlu0 %2105
  %2108 = vst.msk [vmem:[#allocation4] sm:$0x3] %vm15, %v2106
  %v2111 = vunpack.c.l.s4 1983009808
  %v2112 = vunpack.c.0.s8 %v2111
  %v2113 = vlaneseq
  %v2114 = vshrl.u32 %v2113, 7
  %v2115 = vsub.s32 %v2112, %v2114
  %v2116 = vrot.slane %v2090, %v2115
  %2117 = vrot.lane.b32.xlu0 %v2116, 96
  %v2118 = vpop.permute.xlu0 %2117
  %2120 = vst.msk [vmem:[#allocation5] sm:$0x3] %vm15, %v2118
  %v2121 = vpack.c.bf16 %v2096, %v2096
  %v2124 = vunpack.c.l.s4 1966171168
  %v2125 = vunpack.c.0.s8 %v2124
  %v2126 = vlaneseq
  %v2127 = vshrl.u32 %v2126, 7
  %v2128 = vsub.s32 %v2125, %v2127
  %v2129 = vrot.slane %v2121, %v2128
  %v2131 = vunpack.c.l.s4 1966171168
  %v2132 = vunpack.c.0.s8 %v2131
  %v2133 = vlaneseq
  %v2134 = vshrl.u32 %v2133, 7
  %v2135 = vsub.s32 %v2132, %v2134
  %v2136 = vrot.slane %v2129, %v2135
  %2137 = vrot.lane.b32.xlu0 %v2136, 64
  %v2138 = vpop.permute.xlu0 %2137
  %2140 = vst.msk [vmem:[%s3] sm:$0x1] %vm314, %v2138
  // Predicated region
  $region14: #{robert_lstm_forward.10} parent=0 // pred_check
    _
  $region15: #{robert_lstm_forward.10} parent=0 // pred_check_branch
    %2142 = sbr.rel (0) target = $region17
  $region16: #{robert_lstm_forward.10} parent=0 // pred_region
    _
  $region17: #{robert_lstm_forward.10} parent=0 // pred_fallthru
    _
  // Predicated region
  $region18: #{robert_lstm_forward.10} parent=0 // pred_check
    _
  $region19: #{robert_lstm_forward.10} parent=0 // pred_check_branch
    %2144 = sbr.rel (0) target = $region21
  $region20: #{robert_lstm_forward.10} parent=0 // pred_region
    _
  $region21: #{robert_lstm_forward.10} parent=0 // pred_fallthru
    _

// kernel: robert_lstm_forward.12
$region0: #{robert_lstm_forward.12}
  #allocation0 [shape = 'u32[]', space=smem, size = 0x4, offset = 0x4, fixed_abs, tag = 'smem constant byte address 0x4 - core index']
  #allocation1 [shape = 'u32[144,128]{1,0:T(1,128)}', space=vmem, size = 0x12000, scoped, tag = 'internal scratch']
  #allocation2 [shape = 'f32[2,32]{1,0:T(2,128)}', space=vmem, size = 0x400, scoped, tag = 'scratch operand']
  #allocation3 [shape = 'f32[2,32]{1,0:T(2,128)}', space=vmem, size = 0x400, scoped, tag = 'scratch operand']
  #allocation4 [shape = 'f32[2,32]{1,0:T(2,128)}', space=vmem, size = 0x400, scoped, tag = 'scratch operand']
  #allocation5 [shape = 'f32[2,32]{1,0:T(2,128)}', space=vmem, size = 0x400, scoped, tag = 'scratch operand']
  %s0 = inlined_call_operand.vmem [shape: bf16[8,2,256], index: 0, kind: input, shape index: {}]
  %s1 = inlined_call_operand.vmem [shape: bf16[32,128], index: 1, kind: input, shape index: {}]
  %s2 = inlined_call_operand.vmem [shape: bf16[32,128], index: 2, kind: input, shape index: {}]
  %s3 = inlined_call_operand.vmem [shape: bf16[1,2,64], index: 3, kind: output, shape index: {}]
  %s4 = sld [smem:[#allocation0]]
  $region22: #{robert_lstm_forward.12} parent=0
    _
  %s6 = ssub.s32 1, %s4
  %s7 = scalar_select 0, %s6, %s4
  // Predicated region
  $region2: #{robert_lstm_forward.12} parent=0 // pred_check
    _
  $region3: #{robert_lstm_forward.12} parent=0 // pred_check_branch
    %9 = sbr.rel (0) target = $region5
  $region4: #{robert_lstm_forward.12} parent=0 // pred_region
    _
  $region5: #{robert_lstm_forward.12} parent=0 // pred_fallthru
    _
  // Predicated region
  $region6: #{robert_lstm_forward.12} parent=0 // pred_check
    _
  $region7: #{robert_lstm_forward.12} parent=0 // pred_check_branch
    %11 = sbr.rel (0) target = $region9
  $region8: #{robert_lstm_forward.12} parent=0 // pred_region
    _
  $region9: #{robert_lstm_forward.12} parent=0 // pred_fallthru
    _
  // Predicated region
  $region10: #{robert_lstm_forward.12} parent=0 // pred_check
    _
  $region11: #{robert_lstm_forward.12} parent=0 // pred_check_branch
    %13 = sbr.rel (0) target = $region13
  $region12: #{robert_lstm_forward.12} parent=0 // pred_region
    _
  $region13: #{robert_lstm_forward.12} parent=0 // pred_fallthru
    _
  %vm15 = vcmask 254976
  %16 = vst.msk [vmem:[#allocation2] sm:$0x3] %vm15, 0.0
  %17 = vst.msk [vmem:[#allocation3] sm:$0x3] %vm15, 0.0
  %18 = vst.msk [vmem:[#allocation4] sm:$0x3] %vm15, 0.0
  %19 = vst.msk [vmem:[#allocation5] sm:$0x3] %vm15, 0.0
  %v20 = vld [vmem:[%s1] sm:$0xf]
  %v21 = vld [vmem:[%s1 + $0x4] sm:$0xf]
  %v22 = vld [vmem:[%s1 + $0x8] sm:$0xf]
  %v23 = vld [vmem:[%s1 + $0xc] sm:$0xf]
  %v24 = vld [vmem:[%s2] sm:$0xf]
  %v25 = vld [vmem:[%s2 + $0x4] sm:$0xf]
  %v26 = vld [vmem:[%s2 + $0x8] sm:$0xf]
  %v27 = vld [vmem:[%s2 + $0xc] sm:$0xf]
  %v28 = vld [vmem:[%s0] sm:$0x3]
  %v29 = vunpack.c.l.bf16 %v28
  %v30 = vld [vmem:[#allocation2] sm:$0x3]
  %v31 = vpack.c.bf16 %v30, %v30
  %v36 = vunpack.c.l.b16 %v20
  %v37 = vunpack.c.l.b16 %v21
  %v38 = vunpack.c.l.b16 %v22
  %v39 = vunpack.c.l.b16 %v23
  %v40 = vpack.c.b16 %v37, %v36
  %v41 = vpack.c.b16 %v39, %v38
  %vm44 = vcmask 261120
  %v46 = vsel %vm44, %v31, 0
  %48 = vmatprep.subr.bf16.mxu0 0
  %49 = vmatpush1.bf16.msra.mxu0 %v40
  %50 = vmatprep.subr.bf16.mxu0 0
  %51 = vmatpush1.bf16.msra.mxu0 %v41
  %52 = vmatprep.subr.bf16.mxu0 0
  %53 = vmatpush1.bf16.msra.mxu0 0
  %54 = vmatprep.subr.bf16.mxu0 0
  %55 = vmatpush1.bf16.msra.mxu0 0
  %56 = vmatprep.subr.bf16.mxu0 0
  %57 = vmatpush1.bf16.msra.mxu0 0
  %58 = vmatprep.subr.bf16.mxu0 0
  %59 = vmatpush1.bf16.msra.mxu0 0
  %60 = vmatprep.subr.bf16.mxu0 0
  %61 = vmatpush1.bf16.msra.mxu0 0
  %62 = vmatprep.subr.bf16.mxu0 0
  %63 = vmatpush1.bf16.msra.mxu0 0
  %64 = vmatprep.subr.bf16.mxu0 0
  %65 = vmatpush1.bf16.msra.mxu0 0
  %66 = vmatprep.subr.bf16.mxu0 0
  %67 = vmatpush1.bf16.msra.mxu0 0
  %68 = vmatprep.subr.bf16.mxu0 0
  %69 = vmatpush1.bf16.msra.mxu0 0
  %70 = vmatprep.subr.bf16.mxu0 0
  %71 = vmatpush1.bf16.msra.mxu0 0
  %72 = vmatprep.subr.bf16.mxu0 0
  %73 = vmatpush1.bf16.msra.mxu0 0
  %74 = vmatprep.subr.bf16.mxu0 0
  %75 = vmatpush1.bf16.msra.mxu0 0
  %76 = vmatprep.subr.bf16.mxu0 0
  %77 = vmatpush1.bf16.msra.mxu0 0
  %78 = vmatprep.subr.bf16.mxu0 0
  %79 = vmatpush1.bf16.msra.mxu0 0
  %80 = vmatprep.mubr.bf16.mxu0 0
  %81 = vmatmul.mubr.bf16.gmra.mrb[0].mxu0 %v46
  %v82 = vpop.f32.mrb[0].mxu0
  %v83 = vadd.f32 0.0, %v82
  %v84 = vpop.f32.mrb[0].mxu0
  %v85 = vpop.f32.mrb[0].mxu0
  %v86 = vpop.f32.mrb[0].mxu0
  %87 = vdwg.mxu0
  %v88 = vadd.f32 %v29, %v83
  %v89 = vld [vmem:[#allocation3] sm:$0x3]
  %v90 = vxor.u32 %v88, 2147483648
  %v91 = vmul.f32 %v90, 1.442695
  %v92 = vpow.pop %v91
  %v93 = vadd.f32 %v92, 1.0
  %v94 = vrcp.pop %v93
  %v95 = vmul.f32 1.0, %v94
  %v96 = vtanh.pop %v88
  %v99 = vunpack.c.l.s4 1983009808
  %v100 = vunpack.c.0.s8 %v99
  %v101 = vlaneseq
  %v102 = vshrl.u32 %v101, 7
  %v103 = vsub.s32 %v100, %v102
  %v104 = vrot.slane %v89, %v103
  %105 = vrot.lane.b32.xlu0 %v104, 32
  %v106 = vpop.permute.xlu0 %105
  %v108 = vmul.f32 %v95, %v106
  %110 = vrot.lane.b32.xlu0 %v96, 64
  %v111 = vpop.permute.xlu0 %110
  %v113 = vmul.f32 %v95, %v111
  %115 = vrot.lane.b32.xlu0 %v113, 32
  %v116 = vpop.permute.xlu0 %115
  %v118 = vadd.f32 %v108, %v116
  %v119 = vtanh.pop %v118
  %121 = vrot.lane.b32.xlu0 %v119, 64
  %v122 = vpop.permute.xlu0 %121
  %v124 = vmul.f32 %v95, %v122
  %v127 = vunpack.c.l.s4 1983009808
  %v128 = vunpack.c.0.s8 %v127
  %v129 = vlaneseq
  %v130 = vshrl.u32 %v129, 7
  %v131 = vsub.s32 %v128, %v130
  %v132 = vrot.slane %v124, %v131
  %133 = vrot.lane.b32.xlu0 %v132, 32
  %v134 = vpop.permute.xlu0 %133
  %136 = vst.msk [vmem:[#allocation2] sm:$0x3] %vm15, %v134
  %v139 = vunpack.c.l.s4 1983009808
  %v140 = vunpack.c.0.s8 %v139
  %v141 = vlaneseq
  %v142 = vshrl.u32 %v141, 7
  %v143 = vsub.s32 %v140, %v142
  %v144 = vrot.slane %v118, %v143
  %145 = vrot.lane.b32.xlu0 %v144, 96
  %v146 = vpop.permute.xlu0 %145
  %148 = vst.msk [vmem:[#allocation3] sm:$0x3] %vm15, %v146
  %s149 = scalar_lea.vmem %s0, 14
  %v150 = vld [vmem:[%s149] sm:$0x3]
  %v151 = vunpack.c.l.bf16 %v150
  %v152 = vld [vmem:[#allocation4] sm:$0x3]
  %v153 = vpack.c.bf16 %v152, %v152
  %v158 = vunpack.c.l.b16 %v24
  %v159 = vunpack.c.l.b16 %v25
  %v160 = vunpack.c.l.b16 %v26
  %v161 = vunpack.c.l.b16 %v27
  %v162 = vpack.c.b16 %v159, %v158
  %v163 = vpack.c.b16 %v161, %v160
  %v167 = vsel %vm44, %v153, 0
  %169 = vmatprep.subr.bf16.mxu0 0
  %170 = vmatpush1.bf16.msra.mxu0 %v162
  %171 = vmatprep.subr.bf16.mxu0 0
  %172 = vmatpush1.bf16.msra.mxu0 %v163
  %173 = vmatprep.subr.bf16.mxu0 0
  %174 = vmatpush1.bf16.msra.mxu0 0
  %175 = vmatprep.subr.bf16.mxu0 0
  %176 = vmatpush1.bf16.msra.mxu0 0
  %177 = vmatprep.subr.bf16.mxu0 0
  %178 = vmatpush1.bf16.msra.mxu0 0
  %179 = vmatprep.subr.bf16.mxu0 0
  %180 = vmatpush1.bf16.msra.mxu0 0
  %181 = vmatprep.subr.bf16.mxu0 0
  %182 = vmatpush1.bf16.msra.mxu0 0
  %183 = vmatprep.subr.bf16.mxu0 0
  %184 = vmatpush1.bf16.msra.mxu0 0
  %185 = vmatprep.subr.bf16.mxu0 0
  %186 = vmatpush1.bf16.msra.mxu0 0
  %187 = vmatprep.subr.bf16.mxu0 0
  %188 = vmatpush1.bf16.msra.mxu0 0
  %189 = vmatprep.subr.bf16.mxu0 0
  %190 = vmatpush1.bf16.msra.mxu0 0
  %191 = vmatprep.subr.bf16.mxu0 0
  %192 = vmatpush1.bf16.msra.mxu0 0
  %193 = vmatprep.subr.bf16.mxu0 0
  %194 = vmatpush1.bf16.msra.mxu0 0
  %195 = vmatprep.subr.bf16.mxu0 0
  %196 = vmatpush1.bf16.msra.mxu0 0
  %197 = vmatprep.subr.bf16.mxu0 0
  %198 = vmatpush1.bf16.msra.mxu0 0
  %199 = vmatprep.subr.bf16.mxu0 0
  %200 = vmatpush1.bf16.msra.mxu0 0
  %201 = vmatprep.mubr.bf16.mxu0 0
  %202 = vmatmul.mubr.bf16.gmra.mrb[0].mxu0 %v167
  %v203 = vpop.f32.mrb[0].mxu0
  %v204 = vadd.f32 0.0, %v203
  %v205 = vpop.f32.mrb[0].mxu0
  %v206 = vpop.f32.mrb[0].mxu0
  %v207 = vpop.f32.mrb[0].mxu0
  %208 = vdwg.mxu0
  %v210 = vrot.slane %v151, 2
  %v212 = vadd.f32 %v210, %v204
  %v213 = vld [vmem:[#allocation5] sm:$0x3]
  %v214 = vxor.u32 %v212, 2147483648
  %v215 = vmul.f32 %v214, 1.442695
  %v216 = vpow.pop %v215
  %v217 = vadd.f32 %v216, 1.0
  %v218 = vrcp.pop %v217
  %v219 = vmul.f32 1.0, %v218
  %v220 = vtanh.pop %v212
  %v223 = vunpack.c.l.s4 1983009808
  %v224 = vunpack.c.0.s8 %v223
  %v225 = vlaneseq
  %v226 = vshrl.u32 %v225, 7
  %v227 = vsub.s32 %v224, %v226
  %v228 = vrot.slane %v213, %v227
  %229 = vrot.lane.b32.xlu0 %v228, 32
  %v230 = vpop.permute.xlu0 %229
  %v232 = vmul.f32 %v219, %v230
  %234 = vrot.lane.b32.xlu0 %v220, 64
  %v235 = vpop.permute.xlu0 %234
  %v237 = vmul.f32 %v219, %v235
  %239 = vrot.lane.b32.xlu0 %v237, 32
  %v240 = vpop.permute.xlu0 %239
  %v242 = vadd.f32 %v232, %v240
  %v243 = vtanh.pop %v242
  %245 = vrot.lane.b32.xlu0 %v243, 64
  %v246 = vpop.permute.xlu0 %245
  %v248 = vmul.f32 %v219, %v246
  %v251 = vunpack.c.l.s4 1983009808
  %v252 = vunpack.c.0.s8 %v251
  %v253 = vlaneseq
  %v254 = vshrl.u32 %v253, 7
  %v255 = vsub.s32 %v252, %v254
  %v256 = vrot.slane %v248, %v255
  %257 = vrot.lane.b32.xlu0 %v256, 32
  %v258 = vpop.permute.xlu0 %257
  %260 = vst.msk [vmem:[#allocation4] sm:$0x3] %vm15, %v258
  %v263 = vunpack.c.l.s4 1983009808
  %v264 = vunpack.c.0.s8 %v263
  %v265 = vlaneseq
  %v266 = vshrl.u32 %v265, 7
  %v267 = vsub.s32 %v264, %v266
  %v268 = vrot.slane %v242, %v267
  %269 = vrot.lane.b32.xlu0 %v268, 96
  %v270 = vpop.permute.xlu0 %269
  %272 = vst.msk [vmem:[#allocation5] sm:$0x3] %vm15, %v270
  %v273 = vpack.c.bf16 %v248, %v248
  %v276 = vunpack.c.l.s4 1966171168
  %v277 = vunpack.c.0.s8 %v276
  %v278 = vlaneseq
  %v279 = vshrl.u32 %v278, 7
  %v280 = vsub.s32 %v277, %v279
  %v281 = vrot.slane %v273, %v280
  %v283 = vunpack.c.l.s4 1966171168
  %v284 = vunpack.c.0.s8 %v283
  %v285 = vlaneseq
  %v286 = vshrl.u32 %v285, 7
  %v287 = vsub.s32 %v284, %v286
  %v288 = vrot.slane %v281, %v287
  %289 = vrot.lane.b32.xlu0 %v288, 64
  %v290 = vpop.permute.xlu0 %289
  %vm292 = vcmask 516352
  %293 = vst.msk [vmem:[%s3] sm:$0x1] %vm292, %v290
  %s294 = scalar_lea.vmem %s0, 2
  %v295 = vld [vmem:[%s294] sm:$0x3]
  %v296 = vunpack.c.l.bf16 %v295
  %v297 = vld [vmem:[#allocation2] sm:$0x3]
  %v298 = vpack.c.bf16 %v297, %v297
  %v300 = vsel %vm44, %v298, 0
  %302 = vmatprep.subr.bf16.mxu0 0
  %303 = vmatpush1.bf16.msra.mxu0 %v40
  %304 = vmatprep.subr.bf16.mxu0 0
  %305 = vmatpush1.bf16.msra.mxu0 %v41
  %306 = vmatprep.subr.bf16.mxu0 0
  %307 = vmatpush1.bf16.msra.mxu0 0
  %308 = vmatprep.subr.bf16.mxu0 0
  %309 = vmatpush1.bf16.msra.mxu0 0
  %310 = vmatprep.subr.bf16.mxu0 0
  %311 = vmatpush1.bf16.msra.mxu0 0
  %312 = vmatprep.subr.bf16.mxu0 0
  %313 = vmatpush1.bf16.msra.mxu0 0
  %314 = vmatprep.subr.bf16.mxu0 0
  %315 = vmatpush1.bf16.msra.mxu0 0
  %316 = vmatprep.subr.bf16.mxu0 0
  %317 = vmatpush1.bf16.msra.mxu0 0
  %318 = vmatprep.subr.bf16.mxu0 0
  %319 = vmatpush1.bf16.msra.mxu0 0
  %320 = vmatprep.subr.bf16.mxu0 0
  %321 = vmatpush1.bf16.msra.mxu0 0
  %322 = vmatprep.subr.bf16.mxu0 0
  %323 = vmatpush1.bf16.msra.mxu0 0
  %324 = vmatprep.subr.bf16.mxu0 0
  %325 = vmatpush1.bf16.msra.mxu0 0
  %326 = vmatprep.subr.bf16.mxu0 0
  %327 = vmatpush1.bf16.msra.mxu0 0
  %328 = vmatprep.subr.bf16.mxu0 0
  %329 = vmatpush1.bf16.msra.mxu0 0
  %330 = vmatprep.subr.bf16.mxu0 0
  %331 = vmatpush1.bf16.msra.mxu0 0
  %332 = vmatprep.subr.bf16.mxu0 0
  %333 = vmatpush1.bf16.msra.mxu0 0
  %334 = vmatprep.mubr.bf16.mxu0 0
  %335 = vmatmul.mubr.bf16.gmra.mrb[0].mxu0 %v300
  %v336 = vpop.f32.mrb[0].mxu0
  %v337 = vadd.f32 0.0, %v336
  %v338 = vpop.f32.mrb[0].mxu0
  %v339 = vpop.f32.mrb[0].mxu0
  %v340 = vpop.f32.mrb[0].mxu0
  %341 = vdwg.mxu0
  %v342 = vadd.f32 %v296, %v337
  %v343 = vld [vmem:[#allocation3] sm:$0x3]
  %v344 = vxor.u32 %v342, 2147483648
  %v345 = vmul.f32 %v344, 1.442695
  %v346 = vpow.pop %v345
  %v347 = vadd.f32 %v346, 1.0
  %v348 = vrcp.pop %v347
  %v349 = vmul.f32 1.0, %v348
  %v350 = vtanh.pop %v342
  %v353 = vunpack.c.l.s4 1983009808
  %v354 = vunpack.c.0.s8 %v353
  %v355 = vlaneseq
  %v356 = vshrl.u32 %v355, 7
  %v357 = vsub.s32 %v354, %v356
  %v358 = vrot.slane %v343, %v357
  %359 = vrot.lane.b32.xlu0 %v358, 32
  %v360 = vpop.permute.xlu0 %359
  %v362 = vmul.f32 %v349, %v360
  %364 = vrot.lane.b32.xlu0 %v350, 64
  %v365 = vpop.permute.xlu0 %364
  %v367 = vmul.f32 %v349, %v365
  %369 = vrot.lane.b32.xlu0 %v367, 32
  %v370 = vpop.permute.xlu0 %369
  %v372 = vadd.f32 %v362, %v370
  %v373 = vtanh.pop %v372
  %375 = vrot.lane.b32.xlu0 %v373, 64
  %v376 = vpop.permute.xlu0 %375
  %v378 = vmul.f32 %v349, %v376
  %v381 = vunpack.c.l.s4 1983009808
  %v382 = vunpack.c.0.s8 %v381
  %v383 = vlaneseq
  %v384 = vshrl.u32 %v383, 7
  %v385 = vsub.s32 %v382, %v384
  %v386 = vrot.slane %v378, %v385
  %387 = vrot.lane.b32.xlu0 %v386, 32
  %v388 = vpop.permute.xlu0 %387
  %390 = vst.msk [vmem:[#allocation2] sm:$0x3] %vm15, %v388
  %v393 = vunpack.c.l.s4 1983009808
  %v394 = vunpack.c.0.s8 %v393
  %v395 = vlaneseq
  %v396 = vshrl.u32 %v395, 7
  %v397 = vsub.s32 %v394, %v396
  %v398 = vrot.slane %v372, %v397
  %399 = vrot.lane.b32.xlu0 %v398, 96
  %v400 = vpop.permute.xlu0 %399
  %402 = vst.msk [vmem:[#allocation3] sm:$0x3] %vm15, %v400
  %s403 = scalar_lea.vmem %s0, 12
  %v404 = vld [vmem:[%s403] sm:$0x3]
  %v405 = vunpack.c.l.bf16 %v404
  %v406 = vld [vmem:[#allocation4] sm:$0x3]
  %v407 = vpack.c.bf16 %v406, %v406
  %v409 = vsel %vm44, %v407, 0
  %411 = vmatprep.subr.bf16.mxu0 0
  %412 = vmatpush1.bf16.msra.mxu0 %v162
  %413 = vmatprep.subr.bf16.mxu0 0
  %414 = vmatpush1.bf16.msra.mxu0 %v163
  %415 = vmatprep.subr.bf16.mxu0 0
  %416 = vmatpush1.bf16.msra.mxu0 0
  %417 = vmatprep.subr.bf16.mxu0 0
  %418 = vmatpush1.bf16.msra.mxu0 0
  %419 = vmatprep.subr.bf16.mxu0 0
  %420 = vmatpush1.bf16.msra.mxu0 0
  %421 = vmatprep.subr.bf16.mxu0 0
  %422 = vmatpush1.bf16.msra.mxu0 0
  %423 = vmatprep.subr.bf16.mxu0 0
  %424 = vmatpush1.bf16.msra.mxu0 0
  %425 = vmatprep.subr.bf16.mxu0 0
  %426 = vmatpush1.bf16.msra.mxu0 0
  %427 = vmatprep.subr.bf16.mxu0 0
  %428 = vmatpush1.bf16.msra.mxu0 0
  %429 = vmatprep.subr.bf16.mxu0 0
  %430 = vmatpush1.bf16.msra.mxu0 0
  %431 = vmatprep.subr.bf16.mxu0 0
  %432 = vmatpush1.bf16.msra.mxu0 0
  %433 = vmatprep.subr.bf16.mxu0 0
  %434 = vmatpush1.bf16.msra.mxu0 0
  %435 = vmatprep.subr.bf16.mxu0 0
  %436 = vmatpush1.bf16.msra.mxu0 0
  %437 = vmatprep.subr.bf16.mxu0 0
  %438 = vmatpush1.bf16.msra.mxu0 0
  %439 = vmatprep.subr.bf16.mxu0 0
  %440 = vmatpush1.bf16.msra.mxu0 0
  %441 = vmatprep.subr.bf16.mxu0 0
  %442 = vmatpush1.bf16.msra.mxu0 0
  %443 = vmatprep.mubr.bf16.mxu0 0
  %444 = vmatmul.mubr.bf16.gmra.mrb[0].mxu0 %v409
  %v445 = vpop.f32.mrb[0].mxu0
  %v446 = vadd.f32 0.0, %v445
  %v447 = vpop.f32.mrb[0].mxu0
  %v448 = vpop.f32.mrb[0].mxu0
  %v449 = vpop.f32.mrb[0].mxu0
  %450 = vdwg.mxu0
  %v452 = vrot.slane %v405, 2
  %v454 = vadd.f32 %v452, %v446
  %v455 = vld [vmem:[#allocation5] sm:$0x3]
  %v456 = vxor.u32 %v454, 2147483648
  %v457 = vmul.f32 %v456, 1.442695
  %v458 = vpow.pop %v457
  %v459 = vadd.f32 %v458, 1.0
  %v460 = vrcp.pop %v459
  %v461 = vmul.f32 1.0, %v460
  %v462 = vtanh.pop %v454
  %v465 = vunpack.c.l.s4 1983009808
  %v466 = vunpack.c.0.s8 %v465
  %v467 = vlaneseq
  %v468 = vshrl.u32 %v467, 7
  %v469 = vsub.s32 %v466, %v468
  %v470 = vrot.slane %v455, %v469
  %471 = vrot.lane.b32.xlu0 %v470, 32
  %v472 = vpop.permute.xlu0 %471
  %v474 = vmul.f32 %v461, %v472
  %476 = vrot.lane.b32.xlu0 %v462, 64
  %v477 = vpop.permute.xlu0 %476
  %v479 = vmul.f32 %v461, %v477
  %481 = vrot.lane.b32.xlu0 %v479, 32
  %v482 = vpop.permute.xlu0 %481
  %v484 = vadd.f32 %v474, %v482
  %v485 = vtanh.pop %v484
  %487 = vrot.lane.b32.xlu0 %v485, 64
  %v488 = vpop.permute.xlu0 %487
  %v490 = vmul.f32 %v461, %v488
  %v493 = vunpack.c.l.s4 1983009808
  %v494 = vunpack.c.0.s8 %v493
  %v495 = vlaneseq
  %v496 = vshrl.u32 %v495, 7
  %v497 = vsub.s32 %v494, %v496
  %v498 = vrot.slane %v490, %v497
  %499 = vrot.lane.b32.xlu0 %v498, 32
  %v500 = vpop.permute.xlu0 %499
  %502 = vst.msk [vmem:[#allocation4] sm:$0x3] %vm15, %v500
  %v505 = vunpack.c.l.s4 1983009808
  %v506 = vunpack.c.0.s8 %v505
  %v507 = vlaneseq
  %v508 = vshrl.u32 %v507, 7
  %v509 = vsub.s32 %v506, %v508
  %v510 = vrot.slane %v484, %v509
  %511 = vrot.lane.b32.xlu0 %v510, 96
  %v512 = vpop.permute.xlu0 %511
  %514 = vst.msk [vmem:[#allocation5] sm:$0x3] %vm15, %v512
  %s515 = scalar_lea.vmem %s0, 4
  %v516 = vld [vmem:[%s515] sm:$0x3]
  %v517 = vunpack.c.l.bf16 %v516
  %v518 = vld [vmem:[#allocation2] sm:$0x3]
  %v519 = vpack.c.bf16 %v518, %v518
  %v521 = vsel %vm44, %v519, 0
  %523 = vmatprep.subr.bf16.mxu0 0
  %524 = vmatpush1.bf16.msra.mxu0 %v40
  %525 = vmatprep.subr.bf16.mxu0 0
  %526 = vmatpush1.bf16.msra.mxu0 %v41
  %527 = vmatprep.subr.bf16.mxu0 0
  %528 = vmatpush1.bf16.msra.mxu0 0
  %529 = vmatprep.subr.bf16.mxu0 0
  %530 = vmatpush1.bf16.msra.mxu0 0
  %531 = vmatprep.subr.bf16.mxu0 0
  %532 = vmatpush1.bf16.msra.mxu0 0
  %533 = vmatprep.subr.bf16.mxu0 0
  %534 = vmatpush1.bf16.msra.mxu0 0
  %535 = vmatprep.subr.bf16.mxu0 0
  %536 = vmatpush1.bf16.msra.mxu0 0
  %537 = vmatprep.subr.bf16.mxu0 0
  %538 = vmatpush1.bf16.msra.mxu0 0
  %539 = vmatprep.subr.bf16.mxu0 0
  %540 = vmatpush1.bf16.msra.mxu0 0
  %541 = vmatprep.subr.bf16.mxu0 0
  %542 = vmatpush1.bf16.msra.mxu0 0
  %543 = vmatprep.subr.bf16.mxu0 0
  %544 = vmatpush1.bf16.msra.mxu0 0
  %545 = vmatprep.subr.bf16.mxu0 0
  %546 = vmatpush1.bf16.msra.mxu0 0
  %547 = vmatprep.subr.bf16.mxu0 0
  %548 = vmatpush1.bf16.msra.mxu0 0
  %549 = vmatprep.subr.bf16.mxu0 0
  %550 = vmatpush1.bf16.msra.mxu0 0
  %551 = vmatprep.subr.bf16.mxu0 0
  %552 = vmatpush1.bf16.msra.mxu0 0
  %553 = vmatprep.subr.bf16.mxu0 0
  %554 = vmatpush1.bf16.msra.mxu0 0
  %555 = vmatprep.mubr.bf16.mxu0 0
  %556 = vmatmul.mubr.bf16.gmra.mrb[0].mxu0 %v521
  %v557 = vpop.f32.mrb[0].mxu0
  %v558 = vadd.f32 0.0, %v557
  %v559 = vpop.f32.mrb[0].mxu0
  %v560 = vpop.f32.mrb[0].mxu0
  %v561 = vpop.f32.mrb[0].mxu0
  %562 = vdwg.mxu0
  %v563 = vadd.f32 %v517, %v558
  %v564 = vld [vmem:[#allocation3] sm:$0x3]
  %v565 = vxor.u32 %v563, 2147483648
  %v566 = vmul.f32 %v565, 1.442695
  %v567 = vpow.pop %v566
  %v568 = vadd.f32 %v567, 1.0
  %v569 = vrcp.pop %v568
  %v570 = vmul.f32 1.0, %v569
  %v571 = vtanh.pop %v563
  %v574 = vunpack.c.l.s4 1983009808
  %v575 = vunpack.c.0.s8 %v574
  %v576 = vlaneseq
  %v577 = vshrl.u32 %v576, 7
  %v578 = vsub.s32 %v575, %v577
  %v579 = vrot.slane %v564, %v578
  %580 = vrot.lane.b32.xlu0 %v579, 32
  %v581 = vpop.permute.xlu0 %580
  %v583 = vmul.f32 %v570, %v581
  %585 = vrot.lane.b32.xlu0 %v571, 64
  %v586 = vpop.permute.xlu0 %585
  %v588 = vmul.f32 %v570, %v586
  %590 = vrot.lane.b32.xlu0 %v588, 32
  %v591 = vpop.permute.xlu0 %590
  %v593 = vadd.f32 %v583, %v591
  %v594 = vtanh.pop %v593
  %596 = vrot.lane.b32.xlu0 %v594, 64
  %v597 = vpop.permute.xlu0 %596
  %v599 = vmul.f32 %v570, %v597
  %v602 = vunpack.c.l.s4 1983009808
  %v603 = vunpack.c.0.s8 %v602
  %v604 = vlaneseq
  %v605 = vshrl.u32 %v604, 7
  %v606 = vsub.s32 %v603, %v605
  %v607 = vrot.slane %v599, %v606
  %608 = vrot.lane.b32.xlu0 %v607, 32
  %v609 = vpop.permute.xlu0 %608
  %611 = vst.msk [vmem:[#allocation2] sm:$0x3] %vm15, %v609
  %v614 = vunpack.c.l.s4 1983009808
  %v615 = vunpack.c.0.s8 %v614
  %v616 = vlaneseq
  %v617 = vshrl.u32 %v616, 7
  %v618 = vsub.s32 %v615, %v617
  %v619 = vrot.slane %v593, %v618
  %620 = vrot.lane.b32.xlu0 %v619, 96
  %v621 = vpop.permute.xlu0 %620
  %623 = vst.msk [vmem:[#allocation3] sm:$0x3] %vm15, %v621
  %s624 = scalar_lea.vmem %s0, 10
  %v625 = vld [vmem:[%s624] sm:$0x3]
  %v626 = vunpack.c.l.bf16 %v625
  %v627 = vld [vmem:[#allocation4] sm:$0x3]
  %v628 = vpack.c.bf16 %v627, %v627
  %v630 = vsel %vm44, %v628, 0
  %632 = vmatprep.subr.bf16.mxu0 0
  %633 = vmatpush1.bf16.msra.mxu0 %v162
  %634 = vmatprep.subr.bf16.mxu0 0
  %635 = vmatpush1.bf16.msra.mxu0 %v163
  %636 = vmatprep.subr.bf16.mxu0 0
  %637 = vmatpush1.bf16.msra.mxu0 0
  %638 = vmatprep.subr.bf16.mxu0 0
  %639 = vmatpush1.bf16.msra.mxu0 0
  %640 = vmatprep.subr.bf16.mxu0 0
  %641 = vmatpush1.bf16.msra.mxu0 0
  %642 = vmatprep.subr.bf16.mxu0 0
  %643 = vmatpush1.bf16.msra.mxu0 0
  %644 = vmatprep.subr.bf16.mxu0 0
  %645 = vmatpush1.bf16.msra.mxu0 0
  %646 = vmatprep.subr.bf16.mxu0 0
  %647 = vmatpush1.bf16.msra.mxu0 0
  %648 = vmatprep.subr.bf16.mxu0 0
  %649 = vmatpush1.bf16.msra.mxu0 0
  %650 = vmatprep.subr.bf16.mxu0 0
  %651 = vmatpush1.bf16.msra.mxu0 0
  %652 = vmatprep.subr.bf16.mxu0 0
  %653 = vmatpush1.bf16.msra.mxu0 0
  %654 = vmatprep.subr.bf16.mxu0 0
  %655 = vmatpush1.bf16.msra.mxu0 0
  %656 = vmatprep.subr.bf16.mxu0 0
  %657 = vmatpush1.bf16.msra.mxu0 0
  %658 = vmatprep.subr.bf16.mxu0 0
  %659 = vmatpush1.bf16.msra.mxu0 0
  %660 = vmatprep.subr.bf16.mxu0 0
  %661 = vmatpush1.bf16.msra.mxu0 0
  %662 = vmatprep.subr.bf16.mxu0 0
  %663 = vmatpush1.bf16.msra.mxu0 0
  %664 = vmatprep.mubr.bf16.mxu0 0
  %665 = vmatmul.mubr.bf16.gmra.mrb[0].mxu0 %v630
  %v666 = vpop.f32.mrb[0].mxu0
  %v667 = vadd.f32 0.0, %v666
  %v668 = vpop.f32.mrb[0].mxu0
  %v669 = vpop.f32.mrb[0].mxu0
  %v670 = vpop.f32.mrb[0].mxu0
  %671 = vdwg.mxu0
  %v673 = vrot.slane %v626, 2
  %v675 = vadd.f32 %v673, %v667
  %v676 = vld [vmem:[#allocation5] sm:$0x3]
  %v677 = vxor.u32 %v675, 2147483648
  %v678 = vmul.f32 %v677, 1.442695
  %v679 = vpow.pop %v678
  %v680 = vadd.f32 %v679, 1.0
  %v681 = vrcp.pop %v680
  %v682 = vmul.f32 1.0, %v681
  %v683 = vtanh.pop %v675
  %v686 = vunpack.c.l.s4 1983009808
  %v687 = vunpack.c.0.s8 %v686
  %v688 = vlaneseq
  %v689 = vshrl.u32 %v688, 7
  %v690 = vsub.s32 %v687, %v689
  %v691 = vrot.slane %v676, %v690
  %692 = vrot.lane.b32.xlu0 %v691, 32
  %v693 = vpop.permute.xlu0 %692
  %v695 = vmul.f32 %v682, %v693
  %697 = vrot.lane.b32.xlu0 %v683, 64
  %v698 = vpop.permute.xlu0 %697
  %v700 = vmul.f32 %v682, %v698
  %702 = vrot.lane.b32.xlu0 %v700, 32
  %v703 = vpop.permute.xlu0 %702
  %v705 = vadd.f32 %v695, %v703
  %v706 = vtanh.pop %v705
  %708 = vrot.lane.b32.xlu0 %v706, 64
  %v709 = vpop.permute.xlu0 %708
  %v711 = vmul.f32 %v682, %v709
  %v714 = vunpack.c.l.s4 1983009808
  %v715 = vunpack.c.0.s8 %v714
  %v716 = vlaneseq
  %v717 = vshrl.u32 %v716, 7
  %v718 = vsub.s32 %v715, %v717
  %v719 = vrot.slane %v711, %v718
  %720 = vrot.lane.b32.xlu0 %v719, 32
  %v721 = vpop.permute.xlu0 %720
  %723 = vst.msk [vmem:[#allocation4] sm:$0x3] %vm15, %v721
  %v726 = vunpack.c.l.s4 1983009808
  %v727 = vunpack.c.0.s8 %v726
  %v728 = vlaneseq
  %v729 = vshrl.u32 %v728, 7
  %v730 = vsub.s32 %v727, %v729
  %v731 = vrot.slane %v705, %v730
  %732 = vrot.lane.b32.xlu0 %v731, 96
  %v733 = vpop.permute.xlu0 %732
  %735 = vst.msk [vmem:[#allocation5] sm:$0x3] %vm15, %v733
  %s736 = scalar_lea.vmem %s0, 6
  %v737 = vld [vmem:[%s736] sm:$0x3]
  %v738 = vunpack.c.l.bf16 %v737
  %v739 = vld [vmem:[#allocation2] sm:$0x3]
  %v740 = vpack.c.bf16 %v739, %v739
  %v742 = vsel %vm44, %v740, 0
  %744 = vmatprep.subr.bf16.mxu0 0
  %745 = vmatpush1.bf16.msra.mxu0 %v40
  %746 = vmatprep.subr.bf16.mxu0 0
  %747 = vmatpush1.bf16.msra.mxu0 %v41
  %748 = vmatprep.subr.bf16.mxu0 0
  %749 = vmatpush1.bf16.msra.mxu0 0
  %750 = vmatprep.subr.bf16.mxu0 0
  %751 = vmatpush1.bf16.msra.mxu0 0
  %752 = vmatprep.subr.bf16.mxu0 0
  %753 = vmatpush1.bf16.msra.mxu0 0
  %754 = vmatprep.subr.bf16.mxu0 0
  %755 = vmatpush1.bf16.msra.mxu0 0
  %756 = vmatprep.subr.bf16.mxu0 0
  %757 = vmatpush1.bf16.msra.mxu0 0
  %758 = vmatprep.subr.bf16.mxu0 0
  %759 = vmatpush1.bf16.msra.mxu0 0
  %760 = vmatprep.subr.bf16.mxu0 0
  %761 = vmatpush1.bf16.msra.mxu0 0
  %762 = vmatprep.subr.bf16.mxu0 0
  %763 = vmatpush1.bf16.msra.mxu0 0
  %764 = vmatprep.subr.bf16.mxu0 0
  %765 = vmatpush1.bf16.msra.mxu0 0
  %766 = vmatprep.subr.bf16.mxu0 0
  %767 = vmatpush1.bf16.msra.mxu0 0
  %768 = vmatprep.subr.bf16.mxu0 0
  %769 = vmatpush1.bf16.msra.mxu0 0
  %770 = vmatprep.subr.bf16.mxu0 0
  %771 = vmatpush1.bf16.msra.mxu0 0
  %772 = vmatprep.subr.bf16.mxu0 0
  %773 = vmatpush1.bf16.msra.mxu0 0
  %774 = vmatprep.subr.bf16.mxu0 0
  %775 = vmatpush1.bf16.msra.mxu0 0
  %776 = vmatprep.mubr.bf16.mxu0 0
  %777 = vmatmul.mubr.bf16.gmra.mrb[0].mxu0 %v742
  %v778 = vpop.f32.mrb[0].mxu0
  %v779 = vadd.f32 0.0, %v778
  %v780 = vpop.f32.mrb[0].mxu0
  %v781 = vpop.f32.mrb[0].mxu0
  %v782 = vpop.f32.mrb[0].mxu0
  %783 = vdwg.mxu0
  %v784 = vadd.f32 %v738, %v779
  %v785 = vld [vmem:[#allocation3] sm:$0x3]
  %v786 = vxor.u32 %v784, 2147483648
  %v787 = vmul.f32 %v786, 1.442695
  %v788 = vpow.pop %v787
  %v789 = vadd.f32 %v788, 1.0
  %v790 = vrcp.pop %v789
  %v791 = vmul.f32 1.0, %v790
  %v792 = vtanh.pop %v784
  %v795 = vunpack.c.l.s4 1983009808
  %v796 = vunpack.c.0.s8 %v795
  %v797 = vlaneseq
  %v798 = vshrl.u32 %v797, 7
  %v799 = vsub.s32 %v796, %v798
  %v800 = vrot.slane %v785, %v799
  %801 = vrot.lane.b32.xlu0 %v800, 32
  %v802 = vpop.permute.xlu0 %801
  %v804 = vmul.f32 %v791, %v802
  %806 = vrot.lane.b32.xlu0 %v792, 64
  %v807 = vpop.permute.xlu0 %806
  %v809 = vmul.f32 %v791, %v807
  %811 = vrot.lane.b32.xlu0 %v809, 32
  %v812 = vpop.permute.xlu0 %811
  %v814 = vadd.f32 %v804, %v812
  %v815 = vtanh.pop %v814
  %817 = vrot.lane.b32.xlu0 %v815, 64
  %v818 = vpop.permute.xlu0 %817
  %v820 = vmul.f32 %v791, %v818
  %v823 = vunpack.c.l.s4 1983009808
  %v824 = vunpack.c.0.s8 %v823
  %v825 = vlaneseq
  %v826 = vshrl.u32 %v825, 7
  %v827 = vsub.s32 %v824, %v826
  %v828 = vrot.slane %v820, %v827
  %829 = vrot.lane.b32.xlu0 %v828, 32
  %v830 = vpop.permute.xlu0 %829
  %832 = vst.msk [vmem:[#allocation2] sm:$0x3] %vm15, %v830
  %v835 = vunpack.c.l.s4 1983009808
  %v836 = vunpack.c.0.s8 %v835
  %v837 = vlaneseq
  %v838 = vshrl.u32 %v837, 7
  %v839 = vsub.s32 %v836, %v838
  %v840 = vrot.slane %v814, %v839
  %841 = vrot.lane.b32.xlu0 %v840, 96
  %v842 = vpop.permute.xlu0 %841
  %844 = vst.msk [vmem:[#allocation3] sm:$0x3] %vm15, %v842
  %s845 = scalar_lea.vmem %s0, 8
  %v846 = vld [vmem:[%s845] sm:$0x3]
  %v847 = vunpack.c.l.bf16 %v846
  %v848 = vld [vmem:[#allocation4] sm:$0x3]
  %v849 = vpack.c.bf16 %v848, %v848
  %v851 = vsel %vm44, %v849, 0
  %853 = vmatprep.subr.bf16.mxu0 0
  %854 = vmatpush1.bf16.msra.mxu0 %v162
  %855 = vmatprep.subr.bf16.mxu0 0
  %856 = vmatpush1.bf16.msra.mxu0 %v163
  %857 = vmatprep.subr.bf16.mxu0 0
  %858 = vmatpush1.bf16.msra.mxu0 0
  %859 = vmatprep.subr.bf16.mxu0 0
  %860 = vmatpush1.bf16.msra.mxu0 0
  %861 = vmatprep.subr.bf16.mxu0 0
  %862 = vmatpush1.bf16.msra.mxu0 0
  %863 = vmatprep.subr.bf16.mxu0 0
  %864 = vmatpush1.bf16.msra.mxu0 0
  %865 = vmatprep.subr.bf16.mxu0 0
  %866 = vmatpush1.bf16.msra.mxu0 0
  %867 = vmatprep.subr.bf16.mxu0 0
  %868 = vmatpush1.bf16.msra.mxu0 0
  %869 = vmatprep.subr.bf16.mxu0 0
  %870 = vmatpush1.bf16.msra.mxu0 0
  %871 = vmatprep.subr.bf16.mxu0 0
  %872 = vmatpush1.bf16.msra.mxu0 0
  %873 = vmatprep.subr.bf16.mxu0 0
  %874 = vmatpush1.bf16.msra.mxu0 0
  %875 = vmatprep.subr.bf16.mxu0 0
  %876 = vmatpush1.bf16.msra.mxu0 0
  %877 = vmatprep.subr.bf16.mxu0 0
  %878 = vmatpush1.bf16.msra.mxu0 0
  %879 = vmatprep.subr.bf16.mxu0 0
  %880 = vmatpush1.bf16.msra.mxu0 0
  %881 = vmatprep.subr.bf16.mxu0 0
  %882 = vmatpush1.bf16.msra.mxu0 0
  %883 = vmatprep.subr.bf16.mxu0 0
  %884 = vmatpush1.bf16.msra.mxu0 0
  %885 = vmatprep.mubr.bf16.mxu0 0
  %886 = vmatmul.mubr.bf16.gmra.mrb[0].mxu0 %v851
  %v887 = vpop.f32.mrb[0].mxu0
  %v888 = vadd.f32 0.0, %v887
  %v889 = vpop.f32.mrb[0].mxu0
  %v890 = vpop.f32.mrb[0].mxu0
  %v891 = vpop.f32.mrb[0].mxu0
  %892 = vdwg.mxu0
  %v894 = vrot.slane %v847, 2
  %v896 = vadd.f32 %v894, %v888
  %v897 = vld [vmem:[#allocation5] sm:$0x3]
  %v898 = vxor.u32 %v896, 2147483648
  %v899 = vmul.f32 %v898, 1.442695
  %v900 = vpow.pop %v899
  %v901 = vadd.f32 %v900, 1.0
  %v902 = vrcp.pop %v901
  %v903 = vmul.f32 1.0, %v902
  %v904 = vtanh.pop %v896
  %v907 = vunpack.c.l.s4 1983009808
  %v908 = vunpack.c.0.s8 %v907
  %v909 = vlaneseq
  %v910 = vshrl.u32 %v909, 7
  %v911 = vsub.s32 %v908, %v910
  %v912 = vrot.slane %v897, %v911
  %913 = vrot.lane.b32.xlu0 %v912, 32
  %v914 = vpop.permute.xlu0 %913
  %v916 = vmul.f32 %v903, %v914
  %918 = vrot.lane.b32.xlu0 %v904, 64
  %v919 = vpop.permute.xlu0 %918
  %v921 = vmul.f32 %v903, %v919
  %923 = vrot.lane.b32.xlu0 %v921, 32
  %v924 = vpop.permute.xlu0 %923
  %v926 = vadd.f32 %v916, %v924
  %v927 = vtanh.pop %v926
  %929 = vrot.lane.b32.xlu0 %v927, 64
  %v930 = vpop.permute.xlu0 %929
  %v932 = vmul.f32 %v903, %v930
  %v935 = vunpack.c.l.s4 1983009808
  %v936 = vunpack.c.0.s8 %v935
  %v937 = vlaneseq
  %v938 = vshrl.u32 %v937, 7
  %v939 = vsub.s32 %v936, %v938
  %v940 = vrot.slane %v932, %v939
  %941 = vrot.lane.b32.xlu0 %v940, 32
  %v942 = vpop.permute.xlu0 %941
  %944 = vst.msk [vmem:[#allocation4] sm:$0x3] %vm15, %v942
  %v947 = vunpack.c.l.s4 1983009808
  %v948 = vunpack.c.0.s8 %v947
  %v949 = vlaneseq
  %v950 = vshrl.u32 %v949, 7
  %v951 = vsub.s32 %v948, %v950
  %v952 = vrot.slane %v926, %v951
  %953 = vrot.lane.b32.xlu0 %v952, 96
  %v954 = vpop.permute.xlu0 %953
  %956 = vst.msk [vmem:[#allocation5] sm:$0x3] %vm15, %v954
  %v957 = vld [vmem:[%s845] sm:$0x3]
  %v958 = vunpack.c.l.bf16 %v957
  %v959 = vld [vmem:[#allocation2] sm:$0x3]
  %v960 = vpack.c.bf16 %v959, %v959
  %v962 = vsel %vm44, %v960, 0
  %964 = vmatprep.subr.bf16.mxu0 0
  %965 = vmatpush1.bf16.msra.mxu0 %v40
  %966 = vmatprep.subr.bf16.mxu0 0
  %967 = vmatpush1.bf16.msra.mxu0 %v41
  %968 = vmatprep.subr.bf16.mxu0 0
  %969 = vmatpush1.bf16.msra.mxu0 0
  %970 = vmatprep.subr.bf16.mxu0 0
  %971 = vmatpush1.bf16.msra.mxu0 0
  %972 = vmatprep.subr.bf16.mxu0 0
  %973 = vmatpush1.bf16.msra.mxu0 0
  %974 = vmatprep.subr.bf16.mxu0 0
  %975 = vmatpush1.bf16.msra.mxu0 0
  %976 = vmatprep.subr.bf16.mxu0 0
  %977 = vmatpush1.bf16.msra.mxu0 0
  %978 = vmatprep.subr.bf16.mxu0 0
  %979 = vmatpush1.bf16.msra.mxu0 0
  %980 = vmatprep.subr.bf16.mxu0 0
  %981 = vmatpush1.bf16.msra.mxu0 0
  %982 = vmatprep.subr.bf16.mxu0 0
  %983 = vmatpush1.bf16.msra.mxu0 0
  %984 = vmatprep.subr.bf16.mxu0 0
  %985 = vmatpush1.bf16.msra.mxu0 0
  %986 = vmatprep.subr.bf16.mxu0 0
  %987 = vmatpush1.bf16.msra.mxu0 0
  %988 = vmatprep.subr.bf16.mxu0 0
  %989 = vmatpush1.bf16.msra.mxu0 0
  %990 = vmatprep.subr.bf16.mxu0 0
  %991 = vmatpush1.bf16.msra.mxu0 0
  %992 = vmatprep.subr.bf16.mxu0 0
  %993 = vmatpush1.bf16.msra.mxu0 0
  %994 = vmatprep.subr.bf16.mxu0 0
  %995 = vmatpush1.bf16.msra.mxu0 0
  %996 = vmatprep.mubr.bf16.mxu0 0
  %997 = vmatmul.mubr.bf16.gmra.mrb[0].mxu0 %v962
  %v998 = vpop.f32.mrb[0].mxu0
  %v999 = vadd.f32 0.0, %v998
  %v1000 = vpop.f32.mrb[0].mxu0
  %v1001 = vpop.f32.mrb[0].mxu0
  %v1002 = vpop.f32.mrb[0].mxu0
  %1003 = vdwg.mxu0
  %v1004 = vadd.f32 %v958, %v999
  %v1005 = vld [vmem:[#allocation3] sm:$0x3]
  %v1006 = vxor.u32 %v1004, 2147483648
  %v1007 = vmul.f32 %v1006, 1.442695
  %v1008 = vpow.pop %v1007
  %v1009 = vadd.f32 %v1008, 1.0
  %v1010 = vrcp.pop %v1009
  %v1011 = vmul.f32 1.0, %v1010
  %v1012 = vtanh.pop %v1004
  %v1015 = vunpack.c.l.s4 1983009808
  %v1016 = vunpack.c.0.s8 %v1015
  %v1017 = vlaneseq
  %v1018 = vshrl.u32 %v1017, 7
  %v1019 = vsub.s32 %v1016, %v1018
  %v1020 = vrot.slane %v1005, %v1019
  %1021 = vrot.lane.b32.xlu0 %v1020, 32
  %v1022 = vpop.permute.xlu0 %1021
  %v1024 = vmul.f32 %v1011, %v1022
  %1026 = vrot.lane.b32.xlu0 %v1012, 64
  %v1027 = vpop.permute.xlu0 %1026
  %v1029 = vmul.f32 %v1011, %v1027
  %1031 = vrot.lane.b32.xlu0 %v1029, 32
  %v1032 = vpop.permute.xlu0 %1031
  %v1034 = vadd.f32 %v1024, %v1032
  %v1035 = vtanh.pop %v1034
  %1037 = vrot.lane.b32.xlu0 %v1035, 64
  %v1038 = vpop.permute.xlu0 %1037
  %v1040 = vmul.f32 %v1011, %v1038
  %v1043 = vunpack.c.l.s4 1983009808
  %v1044 = vunpack.c.0.s8 %v1043
  %v1045 = vlaneseq
  %v1046 = vshrl.u32 %v1045, 7
  %v1047 = vsub.s32 %v1044, %v1046
  %v1048 = vrot.slane %v1040, %v1047
  %1049 = vrot.lane.b32.xlu0 %v1048, 32
  %v1050 = vpop.permute.xlu0 %1049
  %1052 = vst.msk [vmem:[#allocation2] sm:$0x3] %vm15, %v1050
  %v1055 = vunpack.c.l.s4 1983009808
  %v1056 = vunpack.c.0.s8 %v1055
  %v1057 = vlaneseq
  %v1058 = vshrl.u32 %v1057, 7
  %v1059 = vsub.s32 %v1056, %v1058
  %v1060 = vrot.slane %v1034, %v1059
  %1061 = vrot.lane.b32.xlu0 %v1060, 96
  %v1062 = vpop.permute.xlu0 %1061
  %1064 = vst.msk [vmem:[#allocation3] sm:$0x3] %vm15, %v1062
  %v1065 = vld [vmem:[%s736] sm:$0x3]
  %v1066 = vunpack.c.l.bf16 %v1065
  %v1067 = vld [vmem:[#allocation4] sm:$0x3]
  %v1068 = vpack.c.bf16 %v1067, %v1067
  %v1070 = vsel %vm44, %v1068, 0
  %1072 = vmatprep.subr.bf16.mxu0 0
  %1073 = vmatpush1.bf16.msra.mxu0 %v162
  %1074 = vmatprep.subr.bf16.mxu0 0
  %1075 = vmatpush1.bf16.msra.mxu0 %v163
  %1076 = vmatprep.subr.bf16.mxu0 0
  %1077 = vmatpush1.bf16.msra.mxu0 0
  %1078 = vmatprep.subr.bf16.mxu0 0
  %1079 = vmatpush1.bf16.msra.mxu0 0
  %1080 = vmatprep.subr.bf16.mxu0 0
  %1081 = vmatpush1.bf16.msra.mxu0 0
  %1082 = vmatprep.subr.bf16.mxu0 0
  %1083 = vmatpush1.bf16.msra.mxu0 0
  %1084 = vmatprep.subr.bf16.mxu0 0
  %1085 = vmatpush1.bf16.msra.mxu0 0
  %1086 = vmatprep.subr.bf16.mxu0 0
  %1087 = vmatpush1.bf16.msra.mxu0 0
  %1088 = vmatprep.subr.bf16.mxu0 0
  %1089 = vmatpush1.bf16.msra.mxu0 0
  %1090 = vmatprep.subr.bf16.mxu0 0
  %1091 = vmatpush1.bf16.msra.mxu0 0
  %1092 = vmatprep.subr.bf16.mxu0 0
  %1093 = vmatpush1.bf16.msra.mxu0 0
  %1094 = vmatprep.subr.bf16.mxu0 0
  %1095 = vmatpush1.bf16.msra.mxu0 0
  %1096 = vmatprep.subr.bf16.mxu0 0
  %1097 = vmatpush1.bf16.msra.mxu0 0
  %1098 = vmatprep.subr.bf16.mxu0 0
  %1099 = vmatpush1.bf16.msra.mxu0 0
  %1100 = vmatprep.subr.bf16.mxu0 0
  %1101 = vmatpush1.bf16.msra.mxu0 0
  %1102 = vmatprep.subr.bf16.mxu0 0
  %1103 = vmatpush1.bf16.msra.mxu0 0
  %1104 = vmatprep.mubr.bf16.mxu0 0
  %1105 = vmatmul.mubr.bf16.gmra.mrb[0].mxu0 %v1070
  %v1106 = vpop.f32.mrb[0].mxu0
  %v1107 = vadd.f32 0.0, %v1106
  %v1108 = vpop.f32.mrb[0].mxu0
  %v1109 = vpop.f32.mrb[0].mxu0
  %v1110 = vpop.f32.mrb[0].mxu0
  %1111 = vdwg.mxu0
  %v1113 = vrot.slane %v1066, 2
  %v1115 = vadd.f32 %v1113, %v1107
  %v1116 = vld [vmem:[#allocation5] sm:$0x3]
  %v1117 = vxor.u32 %v1115, 2147483648
  %v1118 = vmul.f32 %v1117, 1.442695
  %v1119 = vpow.pop %v1118
  %v1120 = vadd.f32 %v1119, 1.0
  %v1121 = vrcp.pop %v1120
  %v1122 = vmul.f32 1.0, %v1121
  %v1123 = vtanh.pop %v1115
  %v1126 = vunpack.c.l.s4 1983009808
  %v1127 = vunpack.c.0.s8 %v1126
  %v1128 = vlaneseq
  %v1129 = vshrl.u32 %v1128, 7
  %v1130 = vsub.s32 %v1127, %v1129
  %v1131 = vrot.slane %v1116, %v1130
  %1132 = vrot.lane.b32.xlu0 %v1131, 32
  %v1133 = vpop.permute.xlu0 %1132
  %v1135 = vmul.f32 %v1122, %v1133
  %1137 = vrot.lane.b32.xlu0 %v1123, 64
  %v1138 = vpop.permute.xlu0 %1137
  %v1140 = vmul.f32 %v1122, %v1138
  %1142 = vrot.lane.b32.xlu0 %v1140, 32
  %v1143 = vpop.permute.xlu0 %1142
  %v1145 = vadd.f32 %v1135, %v1143
  %v1146 = vtanh.pop %v1145
  %1148 = vrot.lane.b32.xlu0 %v1146, 64
  %v1149 = vpop.permute.xlu0 %1148
  %v1151 = vmul.f32 %v1122, %v1149
  %v1154 = vunpack.c.l.s4 1983009808
  %v1155 = vunpack.c.0.s8 %v1154
  %v1156 = vlaneseq
  %v1157 = vshrl.u32 %v1156, 7
  %v1158 = vsub.s32 %v1155, %v1157
  %v1159 = vrot.slane %v1151, %v1158
  %1160 = vrot.lane.b32.xlu0 %v1159, 32
  %v1161 = vpop.permute.xlu0 %1160
  %1163 = vst.msk [vmem:[#allocation4] sm:$0x3] %vm15, %v1161
  %v1166 = vunpack.c.l.s4 1983009808
  %v1167 = vunpack.c.0.s8 %v1166
  %v1168 = vlaneseq
  %v1169 = vshrl.u32 %v1168, 7
  %v1170 = vsub.s32 %v1167, %v1169
  %v1171 = vrot.slane %v1145, %v1170
  %1172 = vrot.lane.b32.xlu0 %v1171, 96
  %v1173 = vpop.permute.xlu0 %1172
  %1175 = vst.msk [vmem:[#allocation5] sm:$0x3] %vm15, %v1173
  %v1176 = vld [vmem:[%s624] sm:$0x3]
  %v1177 = vunpack.c.l.bf16 %v1176
  %v1178 = vld [vmem:[#allocation2] sm:$0x3]
  %v1179 = vpack.c.bf16 %v1178, %v1178
  %v1181 = vsel %vm44, %v1179, 0
  %1183 = vmatprep.subr.bf16.mxu0 0
  %1184 = vmatpush1.bf16.msra.mxu0 %v40
  %1185 = vmatprep.subr.bf16.mxu0 0
  %1186 = vmatpush1.bf16.msra.mxu0 %v41
  %1187 = vmatprep.subr.bf16.mxu0 0
  %1188 = vmatpush1.bf16.msra.mxu0 0
  %1189 = vmatprep.subr.bf16.mxu0 0
  %1190 = vmatpush1.bf16.msra.mxu0 0
  %1191 = vmatprep.subr.bf16.mxu0 0
  %1192 = vmatpush1.bf16.msra.mxu0 0
  %1193 = vmatprep.subr.bf16.mxu0 0
  %1194 = vmatpush1.bf16.msra.mxu0 0
  %1195 = vmatprep.subr.bf16.mxu0 0
  %1196 = vmatpush1.bf16.msra.mxu0 0
  %1197 = vmatprep.subr.bf16.mxu0 0
  %1198 = vmatpush1.bf16.msra.mxu0 0
  %1199 = vmatprep.subr.bf16.mxu0 0
  %1200 = vmatpush1.bf16.msra.mxu0 0
  %1201 = vmatprep.subr.bf16.mxu0 0
  %1202 = vmatpush1.bf16.msra.mxu0 0
  %1203 = vmatprep.subr.bf16.mxu0 0
  %1204 = vmatpush1.bf16.msra.mxu0 0
  %1205 = vmatprep.subr.bf16.mxu0 0
  %1206 = vmatpush1.bf16.msra.mxu0 0
  %1207 = vmatprep.subr.bf16.mxu0 0
  %1208 = vmatpush1.bf16.msra.mxu0 0
  %1209 = vmatprep.subr.bf16.mxu0 0
  %1210 = vmatpush1.bf16.msra.mxu0 0
  %1211 = vmatprep.subr.bf16.mxu0 0
  %1212 = vmatpush1.bf16.msra.mxu0 0
  %1213 = vmatprep.subr.bf16.mxu0 0
  %1214 = vmatpush1.bf16.msra.mxu0 0
  %1215 = vmatprep.mubr.bf16.mxu0 0
  %1216 = vmatmul.mubr.bf16.gmra.mrb[0].mxu0 %v1181
  %v1217 = vpop.f32.mrb[0].mxu0
  %v1218 = vadd.f32 0.0, %v1217
  %v1219 = vpop.f32.mrb[0].mxu0
  %v1220 = vpop.f32.mrb[0].mxu0
  %v1221 = vpop.f32.mrb[0].mxu0
  %1222 = vdwg.mxu0
  %v1223 = vadd.f32 %v1177, %v1218
  %v1224 = vld [vmem:[#allocation3] sm:$0x3]
  %v1225 = vxor.u32 %v1223, 2147483648
  %v1226 = vmul.f32 %v1225, 1.442695
  %v1227 = vpow.pop %v1226
  %v1228 = vadd.f32 %v1227, 1.0
  %v1229 = vrcp.pop %v1228
  %v1230 = vmul.f32 1.0, %v1229
  %v1231 = vtanh.pop %v1223
  %v1234 = vunpack.c.l.s4 1983009808
  %v1235 = vunpack.c.0.s8 %v1234
  %v1236 = vlaneseq
  %v1237 = vshrl.u32 %v1236, 7
  %v1238 = vsub.s32 %v1235, %v1237
  %v1239 = vrot.slane %v1224, %v1238
  %1240 = vrot.lane.b32.xlu0 %v1239, 32
  %v1241 = vpop.permute.xlu0 %1240
  %v1243 = vmul.f32 %v1230, %v1241
  %1245 = vrot.lane.b32.xlu0 %v1231, 64
  %v1246 = vpop.permute.xlu0 %1245
  %v1248 = vmul.f32 %v1230, %v1246
  %1250 = vrot.lane.b32.xlu0 %v1248, 32
  %v1251 = vpop.permute.xlu0 %1250
  %v1253 = vadd.f32 %v1243, %v1251
  %v1254 = vtanh.pop %v1253
  %1256 = vrot.lane.b32.xlu0 %v1254, 64
  %v1257 = vpop.permute.xlu0 %1256
  %v1259 = vmul.f32 %v1230, %v1257
  %v1262 = vunpack.c.l.s4 1983009808
  %v1263 = vunpack.c.0.s8 %v1262
  %v1264 = vlaneseq
  %v1265 = vshrl.u32 %v1264, 7
  %v1266 = vsub.s32 %v1263, %v1265
  %v1267 = vrot.slane %v1259, %v1266
  %1268 = vrot.lane.b32.xlu0 %v1267, 32
  %v1269 = vpop.permute.xlu0 %1268
  %1271 = vst.msk [vmem:[#allocation2] sm:$0x3] %vm15, %v1269
  %v1274 = vunpack.c.l.s4 1983009808
  %v1275 = vunpack.c.0.s8 %v1274
  %v1276 = vlaneseq
  %v1277 = vshrl.u32 %v1276, 7
  %v1278 = vsub.s32 %v1275, %v1277
  %v1279 = vrot.slane %v1253, %v1278
  %1280 = vrot.lane.b32.xlu0 %v1279, 96
  %v1281 = vpop.permute.xlu0 %1280
  %1283 = vst.msk [vmem:[#allocation3] sm:$0x3] %vm15, %v1281
  %v1284 = vld [vmem:[%s515] sm:$0x3]
  %v1285 = vunpack.c.l.bf16 %v1284
  %v1286 = vld [vmem:[#allocation4] sm:$0x3]
  %v1287 = vpack.c.bf16 %v1286, %v1286
  %v1289 = vsel %vm44, %v1287, 0
  %1291 = vmatprep.subr.bf16.mxu0 0
  %1292 = vmatpush1.bf16.msra.mxu0 %v162
  %1293 = vmatprep.subr.bf16.mxu0 0
  %1294 = vmatpush1.bf16.msra.mxu0 %v163
  %1295 = vmatprep.subr.bf16.mxu0 0
  %1296 = vmatpush1.bf16.msra.mxu0 0
  %1297 = vmatprep.subr.bf16.mxu0 0
  %1298 = vmatpush1.bf16.msra.mxu0 0
  %1299 = vmatprep.subr.bf16.mxu0 0
  %1300 = vmatpush1.bf16.msra.mxu0 0
  %1301 = vmatprep.subr.bf16.mxu0 0
  %1302 = vmatpush1.bf16.msra.mxu0 0
  %1303 = vmatprep.subr.bf16.mxu0 0
  %1304 = vmatpush1.bf16.msra.mxu0 0
  %1305 = vmatprep.subr.bf16.mxu0 0
  %1306 = vmatpush1.bf16.msra.mxu0 0
  %1307 = vmatprep.subr.bf16.mxu0 0
  %1308 = vmatpush1.bf16.msra.mxu0 0
  %1309 = vmatprep.subr.bf16.mxu0 0
  %1310 = vmatpush1.bf16.msra.mxu0 0
  %1311 = vmatprep.subr.bf16.mxu0 0
  %1312 = vmatpush1.bf16.msra.mxu0 0
  %1313 = vmatprep.subr.bf16.mxu0 0
  %1314 = vmatpush1.bf16.msra.mxu0 0
  %1315 = vmatprep.subr.bf16.mxu0 0
  %1316 = vmatpush1.bf16.msra.mxu0 0
  %1317 = vmatprep.subr.bf16.mxu0 0
  %1318 = vmatpush1.bf16.msra.mxu0 0
  %1319 = vmatprep.subr.bf16.mxu0 0
  %1320 = vmatpush1.bf16.msra.mxu0 0
  %1321 = vmatprep.subr.bf16.mxu0 0
  %1322 = vmatpush1.bf16.msra.mxu0 0
  %1323 = vmatprep.mubr.bf16.mxu0 0
  %1324 = vmatmul.mubr.bf16.gmra.mrb[0].mxu0 %v1289
  %v1325 = vpop.f32.mrb[0].mxu0
  %v1326 = vadd.f32 0.0, %v1325
  %v1327 = vpop.f32.mrb[0].mxu0
  %v1328 = vpop.f32.mrb[0].mxu0
  %v1329 = vpop.f32.mrb[0].mxu0
  %1330 = vdwg.mxu0
  %v1332 = vrot.slane %v1285, 2
  %v1334 = vadd.f32 %v1332, %v1326
  %v1335 = vld [vmem:[#allocation5] sm:$0x3]
  %v1336 = vxor.u32 %v1334, 2147483648
  %v1337 = vmul.f32 %v1336, 1.442695
  %v1338 = vpow.pop %v1337
  %v1339 = vadd.f32 %v1338, 1.0
  %v1340 = vrcp.pop %v1339
  %v1341 = vmul.f32 1.0, %v1340
  %v1342 = vtanh.pop %v1334
  %v1345 = vunpack.c.l.s4 1983009808
  %v1346 = vunpack.c.0.s8 %v1345
  %v1347 = vlaneseq
  %v1348 = vshrl.u32 %v1347, 7
  %v1349 = vsub.s32 %v1346, %v1348
  %v1350 = vrot.slane %v1335, %v1349
  %1351 = vrot.lane.b32.xlu0 %v1350, 32
  %v1352 = vpop.permute.xlu0 %1351
  %v1354 = vmul.f32 %v1341, %v1352
  %1356 = vrot.lane.b32.xlu0 %v1342, 64
  %v1357 = vpop.permute.xlu0 %1356
  %v1359 = vmul.f32 %v1341, %v1357
  %1361 = vrot.lane.b32.xlu0 %v1359, 32
  %v1362 = vpop.permute.xlu0 %1361
  %v1364 = vadd.f32 %v1354, %v1362
  %v1365 = vtanh.pop %v1364
  %1367 = vrot.lane.b32.xlu0 %v1365, 64
  %v1368 = vpop.permute.xlu0 %1367
  %v1370 = vmul.f32 %v1341, %v1368
  %v1373 = vunpack.c.l.s4 1983009808
  %v1374 = vunpack.c.0.s8 %v1373
  %v1375 = vlaneseq
  %v1376 = vshrl.u32 %v1375, 7
  %v1377 = vsub.s32 %v1374, %v1376
  %v1378 = vrot.slane %v1370, %v1377
  %1379 = vrot.lane.b32.xlu0 %v1378, 32
  %v1380 = vpop.permute.xlu0 %1379
  %1382 = vst.msk [vmem:[#allocation4] sm:$0x3] %vm15, %v1380
  %v1385 = vunpack.c.l.s4 1983009808
  %v1386 = vunpack.c.0.s8 %v1385
  %v1387 = vlaneseq
  %v1388 = vshrl.u32 %v1387, 7
  %v1389 = vsub.s32 %v1386, %v1388
  %v1390 = vrot.slane %v1364, %v1389
  %1391 = vrot.lane.b32.xlu0 %v1390, 96
  %v1392 = vpop.permute.xlu0 %1391
  %1394 = vst.msk [vmem:[#allocation5] sm:$0x3] %vm15, %v1392
  %v1395 = vld [vmem:[%s403] sm:$0x3]
  %v1396 = vunpack.c.l.bf16 %v1395
  %v1397 = vld [vmem:[#allocation2] sm:$0x3]
  %v1398 = vpack.c.bf16 %v1397, %v1397
  %v1400 = vsel %vm44, %v1398, 0
  %1402 = vmatprep.subr.bf16.mxu0 0
  %1403 = vmatpush1.bf16.msra.mxu0 %v40
  %1404 = vmatprep.subr.bf16.mxu0 0
  %1405 = vmatpush1.bf16.msra.mxu0 %v41
  %1406 = vmatprep.subr.bf16.mxu0 0
  %1407 = vmatpush1.bf16.msra.mxu0 0
  %1408 = vmatprep.subr.bf16.mxu0 0
  %1409 = vmatpush1.bf16.msra.mxu0 0
  %1410 = vmatprep.subr.bf16.mxu0 0
  %1411 = vmatpush1.bf16.msra.mxu0 0
  %1412 = vmatprep.subr.bf16.mxu0 0
  %1413 = vmatpush1.bf16.msra.mxu0 0
  %1414 = vmatprep.subr.bf16.mxu0 0
  %1415 = vmatpush1.bf16.msra.mxu0 0
  %1416 = vmatprep.subr.bf16.mxu0 0
  %1417 = vmatpush1.bf16.msra.mxu0 0
  %1418 = vmatprep.subr.bf16.mxu0 0
  %1419 = vmatpush1.bf16.msra.mxu0 0
  %1420 = vmatprep.subr.bf16.mxu0 0
  %1421 = vmatpush1.bf16.msra.mxu0 0
  %1422 = vmatprep.subr.bf16.mxu0 0
  %1423 = vmatpush1.bf16.msra.mxu0 0
  %1424 = vmatprep.subr.bf16.mxu0 0
  %1425 = vmatpush1.bf16.msra.mxu0 0
  %1426 = vmatprep.subr.bf16.mxu0 0
  %1427 = vmatpush1.bf16.msra.mxu0 0
  %1428 = vmatprep.subr.bf16.mxu0 0
  %1429 = vmatpush1.bf16.msra.mxu0 0
  %1430 = vmatprep.subr.bf16.mxu0 0
  %1431 = vmatpush1.bf16.msra.mxu0 0
  %1432 = vmatprep.subr.bf16.mxu0 0
  %1433 = vmatpush1.bf16.msra.mxu0 0
  %1434 = vmatprep.mubr.bf16.mxu0 0
  %1435 = vmatmul.mubr.bf16.gmra.mrb[0].mxu0 %v1400
  %v1436 = vpop.f32.mrb[0].mxu0
  %v1437 = vadd.f32 0.0, %v1436
  %v1438 = vpop.f32.mrb[0].mxu0
  %v1439 = vpop.f32.mrb[0].mxu0
  %v1440 = vpop.f32.mrb[0].mxu0
  %1441 = vdwg.mxu0
  %v1442 = vadd.f32 %v1396, %v1437
  %v1443 = vld [vmem:[#allocation3] sm:$0x3]
  %v1444 = vxor.u32 %v1442, 2147483648
  %v1445 = vmul.f32 %v1444, 1.442695
  %v1446 = vpow.pop %v1445
  %v1447 = vadd.f32 %v1446, 1.0
  %v1448 = vrcp.pop %v1447
  %v1449 = vmul.f32 1.0, %v1448
  %v1450 = vtanh.pop %v1442
  %v1453 = vunpack.c.l.s4 1983009808
  %v1454 = vunpack.c.0.s8 %v1453
  %v1455 = vlaneseq
  %v1456 = vshrl.u32 %v1455, 7
  %v1457 = vsub.s32 %v1454, %v1456
  %v1458 = vrot.slane %v1443, %v1457
  %1459 = vrot.lane.b32.xlu0 %v1458, 32
  %v1460 = vpop.permute.xlu0 %1459
  %v1462 = vmul.f32 %v1449, %v1460
  %1464 = vrot.lane.b32.xlu0 %v1450, 64
  %v1465 = vpop.permute.xlu0 %1464
  %v1467 = vmul.f32 %v1449, %v1465
  %1469 = vrot.lane.b32.xlu0 %v1467, 32
  %v1470 = vpop.permute.xlu0 %1469
  %v1472 = vadd.f32 %v1462, %v1470
  %v1473 = vtanh.pop %v1472
  %1475 = vrot.lane.b32.xlu0 %v1473, 64
  %v1476 = vpop.permute.xlu0 %1475
  %v1478 = vmul.f32 %v1449, %v1476
  %v1481 = vunpack.c.l.s4 1983009808
  %v1482 = vunpack.c.0.s8 %v1481
  %v1483 = vlaneseq
  %v1484 = vshrl.u32 %v1483, 7
  %v1485 = vsub.s32 %v1482, %v1484
  %v1486 = vrot.slane %v1478, %v1485
  %1487 = vrot.lane.b32.xlu0 %v1486, 32
  %v1488 = vpop.permute.xlu0 %1487
  %1490 = vst.msk [vmem:[#allocation2] sm:$0x3] %vm15, %v1488
  %v1493 = vunpack.c.l.s4 1983009808
  %v1494 = vunpack.c.0.s8 %v1493
  %v1495 = vlaneseq
  %v1496 = vshrl.u32 %v1495, 7
  %v1497 = vsub.s32 %v1494, %v1496
  %v1498 = vrot.slane %v1472, %v1497
  %1499 = vrot.lane.b32.xlu0 %v1498, 96
  %v1500 = vpop.permute.xlu0 %1499
  %1502 = vst.msk [vmem:[#allocation3] sm:$0x3] %vm15, %v1500
  %v1503 = vld [vmem:[%s294] sm:$0x3]
  %v1504 = vunpack.c.l.bf16 %v1503
  %v1505 = vld [vmem:[#allocation4] sm:$0x3]
  %v1506 = vpack.c.bf16 %v1505, %v1505
  %v1508 = vsel %vm44, %v1506, 0
  %1510 = vmatprep.subr.bf16.mxu0 0
  %1511 = vmatpush1.bf16.msra.mxu0 %v162
  %1512 = vmatprep.subr.bf16.mxu0 0
  %1513 = vmatpush1.bf16.msra.mxu0 %v163
  %1514 = vmatprep.subr.bf16.mxu0 0
  %1515 = vmatpush1.bf16.msra.mxu0 0
  %1516 = vmatprep.subr.bf16.mxu0 0
  %1517 = vmatpush1.bf16.msra.mxu0 0
  %1518 = vmatprep.subr.bf16.mxu0 0
  %1519 = vmatpush1.bf16.msra.mxu0 0
  %1520 = vmatprep.subr.bf16.mxu0 0
  %1521 = vmatpush1.bf16.msra.mxu0 0
  %1522 = vmatprep.subr.bf16.mxu0 0
  %1523 = vmatpush1.bf16.msra.mxu0 0
  %1524 = vmatprep.subr.bf16.mxu0 0
  %1525 = vmatpush1.bf16.msra.mxu0 0
  %1526 = vmatprep.subr.bf16.mxu0 0
  %1527 = vmatpush1.bf16.msra.mxu0 0
  %1528 = vmatprep.subr.bf16.mxu0 0
  %1529 = vmatpush1.bf16.msra.mxu0 0
  %1530 = vmatprep.subr.bf16.mxu0 0
  %1531 = vmatpush1.bf16.msra.mxu0 0
  %1532 = vmatprep.subr.bf16.mxu0 0
  %1533 = vmatpush1.bf16.msra.mxu0 0
  %1534 = vmatprep.subr.bf16.mxu0 0
  %1535 = vmatpush1.bf16.msra.mxu0 0
  %1536 = vmatprep.subr.bf16.mxu0 0
  %1537 = vmatpush1.bf16.msra.mxu0 0
  %1538 = vmatprep.subr.bf16.mxu0 0
  %1539 = vmatpush1.bf16.msra.mxu0 0
  %1540 = vmatprep.subr.bf16.mxu0 0
  %1541 = vmatpush1.bf16.msra.mxu0 0
  %1542 = vmatprep.mubr.bf16.mxu0 0
  %1543 = vmatmul.mubr.bf16.gmra.mrb[0].mxu0 %v1508
  %v1544 = vpop.f32.mrb[0].mxu0
  %v1545 = vadd.f32 0.0, %v1544
  %v1546 = vpop.f32.mrb[0].mxu0
  %v1547 = vpop.f32.mrb[0].mxu0
  %v1548 = vpop.f32.mrb[0].mxu0
  %1549 = vdwg.mxu0
  %v1551 = vrot.slane %v1504, 2
  %v1553 = vadd.f32 %v1551, %v1545
  %v1554 = vld [vmem:[#allocation5] sm:$0x3]
  %v1555 = vxor.u32 %v1553, 2147483648
  %v1556 = vmul.f32 %v1555, 1.442695
  %v1557 = vpow.pop %v1556
  %v1558 = vadd.f32 %v1557, 1.0
  %v1559 = vrcp.pop %v1558
  %v1560 = vmul.f32 1.0, %v1559
  %v1561 = vtanh.pop %v1553
  %v1564 = vunpack.c.l.s4 1983009808
  %v1565 = vunpack.c.0.s8 %v1564
  %v1566 = vlaneseq
  %v1567 = vshrl.u32 %v1566, 7
  %v1568 = vsub.s32 %v1565, %v1567
  %v1569 = vrot.slane %v1554, %v1568
  %1570 = vrot.lane.b32.xlu0 %v1569, 32
  %v1571 = vpop.permute.xlu0 %1570
  %v1573 = vmul.f32 %v1560, %v1571
  %1575 = vrot.lane.b32.xlu0 %v1561, 64
  %v1576 = vpop.permute.xlu0 %1575
  %v1578 = vmul.f32 %v1560, %v1576
  %1580 = vrot.lane.b32.xlu0 %v1578, 32
  %v1581 = vpop.permute.xlu0 %1580
  %v1583 = vadd.f32 %v1573, %v1581
  %v1584 = vtanh.pop %v1583
  %1586 = vrot.lane.b32.xlu0 %v1584, 64
  %v1587 = vpop.permute.xlu0 %1586
  %v1589 = vmul.f32 %v1560, %v1587
  %v1592 = vunpack.c.l.s4 1983009808
  %v1593 = vunpack.c.0.s8 %v1592
  %v1594 = vlaneseq
  %v1595 = vshrl.u32 %v1594, 7
  %v1596 = vsub.s32 %v1593, %v1595
  %v1597 = vrot.slane %v1589, %v1596
  %1598 = vrot.lane.b32.xlu0 %v1597, 32
  %v1599 = vpop.permute.xlu0 %1598
  %1601 = vst.msk [vmem:[#allocation4] sm:$0x3] %vm15, %v1599
  %v1604 = vunpack.c.l.s4 1983009808
  %v1605 = vunpack.c.0.s8 %v1604
  %v1606 = vlaneseq
  %v1607 = vshrl.u32 %v1606, 7
  %v1608 = vsub.s32 %v1605, %v1607
  %v1609 = vrot.slane %v1583, %v1608
  %1610 = vrot.lane.b32.xlu0 %v1609, 96
  %v1611 = vpop.permute.xlu0 %1610
  %1613 = vst.msk [vmem:[#allocation5] sm:$0x3] %vm15, %v1611
  %v1614 = vld [vmem:[%s149] sm:$0x3]
  %v1615 = vunpack.c.l.bf16 %v1614
  %v1616 = vld [vmem:[#allocation2] sm:$0x3]
  %v1617 = vpack.c.bf16 %v1616, %v1616
  %v1619 = vsel %vm44, %v1617, 0
  %1621 = vmatprep.subr.bf16.mxu0 0
  %1622 = vmatpush1.bf16.msra.mxu0 %v40
  %1623 = vmatprep.subr.bf16.mxu0 0
  %1624 = vmatpush1.bf16.msra.mxu0 %v41
  %1625 = vmatprep.subr.bf16.mxu0 0
  %1626 = vmatpush1.bf16.msra.mxu0 0
  %1627 = vmatprep.subr.bf16.mxu0 0
  %1628 = vmatpush1.bf16.msra.mxu0 0
  %1629 = vmatprep.subr.bf16.mxu0 0
  %1630 = vmatpush1.bf16.msra.mxu0 0
  %1631 = vmatprep.subr.bf16.mxu0 0
  %1632 = vmatpush1.bf16.msra.mxu0 0
  %1633 = vmatprep.subr.bf16.mxu0 0
  %1634 = vmatpush1.bf16.msra.mxu0 0
  %1635 = vmatprep.subr.bf16.mxu0 0
  %1636 = vmatpush1.bf16.msra.mxu0 0
  %1637 = vmatprep.subr.bf16.mxu0 0
  %1638 = vmatpush1.bf16.msra.mxu0 0
  %1639 = vmatprep.subr.bf16.mxu0 0
  %1640 = vmatpush1.bf16.msra.mxu0 0
  %1641 = vmatprep.subr.bf16.mxu0 0
  %1642 = vmatpush1.bf16.msra.mxu0 0
  %1643 = vmatprep.subr.bf16.mxu0 0
  %1644 = vmatpush1.bf16.msra.mxu0 0
  %1645 = vmatprep.subr.bf16.mxu0 0
  %1646 = vmatpush1.bf16.msra.mxu0 0
  %1647 = vmatprep.subr.bf16.mxu0 0
  %1648 = vmatpush1.bf16.msra.mxu0 0
  %1649 = vmatprep.subr.bf16.mxu0 0
  %1650 = vmatpush1.bf16.msra.mxu0 0
  %1651 = vmatprep.subr.bf16.mxu0 0
  %1652 = vmatpush1.bf16.msra.mxu0 0
  %1653 = vmatprep.mubr.bf16.mxu0 0
  %1654 = vmatmul.mubr.bf16.gmra.mrb[0].mxu0 %v1619
  %v1655 = vpop.f32.mrb[0].mxu0
  %v1656 = vadd.f32 0.0, %v1655
  %v1657 = vpop.f32.mrb[0].mxu0
  %v1658 = vpop.f32.mrb[0].mxu0
  %v1659 = vpop.f32.mrb[0].mxu0
  %1660 = vdwg.mxu0
  %v1661 = vadd.f32 %v1615, %v1656
  %v1662 = vld [vmem:[#allocation3] sm:$0x3]
  %v1663 = vxor.u32 %v1661, 2147483648
  %v1664 = vmul.f32 %v1663, 1.442695
  %v1665 = vpow.pop %v1664
  %v1666 = vadd.f32 %v1665, 1.0
  %v1667 = vrcp.pop %v1666
  %v1668 = vmul.f32 1.0, %v1667
  %v1669 = vtanh.pop %v1661
  %v1672 = vunpack.c.l.s4 1983009808
  %v1673 = vunpack.c.0.s8 %v1672
  %v1674 = vlaneseq
  %v1675 = vshrl.u32 %v1674, 7
  %v1676 = vsub.s32 %v1673, %v1675
  %v1677 = vrot.slane %v1662, %v1676
  %1678 = vrot.lane.b32.xlu0 %v1677, 32
  %v1679 = vpop.permute.xlu0 %1678
  %v1681 = vmul.f32 %v1668, %v1679
  %1683 = vrot.lane.b32.xlu0 %v1669, 64
  %v1684 = vpop.permute.xlu0 %1683
  %v1686 = vmul.f32 %v1668, %v1684
  %1688 = vrot.lane.b32.xlu0 %v1686, 32
  %v1689 = vpop.permute.xlu0 %1688
  %v1691 = vadd.f32 %v1681, %v1689
  %v1692 = vtanh.pop %v1691
  %1694 = vrot.lane.b32.xlu0 %v1692, 64
  %v1695 = vpop.permute.xlu0 %1694
  %v1697 = vmul.f32 %v1668, %v1695
  %v1700 = vunpack.c.l.s4 1983009808
  %v1701 = vunpack.c.0.s8 %v1700
  %v1702 = vlaneseq
  %v1703 = vshrl.u32 %v1702, 7
  %v1704 = vsub.s32 %v1701, %v1703
  %v1705 = vrot.slane %v1697, %v1704
  %1706 = vrot.lane.b32.xlu0 %v1705, 32
  %v1707 = vpop.permute.xlu0 %1706
  %1709 = vst.msk [vmem:[#allocation2] sm:$0x3] %vm15, %v1707
  %v1712 = vunpack.c.l.s4 1983009808
  %v1713 = vunpack.c.0.s8 %v1712
  %v1714 = vlaneseq
  %v1715 = vshrl.u32 %v1714, 7
  %v1716 = vsub.s32 %v1713, %v1715
  %v1717 = vrot.slane %v1691, %v1716
  %1718 = vrot.lane.b32.xlu0 %v1717, 96
  %v1719 = vpop.permute.xlu0 %1718
  %1721 = vst.msk [vmem:[#allocation3] sm:$0x3] %vm15, %v1719
  %v1722 = vpack.c.bf16 %v1697, %v1697
  %v1725 = vunpack.c.l.s4 1966171168
  %v1726 = vunpack.c.0.s8 %v1725
  %v1727 = vlaneseq
  %v1728 = vshrl.u32 %v1727, 7
  %v1729 = vsub.s32 %v1726, %v1728
  %v1730 = vrot.slane %v1722, %v1729
  %v1732 = vunpack.c.l.s4 1966171168
  %v1733 = vunpack.c.0.s8 %v1732
  %v1734 = vlaneseq
  %v1735 = vshrl.u32 %v1734, 7
  %v1736 = vsub.s32 %v1733, %v1735
  %v1737 = vrot.slane %v1730, %v1736
  %1738 = vrot.lane.b32.xlu0 %v1737, 32
  %v1739 = vpop.permute.xlu0 %1738
  %vm1741 = vcmask 253952
  %1742 = vst.msk [vmem:[%s3] sm:$0x1] %vm1741, %v1739
  %v1743 = vld [vmem:[%s0] sm:$0x3]
  %v1744 = vunpack.c.l.bf16 %v1743
  %v1745 = vld [vmem:[#allocation4] sm:$0x3]
  %v1746 = vpack.c.bf16 %v1745, %v1745
  %v1748 = vsel %vm44, %v1746, 0
  %1750 = vmatprep.subr.bf16.mxu0 0
  %1751 = vmatpush1.bf16.msra.mxu0 %v162
  %1752 = vmatprep.subr.bf16.mxu0 0
  %1753 = vmatpush1.bf16.msra.mxu0 %v163
  %1754 = vmatprep.subr.bf16.mxu0 0
  %1755 = vmatpush1.bf16.msra.mxu0 0
  %1756 = vmatprep.subr.bf16.mxu0 0
  %1757 = vmatpush1.bf16.msra.mxu0 0
  %1758 = vmatprep.subr.bf16.mxu0 0
  %1759 = vmatpush1.bf16.msra.mxu0 0
  %1760 = vmatprep.subr.bf16.mxu0 0
  %1761 = vmatpush1.bf16.msra.mxu0 0
  %1762 = vmatprep.subr.bf16.mxu0 0
  %1763 = vmatpush1.bf16.msra.mxu0 0
  %1764 = vmatprep.subr.bf16.mxu0 0
  %1765 = vmatpush1.bf16.msra.mxu0 0
  %1766 = vmatprep.subr.bf16.mxu0 0
  %1767 = vmatpush1.bf16.msra.mxu0 0
  %1768 = vmatprep.subr.bf16.mxu0 0
  %1769 = vmatpush1.bf16.msra.mxu0 0
  %1770 = vmatprep.subr.bf16.mxu0 0
  %1771 = vmatpush1.bf16.msra.mxu0 0
  %1772 = vmatprep.subr.bf16.mxu0 0
  %1773 = vmatpush1.bf16.msra.mxu0 0
  %1774 = vmatprep.subr.bf16.mxu0 0
  %1775 = vmatpush1.bf16.msra.mxu0 0
  %1776 = vmatprep.subr.bf16.mxu0 0
  %1777 = vmatpush1.bf16.msra.mxu0 0
  %1778 = vmatprep.subr.bf16.mxu0 0
  %1779 = vmatpush1.bf16.msra.mxu0 0
  %1780 = vmatprep.subr.bf16.mxu0 0
  %1781 = vmatpush1.bf16.msra.mxu0 0
  %1782 = vmatprep.mubr.bf16.mxu0 0
  %1783 = vmatmul.mubr.bf16.gmra.mrb[0].mxu0 %v1748
  %v1784 = vpop.f32.mrb[0].mxu0
  %v1785 = vadd.f32 0.0, %v1784
  %v1786 = vpop.f32.mrb[0].mxu0
  %v1787 = vpop.f32.mrb[0].mxu0
  %v1788 = vpop.f32.mrb[0].mxu0
  %1789 = vdwg.mxu0
  %v1791 = vrot.slane %v1744, 2
  %v1793 = vadd.f32 %v1791, %v1785
  %v1794 = vld [vmem:[#allocation5] sm:$0x3]
  %v1795 = vxor.u32 %v1793, 2147483648
  %v1796 = vmul.f32 %v1795, 1.442695
  %v1797 = vpow.pop %v1796
  %v1798 = vadd.f32 %v1797, 1.0
  %v1799 = vrcp.pop %v1798
  %v1800 = vmul.f32 1.0, %v1799
  %v1801 = vtanh.pop %v1793
  %v1804 = vunpack.c.l.s4 1983009808
  %v1805 = vunpack.c.0.s8 %v1804
  %v1806 = vlaneseq
  %v1807 = vshrl.u32 %v1806, 7
  %v1808 = vsub.s32 %v1805, %v1807
  %v1809 = vrot.slane %v1794, %v1808
  %1810 = vrot.lane.b32.xlu0 %v1809, 32
  %v1811 = vpop.permute.xlu0 %1810
  %v1813 = vmul.f32 %v1800, %v1811
  %1815 = vrot.lane.b32.xlu0 %v1801, 64
  %v1816 = vpop.permute.xlu0 %1815
  %v1818 = vmul.f32 %v1800, %v1816
  %1820 = vrot.lane.b32.xlu0 %v1818, 32
  %v1821 = vpop.permute.xlu0 %1820
  %v1823 = vadd.f32 %v1813, %v1821
  %v1824 = vtanh.pop %v1823
  %1826 = vrot.lane.b32.xlu0 %v1824, 64
  %v1827 = vpop.permute.xlu0 %1826
  %v1829 = vmul.f32 %v1800, %v1827
  %v1832 = vunpack.c.l.s4 1983009808
  %v1833 = vunpack.c.0.s8 %v1832
  %v1834 = vlaneseq
  %v1835 = vshrl.u32 %v1834, 7
  %v1836 = vsub.s32 %v1833, %v1835
  %v1837 = vrot.slane %v1829, %v1836
  %1838 = vrot.lane.b32.xlu0 %v1837, 32
  %v1839 = vpop.permute.xlu0 %1838
  %1841 = vst.msk [vmem:[#allocation4] sm:$0x3] %vm15, %v1839
  %v1844 = vunpack.c.l.s4 1983009808
  %v1845 = vunpack.c.0.s8 %v1844
  %v1846 = vlaneseq
  %v1847 = vshrl.u32 %v1846, 7
  %v1848 = vsub.s32 %v1845, %v1847
  %v1849 = vrot.slane %v1823, %v1848
  %1850 = vrot.lane.b32.xlu0 %v1849, 96
  %v1851 = vpop.permute.xlu0 %1850
  %1853 = vst.msk [vmem:[#allocation5] sm:$0x3] %vm15, %v1851
  // Predicated region
  $region14: #{robert_lstm_forward.12} parent=0 // pred_check
    _
  $region15: #{robert_lstm_forward.12} parent=0 // pred_check_branch
    %1855 = sbr.rel (0) target = $region17
  $region16: #{robert_lstm_forward.12} parent=0 // pred_region
    _
  $region17: #{robert_lstm_forward.12} parent=0 // pred_fallthru
    _
  // Predicated region
  $region18: #{robert_lstm_forward.12} parent=0 // pred_check
    _
  $region19: #{robert_lstm_forward.12} parent=0 // pred_check_branch
    %1857 = sbr.rel (0) target = $region21
  $region20: #{robert_lstm_forward.12} parent=0 // pred_region
    _
  $region21: #{robert_lstm_forward.12} parent=0 // pred_fallthru
    _

</llo_original>
